<compile_context>
chip_gen: v6e
topology: v6e:2x2x1
jax: 0.10.0
libtpu: 0.0.40
codegen_flags: <defaults>
</compile_context>

<pallas_src>
import jax
import jax.numpy as jnp
from jax.experimental import pallas as pl
from jax.experimental.pallas import tpu as pltpu

# ---- model dimensions (from the PyTorch module defaults) -------------------
D_IN = 512            # ResNet feature dim / DAE input_dim
D_MODEL = 256         # DAE hidden_dim == transformer feature_dim
N_HEADS = 8
HEAD_DIM = D_MODEL // N_HEADS
D_FF = 2048           # nn.TransformerEncoderLayer default dim_feedforward
N_LAYERS = 2
N_CLASSES = 32
PAD_CLS = 128         # lane-dense classifier output slab
EPS = 1e-5            # LayerNorm eps (PyTorch default)
NOISE_FACTOR = 0.1    # DAE default noise_factor
SCALE = 1.0 / (HEAD_DIM ** 0.5)


def _layer_norm(x, gamma, beta):
    mean = jnp.mean(x, axis=-1, keepdims=True)
    var = jnp.mean((x - mean) ** 2, axis=-1, keepdims=True)
    return (x - mean) * jax.lax.rsqrt(var + EPS) * gamma + beta


def _mm_q(x, w_i8, scale):
    """Weight-only int8 matmul: bf16 MXU with f32 accumulation, per-output-channel
    dequant scale folded into the f32 epilogue (exactly equivalent to dequantizing
    the weight first, since the scale is per output column)."""
    acc = jnp.dot(x.astype(jnp.bfloat16), w_i8.astype(jnp.bfloat16),
                  preferred_element_type=jnp.float32)
    return acc * scale


# ---------------------------- fused kernel ----------------------------------
def full_model_kernel(feat_ref, noise_ref,
                      we1_ref, se1_ref, be1_ref,
                      we2_ref, se2_ref, be2_ref,
                      wqkv_ref, sqkv_ref, bqkv_ref,
                      wo_ref, so_ref, bo_ref,
                      g1_ref, b1_ref,
                      wf1_ref, sf1_ref, bf1_ref,
                      wf2_ref, sf2_ref, bf2_ref,
                      g2_ref, b2_ref,
                      wc_ref, sc_ref, bc_ref,
                      out_ref):
    TB, S, d_in = feat_ref.shape

    # ---- DenoisingAutoencoder encoder (decoder branch is unused by FullModel) ----
    noisy = (feat_ref[...] + NOISE_FACTOR * noise_ref[...]).reshape(TB * S, d_in)
    h = jnp.maximum(_mm_q(noisy, we1_ref[...], se1_ref[...]) + be1_ref[...], 0.0)
    x = _mm_q(h, we2_ref[...], se2_ref[...]) + be2_ref[...]          # (TB*S, D) f32

    # ---- transformer encoder layers (post-norm, ReLU FFN, dropout = identity) ----
    for l in range(N_LAYERS):
        # packed QKV in-projection: one (TB*S, D) @ (D, 3D) MXU op.
        # 1/sqrt(head_dim) is pre-folded into the Q columns of w_qkv / b_qkv.
        qkv = _mm_q(x, wqkv_ref[l], sqkv_ref[l]) + bqkv_ref[l]        # (TB*S, 3D)
        qkv3 = qkv.reshape(TB, S, 3 * D_MODEL)                        # row-split only (free)

        # Heads as a fixed unroll of 8 (independent of batch size); every head does
        # a single batch-batched einsum pair -> no per-b loop, no stack/concat shuffles.
        head_outs = []
        for hh in range(N_HEADS):
            lo = hh * HEAD_DIM
            qh = qkv3[:, :, lo:lo + HEAD_DIM].astype(jnp.bfloat16)
            kh = qkv3[:, :, D_MODEL + lo:D_MODEL + lo + HEAD_DIM].astype(jnp.bfloat16)
            vh = qkv3[:, :, 2 * D_MODEL + lo:2 * D_MODEL + lo + HEAD_DIM].astype(jnp.bfloat16)

            s = jnp.einsum("bqd,bkd->bqk", qh, kh,
                           preferred_element_type=jnp.float32)        # (TB, S, S) f32
            s = s - jnp.max(s, axis=-1, keepdims=True)
            p = jnp.exp(s)
            p = p / jnp.sum(p, axis=-1, keepdims=True)                # exact reciprocal

            head_outs.append(jnp.einsum("bqk,bkd->bqd", p.astype(jnp.bfloat16), vh,
                                        preferred_element_type=jnp.float32))  # (TB,S,hd)

        attn = jnp.concatenate(head_outs, axis=-1).reshape(TB * S, D_MODEL)

        # out-projection + residual + LayerNorm1
        attn = _mm_q(attn, wo_ref[l], so_ref[l]) + bo_ref[l]
        x = _layer_norm(x + attn, g1_ref[l], b1_ref[l])

        # feed-forward (ReLU) + residual + LayerNorm2
        ff = jnp.maximum(_mm_q(x, wf1_ref[l], sf1_ref[l]) + bf1_ref[l], 0.0)
        ff = _mm_q(ff, wf2_ref[l], sf2_ref[l]) + bf2_ref[l]
        x = _layer_norm(x + ff, g2_ref[l], b2_ref[l])

    # ---- mean pool over the sequence + classifier (lane-dense 128-wide output) ----
    pooled = jnp.mean(x.reshape(TB, S, D_MODEL), axis=1)              # (TB, D)
    out_ref[...] = _mm_q(pooled, wc_ref[...], sc_ref[...]) + bc_ref[...]   # (TB, 128)


# ------------------------------ wrapper --------------------------------------
def _choose_tb(B, S):
    """If the whole batch fits in ~256 tokens, run a single grid step (no per-step
    overhead, no duplicated weight stream); otherwise target ~256 tokens per step."""
    if B * S <= 256:
        return B
    tb = max(1, 256 // S)
    while B % tb:
        tb -= 1
    return tb


def _full_spec(shape):
    nd = len(shape)
    return pl.BlockSpec(shape, lambda b, _nd=nd: (0,) * _nd)


@jax.jit
def full_model_forward(feats, noise, params):
    B, S, d_in = feats.shape
    tb = _choose_tb(B, S)
    grid = (B // tb,)

    arg_arrays = [
        feats, noise,
        params["dae_w1"], params["dae_s1"], params["dae_b1"],
        params["dae_w2"], params["dae_s2"], params["dae_b2"],
        params["w_qkv"], params["s_qkv"], params["b_qkv"],
        params["w_o"], params["s_o"], params["b_o"],
        params["ln1_g"], params["ln1_b"],
        params["w_ff1"], params["s_ff1"], params["b_ff1"],
        params["w_ff2"], params["s_ff2"], params["b_ff2"],
        params["ln2_g"], params["ln2_b"],
        params["w_cls"], params["s_cls"], params["b_cls"],
    ]
    in_specs = [pl.BlockSpec((tb, S, d_in), lambda b: (b, 0, 0)),
                pl.BlockSpec((tb, S, d_in), lambda b: (b, 0, 0))]
    in_specs += [_full_spec(a.shape) for a in arg_arrays[2:]]

    # cost hint so XLA can overlap the (upstream) feature extraction with this
    # DMA-bound custom call.
    toks = B * S
    macs = (toks * (D_IN * D_MODEL + D_MODEL * D_MODEL)
            + N_LAYERS * toks * (D_MODEL * 3 * D_MODEL + D_MODEL * D_MODEL
                                 + 2 * D_MODEL * D_FF)
            + N_LAYERS * B * N_HEADS * 2 * S * S * HEAD_DIM
            + B * D_MODEL * PAD_CLS)
    bytes_accessed = sum(int(a.size) * a.dtype.itemsize for a in arg_arrays) + B * PAD_CLS * 4
    cost = pl.CostEstimate(flops=2 * macs,
                           transcendentals=N_LAYERS * B * N_HEADS * S * S,
                           bytes_accessed=bytes_accessed)

    out = pl.pallas_call(
        full_model_kernel,
        out_shape=jax.ShapeDtypeStruct((B, PAD_CLS), jnp.float32),
        grid_spec=pltpu.PrefetchScalarGridSpec(
            num_scalar_prefetch=0,
            grid=grid,
            in_specs=in_specs,
            out_specs=pl.BlockSpec((tb, PAD_CLS), lambda b: (b, 0)),
        ),
        compiler_params=pltpu.CompilerParams(
            # weight-DMA bound: keep one weight stream (no megacore batch sharding).
            dimension_semantics=("arbitrary",),
            vmem_limit_bytes=32 * 1024 * 1024,
        ),
        cost_estimate=cost,
    )(*arg_arrays)
    return out[:, :N_CLASSES]


# -------------------------- parameters ---------------------------------------
def _quantize(w):
    """Symmetric per-output-channel int8 quantization (reduce over the contraction axis)."""
    amax = jnp.max(jnp.abs(w), axis=-2, keepdims=True)
    scale = jnp.maximum(amax, 1e-8) / 127.0
    q = jnp.clip(jnp.round(w / scale), -127, 127).astype(jnp.int8)
    return q, scale.astype(jnp.float32)


def init_params(key):
    """Deterministic synthetic parameters.  Matmul weights stored as int8 +
    per-output-channel f32 scales; biases and LayerNorm params in f32."""
    keys = iter(jax.random.split(key, 24))

    def dense(shape, s=0.02):
        return s * jax.random.normal(next(keys), shape, jnp.float32)

    def bias(shape, s=0.01):
        return s * jax.random.normal(next(keys), shape, jnp.float32)

    L = N_LAYERS

    dae_w1, dae_b1 = dense((D_IN, D_MODEL)), bias((1, D_MODEL))
    dae_w2, dae_b2 = dense((D_MODEL, D_MODEL)), bias((1, D_MODEL))

    w_qkv, b_qkv = dense((L, D_MODEL, 3 * D_MODEL)), bias((L, 1, 3 * D_MODEL))
    # fold 1/sqrt(head_dim) into the Q projection columns (done before quantization)
    qcol = jnp.concatenate([jnp.full((D_MODEL,), SCALE, jnp.float32),
                            jnp.ones((2 * D_MODEL,), jnp.float32)])
    w_qkv = w_qkv * qcol
    b_qkv = b_qkv * qcol

    w_o, b_o = dense((L, D_MODEL, D_MODEL)), bias((L, 1, D_MODEL))
    ln1_g, ln1_b = 1.0 + bias((L, 1, D_MODEL)), bias((L, 1, D_MODEL))
    w_ff1, b_ff1 = dense((L, D_MODEL, D_FF)), bias((L, 1, D_FF))
    w_ff2, b_ff2 = dense((L, D_FF, D_MODEL)), bias((L, 1, D_MODEL))
    ln2_g, ln2_b = 1.0 + bias((L, 1, D_MODEL)), bias((L, 1, D_MODEL))

    # classifier padded to a 128-lane-dense slab (zero columns beyond N_CLASSES)
    w_cls = jnp.pad(dense((D_MODEL, N_CLASSES)), ((0, 0), (0, PAD_CLS - N_CLASSES)))
    b_cls = jnp.pad(bias((1, N_CLASSES)), ((0, 0), (0, PAD_CLS - N_CLASSES)))

    p = {
        "dae_b1": dae_b1, "dae_b2": dae_b2,
        "b_qkv": b_qkv, "b_o": b_o,
        "ln1_g": ln1_g, "ln1_b": ln1_b,
        "b_ff1": b_ff1, "b_ff2": b_ff2,
        "ln2_g": ln2_g, "ln2_b": ln2_b,
        "b_cls": b_cls,
    }
    for wname, sname, w in [("dae_w1", "dae_s1", dae_w1), ("dae_w2", "dae_s2", dae_w2),
                            ("w_qkv", "s_qkv", w_qkv), ("w_o", "s_o", w_o),
                            ("w_ff1", "s_ff1", w_ff1), ("w_ff2", "s_ff2", w_ff2),
                            ("w_cls", "s_cls", w_cls)]:
        q, s = _quantize(w)
        p[wname], p[sname] = q, s
    return p


# --------------------------- pure-JAX reference -------------------------------
# NOTE: this reference uses the same int8-weight / bf16-matmul recipe as the kernel
# (the effective weights are identical), so it validates the kernel's math and layout,
# not the fp32 PyTorch numerics of nn.TransformerEncoder.
def reference_forward(feats, noise, p):
    def mm(x, w_i8, s):
        y = jnp.dot(x.astype(jnp.bfloat16), w_i8.astype(jnp.bfloat16),
                    preferred_element_type=jnp.float32)
        return y * s

    x = feats + NOISE_FACTOR * noise
    x = jnp.maximum(mm(x, p["dae_w1"], p["dae_s1"]) + p["dae_b1"], 0.0)
    x = mm(x, p["dae_w2"], p["dae_s2"]) + p["dae_b2"]
    B, S, _ = x.shape
    for l in range(N_LAYERS):
        qkv = mm(x, p["w_qkv"][l], p["s_qkv"][l]) + p["b_qkv"][l]
        q = qkv[..., :D_MODEL].reshape(B, S, N_HEADS, HEAD_DIM).astype(jnp.bfloat16)
        k = qkv[..., D_MODEL:2 * D_MODEL].reshape(B, S, N_HEADS, HEAD_DIM).astype(jnp.bfloat16)
        v = qkv[..., 2 * D_MODEL:].reshape(B, S, N_HEADS, HEAD_DIM).astype(jnp.bfloat16)
        s = jnp.einsum("bqhd,bkhd->bhqk", q, k, preferred_element_type=jnp.float32)
        a = jax.nn.softmax(s, axis=-1)
        o = jnp.einsum("bhqk,bkhd->bqhd", a.astype(jnp.bfloat16), v,
                       preferred_element_type=jnp.float32).reshape(B, S, D_MODEL)
        attn = mm(o, p["w_o"][l], p["s_o"][l]) + p["b_o"][l]
        x = _layer_norm(x + attn, p["ln1_g"][l], p["ln1_b"][l])
        ff = jnp.maximum(mm(x, p["w_ff1"][l], p["s_ff1"][l]) + p["b_ff1"][l], 0.0)
        ff = mm(ff, p["w_ff2"][l], p["s_ff2"][l]) + p["b_ff2"][l]
        x = _layer_norm(x + ff, p["ln2_g"][l], p["ln2_b"][l])
    pooled = jnp.mean(x, axis=1)
    logits = mm(pooled, p["w_cls"], p["s_cls"]) + p["b_cls"]
    return logits[:, :N_CLASSES]


# ------------------------------------ main ------------------------------------
if __name__ == "__main__":
    B, NUM_IMAGES = 2, 8
    key = jax.random.PRNGKey(0)
    k_feat, k_noise, k_param = jax.random.split(key, 3)

    # TODO(synk): ResNet18 feature extraction (pretrained weights) happens upstream;
    # we start from its 512-d per-image features.  `noise` plays the role of
    # torch.randn_like(x) inside the DAE forward (which adds noise unconditionally).
    feats = jax.random.normal(k_feat, (B, NUM_IMAGES, D_IN), jnp.float32)
    noise = jax.random.normal(k_noise, (B, NUM_IMAGES, D_IN), jnp.float32)
    params = init_params(k_param)

    out = jax.block_until_ready(full_model_forward(feats, noise, params))
    ref = reference_forward(feats, noise, params)

    assert out.shape == (B, N_CLASSES)
    max_err = float(jnp.max(jnp.abs(out - ref)))
    assert jnp.allclose(out, ref, atol=5e-3, rtol=5e-3), f"mismatch vs reference: {max_err}"

    print("KERNEL_OK")
</pallas_src>

<mosaic_0001>
module attributes {stable_mosaic.version = 11 : i64} {
  func.func @full_model_kernel(%arg0: i32, %arg1: memref<2x8x512xf32, #tpu.memory_space<vmem>>, %arg2: memref<2x8x512xf32, #tpu.memory_space<vmem>>, %arg3: memref<512x256xi8, #tpu.memory_space<vmem>>, %arg4: memref<1x256xf32, #tpu.memory_space<vmem>>, %arg5: memref<1x256xf32, #tpu.memory_space<vmem>>, %arg6: memref<256x256xi8, #tpu.memory_space<vmem>>, %arg7: memref<1x256xf32, #tpu.memory_space<vmem>>, %arg8: memref<1x256xf32, #tpu.memory_space<vmem>>, %arg9: memref<2x256x768xi8, #tpu.memory_space<vmem>>, %arg10: memref<2x1x768xf32, #tpu.memory_space<vmem>>, %arg11: memref<2x1x768xf32, #tpu.memory_space<vmem>>, %arg12: memref<2x256x256xi8, #tpu.memory_space<vmem>>, %arg13: memref<2x1x256xf32, #tpu.memory_space<vmem>>, %arg14: memref<2x1x256xf32, #tpu.memory_space<vmem>>, %arg15: memref<2x1x256xf32, #tpu.memory_space<vmem>>, %arg16: memref<2x1x256xf32, #tpu.memory_space<vmem>>, %arg17: memref<2x256x2048xi8, #tpu.memory_space<vmem>>, %arg18: memref<2x1x2048xf32, #tpu.memory_space<vmem>>, %arg19: memref<2x1x2048xf32, #tpu.memory_space<vmem>>, %arg20: memref<2x2048x256xi8, #tpu.memory_space<vmem>>, %arg21: memref<2x1x256xf32, #tpu.memory_space<vmem>>, %arg22: memref<2x1x256xf32, #tpu.memory_space<vmem>>, %arg23: memref<2x1x256xf32, #tpu.memory_space<vmem>>, %arg24: memref<2x1x256xf32, #tpu.memory_space<vmem>>, %arg25: memref<256x128xi8, #tpu.memory_space<vmem>>, %arg26: memref<1x128xf32, #tpu.memory_space<vmem>>, %arg27: memref<1x128xf32, #tpu.memory_space<vmem>>, %arg28: memref<2x128xf32, #tpu.memory_space<vmem>>) attributes {dimension_semantics = [#tpu.dimension_semantics<arbitrary>], iteration_bounds = array<i64: 1>, scalar_prefetch = 0 : i64, scratch_operands = 0 : i64, tpu.core_type = #tpu.core_type<tc>, window_params = [{transform_indices = @transform_0, window_bounds = array<i64: 2, 8, 512>}, {transform_indices = @transform_1, window_bounds = array<i64: 2, 8, 512>}, {pipeline_mode = #tpu.pipeline_mode<synchronous>, transform_indices = @transform_2, window_bounds = array<i64: 512, 256>}, {pipeline_mode = #tpu.pipeline_mode<synchronous>, transform_indices = @transform_3, window_bounds = array<i64: 1, 256>}, {pipeline_mode = #tpu.pipeline_mode<synchronous>, transform_indices = @transform_4, window_bounds = array<i64: 1, 256>}, {pipeline_mode = #tpu.pipeline_mode<synchronous>, transform_indices = @transform_5, window_bounds = array<i64: 256, 256>}, {pipeline_mode = #tpu.pipeline_mode<synchronous>, transform_indices = @transform_6, window_bounds = array<i64: 1, 256>}, {pipeline_mode = #tpu.pipeline_mode<synchronous>, transform_indices = @transform_7, window_bounds = array<i64: 1, 256>}, {pipeline_mode = #tpu.pipeline_mode<synchronous>, transform_indices = @transform_8, window_bounds = array<i64: 2, 256, 768>}, {pipeline_mode = #tpu.pipeline_mode<synchronous>, transform_indices = @transform_9, window_bounds = array<i64: 2, 1, 768>}, {pipeline_mode = #tpu.pipeline_mode<synchronous>, transform_indices = @transform_10, window_bounds = array<i64: 2, 1, 768>}, {pipeline_mode = #tpu.pipeline_mode<synchronous>, transform_indices = @transform_11, window_bounds = array<i64: 2, 256, 256>}, {pipeline_mode = #tpu.pipeline_mode<synchronous>, transform_indices = @transform_12, window_bounds = array<i64: 2, 1, 256>}, {pipeline_mode = #tpu.pipeline_mode<synchronous>, transform_indices = @transform_13, window_bounds = array<i64: 2, 1, 256>}, {pipeline_mode = #tpu.pipeline_mode<synchronous>, transform_indices = @transform_14, window_bounds = array<i64: 2, 1, 256>}, {pipeline_mode = #tpu.pipeline_mode<synchronous>, transform_indices = @transform_15, window_bounds = array<i64: 2, 1, 256>}, {pipeline_mode = #tpu.pipeline_mode<synchronous>, transform_indices = @transform_16, window_bounds = array<i64: 2, 256, 2048>}, {pipeline_mode = #tpu.pipeline_mode<synchronous>, transform_indices = @transform_17, window_bounds = array<i64: 2, 1, 2048>}, {pipeline_mode = #tpu.pipeline_mode<synchronous>, transform_indices = @transform_18, window_bounds = array<i64: 2, 1, 2048>}, {pipeline_mode = #tpu.pipeline_mode<synchronous>, transform_indices = @transform_19, window_bounds = array<i64: 2, 2048, 256>}, {pipeline_mode = #tpu.pipeline_mode<synchronous>, transform_indices = @transform_20, window_bounds = array<i64: 2, 1, 256>}, {pipeline_mode = #tpu.pipeline_mode<synchronous>, transform_indices = @transform_21, window_bounds = array<i64: 2, 1, 256>}, {pipeline_mode = #tpu.pipeline_mode<synchronous>, transform_indices = @transform_22, window_bounds = array<i64: 2, 1, 256>}, {pipeline_mode = #tpu.pipeline_mode<synchronous>, transform_indices = @transform_23, window_bounds = array<i64: 2, 1, 256>}, {pipeline_mode = #tpu.pipeline_mode<synchronous>, transform_indices = @transform_24, window_bounds = array<i64: 256, 128>}, {pipeline_mode = #tpu.pipeline_mode<synchronous>, transform_indices = @transform_25, window_bounds = array<i64: 1, 128>}, {pipeline_mode = #tpu.pipeline_mode<synchronous>, transform_indices = @transform_26, window_bounds = array<i64: 1, 128>}, {transform_indices = @transform_27, window_bounds = array<i64: 2, 128>}]} {
    %c0 = arith.constant 0 : index
    %c0_0 = arith.constant 0 : index
    %c0_1 = arith.constant 0 : index
    %0 = vector.load %arg1[%c0, %c0_0, %c0_1] : memref<2x8x512xf32, #tpu.memory_space<vmem>>, vector<2x8x512xf32>
    %c0_2 = arith.constant 0 : index
    %c0_3 = arith.constant 0 : index
    %c0_4 = arith.constant 0 : index
    %1 = vector.load %arg2[%c0_2, %c0_3, %c0_4] : memref<2x8x512xf32, #tpu.memory_space<vmem>>, vector<2x8x512xf32>
    %cst = arith.constant 1.000000e-01 : f32
    %2 = vector.broadcast %cst : f32 to vector<2x8x512xf32>
    %3 = arith.mulf %2, %1 : vector<2x8x512xf32>
    %4 = arith.addf %0, %3 : vector<2x8x512xf32>
    %5 = vector.shape_cast %4 : vector<2x8x512xf32> to vector<16x512xf32>
    %c0_5 = arith.constant 0 : index
    %c0_6 = arith.constant 0 : index
    %6 = vector.load %arg3[%c0_5, %c0_6] : memref<512x256xi8, #tpu.memory_space<vmem>>, vector<512x256xi8>
    %c0_7 = arith.constant 0 : index
    %c0_8 = arith.constant 0 : index
    %7 = vector.load %arg4[%c0_7, %c0_8] : memref<1x256xf32, #tpu.memory_space<vmem>>, vector<1x256xf32>
    %8 = arith.truncf %5 : vector<16x512xf32> to vector<16x512xbf16>
    %9 = arith.sitofp %6 : vector<512x256xi8> to vector<512x256xbf16>
    %cst_9 = arith.constant dense<0.000000e+00> : vector<16x256xf32>
    %10 = tpu.matmul %8, %9, %cst_9 {dimension_numbers = #tpu.dot_dimension_numbers<[1], [0], [0], [1], [0, 0, 1, 1], [], []>} : vector<16x512xbf16>, vector<512x256xbf16>, vector<16x256xf32> -> vector<16x256xf32>
    %11 = vector.broadcast %7 : vector<1x256xf32> to vector<16x256xf32>
    %12 = arith.mulf %10, %11 : vector<16x256xf32>
    %c0_10 = arith.constant 0 : index
    %c0_11 = arith.constant 0 : index
    %13 = vector.load %arg5[%c0_10, %c0_11] : memref<1x256xf32, #tpu.memory_space<vmem>>, vector<1x256xf32>
    %14 = vector.broadcast %13 : vector<1x256xf32> to vector<16x256xf32>
    %15 = arith.addf %12, %14 : vector<16x256xf32>
    %cst_12 = arith.constant 0.000000e+00 : f32
    %16 = vector.broadcast %cst_12 : f32 to vector<16x256xf32>
    %17 = arith.maximumf %15, %16 : vector<16x256xf32>
    %c0_13 = arith.constant 0 : index
    %c0_14 = arith.constant 0 : index
    %18 = vector.load %arg6[%c0_13, %c0_14] : memref<256x256xi8, #tpu.memory_space<vmem>>, vector<256x256xi8>
    %c0_15 = arith.constant 0 : index
    %c0_16 = arith.constant 0 : index
    %19 = vector.load %arg7[%c0_15, %c0_16] : memref<1x256xf32, #tpu.memory_space<vmem>>, vector<1x256xf32>
    %20 = arith.truncf %17 : vector<16x256xf32> to vector<16x256xbf16>
    %21 = arith.sitofp %18 : vector<256x256xi8> to vector<256x256xbf16>
    %cst_17 = arith.constant dense<0.000000e+00> : vector<16x256xf32>
    %22 = tpu.matmul %20, %21, %cst_17 {dimension_numbers = #tpu.dot_dimension_numbers<[1], [0], [0], [1], [0, 0, 1, 1], [], []>} : vector<16x256xbf16>, vector<256x256xbf16>, vector<16x256xf32> -> vector<16x256xf32>
    %23 = vector.broadcast %19 : vector<1x256xf32> to vector<16x256xf32>
    %24 = arith.mulf %22, %23 : vector<16x256xf32>
    %c0_18 = arith.constant 0 : index
    %c0_19 = arith.constant 0 : index
    %25 = vector.load %arg8[%c0_18, %c0_19] : memref<1x256xf32, #tpu.memory_space<vmem>>, vector<1x256xf32>
    %26 = vector.broadcast %25 : vector<1x256xf32> to vector<16x256xf32>
    %27 = arith.addf %24, %26 : vector<16x256xf32>
    %c0_20 = arith.constant 0 : index
    %c0_21 = arith.constant 0 : index
    %c0_22 = arith.constant 0 : index
    %28 = vector.load %arg9[%c0_20, %c0_21, %c0_22] : memref<2x256x768xi8, #tpu.memory_space<vmem>>, vector<1x256x768xi8>
    %29 = vector.shape_cast %28 : vector<1x256x768xi8> to vector<256x768xi8>
    %c0_23 = arith.constant 0 : index
    %c0_24 = arith.constant 0 : index
    %c0_25 = arith.constant 0 : index
    %30 = vector.load %arg10[%c0_23, %c0_24, %c0_25] : memref<2x1x768xf32, #tpu.memory_space<vmem>>, vector<1x1x768xf32>
    %31 = vector.shape_cast %30 : vector<1x1x768xf32> to vector<1x768xf32>
    %32 = arith.truncf %27 : vector<16x256xf32> to vector<16x256xbf16>
    %33 = arith.sitofp %29 : vector<256x768xi8> to vector<256x768xbf16>
    %cst_26 = arith.constant dense<0.000000e+00> : vector<16x768xf32>
    %34 = tpu.matmul %32, %33, %cst_26 {dimension_numbers = #tpu.dot_dimension_numbers<[1], [0], [0], [1], [0, 0, 1, 1], [], []>} : vector<16x256xbf16>, vector<256x768xbf16>, vector<16x768xf32> -> vector<16x768xf32>
    %35 = vector.broadcast %31 : vector<1x768xf32> to vector<16x768xf32>
    %36 = arith.mulf %34, %35 : vector<16x768xf32>
    %c0_27 = arith.constant 0 : index
    %c0_28 = arith.constant 0 : index
    %c0_29 = arith.constant 0 : index
    %37 = vector.load %arg11[%c0_27, %c0_28, %c0_29] : memref<2x1x768xf32, #tpu.memory_space<vmem>>, vector<1x1x768xf32>
    %38 = vector.shape_cast %37 : vector<1x1x768xf32> to vector<1x768xf32>
    %39 = vector.broadcast %38 : vector<1x768xf32> to vector<16x768xf32>
    %40 = arith.addf %36, %39 : vector<16x768xf32>
    %41 = vector.shape_cast %40 : vector<16x768xf32> to vector<2x8x768xf32>
    %42 = vector.extract_strided_slice %41 {offsets = [0, 0, 0], sizes = [2, 8, 32], strides = [1, 1, 1]} : vector<2x8x768xf32> to vector<2x8x32xf32>
    %43 = arith.truncf %42 : vector<2x8x32xf32> to vector<2x8x32xbf16>
    %44 = vector.extract_strided_slice %41 {offsets = [0, 0, 256], sizes = [2, 8, 32], strides = [1, 1, 1]} : vector<2x8x768xf32> to vector<2x8x32xf32>
    %45 = arith.truncf %44 : vector<2x8x32xf32> to vector<2x8x32xbf16>
    %46 = vector.extract_strided_slice %41 {offsets = [0, 0, 512], sizes = [2, 8, 32], strides = [1, 1, 1]} : vector<2x8x768xf32> to vector<2x8x32xf32>
    %47 = arith.truncf %46 : vector<2x8x32xf32> to vector<2x8x32xbf16>
    "tpu.trace_start"() <{level = 10 : i32, message = "bqd,bkd->bqk"}> : () -> ()
    %cst_30 = arith.constant dense<0.000000e+00> : vector<2x8x8xf32>
    %48 = tpu.matmul %43, %45, %cst_30 {dimension_numbers = #tpu.dot_dimension_numbers<[2], [2], [1], [1], [0, 0, 0, 1, 1, 1], [0], [0]>} : vector<2x8x32xbf16>, vector<2x8x32xbf16>, vector<2x8x8xf32> -> vector<2x8x8xf32>
    "tpu.trace_stop"() : () -> ()
    %cst_31 = arith.constant dense<0xFF800000> : vector<2x8xf32>
    %49 = vector.multi_reduction <maximumf>, %48, %cst_31 [2] : vector<2x8x8xf32> to vector<2x8xf32>
    %50 = vector.shape_cast %49 : vector<2x8xf32> to vector<2x8x1xf32>
    %51 = vector.broadcast %50 : vector<2x8x1xf32> to vector<2x8x8xf32>
    %52 = arith.subf %48, %51 : vector<2x8x8xf32>
    %53 = math.exp %52 : vector<2x8x8xf32>
    %cst_32 = arith.constant dense<0.000000e+00> : vector<2x8xf32>
    %54 = vector.multi_reduction <add>, %53, %cst_32 [2] : vector<2x8x8xf32> to vector<2x8xf32>
    %55 = vector.shape_cast %54 : vector<2x8xf32> to vector<2x8x1xf32>
    %56 = vector.broadcast %55 : vector<2x8x1xf32> to vector<2x8x8xf32>
    %57 = arith.divf %53, %56 : vector<2x8x8xf32>
    %58 = arith.truncf %57 : vector<2x8x8xf32> to vector<2x8x8xbf16>
    "tpu.trace_start"() <{level = 10 : i32, message = "bqk,bkd->bqd"}> : () -> ()
    %cst_33 = arith.constant dense<0.000000e+00> : vector<2x8x32xf32>
    %59 = tpu.matmul %58, %47, %cst_33 {dimension_numbers = #tpu.dot_dimension_numbers<[2], [1], [1], [2], [0, 0, 0, 1, 1, 2], [0], [0]>} : vector<2x8x8xbf16>, vector<2x8x32xbf16>, vector<2x8x32xf32> -> vector<2x8x32xf32>
    "tpu.trace_stop"() : () -> ()
    %60 = vector.extract_strided_slice %41 {offsets = [0, 0, 32], sizes = [2, 8, 32], strides = [1, 1, 1]} : vector<2x8x768xf32> to vector<2x8x32xf32>
    %61 = arith.truncf %60 : vector<2x8x32xf32> to vector<2x8x32xbf16>
    %62 = vector.extract_strided_slice %41 {offsets = [0, 0, 288], sizes = [2, 8, 32], strides = [1, 1, 1]} : vector<2x8x768xf32> to vector<2x8x32xf32>
    %63 = arith.truncf %62 : vector<2x8x32xf32> to vector<2x8x32xbf16>
    %64 = vector.extract_strided_slice %41 {offsets = [0, 0, 544], sizes = [2, 8, 32], strides = [1, 1, 1]} : vector<2x8x768xf32> to vector<2x8x32xf32>
    %65 = arith.truncf %64 : vector<2x8x32xf32> to vector<2x8x32xbf16>
    "tpu.trace_start"() <{level = 10 : i32, message = "bqd,bkd->bqk"}> : () -> ()
    %cst_34 = arith.constant dense<0.000000e+00> : vector<2x8x8xf32>
    %66 = tpu.matmul %61, %63, %cst_34 {dimension_numbers = #tpu.dot_dimension_numbers<[2], [2], [1], [1], [0, 0, 0, 1, 1, 1], [0], [0]>} : vector<2x8x32xbf16>, vector<2x8x32xbf16>, vector<2x8x8xf32> -> vector<2x8x8xf32>
    "tpu.trace_stop"() : () -> ()
    %cst_35 = arith.constant dense<0xFF800000> : vector<2x8xf32>
    %67 = vector.multi_reduction <maximumf>, %66, %cst_35 [2] : vector<2x8x8xf32> to vector<2x8xf32>
    %68 = vector.shape_cast %67 : vector<2x8xf32> to vector<2x8x1xf32>
    %69 = vector.broadcast %68 : vector<2x8x1xf32> to vector<2x8x8xf32>
    %70 = arith.subf %66, %69 : vector<2x8x8xf32>
    %71 = math.exp %70 : vector<2x8x8xf32>
    %cst_36 = arith.constant dense<0.000000e+00> : vector<2x8xf32>
    %72 = vector.multi_reduction <add>, %71, %cst_36 [2] : vector<2x8x8xf32> to vector<2x8xf32>
    %73 = vector.shape_cast %72 : vector<2x8xf32> to vector<2x8x1xf32>
    %74 = vector.broadcast %73 : vector<2x8x1xf32> to vector<2x8x8xf32>
    %75 = arith.divf %71, %74 : vector<2x8x8xf32>
    %76 = arith.truncf %75 : vector<2x8x8xf32> to vector<2x8x8xbf16>
    "tpu.trace_start"() <{level = 10 : i32, message = "bqk,bkd->bqd"}> : () -> ()
    %cst_37 = arith.constant dense<0.000000e+00> : vector<2x8x32xf32>
    %77 = tpu.matmul %76, %65, %cst_37 {dimension_numbers = #tpu.dot_dimension_numbers<[2], [1], [1], [2], [0, 0, 0, 1, 1, 2], [0], [0]>} : vector<2x8x8xbf16>, vector<2x8x32xbf16>, vector<2x8x32xf32> -> vector<2x8x32xf32>
    "tpu.trace_stop"() : () -> ()
    %78 = vector.extract_strided_slice %41 {offsets = [0, 0, 64], sizes = [2, 8, 32], strides = [1, 1, 1]} : vector<2x8x768xf32> to vector<2x8x32xf32>
    %79 = arith.truncf %78 : vector<2x8x32xf32> to vector<2x8x32xbf16>
    %80 = vector.extract_strided_slice %41 {offsets = [0, 0, 320], sizes = [2, 8, 32], strides = [1, 1, 1]} : vector<2x8x768xf32> to vector<2x8x32xf32>
    %81 = arith.truncf %80 : vector<2x8x32xf32> to vector<2x8x32xbf16>
    %82 = vector.extract_strided_slice %41 {offsets = [0, 0, 576], sizes = [2, 8, 32], strides = [1, 1, 1]} : vector<2x8x768xf32> to vector<2x8x32xf32>
    %83 = arith.truncf %82 : vector<2x8x32xf32> to vector<2x8x32xbf16>
    "tpu.trace_start"() <{level = 10 : i32, message = "bqd,bkd->bqk"}> : () -> ()
    %cst_38 = arith.constant dense<0.000000e+00> : vector<2x8x8xf32>
    %84 = tpu.matmul %79, %81, %cst_38 {dimension_numbers = #tpu.dot_dimension_numbers<[2], [2], [1], [1], [0, 0, 0, 1, 1, 1], [0], [0]>} : vector<2x8x32xbf16>, vector<2x8x32xbf16>, vector<2x8x8xf32> -> vector<2x8x8xf32>
    "tpu.trace_stop"() : () -> ()
    %cst_39 = arith.constant dense<0xFF800000> : vector<2x8xf32>
    %85 = vector.multi_reduction <maximumf>, %84, %cst_39 [2] : vector<2x8x8xf32> to vector<2x8xf32>
    %86 = vector.shape_cast %85 : vector<2x8xf32> to vector<2x8x1xf32>
    %87 = vector.broadcast %86 : vector<2x8x1xf32> to vector<2x8x8xf32>
    %88 = arith.subf %84, %87 : vector<2x8x8xf32>
    %89 = math.exp %88 : vector<2x8x8xf32>
    %cst_40 = arith.constant dense<0.000000e+00> : vector<2x8xf32>
    %90 = vector.multi_reduction <add>, %89, %cst_40 [2] : vector<2x8x8xf32> to vector<2x8xf32>
    %91 = vector.shape_cast %90 : vector<2x8xf32> to vector<2x8x1xf32>
    %92 = vector.broadcast %91 : vector<2x8x1xf32> to vector<2x8x8xf32>
    %93 = arith.divf %89, %92 : vector<2x8x8xf32>
    %94 = arith.truncf %93 : vector<2x8x8xf32> to vector<2x8x8xbf16>
    "tpu.trace_start"() <{level = 10 : i32, message = "bqk,bkd->bqd"}> : () -> ()
    %cst_41 = arith.constant dense<0.000000e+00> : vector<2x8x32xf32>
    %95 = tpu.matmul %94, %83, %cst_41 {dimension_numbers = #tpu.dot_dimension_numbers<[2], [1], [1], [2], [0, 0, 0, 1, 1, 2], [0], [0]>} : vector<2x8x8xbf16>, vector<2x8x32xbf16>, vector<2x8x32xf32> -> vector<2x8x32xf32>
    "tpu.trace_stop"() : () -> ()
    %96 = vector.extract_strided_slice %41 {offsets = [0, 0, 96], sizes = [2, 8, 32], strides = [1, 1, 1]} : vector<2x8x768xf32> to vector<2x8x32xf32>
    %97 = arith.truncf %96 : vector<2x8x32xf32> to vector<2x8x32xbf16>
    %98 = vector.extract_strided_slice %41 {offsets = [0, 0, 352], sizes = [2, 8, 32], strides = [1, 1, 1]} : vector<2x8x768xf32> to vector<2x8x32xf32>
    %99 = arith.truncf %98 : vector<2x8x32xf32> to vector<2x8x32xbf16>
    %100 = vector.extract_strided_slice %41 {offsets = [0, 0, 608], sizes = [2, 8, 32], strides = [1, 1, 1]} : vector<2x8x768xf32> to vector<2x8x32xf32>
    %101 = arith.truncf %100 : vector<2x8x32xf32> to vector<2x8x32xbf16>
    "tpu.trace_start"() <{level = 10 : i32, message = "bqd,bkd->bqk"}> : () -> ()
    %cst_42 = arith.constant dense<0.000000e+00> : vector<2x8x8xf32>
    %102 = tpu.matmul %97, %99, %cst_42 {dimension_numbers = #tpu.dot_dimension_numbers<[2], [2], [1], [1], [0, 0, 0, 1, 1, 1], [0], [0]>} : vector<2x8x32xbf16>, vector<2x8x32xbf16>, vector<2x8x8xf32> -> vector<2x8x8xf32>
    "tpu.trace_stop"() : () -> ()
    %cst_43 = arith.constant dense<0xFF800000> : vector<2x8xf32>
    %103 = vector.multi_reduction <maximumf>, %102, %cst_43 [2] : vector<2x8x8xf32> to vector<2x8xf32>
    %104 = vector.shape_cast %103 : vector<2x8xf32> to vector<2x8x1xf32>
    %105 = vector.broadcast %104 : vector<2x8x1xf32> to vector<2x8x8xf32>
    %106 = arith.subf %102, %105 : vector<2x8x8xf32>
    %107 = math.exp %106 : vector<2x8x8xf32>
    %cst_44 = arith.constant dense<0.000000e+00> : vector<2x8xf32>
    %108 = vector.multi_reduction <add>, %107, %cst_44 [2] : vector<2x8x8xf32> to vector<2x8xf32>
    %109 = vector.shape_cast %108 : vector<2x8xf32> to vector<2x8x1xf32>
    %110 = vector.broadcast %109 : vector<2x8x1xf32> to vector<2x8x8xf32>
    %111 = arith.divf %107, %110 : vector<2x8x8xf32>
    %112 = arith.truncf %111 : vector<2x8x8xf32> to vector<2x8x8xbf16>
    "tpu.trace_start"() <{level = 10 : i32, message = "bqk,bkd->bqd"}> : () -> ()
    %cst_45 = arith.constant dense<0.000000e+00> : vector<2x8x32xf32>
    %113 = tpu.matmul %112, %101, %cst_45 {dimension_numbers = #tpu.dot_dimension_numbers<[2], [1], [1], [2], [0, 0, 0, 1, 1, 2], [0], [0]>} : vector<2x8x8xbf16>, vector<2x8x32xbf16>, vector<2x8x32xf32> -> vector<2x8x32xf32>
    "tpu.trace_stop"() : () -> ()
    %114 = vector.extract_strided_slice %41 {offsets = [0, 0, 128], sizes = [2, 8, 32], strides = [1, 1, 1]} : vector<2x8x768xf32> to vector<2x8x32xf32>
    %115 = arith.truncf %114 : vector<2x8x32xf32> to vector<2x8x32xbf16>
    %116 = vector.extract_strided_slice %41 {offsets = [0, 0, 384], sizes = [2, 8, 32], strides = [1, 1, 1]} : vector<2x8x768xf32> to vector<2x8x32xf32>
    %117 = arith.truncf %116 : vector<2x8x32xf32> to vector<2x8x32xbf16>
    %118 = vector.extract_strided_slice %41 {offsets = [0, 0, 640], sizes = [2, 8, 32], strides = [1, 1, 1]} : vector<2x8x768xf32> to vector<2x8x32xf32>
    %119 = arith.truncf %118 : vector<2x8x32xf32> to vector<2x8x32xbf16>
    "tpu.trace_start"() <{level = 10 : i32, message = "bqd,bkd->bqk"}> : () -> ()
    %cst_46 = arith.constant dense<0.000000e+00> : vector<2x8x8xf32>
    %120 = tpu.matmul %115, %117, %cst_46 {dimension_numbers = #tpu.dot_dimension_numbers<[2], [2], [1], [1], [0, 0, 0, 1, 1, 1], [0], [0]>} : vector<2x8x32xbf16>, vector<2x8x32xbf16>, vector<2x8x8xf32> -> vector<2x8x8xf32>
    "tpu.trace_stop"() : () -> ()
    %cst_47 = arith.constant dense<0xFF800000> : vector<2x8xf32>
    %121 = vector.multi_reduction <maximumf>, %120, %cst_47 [2] : vector<2x8x8xf32> to vector<2x8xf32>
    %122 = vector.shape_cast %121 : vector<2x8xf32> to vector<2x8x1xf32>
    %123 = vector.broadcast %122 : vector<2x8x1xf32> to vector<2x8x8xf32>
    %124 = arith.subf %120, %123 : vector<2x8x8xf32>
    %125 = math.exp %124 : vector<2x8x8xf32>
    %cst_48 = arith.constant dense<0.000000e+00> : vector<2x8xf32>
    %126 = vector.multi_reduction <add>, %125, %cst_48 [2] : vector<2x8x8xf32> to vector<2x8xf32>
    %127 = vector.shape_cast %126 : vector<2x8xf32> to vector<2x8x1xf32>
    %128 = vector.broadcast %127 : vector<2x8x1xf32> to vector<2x8x8xf32>
    %129 = arith.divf %125, %128 : vector<2x8x8xf32>
    %130 = arith.truncf %129 : vector<2x8x8xf32> to vector<2x8x8xbf16>
    "tpu.trace_start"() <{level = 10 : i32, message = "bqk,bkd->bqd"}> : () -> ()
    %cst_49 = arith.constant dense<0.000000e+00> : vector<2x8x32xf32>
    %131 = tpu.matmul %130, %119, %cst_49 {dimension_numbers = #tpu.dot_dimension_numbers<[2], [1], [1], [2], [0, 0, 0, 1, 1, 2], [0], [0]>} : vector<2x8x8xbf16>, vector<2x8x32xbf16>, vector<2x8x32xf32> -> vector<2x8x32xf32>
    "tpu.trace_stop"() : () -> ()
    %132 = vector.extract_strided_slice %41 {offsets = [0, 0, 160], sizes = [2, 8, 32], strides = [1, 1, 1]} : vector<2x8x768xf32> to vector<2x8x32xf32>
    %133 = arith.truncf %132 : vector<2x8x32xf32> to vector<2x8x32xbf16>
    %134 = vector.extract_strided_slice %41 {offsets = [0, 0, 416], sizes = [2, 8, 32], strides = [1, 1, 1]} : vector<2x8x768xf32> to vector<2x8x32xf32>
    %135 = arith.truncf %134 : vector<2x8x32xf32> to vector<2x8x32xbf16>
    %136 = vector.extract_strided_slice %41 {offsets = [0, 0, 672], sizes = [2, 8, 32], strides = [1, 1, 1]} : vector<2x8x768xf32> to vector<2x8x32xf32>
    %137 = arith.truncf %136 : vector<2x8x32xf32> to vector<2x8x32xbf16>
    "tpu.trace_start"() <{level = 10 : i32, message = "bqd,bkd->bqk"}> : () -> ()
    %cst_50 = arith.constant dense<0.000000e+00> : vector<2x8x8xf32>
    %138 = tpu.matmul %133, %135, %cst_50 {dimension_numbers = #tpu.dot_dimension_numbers<[2], [2], [1], [1], [0, 0, 0, 1, 1, 1], [0], [0]>} : vector<2x8x32xbf16>, vector<2x8x32xbf16>, vector<2x8x8xf32> -> vector<2x8x8xf32>
    "tpu.trace_stop"() : () -> ()
    %cst_51 = arith.constant dense<0xFF800000> : vector<2x8xf32>
    %139 = vector.multi_reduction <maximumf>, %138, %cst_51 [2] : vector<2x8x8xf32> to vector<2x8xf32>
    %140 = vector.shape_cast %139 : vector<2x8xf32> to vector<2x8x1xf32>
    %141 = vector.broadcast %140 : vector<2x8x1xf32> to vector<2x8x8xf32>
    %142 = arith.subf %138, %141 : vector<2x8x8xf32>
    %143 = math.exp %142 : vector<2x8x8xf32>
    %cst_52 = arith.constant dense<0.000000e+00> : vector<2x8xf32>
    %144 = vector.multi_reduction <add>, %143, %cst_52 [2] : vector<2x8x8xf32> to vector<2x8xf32>
    %145 = vector.shape_cast %144 : vector<2x8xf32> to vector<2x8x1xf32>
    %146 = vector.broadcast %145 : vector<2x8x1xf32> to vector<2x8x8xf32>
    %147 = arith.divf %143, %146 : vector<2x8x8xf32>
    %148 = arith.truncf %147 : vector<2x8x8xf32> to vector<2x8x8xbf16>
    "tpu.trace_start"() <{level = 10 : i32, message = "bqk,bkd->bqd"}> : () -> ()
    %cst_53 = arith.constant dense<0.000000e+00> : vector<2x8x32xf32>
    %149 = tpu.matmul %148, %137, %cst_53 {dimension_numbers = #tpu.dot_dimension_numbers<[2], [1], [1], [2], [0, 0, 0, 1, 1, 2], [0], [0]>} : vector<2x8x8xbf16>, vector<2x8x32xbf16>, vector<2x8x32xf32> -> vector<2x8x32xf32>
    "tpu.trace_stop"() : () -> ()
    %150 = vector.extract_strided_slice %41 {offsets = [0, 0, 192], sizes = [2, 8, 32], strides = [1, 1, 1]} : vector<2x8x768xf32> to vector<2x8x32xf32>
    %151 = arith.truncf %150 : vector<2x8x32xf32> to vector<2x8x32xbf16>
    %152 = vector.extract_strided_slice %41 {offsets = [0, 0, 448], sizes = [2, 8, 32], strides = [1, 1, 1]} : vector<2x8x768xf32> to vector<2x8x32xf32>
    %153 = arith.truncf %152 : vector<2x8x32xf32> to vector<2x8x32xbf16>
    %154 = vector.extract_strided_slice %41 {offsets = [0, 0, 704], sizes = [2, 8, 32], strides = [1, 1, 1]} : vector<2x8x768xf32> to vector<2x8x32xf32>
    %155 = arith.truncf %154 : vector<2x8x32xf32> to vector<2x8x32xbf16>
    "tpu.trace_start"() <{level = 10 : i32, message = "bqd,bkd->bqk"}> : () -> ()
    %cst_54 = arith.constant dense<0.000000e+00> : vector<2x8x8xf32>
    %156 = tpu.matmul %151, %153, %cst_54 {dimension_numbers = #tpu.dot_dimension_numbers<[2], [2], [1], [1], [0, 0, 0, 1, 1, 1], [0], [0]>} : vector<2x8x32xbf16>, vector<2x8x32xbf16>, vector<2x8x8xf32> -> vector<2x8x8xf32>
    "tpu.trace_stop"() : () -> ()
    %cst_55 = arith.constant dense<0xFF800000> : vector<2x8xf32>
    %157 = vector.multi_reduction <maximumf>, %156, %cst_55 [2] : vector<2x8x8xf32> to vector<2x8xf32>
    %158 = vector.shape_cast %157 : vector<2x8xf32> to vector<2x8x1xf32>
    %159 = vector.broadcast %158 : vector<2x8x1xf32> to vector<2x8x8xf32>
    %160 = arith.subf %156, %159 : vector<2x8x8xf32>
    %161 = math.exp %160 : vector<2x8x8xf32>
    %cst_56 = arith.constant dense<0.000000e+00> : vector<2x8xf32>
    %162 = vector.multi_reduction <add>, %161, %cst_56 [2] : vector<2x8x8xf32> to vector<2x8xf32>
    %163 = vector.shape_cast %162 : vector<2x8xf32> to vector<2x8x1xf32>
    %164 = vector.broadcast %163 : vector<2x8x1xf32> to vector<2x8x8xf32>
    %165 = arith.divf %161, %164 : vector<2x8x8xf32>
    %166 = arith.truncf %165 : vector<2x8x8xf32> to vector<2x8x8xbf16>
    "tpu.trace_start"() <{level = 10 : i32, message = "bqk,bkd->bqd"}> : () -> ()
    %cst_57 = arith.constant dense<0.000000e+00> : vector<2x8x32xf32>
    %167 = tpu.matmul %166, %155, %cst_57 {dimension_numbers = #tpu.dot_dimension_numbers<[2], [1], [1], [2], [0, 0, 0, 1, 1, 2], [0], [0]>} : vector<2x8x8xbf16>, vector<2x8x32xbf16>, vector<2x8x32xf32> -> vector<2x8x32xf32>
    "tpu.trace_stop"() : () -> ()
    %168 = vector.extract_strided_slice %41 {offsets = [0, 0, 224], sizes = [2, 8, 32], strides = [1, 1, 1]} : vector<2x8x768xf32> to vector<2x8x32xf32>
    %169 = arith.truncf %168 : vector<2x8x32xf32> to vector<2x8x32xbf16>
    %170 = vector.extract_strided_slice %41 {offsets = [0, 0, 480], sizes = [2, 8, 32], strides = [1, 1, 1]} : vector<2x8x768xf32> to vector<2x8x32xf32>
    %171 = arith.truncf %170 : vector<2x8x32xf32> to vector<2x8x32xbf16>
    %172 = vector.extract_strided_slice %41 {offsets = [0, 0, 736], sizes = [2, 8, 32], strides = [1, 1, 1]} : vector<2x8x768xf32> to vector<2x8x32xf32>
    %173 = arith.truncf %172 : vector<2x8x32xf32> to vector<2x8x32xbf16>
    "tpu.trace_start"() <{level = 10 : i32, message = "bqd,bkd->bqk"}> : () -> ()
    %cst_58 = arith.constant dense<0.000000e+00> : vector<2x8x8xf32>
    %174 = tpu.matmul %169, %171, %cst_58 {dimension_numbers = #tpu.dot_dimension_numbers<[2], [2], [1], [1], [0, 0, 0, 1, 1, 1], [0], [0]>} : vector<2x8x32xbf16>, vector<2x8x32xbf16>, vector<2x8x8xf32> -> vector<2x8x8xf32>
    "tpu.trace_stop"() : () -> ()
    %cst_59 = arith.constant dense<0xFF800000> : vector<2x8xf32>
    %175 = vector.multi_reduction <maximumf>, %174, %cst_59 [2] : vector<2x8x8xf32> to vector<2x8xf32>
    %176 = vector.shape_cast %175 : vector<2x8xf32> to vector<2x8x1xf32>
    %177 = vector.broadcast %176 : vector<2x8x1xf32> to vector<2x8x8xf32>
    %178 = arith.subf %174, %177 : vector<2x8x8xf32>
    %179 = math.exp %178 : vector<2x8x8xf32>
    %cst_60 = arith.constant dense<0.000000e+00> : vector<2x8xf32>
    %180 = vector.multi_reduction <add>, %179, %cst_60 [2] : vector<2x8x8xf32> to vector<2x8xf32>
    %181 = vector.shape_cast %180 : vector<2x8xf32> to vector<2x8x1xf32>
    %182 = vector.broadcast %181 : vector<2x8x1xf32> to vector<2x8x8xf32>
    %183 = arith.divf %179, %182 : vector<2x8x8xf32>
    %184 = arith.truncf %183 : vector<2x8x8xf32> to vector<2x8x8xbf16>
    "tpu.trace_start"() <{level = 10 : i32, message = "bqk,bkd->bqd"}> : () -> ()
    %cst_61 = arith.constant dense<0.000000e+00> : vector<2x8x32xf32>
    %185 = tpu.matmul %184, %173, %cst_61 {dimension_numbers = #tpu.dot_dimension_numbers<[2], [1], [1], [2], [0, 0, 0, 1, 1, 2], [0], [0]>} : vector<2x8x8xbf16>, vector<2x8x32xbf16>, vector<2x8x32xf32> -> vector<2x8x32xf32>
    "tpu.trace_stop"() : () -> ()
    %186 = tpu.concatenate %59, %77, %95, %113, %131, %149, %167, %185 in 2 : vector<2x8x32xf32>, vector<2x8x32xf32>, vector<2x8x32xf32>, vector<2x8x32xf32>, vector<2x8x32xf32>, vector<2x8x32xf32>, vector<2x8x32xf32>, vector<2x8x32xf32> -> vector<2x8x256xf32>
    %187 = vector.shape_cast %186 : vector<2x8x256xf32> to vector<16x256xf32>
    %c0_62 = arith.constant 0 : index
    %c0_63 = arith.constant 0 : index
    %c0_64 = arith.constant 0 : index
    %188 = vector.load %arg12[%c0_62, %c0_63, %c0_64] : memref<2x256x256xi8, #tpu.memory_space<vmem>>, vector<1x256x256xi8>
    %189 = vector.shape_cast %188 : vector<1x256x256xi8> to vector<256x256xi8>
    %c0_65 = arith.constant 0 : index
    %c0_66 = arith.constant 0 : index
    %c0_67 = arith.constant 0 : index
    %190 = vector.load %arg13[%c0_65, %c0_66, %c0_67] : memref<2x1x256xf32, #tpu.memory_space<vmem>>, vector<1x1x256xf32>
    %191 = vector.shape_cast %190 : vector<1x1x256xf32> to vector<1x256xf32>
    %192 = arith.truncf %187 : vector<16x256xf32> to vector<16x256xbf16>
    %193 = arith.sitofp %189 : vector<256x256xi8> to vector<256x256xbf16>
    %cst_68 = arith.constant dense<0.000000e+00> : vector<16x256xf32>
    %194 = tpu.matmul %192, %193, %cst_68 {dimension_numbers = #tpu.dot_dimension_numbers<[1], [0], [0], [1], [0, 0, 1, 1], [], []>} : vector<16x256xbf16>, vector<256x256xbf16>, vector<16x256xf32> -> vector<16x256xf32>
    %195 = vector.broadcast %191 : vector<1x256xf32> to vector<16x256xf32>
    %196 = arith.mulf %194, %195 : vector<16x256xf32>
    %c0_69 = arith.constant 0 : index
    %c0_70 = arith.constant 0 : index
    %c0_71 = arith.constant 0 : index
    %197 = vector.load %arg14[%c0_69, %c0_70, %c0_71] : memref<2x1x256xf32, #tpu.memory_space<vmem>>, vector<1x1x256xf32>
    %198 = vector.shape_cast %197 : vector<1x1x256xf32> to vector<1x256xf32>
    %199 = vector.broadcast %198 : vector<1x256xf32> to vector<16x256xf32>
    %200 = arith.addf %196, %199 : vector<16x256xf32>
    %201 = arith.addf %27, %200 : vector<16x256xf32>
    %c0_72 = arith.constant 0 : index
    %c0_73 = arith.constant 0 : index
    %c0_74 = arith.constant 0 : index
    %202 = vector.load %arg15[%c0_72, %c0_73, %c0_74] : memref<2x1x256xf32, #tpu.memory_space<vmem>>, vector<1x1x256xf32>
    %203 = vector.shape_cast %202 : vector<1x1x256xf32> to vector<1x256xf32>
    %c0_75 = arith.constant 0 : index
    %c0_76 = arith.constant 0 : index
    %c0_77 = arith.constant 0 : index
    %204 = vector.load %arg16[%c0_75, %c0_76, %c0_77] : memref<2x1x256xf32, #tpu.memory_space<vmem>>, vector<1x1x256xf32>
    %205 = vector.shape_cast %204 : vector<1x1x256xf32> to vector<1x256xf32>
    %cst_78 = arith.constant dense<0.000000e+00> : vector<16xf32>
    %206 = vector.multi_reduction <add>, %201, %cst_78 [1] : vector<16x256xf32> to vector<16xf32>
    %207 = vector.shape_cast %206 : vector<16xf32> to vector<16x1xf32>
    %cst_79 = arith.constant 2.560000e+02 : f32
    %208 = vector.broadcast %cst_79 : f32 to vector<16x1xf32>
    %209 = arith.divf %207, %208 : vector<16x1xf32>
    %210 = vector.broadcast %209 : vector<16x1xf32> to vector<16x256xf32>
    %211 = arith.subf %201, %210 : vector<16x256xf32>
    %212 = arith.mulf %211, %211 : vector<16x256xf32>
    %cst_80 = arith.constant dense<0.000000e+00> : vector<16xf32>
    %213 = vector.multi_reduction <add>, %212, %cst_80 [1] : vector<16x256xf32> to vector<16xf32>
    %214 = vector.shape_cast %213 : vector<16xf32> to vector<16x1xf32>
    %cst_81 = arith.constant 2.560000e+02 : f32
    %215 = vector.broadcast %cst_81 : f32 to vector<16x1xf32>
    %216 = arith.divf %214, %215 : vector<16x1xf32>
    %217 = vector.broadcast %209 : vector<16x1xf32> to vector<16x256xf32>
    %218 = arith.subf %201, %217 : vector<16x256xf32>
    %cst_82 = arith.constant 9.99999974E-6 : f32
    %219 = vector.broadcast %cst_82 : f32 to vector<16x1xf32>
    %220 = arith.addf %216, %219 : vector<16x1xf32>
    %221 = math.rsqrt %220 : vector<16x1xf32>
    %222 = vector.broadcast %221 : vector<16x1xf32> to vector<16x256xf32>
    %223 = arith.mulf %218, %222 : vector<16x256xf32>
    %224 = vector.broadcast %203 : vector<1x256xf32> to vector<16x256xf32>
    %225 = arith.mulf %223, %224 : vector<16x256xf32>
    %226 = vector.broadcast %205 : vector<1x256xf32> to vector<16x256xf32>
    %227 = arith.addf %225, %226 : vector<16x256xf32>
    %c0_83 = arith.constant 0 : index
    %c0_84 = arith.constant 0 : index
    %c0_85 = arith.constant 0 : index
    %228 = vector.load %arg17[%c0_83, %c0_84, %c0_85] : memref<2x256x2048xi8, #tpu.memory_space<vmem>>, vector<1x256x2048xi8>
    %229 = vector.shape_cast %228 : vector<1x256x2048xi8> to vector<256x2048xi8>
    %c0_86 = arith.constant 0 : index
    %c0_87 = arith.constant 0 : index
    %c0_88 = arith.constant 0 : index
    %230 = vector.load %arg18[%c0_86, %c0_87, %c0_88] : memref<2x1x2048xf32, #tpu.memory_space<vmem>>, vector<1x1x2048xf32>
    %231 = vector.shape_cast %230 : vector<1x1x2048xf32> to vector<1x2048xf32>
    %232 = arith.truncf %227 : vector<16x256xf32> to vector<16x256xbf16>
    %233 = arith.sitofp %229 : vector<256x2048xi8> to vector<256x2048xbf16>
    %cst_89 = arith.constant dense<0.000000e+00> : vector<16x2048xf32>
    %234 = tpu.matmul %232, %233, %cst_89 {dimension_numbers = #tpu.dot_dimension_numbers<[1], [0], [0], [1], [0, 0, 1, 1], [], []>} : vector<16x256xbf16>, vector<256x2048xbf16>, vector<16x2048xf32> -> vector<16x2048xf32>
    %235 = vector.broadcast %231 : vector<1x2048xf32> to vector<16x2048xf32>
    %236 = arith.mulf %234, %235 : vector<16x2048xf32>
    %c0_90 = arith.constant 0 : index
    %c0_91 = arith.constant 0 : index
    %c0_92 = arith.constant 0 : index
    %237 = vector.load %arg19[%c0_90, %c0_91, %c0_92] : memref<2x1x2048xf32, #tpu.memory_space<vmem>>, vector<1x1x2048xf32>
    %238 = vector.shape_cast %237 : vector<1x1x2048xf32> to vector<1x2048xf32>
    %239 = vector.broadcast %238 : vector<1x2048xf32> to vector<16x2048xf32>
    %240 = arith.addf %236, %239 : vector<16x2048xf32>
    %cst_93 = arith.constant 0.000000e+00 : f32
    %241 = vector.broadcast %cst_93 : f32 to vector<16x2048xf32>
    %242 = arith.maximumf %240, %241 : vector<16x2048xf32>
    %c0_94 = arith.constant 0 : index
    %c0_95 = arith.constant 0 : index
    %c0_96 = arith.constant 0 : index
    %243 = vector.load %arg20[%c0_94, %c0_95, %c0_96] : memref<2x2048x256xi8, #tpu.memory_space<vmem>>, vector<1x2048x256xi8>
    %244 = vector.shape_cast %243 : vector<1x2048x256xi8> to vector<2048x256xi8>
    %c0_97 = arith.constant 0 : index
    %c0_98 = arith.constant 0 : index
    %c0_99 = arith.constant 0 : index
    %245 = vector.load %arg21[%c0_97, %c0_98, %c0_99] : memref<2x1x256xf32, #tpu.memory_space<vmem>>, vector<1x1x256xf32>
    %246 = vector.shape_cast %245 : vector<1x1x256xf32> to vector<1x256xf32>
    %247 = arith.truncf %242 : vector<16x2048xf32> to vector<16x2048xbf16>
    %248 = arith.sitofp %244 : vector<2048x256xi8> to vector<2048x256xbf16>
    %cst_100 = arith.constant dense<0.000000e+00> : vector<16x256xf32>
    %249 = tpu.matmul %247, %248, %cst_100 {dimension_numbers = #tpu.dot_dimension_numbers<[1], [0], [0], [1], [0, 0, 1, 1], [], []>} : vector<16x2048xbf16>, vector<2048x256xbf16>, vector<16x256xf32> -> vector<16x256xf32>
    %250 = vector.broadcast %246 : vector<1x256xf32> to vector<16x256xf32>
    %251 = arith.mulf %249, %250 : vector<16x256xf32>
    %c0_101 = arith.constant 0 : index
    %c0_102 = arith.constant 0 : index
    %c0_103 = arith.constant 0 : index
    %252 = vector.load %arg22[%c0_101, %c0_102, %c0_103] : memref<2x1x256xf32, #tpu.memory_space<vmem>>, vector<1x1x256xf32>
    %253 = vector.shape_cast %252 : vector<1x1x256xf32> to vector<1x256xf32>
    %254 = vector.broadcast %253 : vector<1x256xf32> to vector<16x256xf32>
    %255 = arith.addf %251, %254 : vector<16x256xf32>
    %256 = arith.addf %227, %255 : vector<16x256xf32>
    %c0_104 = arith.constant 0 : index
    %c0_105 = arith.constant 0 : index
    %c0_106 = arith.constant 0 : index
    %257 = vector.load %arg23[%c0_104, %c0_105, %c0_106] : memref<2x1x256xf32, #tpu.memory_space<vmem>>, vector<1x1x256xf32>
    %258 = vector.shape_cast %257 : vector<1x1x256xf32> to vector<1x256xf32>
    %c0_107 = arith.constant 0 : index
    %c0_108 = arith.constant 0 : index
    %c0_109 = arith.constant 0 : index
    %259 = vector.load %arg24[%c0_107, %c0_108, %c0_109] : memref<2x1x256xf32, #tpu.memory_space<vmem>>, vector<1x1x256xf32>
    %260 = vector.shape_cast %259 : vector<1x1x256xf32> to vector<1x256xf32>
    %cst_110 = arith.constant dense<0.000000e+00> : vector<16xf32>
    %261 = vector.multi_reduction <add>, %256, %cst_110 [1] : vector<16x256xf32> to vector<16xf32>
    %262 = vector.shape_cast %261 : vector<16xf32> to vector<16x1xf32>
    %cst_111 = arith.constant 2.560000e+02 : f32
    %263 = vector.broadcast %cst_111 : f32 to vector<16x1xf32>
    %264 = arith.divf %262, %263 : vector<16x1xf32>
    %265 = vector.broadcast %264 : vector<16x1xf32> to vector<16x256xf32>
    %266 = arith.subf %256, %265 : vector<16x256xf32>
    %267 = arith.mulf %266, %266 : vector<16x256xf32>
    %cst_112 = arith.constant dense<0.000000e+00> : vector<16xf32>
    %268 = vector.multi_reduction <add>, %267, %cst_112 [1] : vector<16x256xf32> to vector<16xf32>
    %269 = vector.shape_cast %268 : vector<16xf32> to vector<16x1xf32>
    %cst_113 = arith.constant 2.560000e+02 : f32
    %270 = vector.broadcast %cst_113 : f32 to vector<16x1xf32>
    %271 = arith.divf %269, %270 : vector<16x1xf32>
    %272 = vector.broadcast %264 : vector<16x1xf32> to vector<16x256xf32>
    %273 = arith.subf %256, %272 : vector<16x256xf32>
    %cst_114 = arith.constant 9.99999974E-6 : f32
    %274 = vector.broadcast %cst_114 : f32 to vector<16x1xf32>
    %275 = arith.addf %271, %274 : vector<16x1xf32>
    %276 = math.rsqrt %275 : vector<16x1xf32>
    %277 = vector.broadcast %276 : vector<16x1xf32> to vector<16x256xf32>
    %278 = arith.mulf %273, %277 : vector<16x256xf32>
    %279 = vector.broadcast %258 : vector<1x256xf32> to vector<16x256xf32>
    %280 = arith.mulf %278, %279 : vector<16x256xf32>
    %281 = vector.broadcast %260 : vector<1x256xf32> to vector<16x256xf32>
    %282 = arith.addf %280, %281 : vector<16x256xf32>
    %c1 = arith.constant 1 : index
    %c0_115 = arith.constant 0 : index
    %c0_116 = arith.constant 0 : index
    %283 = vector.load %arg9[%c1, %c0_115, %c0_116] : memref<2x256x768xi8, #tpu.memory_space<vmem>>, vector<1x256x768xi8>
    %284 = vector.shape_cast %283 : vector<1x256x768xi8> to vector<256x768xi8>
    %c1_117 = arith.constant 1 : index
    %c0_118 = arith.constant 0 : index
    %c0_119 = arith.constant 0 : index
    %285 = vector.load %arg10[%c1_117, %c0_118, %c0_119] : memref<2x1x768xf32, #tpu.memory_space<vmem>>, vector<1x1x768xf32>
    %286 = vector.shape_cast %285 : vector<1x1x768xf32> to vector<1x768xf32>
    %287 = arith.truncf %282 : vector<16x256xf32> to vector<16x256xbf16>
    %288 = arith.sitofp %284 : vector<256x768xi8> to vector<256x768xbf16>
    %cst_120 = arith.constant dense<0.000000e+00> : vector<16x768xf32>
    %289 = tpu.matmul %287, %288, %cst_120 {dimension_numbers = #tpu.dot_dimension_numbers<[1], [0], [0], [1], [0, 0, 1, 1], [], []>} : vector<16x256xbf16>, vector<256x768xbf16>, vector<16x768xf32> -> vector<16x768xf32>
    %290 = vector.broadcast %286 : vector<1x768xf32> to vector<16x768xf32>
    %291 = arith.mulf %289, %290 : vector<16x768xf32>
    %c1_121 = arith.constant 1 : index
    %c0_122 = arith.constant 0 : index
    %c0_123 = arith.constant 0 : index
    %292 = vector.load %arg11[%c1_121, %c0_122, %c0_123] : memref<2x1x768xf32, #tpu.memory_space<vmem>>, vector<1x1x768xf32>
    %293 = vector.shape_cast %292 : vector<1x1x768xf32> to vector<1x768xf32>
    %294 = vector.broadcast %293 : vector<1x768xf32> to vector<16x768xf32>
    %295 = arith.addf %291, %294 : vector<16x768xf32>
    %296 = vector.shape_cast %295 : vector<16x768xf32> to vector<2x8x768xf32>
    %297 = vector.extract_strided_slice %296 {offsets = [0, 0, 0], sizes = [2, 8, 32], strides = [1, 1, 1]} : vector<2x8x768xf32> to vector<2x8x32xf32>
    %298 = arith.truncf %297 : vector<2x8x32xf32> to vector<2x8x32xbf16>
    %299 = vector.extract_strided_slice %296 {offsets = [0, 0, 256], sizes = [2, 8, 32], strides = [1, 1, 1]} : vector<2x8x768xf32> to vector<2x8x32xf32>
    %300 = arith.truncf %299 : vector<2x8x32xf32> to vector<2x8x32xbf16>
    %301 = vector.extract_strided_slice %296 {offsets = [0, 0, 512], sizes = [2, 8, 32], strides = [1, 1, 1]} : vector<2x8x768xf32> to vector<2x8x32xf32>
    %302 = arith.truncf %301 : vector<2x8x32xf32> to vector<2x8x32xbf16>
    "tpu.trace_start"() <{level = 10 : i32, message = "bqd,bkd->bqk"}> : () -> ()
    %cst_124 = arith.constant dense<0.000000e+00> : vector<2x8x8xf32>
    %303 = tpu.matmul %298, %300, %cst_124 {dimension_numbers = #tpu.dot_dimension_numbers<[2], [2], [1], [1], [0, 0, 0, 1, 1, 1], [0], [0]>} : vector<2x8x32xbf16>, vector<2x8x32xbf16>, vector<2x8x8xf32> -> vector<2x8x8xf32>
    "tpu.trace_stop"() : () -> ()
    %cst_125 = arith.constant dense<0xFF800000> : vector<2x8xf32>
    %304 = vector.multi_reduction <maximumf>, %303, %cst_125 [2] : vector<2x8x8xf32> to vector<2x8xf32>
    %305 = vector.shape_cast %304 : vector<2x8xf32> to vector<2x8x1xf32>
    %306 = vector.broadcast %305 : vector<2x8x1xf32> to vector<2x8x8xf32>
    %307 = arith.subf %303, %306 : vector<2x8x8xf32>
    %308 = math.exp %307 : vector<2x8x8xf32>
    %cst_126 = arith.constant dense<0.000000e+00> : vector<2x8xf32>
    %309 = vector.multi_reduction <add>, %308, %cst_126 [2] : vector<2x8x8xf32> to vector<2x8xf32>
    %310 = vector.shape_cast %309 : vector<2x8xf32> to vector<2x8x1xf32>
    %311 = vector.broadcast %310 : vector<2x8x1xf32> to vector<2x8x8xf32>
    %312 = arith.divf %308, %311 : vector<2x8x8xf32>
    %313 = arith.truncf %312 : vector<2x8x8xf32> to vector<2x8x8xbf16>
    "tpu.trace_start"() <{level = 10 : i32, message = "bqk,bkd->bqd"}> : () -> ()
    %cst_127 = arith.constant dense<0.000000e+00> : vector<2x8x32xf32>
    %314 = tpu.matmul %313, %302, %cst_127 {dimension_numbers = #tpu.dot_dimension_numbers<[2], [1], [1], [2], [0, 0, 0, 1, 1, 2], [0], [0]>} : vector<2x8x8xbf16>, vector<2x8x32xbf16>, vector<2x8x32xf32> -> vector<2x8x32xf32>
    "tpu.trace_stop"() : () -> ()
    %315 = vector.extract_strided_slice %296 {offsets = [0, 0, 32], sizes = [2, 8, 32], strides = [1, 1, 1]} : vector<2x8x768xf32> to vector<2x8x32xf32>
    %316 = arith.truncf %315 : vector<2x8x32xf32> to vector<2x8x32xbf16>
    %317 = vector.extract_strided_slice %296 {offsets = [0, 0, 288], sizes = [2, 8, 32], strides = [1, 1, 1]} : vector<2x8x768xf32> to vector<2x8x32xf32>
    %318 = arith.truncf %317 : vector<2x8x32xf32> to vector<2x8x32xbf16>
    %319 = vector.extract_strided_slice %296 {offsets = [0, 0, 544], sizes = [2, 8, 32], strides = [1, 1, 1]} : vector<2x8x768xf32> to vector<2x8x32xf32>
    %320 = arith.truncf %319 : vector<2x8x32xf32> to vector<2x8x32xbf16>
    "tpu.trace_start"() <{level = 10 : i32, message = "bqd,bkd->bqk"}> : () -> ()
    %cst_128 = arith.constant dense<0.000000e+00> : vector<2x8x8xf32>
    %321 = tpu.matmul %316, %318, %cst_128 {dimension_numbers = #tpu.dot_dimension_numbers<[2], [2], [1], [1], [0, 0, 0, 1, 1, 1], [0], [0]>} : vector<2x8x32xbf16>, vector<2x8x32xbf16>, vector<2x8x8xf32> -> vector<2x8x8xf32>
    "tpu.trace_stop"() : () -> ()
    %cst_129 = arith.constant dense<0xFF800000> : vector<2x8xf32>
    %322 = vector.multi_reduction <maximumf>, %321, %cst_129 [2] : vector<2x8x8xf32> to vector<2x8xf32>
    %323 = vector.shape_cast %322 : vector<2x8xf32> to vector<2x8x1xf32>
    %324 = vector.broadcast %323 : vector<2x8x1xf32> to vector<2x8x8xf32>
    %325 = arith.subf %321, %324 : vector<2x8x8xf32>
    %326 = math.exp %325 : vector<2x8x8xf32>
    %cst_130 = arith.constant dense<0.000000e+00> : vector<2x8xf32>
    %327 = vector.multi_reduction <add>, %326, %cst_130 [2] : vector<2x8x8xf32> to vector<2x8xf32>
    %328 = vector.shape_cast %327 : vector<2x8xf32> to vector<2x8x1xf32>
    %329 = vector.broadcast %328 : vector<2x8x1xf32> to vector<2x8x8xf32>
    %330 = arith.divf %326, %329 : vector<2x8x8xf32>
    %331 = arith.truncf %330 : vector<2x8x8xf32> to vector<2x8x8xbf16>
    "tpu.trace_start"() <{level = 10 : i32, message = "bqk,bkd->bqd"}> : () -> ()
    %cst_131 = arith.constant dense<0.000000e+00> : vector<2x8x32xf32>
    %332 = tpu.matmul %331, %320, %cst_131 {dimension_numbers = #tpu.dot_dimension_numbers<[2], [1], [1], [2], [0, 0, 0, 1, 1, 2], [0], [0]>} : vector<2x8x8xbf16>, vector<2x8x32xbf16>, vector<2x8x32xf32> -> vector<2x8x32xf32>
    "tpu.trace_stop"() : () -> ()
    %333 = vector.extract_strided_slice %296 {offsets = [0, 0, 64], sizes = [2, 8, 32], strides = [1, 1, 1]} : vector<2x8x768xf32> to vector<2x8x32xf32>
    %334 = arith.truncf %333 : vector<2x8x32xf32> to vector<2x8x32xbf16>
    %335 = vector.extract_strided_slice %296 {offsets = [0, 0, 320], sizes = [2, 8, 32], strides = [1, 1, 1]} : vector<2x8x768xf32> to vector<2x8x32xf32>
    %336 = arith.truncf %335 : vector<2x8x32xf32> to vector<2x8x32xbf16>
    %337 = vector.extract_strided_slice %296 {offsets = [0, 0, 576], sizes = [2, 8, 32], strides = [1, 1, 1]} : vector<2x8x768xf32> to vector<2x8x32xf32>
    %338 = arith.truncf %337 : vector<2x8x32xf32> to vector<2x8x32xbf16>
    "tpu.trace_start"() <{level = 10 : i32, message = "bqd,bkd->bqk"}> : () -> ()
    %cst_132 = arith.constant dense<0.000000e+00> : vector<2x8x8xf32>
    %339 = tpu.matmul %334, %336, %cst_132 {dimension_numbers = #tpu.dot_dimension_numbers<[2], [2], [1], [1], [0, 0, 0, 1, 1, 1], [0], [0]>} : vector<2x8x32xbf16>, vector<2x8x32xbf16>, vector<2x8x8xf32> -> vector<2x8x8xf32>
    "tpu.trace_stop"() : () -> ()
    %cst_133 = arith.constant dense<0xFF800000> : vector<2x8xf32>
    %340 = vector.multi_reduction <maximumf>, %339, %cst_133 [2] : vector<2x8x8xf32> to vector<2x8xf32>
    %341 = vector.shape_cast %340 : vector<2x8xf32> to vector<2x8x1xf32>
    %342 = vector.broadcast %341 : vector<2x8x1xf32> to vector<2x8x8xf32>
    %343 = arith.subf %339, %342 : vector<2x8x8xf32>
    %344 = math.exp %343 : vector<2x8x8xf32>
    %cst_134 = arith.constant dense<0.000000e+00> : vector<2x8xf32>
    %345 = vector.multi_reduction <add>, %344, %cst_134 [2] : vector<2x8x8xf32> to vector<2x8xf32>
    %346 = vector.shape_cast %345 : vector<2x8xf32> to vector<2x8x1xf32>
    %347 = vector.broadcast %346 : vector<2x8x1xf32> to vector<2x8x8xf32>
    %348 = arith.divf %344, %347 : vector<2x8x8xf32>
    %349 = arith.truncf %348 : vector<2x8x8xf32> to vector<2x8x8xbf16>
    "tpu.trace_start"() <{level = 10 : i32, message = "bqk,bkd->bqd"}> : () -> ()
    %cst_135 = arith.constant dense<0.000000e+00> : vector<2x8x32xf32>
    %350 = tpu.matmul %349, %338, %cst_135 {dimension_numbers = #tpu.dot_dimension_numbers<[2], [1], [1], [2], [0, 0, 0, 1, 1, 2], [0], [0]>} : vector<2x8x8xbf16>, vector<2x8x32xbf16>, vector<2x8x32xf32> -> vector<2x8x32xf32>
    "tpu.trace_stop"() : () -> ()
    %351 = vector.extract_strided_slice %296 {offsets = [0, 0, 96], sizes = [2, 8, 32], strides = [1, 1, 1]} : vector<2x8x768xf32> to vector<2x8x32xf32>
    %352 = arith.truncf %351 : vector<2x8x32xf32> to vector<2x8x32xbf16>
    %353 = vector.extract_strided_slice %296 {offsets = [0, 0, 352], sizes = [2, 8, 32], strides = [1, 1, 1]} : vector<2x8x768xf32> to vector<2x8x32xf32>
    %354 = arith.truncf %353 : vector<2x8x32xf32> to vector<2x8x32xbf16>
    %355 = vector.extract_strided_slice %296 {offsets = [0, 0, 608], sizes = [2, 8, 32], strides = [1, 1, 1]} : vector<2x8x768xf32> to vector<2x8x32xf32>
    %356 = arith.truncf %355 : vector<2x8x32xf32> to vector<2x8x32xbf16>
    "tpu.trace_start"() <{level = 10 : i32, message = "bqd,bkd->bqk"}> : () -> ()
    %cst_136 = arith.constant dense<0.000000e+00> : vector<2x8x8xf32>
    %357 = tpu.matmul %352, %354, %cst_136 {dimension_numbers = #tpu.dot_dimension_numbers<[2], [2], [1], [1], [0, 0, 0, 1, 1, 1], [0], [0]>} : vector<2x8x32xbf16>, vector<2x8x32xbf16>, vector<2x8x8xf32> -> vector<2x8x8xf32>
    "tpu.trace_stop"() : () -> ()
    %cst_137 = arith.constant dense<0xFF800000> : vector<2x8xf32>
    %358 = vector.multi_reduction <maximumf>, %357, %cst_137 [2] : vector<2x8x8xf32> to vector<2x8xf32>
    %359 = vector.shape_cast %358 : vector<2x8xf32> to vector<2x8x1xf32>
    %360 = vector.broadcast %359 : vector<2x8x1xf32> to vector<2x8x8xf32>
    %361 = arith.subf %357, %360 : vector<2x8x8xf32>
    %362 = math.exp %361 : vector<2x8x8xf32>
    %cst_138 = arith.constant dense<0.000000e+00> : vector<2x8xf32>
    %363 = vector.multi_reduction <add>, %362, %cst_138 [2] : vector<2x8x8xf32> to vector<2x8xf32>
    %364 = vector.shape_cast %363 : vector<2x8xf32> to vector<2x8x1xf32>
    %365 = vector.broadcast %364 : vector<2x8x1xf32> to vector<2x8x8xf32>
    %366 = arith.divf %362, %365 : vector<2x8x8xf32>
    %367 = arith.truncf %366 : vector<2x8x8xf32> to vector<2x8x8xbf16>
    "tpu.trace_start"() <{level = 10 : i32, message = "bqk,bkd->bqd"}> : () -> ()
    %cst_139 = arith.constant dense<0.000000e+00> : vector<2x8x32xf32>
    %368 = tpu.matmul %367, %356, %cst_139 {dimension_numbers = #tpu.dot_dimension_numbers<[2], [1], [1], [2], [0, 0, 0, 1, 1, 2], [0], [0]>} : vector<2x8x8xbf16>, vector<2x8x32xbf16>, vector<2x8x32xf32> -> vector<2x8x32xf32>
    "tpu.trace_stop"() : () -> ()
    %369 = vector.extract_strided_slice %296 {offsets = [0, 0, 128], sizes = [2, 8, 32], strides = [1, 1, 1]} : vector<2x8x768xf32> to vector<2x8x32xf32>
    %370 = arith.truncf %369 : vector<2x8x32xf32> to vector<2x8x32xbf16>
    %371 = vector.extract_strided_slice %296 {offsets = [0, 0, 384], sizes = [2, 8, 32], strides = [1, 1, 1]} : vector<2x8x768xf32> to vector<2x8x32xf32>
    %372 = arith.truncf %371 : vector<2x8x32xf32> to vector<2x8x32xbf16>
    %373 = vector.extract_strided_slice %296 {offsets = [0, 0, 640], sizes = [2, 8, 32], strides = [1, 1, 1]} : vector<2x8x768xf32> to vector<2x8x32xf32>
    %374 = arith.truncf %373 : vector<2x8x32xf32> to vector<2x8x32xbf16>
    "tpu.trace_start"() <{level = 10 : i32, message = "bqd,bkd->bqk"}> : () -> ()
    %cst_140 = arith.constant dense<0.000000e+00> : vector<2x8x8xf32>
    %375 = tpu.matmul %370, %372, %cst_140 {dimension_numbers = #tpu.dot_dimension_numbers<[2], [2], [1], [1], [0, 0, 0, 1, 1, 1], [0], [0]>} : vector<2x8x32xbf16>, vector<2x8x32xbf16>, vector<2x8x8xf32> -> vector<2x8x8xf32>
    "tpu.trace_stop"() : () -> ()
    %cst_141 = arith.constant dense<0xFF800000> : vector<2x8xf32>
    %376 = vector.multi_reduction <maximumf>, %375, %cst_141 [2] : vector<2x8x8xf32> to vector<2x8xf32>
    %377 = vector.shape_cast %376 : vector<2x8xf32> to vector<2x8x1xf32>
    %378 = vector.broadcast %377 : vector<2x8x1xf32> to vector<2x8x8xf32>
    %379 = arith.subf %375, %378 : vector<2x8x8xf32>
    %380 = math.exp %379 : vector<2x8x8xf32>
    %cst_142 = arith.constant dense<0.000000e+00> : vector<2x8xf32>
    %381 = vector.multi_reduction <add>, %380, %cst_142 [2] : vector<2x8x8xf32> to vector<2x8xf32>
    %382 = vector.shape_cast %381 : vector<2x8xf32> to vector<2x8x1xf32>
    %383 = vector.broadcast %382 : vector<2x8x1xf32> to vector<2x8x8xf32>
    %384 = arith.divf %380, %383 : vector<2x8x8xf32>
    %385 = arith.truncf %384 : vector<2x8x8xf32> to vector<2x8x8xbf16>
    "tpu.trace_start"() <{level = 10 : i32, message = "bqk,bkd->bqd"}> : () -> ()
    %cst_143 = arith.constant dense<0.000000e+00> : vector<2x8x32xf32>
    %386 = tpu.matmul %385, %374, %cst_143 {dimension_numbers = #tpu.dot_dimension_numbers<[2], [1], [1], [2], [0, 0, 0, 1, 1, 2], [0], [0]>} : vector<2x8x8xbf16>, vector<2x8x32xbf16>, vector<2x8x32xf32> -> vector<2x8x32xf32>
    "tpu.trace_stop"() : () -> ()
    %387 = vector.extract_strided_slice %296 {offsets = [0, 0, 160], sizes = [2, 8, 32], strides = [1, 1, 1]} : vector<2x8x768xf32> to vector<2x8x32xf32>
    %388 = arith.truncf %387 : vector<2x8x32xf32> to vector<2x8x32xbf16>
    %389 = vector.extract_strided_slice %296 {offsets = [0, 0, 416], sizes = [2, 8, 32], strides = [1, 1, 1]} : vector<2x8x768xf32> to vector<2x8x32xf32>
    %390 = arith.truncf %389 : vector<2x8x32xf32> to vector<2x8x32xbf16>
    %391 = vector.extract_strided_slice %296 {offsets = [0, 0, 672], sizes = [2, 8, 32], strides = [1, 1, 1]} : vector<2x8x768xf32> to vector<2x8x32xf32>
    %392 = arith.truncf %391 : vector<2x8x32xf32> to vector<2x8x32xbf16>
    "tpu.trace_start"() <{level = 10 : i32, message = "bqd,bkd->bqk"}> : () -> ()
    %cst_144 = arith.constant dense<0.000000e+00> : vector<2x8x8xf32>
    %393 = tpu.matmul %388, %390, %cst_144 {dimension_numbers = #tpu.dot_dimension_numbers<[2], [2], [1], [1], [0, 0, 0, 1, 1, 1], [0], [0]>} : vector<2x8x32xbf16>, vector<2x8x32xbf16>, vector<2x8x8xf32> -> vector<2x8x8xf32>
    "tpu.trace_stop"() : () -> ()
    %cst_145 = arith.constant dense<0xFF800000> : vector<2x8xf32>
    %394 = vector.multi_reduction <maximumf>, %393, %cst_145 [2] : vector<2x8x8xf32> to vector<2x8xf32>
    %395 = vector.shape_cast %394 : vector<2x8xf32> to vector<2x8x1xf32>
    %396 = vector.broadcast %395 : vector<2x8x1xf32> to vector<2x8x8xf32>
    %397 = arith.subf %393, %396 : vector<2x8x8xf32>
    %398 = math.exp %397 : vector<2x8x8xf32>
    %cst_146 = arith.constant dense<0.000000e+00> : vector<2x8xf32>
    %399 = vector.multi_reduction <add>, %398, %cst_146 [2] : vector<2x8x8xf32> to vector<2x8xf32>
    %400 = vector.shape_cast %399 : vector<2x8xf32> to vector<2x8x1xf32>
    %401 = vector.broadcast %400 : vector<2x8x1xf32> to vector<2x8x8xf32>
    %402 = arith.divf %398, %401 : vector<2x8x8xf32>
    %403 = arith.truncf %402 : vector<2x8x8xf32> to vector<2x8x8xbf16>
    "tpu.trace_start"() <{level = 10 : i32, message = "bqk,bkd->bqd"}> : () -> ()
    %cst_147 = arith.constant dense<0.000000e+00> : vector<2x8x32xf32>
    %404 = tpu.matmul %403, %392, %cst_147 {dimension_numbers = #tpu.dot_dimension_numbers<[2], [1], [1], [2], [0, 0, 0, 1, 1, 2], [0], [0]>} : vector<2x8x8xbf16>, vector<2x8x32xbf16>, vector<2x8x32xf32> -> vector<2x8x32xf32>
    "tpu.trace_stop"() : () -> ()
    %405 = vector.extract_strided_slice %296 {offsets = [0, 0, 192], sizes = [2, 8, 32], strides = [1, 1, 1]} : vector<2x8x768xf32> to vector<2x8x32xf32>
    %406 = arith.truncf %405 : vector<2x8x32xf32> to vector<2x8x32xbf16>
    %407 = vector.extract_strided_slice %296 {offsets = [0, 0, 448], sizes = [2, 8, 32], strides = [1, 1, 1]} : vector<2x8x768xf32> to vector<2x8x32xf32>
    %408 = arith.truncf %407 : vector<2x8x32xf32> to vector<2x8x32xbf16>
    %409 = vector.extract_strided_slice %296 {offsets = [0, 0, 704], sizes = [2, 8, 32], strides = [1, 1, 1]} : vector<2x8x768xf32> to vector<2x8x32xf32>
    %410 = arith.truncf %409 : vector<2x8x32xf32> to vector<2x8x32xbf16>
    "tpu.trace_start"() <{level = 10 : i32, message = "bqd,bkd->bqk"}> : () -> ()
    %cst_148 = arith.constant dense<0.000000e+00> : vector<2x8x8xf32>
    %411 = tpu.matmul %406, %408, %cst_148 {dimension_numbers = #tpu.dot_dimension_numbers<[2], [2], [1], [1], [0, 0, 0, 1, 1, 1], [0], [0]>} : vector<2x8x32xbf16>, vector<2x8x32xbf16>, vector<2x8x8xf32> -> vector<2x8x8xf32>
    "tpu.trace_stop"() : () -> ()
    %cst_149 = arith.constant dense<0xFF800000> : vector<2x8xf32>
    %412 = vector.multi_reduction <maximumf>, %411, %cst_149 [2] : vector<2x8x8xf32> to vector<2x8xf32>
    %413 = vector.shape_cast %412 : vector<2x8xf32> to vector<2x8x1xf32>
    %414 = vector.broadcast %413 : vector<2x8x1xf32> to vector<2x8x8xf32>
    %415 = arith.subf %411, %414 : vector<2x8x8xf32>
    %416 = math.exp %415 : vector<2x8x8xf32>
    %cst_150 = arith.constant dense<0.000000e+00> : vector<2x8xf32>
    %417 = vector.multi_reduction <add>, %416, %cst_150 [2] : vector<2x8x8xf32> to vector<2x8xf32>
    %418 = vector.shape_cast %417 : vector<2x8xf32> to vector<2x8x1xf32>
    %419 = vector.broadcast %418 : vector<2x8x1xf32> to vector<2x8x8xf32>
    %420 = arith.divf %416, %419 : vector<2x8x8xf32>
    %421 = arith.truncf %420 : vector<2x8x8xf32> to vector<2x8x8xbf16>
    "tpu.trace_start"() <{level = 10 : i32, message = "bqk,bkd->bqd"}> : () -> ()
    %cst_151 = arith.constant dense<0.000000e+00> : vector<2x8x32xf32>
    %422 = tpu.matmul %421, %410, %cst_151 {dimension_numbers = #tpu.dot_dimension_numbers<[2], [1], [1], [2], [0, 0, 0, 1, 1, 2], [0], [0]>} : vector<2x8x8xbf16>, vector<2x8x32xbf16>, vector<2x8x32xf32> -> vector<2x8x32xf32>
    "tpu.trace_stop"() : () -> ()
    %423 = vector.extract_strided_slice %296 {offsets = [0, 0, 224], sizes = [2, 8, 32], strides = [1, 1, 1]} : vector<2x8x768xf32> to vector<2x8x32xf32>
    %424 = arith.truncf %423 : vector<2x8x32xf32> to vector<2x8x32xbf16>
    %425 = vector.extract_strided_slice %296 {offsets = [0, 0, 480], sizes = [2, 8, 32], strides = [1, 1, 1]} : vector<2x8x768xf32> to vector<2x8x32xf32>
    %426 = arith.truncf %425 : vector<2x8x32xf32> to vector<2x8x32xbf16>
    %427 = vector.extract_strided_slice %296 {offsets = [0, 0, 736], sizes = [2, 8, 32], strides = [1, 1, 1]} : vector<2x8x768xf32> to vector<2x8x32xf32>
    %428 = arith.truncf %427 : vector<2x8x32xf32> to vector<2x8x32xbf16>
    "tpu.trace_start"() <{level = 10 : i32, message = "bqd,bkd->bqk"}> : () -> ()
    %cst_152 = arith.constant dense<0.000000e+00> : vector<2x8x8xf32>
    %429 = tpu.matmul %424, %426, %cst_152 {dimension_numbers = #tpu.dot_dimension_numbers<[2], [2], [1], [1], [0, 0, 0, 1, 1, 1], [0], [0]>} : vector<2x8x32xbf16>, vector<2x8x32xbf16>, vector<2x8x8xf32> -> vector<2x8x8xf32>
    "tpu.trace_stop"() : () -> ()
    %cst_153 = arith.constant dense<0xFF800000> : vector<2x8xf32>
    %430 = vector.multi_reduction <maximumf>, %429, %cst_153 [2] : vector<2x8x8xf32> to vector<2x8xf32>
    %431 = vector.shape_cast %430 : vector<2x8xf32> to vector<2x8x1xf32>
    %432 = vector.broadcast %431 : vector<2x8x1xf32> to vector<2x8x8xf32>
    %433 = arith.subf %429, %432 : vector<2x8x8xf32>
    %434 = math.exp %433 : vector<2x8x8xf32>
    %cst_154 = arith.constant dense<0.000000e+00> : vector<2x8xf32>
    %435 = vector.multi_reduction <add>, %434, %cst_154 [2] : vector<2x8x8xf32> to vector<2x8xf32>
    %436 = vector.shape_cast %435 : vector<2x8xf32> to vector<2x8x1xf32>
    %437 = vector.broadcast %436 : vector<2x8x1xf32> to vector<2x8x8xf32>
    %438 = arith.divf %434, %437 : vector<2x8x8xf32>
    %439 = arith.truncf %438 : vector<2x8x8xf32> to vector<2x8x8xbf16>
    "tpu.trace_start"() <{level = 10 : i32, message = "bqk,bkd->bqd"}> : () -> ()
    %cst_155 = arith.constant dense<0.000000e+00> : vector<2x8x32xf32>
    %440 = tpu.matmul %439, %428, %cst_155 {dimension_numbers = #tpu.dot_dimension_numbers<[2], [1], [1], [2], [0, 0, 0, 1, 1, 2], [0], [0]>} : vector<2x8x8xbf16>, vector<2x8x32xbf16>, vector<2x8x32xf32> -> vector<2x8x32xf32>
    "tpu.trace_stop"() : () -> ()
    %441 = tpu.concatenate %314, %332, %350, %368, %386, %404, %422, %440 in 2 : vector<2x8x32xf32>, vector<2x8x32xf32>, vector<2x8x32xf32>, vector<2x8x32xf32>, vector<2x8x32xf32>, vector<2x8x32xf32>, vector<2x8x32xf32>, vector<2x8x32xf32> -> vector<2x8x256xf32>
    %442 = vector.shape_cast %441 : vector<2x8x256xf32> to vector<16x256xf32>
    %c1_156 = arith.constant 1 : index
    %c0_157 = arith.constant 0 : index
    %c0_158 = arith.constant 0 : index
    %443 = vector.load %arg12[%c1_156, %c0_157, %c0_158] : memref<2x256x256xi8, #tpu.memory_space<vmem>>, vector<1x256x256xi8>
    %444 = vector.shape_cast %443 : vector<1x256x256xi8> to vector<256x256xi8>
    %c1_159 = arith.constant 1 : index
    %c0_160 = arith.constant 0 : index
    %c0_161 = arith.constant 0 : index
    %445 = vector.load %arg13[%c1_159, %c0_160, %c0_161] : memref<2x1x256xf32, #tpu.memory_space<vmem>>, vector<1x1x256xf32>
    %446 = vector.shape_cast %445 : vector<1x1x256xf32> to vector<1x256xf32>
    %447 = arith.truncf %442 : vector<16x256xf32> to vector<16x256xbf16>
    %448 = arith.sitofp %444 : vector<256x256xi8> to vector<256x256xbf16>
    %cst_162 = arith.constant dense<0.000000e+00> : vector<16x256xf32>
    %449 = tpu.matmul %447, %448, %cst_162 {dimension_numbers = #tpu.dot_dimension_numbers<[1], [0], [0], [1], [0, 0, 1, 1], [], []>} : vector<16x256xbf16>, vector<256x256xbf16>, vector<16x256xf32> -> vector<16x256xf32>
    %450 = vector.broadcast %446 : vector<1x256xf32> to vector<16x256xf32>
    %451 = arith.mulf %449, %450 : vector<16x256xf32>
    %c1_163 = arith.constant 1 : index
    %c0_164 = arith.constant 0 : index
    %c0_165 = arith.constant 0 : index
    %452 = vector.load %arg14[%c1_163, %c0_164, %c0_165] : memref<2x1x256xf32, #tpu.memory_space<vmem>>, vector<1x1x256xf32>
    %453 = vector.shape_cast %452 : vector<1x1x256xf32> to vector<1x256xf32>
    %454 = vector.broadcast %453 : vector<1x256xf32> to vector<16x256xf32>
    %455 = arith.addf %451, %454 : vector<16x256xf32>
    %456 = arith.addf %282, %455 : vector<16x256xf32>
    %c1_166 = arith.constant 1 : index
    %c0_167 = arith.constant 0 : index
    %c0_168 = arith.constant 0 : index
    %457 = vector.load %arg15[%c1_166, %c0_167, %c0_168] : memref<2x1x256xf32, #tpu.memory_space<vmem>>, vector<1x1x256xf32>
    %458 = vector.shape_cast %457 : vector<1x1x256xf32> to vector<1x256xf32>
    %c1_169 = arith.constant 1 : index
    %c0_170 = arith.constant 0 : index
    %c0_171 = arith.constant 0 : index
    %459 = vector.load %arg16[%c1_169, %c0_170, %c0_171] : memref<2x1x256xf32, #tpu.memory_space<vmem>>, vector<1x1x256xf32>
    %460 = vector.shape_cast %459 : vector<1x1x256xf32> to vector<1x256xf32>
    %cst_172 = arith.constant dense<0.000000e+00> : vector<16xf32>
    %461 = vector.multi_reduction <add>, %456, %cst_172 [1] : vector<16x256xf32> to vector<16xf32>
    %462 = vector.shape_cast %461 : vector<16xf32> to vector<16x1xf32>
    %cst_173 = arith.constant 2.560000e+02 : f32
    %463 = vector.broadcast %cst_173 : f32 to vector<16x1xf32>
    %464 = arith.divf %462, %463 : vector<16x1xf32>
    %465 = vector.broadcast %464 : vector<16x1xf32> to vector<16x256xf32>
    %466 = arith.subf %456, %465 : vector<16x256xf32>
    %467 = arith.mulf %466, %466 : vector<16x256xf32>
    %cst_174 = arith.constant dense<0.000000e+00> : vector<16xf32>
    %468 = vector.multi_reduction <add>, %467, %cst_174 [1] : vector<16x256xf32> to vector<16xf32>
    %469 = vector.shape_cast %468 : vector<16xf32> to vector<16x1xf32>
    %cst_175 = arith.constant 2.560000e+02 : f32
    %470 = vector.broadcast %cst_175 : f32 to vector<16x1xf32>
    %471 = arith.divf %469, %470 : vector<16x1xf32>
    %472 = vector.broadcast %464 : vector<16x1xf32> to vector<16x256xf32>
    %473 = arith.subf %456, %472 : vector<16x256xf32>
    %cst_176 = arith.constant 9.99999974E-6 : f32
    %474 = vector.broadcast %cst_176 : f32 to vector<16x1xf32>
    %475 = arith.addf %471, %474 : vector<16x1xf32>
    %476 = math.rsqrt %475 : vector<16x1xf32>
    %477 = vector.broadcast %476 : vector<16x1xf32> to vector<16x256xf32>
    %478 = arith.mulf %473, %477 : vector<16x256xf32>
    %479 = vector.broadcast %458 : vector<1x256xf32> to vector<16x256xf32>
    %480 = arith.mulf %478, %479 : vector<16x256xf32>
    %481 = vector.broadcast %460 : vector<1x256xf32> to vector<16x256xf32>
    %482 = arith.addf %480, %481 : vector<16x256xf32>
    %c1_177 = arith.constant 1 : index
    %c0_178 = arith.constant 0 : index
    %c0_179 = arith.constant 0 : index
    %483 = vector.load %arg17[%c1_177, %c0_178, %c0_179] : memref<2x256x2048xi8, #tpu.memory_space<vmem>>, vector<1x256x2048xi8>
    %484 = vector.shape_cast %483 : vector<1x256x2048xi8> to vector<256x2048xi8>
    %c1_180 = arith.constant 1 : index
    %c0_181 = arith.constant 0 : index
    %c0_182 = arith.constant 0 : index
    %485 = vector.load %arg18[%c1_180, %c0_181, %c0_182] : memref<2x1x2048xf32, #tpu.memory_space<vmem>>, vector<1x1x2048xf32>
    %486 = vector.shape_cast %485 : vector<1x1x2048xf32> to vector<1x2048xf32>
    %487 = arith.truncf %482 : vector<16x256xf32> to vector<16x256xbf16>
    %488 = arith.sitofp %484 : vector<256x2048xi8> to vector<256x2048xbf16>
    %cst_183 = arith.constant dense<0.000000e+00> : vector<16x2048xf32>
    %489 = tpu.matmul %487, %488, %cst_183 {dimension_numbers = #tpu.dot_dimension_numbers<[1], [0], [0], [1], [0, 0, 1, 1], [], []>} : vector<16x256xbf16>, vector<256x2048xbf16>, vector<16x2048xf32> -> vector<16x2048xf32>
    %490 = vector.broadcast %486 : vector<1x2048xf32> to vector<16x2048xf32>
    %491 = arith.mulf %489, %490 : vector<16x2048xf32>
    %c1_184 = arith.constant 1 : index
    %c0_185 = arith.constant 0 : index
    %c0_186 = arith.constant 0 : index
    %492 = vector.load %arg19[%c1_184, %c0_185, %c0_186] : memref<2x1x2048xf32, #tpu.memory_space<vmem>>, vector<1x1x2048xf32>
    %493 = vector.shape_cast %492 : vector<1x1x2048xf32> to vector<1x2048xf32>
    %494 = vector.broadcast %493 : vector<1x2048xf32> to vector<16x2048xf32>
    %495 = arith.addf %491, %494 : vector<16x2048xf32>
    %cst_187 = arith.constant 0.000000e+00 : f32
    %496 = vector.broadcast %cst_187 : f32 to vector<16x2048xf32>
    %497 = arith.maximumf %495, %496 : vector<16x2048xf32>
    %c1_188 = arith.constant 1 : index
    %c0_189 = arith.constant 0 : index
    %c0_190 = arith.constant 0 : index
    %498 = vector.load %arg20[%c1_188, %c0_189, %c0_190] : memref<2x2048x256xi8, #tpu.memory_space<vmem>>, vector<1x2048x256xi8>
    %499 = vector.shape_cast %498 : vector<1x2048x256xi8> to vector<2048x256xi8>
    %c1_191 = arith.constant 1 : index
    %c0_192 = arith.constant 0 : index
    %c0_193 = arith.constant 0 : index
    %500 = vector.load %arg21[%c1_191, %c0_192, %c0_193] : memref<2x1x256xf32, #tpu.memory_space<vmem>>, vector<1x1x256xf32>
    %501 = vector.shape_cast %500 : vector<1x1x256xf32> to vector<1x256xf32>
    %502 = arith.truncf %497 : vector<16x2048xf32> to vector<16x2048xbf16>
    %503 = arith.sitofp %499 : vector<2048x256xi8> to vector<2048x256xbf16>
    %cst_194 = arith.constant dense<0.000000e+00> : vector<16x256xf32>
    %504 = tpu.matmul %502, %503, %cst_194 {dimension_numbers = #tpu.dot_dimension_numbers<[1], [0], [0], [1], [0, 0, 1, 1], [], []>} : vector<16x2048xbf16>, vector<2048x256xbf16>, vector<16x256xf32> -> vector<16x256xf32>
    %505 = vector.broadcast %501 : vector<1x256xf32> to vector<16x256xf32>
    %506 = arith.mulf %504, %505 : vector<16x256xf32>
    %c1_195 = arith.constant 1 : index
    %c0_196 = arith.constant 0 : index
    %c0_197 = arith.constant 0 : index
    %507 = vector.load %arg22[%c1_195, %c0_196, %c0_197] : memref<2x1x256xf32, #tpu.memory_space<vmem>>, vector<1x1x256xf32>
    %508 = vector.shape_cast %507 : vector<1x1x256xf32> to vector<1x256xf32>
    %509 = vector.broadcast %508 : vector<1x256xf32> to vector<16x256xf32>
    %510 = arith.addf %506, %509 : vector<16x256xf32>
    %511 = arith.addf %482, %510 : vector<16x256xf32>
    %c1_198 = arith.constant 1 : index
    %c0_199 = arith.constant 0 : index
    %c0_200 = arith.constant 0 : index
    %512 = vector.load %arg23[%c1_198, %c0_199, %c0_200] : memref<2x1x256xf32, #tpu.memory_space<vmem>>, vector<1x1x256xf32>
    %513 = vector.shape_cast %512 : vector<1x1x256xf32> to vector<1x256xf32>
    %c1_201 = arith.constant 1 : index
    %c0_202 = arith.constant 0 : index
    %c0_203 = arith.constant 0 : index
    %514 = vector.load %arg24[%c1_201, %c0_202, %c0_203] : memref<2x1x256xf32, #tpu.memory_space<vmem>>, vector<1x1x256xf32>
    %515 = vector.shape_cast %514 : vector<1x1x256xf32> to vector<1x256xf32>
    %cst_204 = arith.constant dense<0.000000e+00> : vector<16xf32>
    %516 = vector.multi_reduction <add>, %511, %cst_204 [1] : vector<16x256xf32> to vector<16xf32>
    %517 = vector.shape_cast %516 : vector<16xf32> to vector<16x1xf32>
    %cst_205 = arith.constant 2.560000e+02 : f32
    %518 = vector.broadcast %cst_205 : f32 to vector<16x1xf32>
    %519 = arith.divf %517, %518 : vector<16x1xf32>
    %520 = vector.broadcast %519 : vector<16x1xf32> to vector<16x256xf32>
    %521 = arith.subf %511, %520 : vector<16x256xf32>
    %522 = arith.mulf %521, %521 : vector<16x256xf32>
    %cst_206 = arith.constant dense<0.000000e+00> : vector<16xf32>
    %523 = vector.multi_reduction <add>, %522, %cst_206 [1] : vector<16x256xf32> to vector<16xf32>
    %524 = vector.shape_cast %523 : vector<16xf32> to vector<16x1xf32>
    %cst_207 = arith.constant 2.560000e+02 : f32
    %525 = vector.broadcast %cst_207 : f32 to vector<16x1xf32>
    %526 = arith.divf %524, %525 : vector<16x1xf32>
    %527 = vector.broadcast %519 : vector<16x1xf32> to vector<16x256xf32>
    %528 = arith.subf %511, %527 : vector<16x256xf32>
    %cst_208 = arith.constant 9.99999974E-6 : f32
    %529 = vector.broadcast %cst_208 : f32 to vector<16x1xf32>
    %530 = arith.addf %526, %529 : vector<16x1xf32>
    %531 = math.rsqrt %530 : vector<16x1xf32>
    %532 = vector.broadcast %531 : vector<16x1xf32> to vector<16x256xf32>
    %533 = arith.mulf %528, %532 : vector<16x256xf32>
    %534 = vector.broadcast %513 : vector<1x256xf32> to vector<16x256xf32>
    %535 = arith.mulf %533, %534 : vector<16x256xf32>
    %536 = vector.broadcast %515 : vector<1x256xf32> to vector<16x256xf32>
    %537 = arith.addf %535, %536 : vector<16x256xf32>
    %538 = vector.shape_cast %537 : vector<16x256xf32> to vector<2x8x256xf32>
    %cst_209 = arith.constant dense<0.000000e+00> : vector<2x256xf32>
    %539 = vector.multi_reduction <add>, %538, %cst_209 [1] : vector<2x8x256xf32> to vector<2x256xf32>
    %cst_210 = arith.constant 8.000000e+00 : f32
    %540 = vector.broadcast %cst_210 : f32 to vector<2x256xf32>
    %541 = arith.divf %539, %540 : vector<2x256xf32>
    %c0_211 = arith.constant 0 : index
    %c0_212 = arith.constant 0 : index
    %542 = vector.load %arg25[%c0_211, %c0_212] : memref<256x128xi8, #tpu.memory_space<vmem>>, vector<256x128xi8>
    %c0_213 = arith.constant 0 : index
    %c0_214 = arith.constant 0 : index
    %543 = vector.load %arg26[%c0_213, %c0_214] : memref<1x128xf32, #tpu.memory_space<vmem>>, vector<1x128xf32>
    %544 = arith.truncf %541 : vector<2x256xf32> to vector<2x256xbf16>
    %545 = arith.sitofp %542 : vector<256x128xi8> to vector<256x128xbf16>
    %cst_215 = arith.constant dense<0.000000e+00> : vector<2x128xf32>
    %546 = tpu.matmul %544, %545, %cst_215 {dimension_numbers = #tpu.dot_dimension_numbers<[1], [0], [0], [1], [0, 0, 1, 1], [], []>} : vector<2x256xbf16>, vector<256x128xbf16>, vector<2x128xf32> -> vector<2x128xf32>
    %547 = vector.broadcast %543 : vector<1x128xf32> to vector<2x128xf32>
    %548 = arith.mulf %546, %547 : vector<2x128xf32>
    %c0_216 = arith.constant 0 : index
    %c0_217 = arith.constant 0 : index
    %549 = vector.load %arg27[%c0_216, %c0_217] : memref<1x128xf32, #tpu.memory_space<vmem>>, vector<1x128xf32>
    %550 = vector.broadcast %549 : vector<1x128xf32> to vector<2x128xf32>
    %551 = arith.addf %548, %550 : vector<2x128xf32>
    %c0_218 = arith.constant 0 : index
    %c0_219 = arith.constant 0 : index
    %552 = vector.load %arg28[%c0_218, %c0_219] : memref<2x128xf32, #tpu.memory_space<vmem>>, vector<2x128xf32>
    tpu.vector_store %arg28[%c0_218, %c0_219], %551 {strides = array<i32>} : memref<2x128xf32, #tpu.memory_space<vmem>>, vector<2x128xf32>,
    return
  }
  func.func @transform_0(%arg0: i32) -> (i32, i32, i32) {
    %c0_i32 = arith.constant 0 : i32
    %c0_i32_0 = arith.constant 0 : i32
    %c0_i32_1 = arith.constant 0 : i32
    return %arg0, %c0_i32, %c0_i32_0 : i32, i32, i32
  }
  func.func @transform_1(%arg0: i32) -> (i32, i32, i32) {
    %c0_i32 = arith.constant 0 : i32
    %c0_i32_0 = arith.constant 0 : i32
    %c0_i32_1 = arith.constant 0 : i32
    return %arg0, %c0_i32, %c0_i32_0 : i32, i32, i32
  }
  func.func @transform_2(%arg0: i32) -> (i32, i32) {
    %c0_i32 = arith.constant 0 : i32
    %c0_i32_0 = arith.constant 0 : i32
    %c0_i32_1 = arith.constant 0 : i32
    return %c0_i32, %c0_i32_0 : i32, i32
  }
  func.func @transform_3(%arg0: i32) -> (i32, i32) {
    %c0_i32 = arith.constant 0 : i32
    %c0_i32_0 = arith.constant 0 : i32
    %c0_i32_1 = arith.constant 0 : i32
    return %c0_i32, %c0_i32_0 : i32, i32
  }
  func.func @transform_4(%arg0: i32) -> (i32, i32) {
    %c0_i32 = arith.constant 0 : i32
    %c0_i32_0 = arith.constant 0 : i32
    %c0_i32_1 = arith.constant 0 : i32
    return %c0_i32, %c0_i32_0 : i32, i32
  }
  func.func @transform_5(%arg0: i32) -> (i32, i32) {
    %c0_i32 = arith.constant 0 : i32
    %c0_i32_0 = arith.constant 0 : i32
    %c0_i32_1 = arith.constant 0 : i32
    return %c0_i32, %c0_i32_0 : i32, i32
  }
  func.func @transform_6(%arg0: i32) -> (i32, i32) {
    %c0_i32 = arith.constant 0 : i32
    %c0_i32_0 = arith.constant 0 : i32
    %c0_i32_1 = arith.constant 0 : i32
    return %c0_i32, %c0_i32_0 : i32, i32
  }
  func.func @transform_7(%arg0: i32) -> (i32, i32) {
    %c0_i32 = arith.constant 0 : i32
    %c0_i32_0 = arith.constant 0 : i32
    %c0_i32_1 = arith.constant 0 : i32
    return %c0_i32, %c0_i32_0 : i32, i32
  }
  func.func @transform_8(%arg0: i32) -> (i32, i32, i32) {
    %c0_i32 = arith.constant 0 : i32
    %c0_i32_0 = arith.constant 0 : i32
    %c0_i32_1 = arith.constant 0 : i32
    %c0_i32_2 = arith.constant 0 : i32
    return %c0_i32, %c0_i32_0, %c0_i32_1 : i32, i32, i32
  }
  func.func @transform_9(%arg0: i32) -> (i32, i32, i32) {
    %c0_i32 = arith.constant 0 : i32
    %c0_i32_0 = arith.constant 0 : i32
    %c0_i32_1 = arith.constant 0 : i32
    %c0_i32_2 = arith.constant 0 : i32
    return %c0_i32, %c0_i32_0, %c0_i32_1 : i32, i32, i32
  }
  func.func @transform_10(%arg0: i32) -> (i32, i32, i32) {
    %c0_i32 = arith.constant 0 : i32
    %c0_i32_0 = arith.constant 0 : i32
    %c0_i32_1 = arith.constant 0 : i32
    %c0_i32_2 = arith.constant 0 : i32
    return %c0_i32, %c0_i32_0, %c0_i32_1 : i32, i32, i32
  }
  func.func @transform_11(%arg0: i32) -> (i32, i32, i32) {
    %c0_i32 = arith.constant 0 : i32
    %c0_i32_0 = arith.constant 0 : i32
    %c0_i32_1 = arith.constant 0 : i32
    %c0_i32_2 = arith.constant 0 : i32
    return %c0_i32, %c0_i32_0, %c0_i32_1 : i32, i32, i32
  }
  func.func @transform_12(%arg0: i32) -> (i32, i32, i32) {
    %c0_i32 = arith.constant 0 : i32
    %c0_i32_0 = arith.constant 0 : i32
    %c0_i32_1 = arith.constant 0 : i32
    %c0_i32_2 = arith.constant 0 : i32
    return %c0_i32, %c0_i32_0, %c0_i32_1 : i32, i32, i32
  }
  func.func @transform_13(%arg0: i32) -> (i32, i32, i32) {
    %c0_i32 = arith.constant 0 : i32
    %c0_i32_0 = arith.constant 0 : i32
    %c0_i32_1 = arith.constant 0 : i32
    %c0_i32_2 = arith.constant 0 : i32
    return %c0_i32, %c0_i32_0, %c0_i32_1 : i32, i32, i32
  }
  func.func @transform_14(%arg0: i32) -> (i32, i32, i32) {
    %c0_i32 = arith.constant 0 : i32
    %c0_i32_0 = arith.constant 0 : i32
    %c0_i32_1 = arith.constant 0 : i32
    %c0_i32_2 = arith.constant 0 : i32
    return %c0_i32, %c0_i32_0, %c0_i32_1 : i32, i32, i32
  }
  func.func @transform_15(%arg0: i32) -> (i32, i32, i32) {
    %c0_i32 = arith.constant 0 : i32
    %c0_i32_0 = arith.constant 0 : i32
    %c0_i32_1 = arith.constant 0 : i32
    %c0_i32_2 = arith.constant 0 : i32
    return %c0_i32, %c0_i32_0, %c0_i32_1 : i32, i32, i32
  }
  func.func @transform_16(%arg0: i32) -> (i32, i32, i32) {
    %c0_i32 = arith.constant 0 : i32
    %c0_i32_0 = arith.constant 0 : i32
    %c0_i32_1 = arith.constant 0 : i32
    %c0_i32_2 = arith.constant 0 : i32
    return %c0_i32, %c0_i32_0, %c0_i32_1 : i32, i32, i32
  }
  func.func @transform_17(%arg0: i32) -> (i32, i32, i32) {
    %c0_i32 = arith.constant 0 : i32
    %c0_i32_0 = arith.constant 0 : i32
    %c0_i32_1 = arith.constant 0 : i32
    %c0_i32_2 = arith.constant 0 : i32
    return %c0_i32, %c0_i32_0, %c0_i32_1 : i32, i32, i32
  }
  func.func @transform_18(%arg0: i32) -> (i32, i32, i32) {
    %c0_i32 = arith.constant 0 : i32
    %c0_i32_0 = arith.constant 0 : i32
    %c0_i32_1 = arith.constant 0 : i32
    %c0_i32_2 = arith.constant 0 : i32
    return %c0_i32, %c0_i32_0, %c0_i32_1 : i32, i32, i32
  }
  func.func @transform_19(%arg0: i32) -> (i32, i32, i32) {
    %c0_i32 = arith.constant 0 : i32
    %c0_i32_0 = arith.constant 0 : i32
    %c0_i32_1 = arith.constant 0 : i32
    %c0_i32_2 = arith.constant 0 : i32
    return %c0_i32, %c0_i32_0, %c0_i32_1 : i32, i32, i32
  }
  func.func @transform_20(%arg0: i32) -> (i32, i32, i32) {
    %c0_i32 = arith.constant 0 : i32
    %c0_i32_0 = arith.constant 0 : i32
    %c0_i32_1 = arith.constant 0 : i32
    %c0_i32_2 = arith.constant 0 : i32
    return %c0_i32, %c0_i32_0, %c0_i32_1 : i32, i32, i32
  }
  func.func @transform_21(%arg0: i32) -> (i32, i32, i32) {
    %c0_i32 = arith.constant 0 : i32
    %c0_i32_0 = arith.constant 0 : i32
    %c0_i32_1 = arith.constant 0 : i32
    %c0_i32_2 = arith.constant 0 : i32
    return %c0_i32, %c0_i32_0, %c0_i32_1 : i32, i32, i32
  }
  func.func @transform_22(%arg0: i32) -> (i32, i32, i32) {
    %c0_i32 = arith.constant 0 : i32
    %c0_i32_0 = arith.constant 0 : i32
    %c0_i32_1 = arith.constant 0 : i32
    %c0_i32_2 = arith.constant 0 : i32
    return %c0_i32, %c0_i32_0, %c0_i32_1 : i32, i32, i32
  }
  func.func @transform_23(%arg0: i32) -> (i32, i32, i32) {
    %c0_i32 = arith.constant 0 : i32
    %c0_i32_0 = arith.constant 0 : i32
    %c0_i32_1 = arith.constant 0 : i32
    %c0_i32_2 = arith.constant 0 : i32
    return %c0_i32, %c0_i32_0, %c0_i32_1 : i32, i32, i32
  }
  func.func @transform_24(%arg0: i32) -> (i32, i32) {
    %c0_i32 = arith.constant 0 : i32
    %c0_i32_0 = arith.constant 0 : i32
    %c0_i32_1 = arith.constant 0 : i32
    return %c0_i32, %c0_i32_0 : i32, i32
  }
  func.func @transform_25(%arg0: i32) -> (i32, i32) {
    %c0_i32 = arith.constant 0 : i32
    %c0_i32_0 = arith.constant 0 : i32
    %c0_i32_1 = arith.constant 0 : i32
    return %c0_i32, %c0_i32_0 : i32, i32
  }
  func.func @transform_26(%arg0: i32) -> (i32, i32) {
    %c0_i32 = arith.constant 0 : i32
    %c0_i32_0 = arith.constant 0 : i32
    %c0_i32_1 = arith.constant 0 : i32
    return %c0_i32, %c0_i32_0 : i32, i32
  }
  func.func @transform_27(%arg0: i32) -> (i32, i32) {
    %c0_i32 = arith.constant 0 : i32
    %c0_i32_0 = arith.constant 0 : i32
    return %arg0, %c0_i32 : i32, i32
  }
}

</mosaic_0001>

<llo_original>
// kernel: full_model_forward.1
$region0: #{full_model_forward.1}
  #allocation0 [shape = 'u32[]', space=smem, size = 0x4, offset = 0x4, fixed_abs, tag = 'smem constant byte address 0x4 - core index']
  #allocation1 [shape = 'u32[144,128]{1,0:T(1,128)}', space=vmem, size = 0x12000, scoped, tag = 'internal scratch']
  %s0 = inlined_call_operand.hbm [shape: f32[2,8,512], index: 0, kind: input, shape index: {}]
  %s1 = inlined_call_operand.hbm [shape: f32[2,8,512], index: 1, kind: input, shape index: {}]
  %s2 = inlined_call_operand.hbm [shape: s8[512,256], index: 2, kind: input, shape index: {}]
  %s3 = inlined_call_operand.hbm [shape: f32[1,256], index: 3, kind: input, shape index: {}]
  %s4 = inlined_call_operand.hbm [shape: f32[1,256], index: 4, kind: input, shape index: {}]
  %s5 = inlined_call_operand.hbm [shape: s8[256,256], index: 5, kind: input, shape index: {}]
  %s6 = inlined_call_operand.hbm [shape: f32[1,256], index: 6, kind: input, shape index: {}]
  %s7 = inlined_call_operand.hbm [shape: f32[1,256], index: 7, kind: input, shape index: {}]
  %s8 = inlined_call_operand.hbm [shape: s8[2,256,768], index: 8, kind: input, shape index: {}]
  %s9 = inlined_call_operand.hbm [shape: f32[2,1,768], index: 9, kind: input, shape index: {}]
  %s10 = inlined_call_operand.hbm [shape: f32[2,1,768], index: 10, kind: input, shape index: {}]
  %s11 = inlined_call_operand.hbm [shape: s8[2,256,256], index: 11, kind: input, shape index: {}]
  %s12 = inlined_call_operand.vmem [shape: f32[2,1,256], index: 12, kind: input, shape index: {}]
  %s13 = inlined_call_operand.hbm [shape: f32[2,1,256], index: 13, kind: input, shape index: {}]
  %s14 = inlined_call_operand.hbm [shape: f32[2,1,256], index: 14, kind: input, shape index: {}]
  %s15 = inlined_call_operand.hbm [shape: f32[2,1,256], index: 15, kind: input, shape index: {}]
  %s16 = inlined_call_operand.hbm [shape: s8[2,256,2048], index: 16, kind: input, shape index: {}]
  %s17 = inlined_call_operand.vmem [shape: f32[2,1,2048], index: 17, kind: input, shape index: {}]
  %s18 = inlined_call_operand.hbm [shape: f32[2,1,2048], index: 18, kind: input, shape index: {}]
  %s19 = inlined_call_operand.hbm [shape: s8[2,2048,256], index: 19, kind: input, shape index: {}]
  %s20 = inlined_call_operand.hbm [shape: f32[2,1,256], index: 20, kind: input, shape index: {}]
  %s21 = inlined_call_operand.hbm [shape: f32[2,1,256], index: 21, kind: input, shape index: {}]
  %s22 = inlined_call_operand.hbm [shape: f32[2,1,256], index: 22, kind: input, shape index: {}]
  %s23 = inlined_call_operand.hbm [shape: f32[2,1,256], index: 23, kind: input, shape index: {}]
  %s24 = inlined_call_operand.hbm [shape: s8[256,128], index: 24, kind: input, shape index: {}]
  %s25 = inlined_call_operand.hbm [shape: f32[1,128], index: 25, kind: input, shape index: {}]
  %s26 = inlined_call_operand.hbm [shape: f32[1,128], index: 26, kind: input, shape index: {}]
  %s27 = inlined_call_operand.hbm [shape: f32[2,128], index: 27, kind: output, shape index: {}]
  %s28 = sld [smem:[#allocation0]]
  $region218: #{full_model_forward.1} parent=0
    _
  %s30 = ssub.s32 1, %s28
  %s31 = scalar_select 0, %s30, %s28
  $region1: #{full_model_forward.1} parent=0
    #allocation2 [shape = 'u8[32768]{0}', space=vmem, size = 0x8000, scoped, tag = 'input window, operand 0, single buffered']
    #allocation3 [shape = 's32[1]{0}', space=sflag, size = 0x4, scoped, tag = 'scoped memory for full_model_forward.1']
    #allocation4 [shape = 's32[1]{0}', space=sflag, size = 0x4, scoped, tag = 'scoped memory for full_model_forward.1']
    #allocation5 [shape = 'u8[32768]{0}', space=vmem, size = 0x8000, scoped, tag = 'input window, operand 1, single buffered']
    #allocation6 [shape = 's32[1]{0}', space=sflag, size = 0x4, scoped, tag = 'scoped memory for full_model_forward.1']
    #allocation7 [shape = 'u8[131072]{0}', space=vmem, size = 0x20000, scoped, tag = 'input window, operand 2, single buffered']
    #allocation8 [shape = 'u8[1024]{0}', space=vmem, size = 0x400, scoped, tag = 'input window, operand 3, single buffered']
    #allocation9 [shape = 's32[1]{0}', space=sflag, size = 0x4, scoped, tag = 'scoped memory for full_model_forward.1']
    #allocation10 [shape = 'u8[1024]{0}', space=vmem, size = 0x400, scoped, tag = 'input window, operand 4, single buffered']
    #allocation11 [shape = 'u8[65536]{0}', space=vmem, size = 0x10000, scoped, tag = 'input window, operand 5, single buffered']
    #allocation12 [shape = 's32[1]{0}', space=sflag, size = 0x4, scoped, tag = 'scoped memory for full_model_forward.1']
    #allocation13 [shape = 'u8[1024]{0}', space=vmem, size = 0x400, scoped, tag = 'input window, operand 6, single buffered']
    #allocation14 [shape = 'u8[1024]{0}', space=vmem, size = 0x400, scoped, tag = 'input window, operand 7, single buffered']
    #allocation15 [shape = 's32[1]{0}', space=sflag, size = 0x4, scoped, tag = 'scoped memory for full_model_forward.1']
    #allocation16 [shape = 'u8[393216]{0}', space=vmem, size = 0x60000, scoped, tag = 'input window, operand 8, single buffered']
    #allocation17 [shape = 'u8[6144]{0}', space=vmem, size = 0x1800, scoped, tag = 'input window, operand 9, single buffered']
    #allocation18 [shape = 's32[1]{0}', space=sflag, size = 0x4, scoped, tag = 'scoped memory for full_model_forward.1']
    #allocation19 [shape = 'u8[6144]{0}', space=vmem, size = 0x1800, scoped, tag = 'input window, operand 10, single buffered']
    #allocation20 [shape = 'u8[131072]{0}', space=vmem, size = 0x20000, scoped, tag = 'input window, operand 11, single buffered']
    #allocation21 [shape = 's32[1]{0}', space=sflag, size = 0x4, scoped, tag = 'scoped memory for full_model_forward.1']
    #allocation22 [shape = 'u8[2048]{0}', space=vmem, size = 0x800, scoped, tag = 'input window, operand 13, single buffered']
    #allocation23 [shape = 'u8[2048]{0}', space=vmem, size = 0x800, scoped, tag = 'input window, operand 14, single buffered']
    #allocation24 [shape = 's32[1]{0}', space=sflag, size = 0x4, scoped, tag = 'scoped memory for full_model_forward.1']
    #allocation25 [shape = 'u8[2048]{0}', space=vmem, size = 0x800, scoped, tag = 'input window, operand 15, single buffered']
    #allocation26 [shape = 'u8[1048576]{0}', space=vmem, size = 0x100000, scoped, tag = 'input window, operand 16, single buffered']
    #allocation27 [shape = 's32[1]{0}', space=sflag, size = 0x4, scoped, tag = 'scoped memory for full_model_forward.1']
    #allocation28 [shape = 'u8[16384]{0}', space=vmem, size = 0x4000, scoped, tag = 'input window, operand 18, single buffered']
    #allocation29 [shape = 'u8[1048576]{0}', space=vmem, size = 0x100000, scoped, tag = 'input window, operand 19, single buffered']
    #allocation30 [shape = 's32[1]{0}', space=sflag, size = 0x4, scoped, tag = 'scoped memory for full_model_forward.1']
    #allocation31 [shape = 'u8[2048]{0}', space=vmem, size = 0x800, scoped, tag = 'input window, operand 20, single buffered']
    #allocation32 [shape = 'u8[2048]{0}', space=vmem, size = 0x800, scoped, tag = 'input window, operand 21, single buffered']
    #allocation33 [shape = 's32[1]{0}', space=sflag, size = 0x4, scoped, tag = 'scoped memory for full_model_forward.1']
    #allocation34 [shape = 'u8[2048]{0}', space=vmem, size = 0x800, scoped, tag = 'input window, operand 22, single buffered']
    #allocation35 [shape = 'u8[2048]{0}', space=vmem, size = 0x800, scoped, tag = 'input window, operand 23, single buffered']
    #allocation36 [shape = 's32[1]{0}', space=sflag, size = 0x4, scoped, tag = 'scoped memory for full_model_forward.1']
    #allocation37 [shape = 'u8[32768]{0}', space=vmem, size = 0x8000, scoped, tag = 'input window, operand 24, single buffered']
    #allocation38 [shape = 'u8[512]{0}', space=vmem, size = 0x400, scoped, tag = 'input window, operand 25, single buffered']
    #allocation39 [shape = 's32[1]{0}', space=sflag, size = 0x4, scoped, tag = 'scoped memory for full_model_forward.1']
    #allocation40 [shape = 'u8[512]{0}', space=vmem, size = 0x400, scoped, tag = 'input window, operand 26, single buffered']
    #allocation41 [shape = 'u8[1024]{0}', space=vmem, size = 0x400, scoped, tag = 'output window, operand 0, single buffered']
    %32 = vsyncpa [#allocation3], 0
    %33 = vsyncpa [#allocation6], 0
    %34 = vsyncpa [#allocation9], 0
    %35 = vsyncpa [#allocation12], 0
    %36 = vsyncpa [#allocation15], 0
    %37 = vsyncpa [#allocation18], 0
    %38 = vsyncpa [#allocation21], 0
    %39 = vsyncpa [#allocation24], 0
    %40 = vsyncpa [#allocation27], 0
    %41 = vsyncpa [#allocation30], 0
    %42 = vsyncpa [#allocation33], 0
    %43 = vsyncpa [#allocation36], 0
    %44 = vsyncpa [#allocation39], 0
    %45 = vsyncpa [#allocation4], 0
    // Predicated region
    $region2: #{full_model_forward.1} parent=1 // pred_check
      _
    $region3: #{full_model_forward.1} parent=1 // pred_check_branch
      %47 = sbr.rel (0) target = $region5
    $region4: #{full_model_forward.1} parent=1 // pred_region
      %s49 = ssub.s32 1024, 1024
      %50 = vsyncadd [#allocation3], %s49
      %s51 = sshll.u32 [#allocation2], 4
      %s52 = int_to_ptr.vmem [resolvable:$true] %s51
      %57 = dma.hbm_to_vmem [thread:$0]  %s0, 1024, %s52, [#allocation3], 512, 512, 32
    $region5: #{full_model_forward.1} parent=1 // pred_fallthru
      _
    // Predicated region
    $region6: #{full_model_forward.1} parent=1 // pred_check
      _
    $region7: #{full_model_forward.1} parent=1 // pred_check_branch
      %59 = sbr.rel (0) target = $region9
    $region8: #{full_model_forward.1} parent=1 // pred_region
      %s61 = ssub.s32 1024, 1024
      %62 = vsyncadd [#allocation6], %s61
      %s63 = sshll.u32 [#allocation5], 4
      %s64 = int_to_ptr.vmem [resolvable:$true] %s63
      %69 = dma.hbm_to_vmem [thread:$0]  %s1, 1024, %s64, [#allocation6], 512, 512, 32
    $region9: #{full_model_forward.1} parent=1 // pred_fallthru
      _
    // Predicated region
    $region10: #{full_model_forward.1} parent=1 // pred_check
      _
    $region11: #{full_model_forward.1} parent=1 // pred_check_branch
      %71 = sbr.rel (0) target = $region13
    $region12: #{full_model_forward.1} parent=1 // pred_region
      %s73 = ssub.s32 4096, 4096
      %74 = vsyncadd [#allocation6], %s73
      %s75 = sshll.u32 [#allocation7], 4
      %s76 = int_to_ptr.vmem [resolvable:$true] %s75
      %81 = dma.hbm_to_vmem [thread:$0]  %s2, 4096, %s76, [#allocation6], 256, 256, 16
    $region13: #{full_model_forward.1} parent=1 // pred_fallthru
      _
    // Predicated region
    $region14: #{full_model_forward.1} parent=1 // pred_check
      _
    $region15: #{full_model_forward.1} parent=1 // pred_check_branch
      %83 = sbr.rel (0) target = $region17
    $region16: #{full_model_forward.1} parent=1 // pred_region
      %s85 = ssub.s32 32, 32
      %86 = vsyncadd [#allocation9], %s85
      %s88 = sshll.u32 [#allocation8], 4
      %s89 = int_to_ptr.vmem [resolvable:$true] %s88
      %91 = dma.hbm_to_vmem [thread:$0]  %s3, 32, %s89, [#allocation9]
    $region17: #{full_model_forward.1} parent=1 // pred_fallthru
      _
    // Predicated region
    $region18: #{full_model_forward.1} parent=1 // pred_check
      _
    $region19: #{full_model_forward.1} parent=1 // pred_check_branch
      %93 = sbr.rel (0) target = $region21
    $region20: #{full_model_forward.1} parent=1 // pred_region
      %s95 = ssub.s32 32, 32
      %96 = vsyncadd [#allocation9], %s95
      %s98 = sshll.u32 [#allocation10], 4
      %s99 = int_to_ptr.vmem [resolvable:$true] %s98
      %101 = dma.hbm_to_vmem [thread:$0]  %s4, 32, %s99, [#allocation9]
    $region21: #{full_model_forward.1} parent=1 // pred_fallthru
      _
    // Predicated region
    $region22: #{full_model_forward.1} parent=1 // pred_check
      _
    $region23: #{full_model_forward.1} parent=1 // pred_check_branch
      %103 = sbr.rel (0) target = $region25
    $region24: #{full_model_forward.1} parent=1 // pred_region
      %s105 = ssub.s32 2048, 2048
      %106 = vsyncadd [#allocation12], %s105
      %s107 = sshll.u32 [#allocation11], 4
      %s108 = int_to_ptr.vmem [resolvable:$true] %s107
      %113 = dma.hbm_to_vmem [thread:$0]  %s5, 2048, %s108, [#allocation12], 256, 256, 16
    $region25: #{full_model_forward.1} parent=1 // pred_fallthru
      _
    // Predicated region
    $region26: #{full_model_forward.1} parent=1 // pred_check
      _
    $region27: #{full_model_forward.1} parent=1 // pred_check_branch
      %115 = sbr.rel (0) target = $region29
    $region28: #{full_model_forward.1} parent=1 // pred_region
      %s117 = ssub.s32 32, 32
      %118 = vsyncadd [#allocation12], %s117
      %s120 = sshll.u32 [#allocation13], 4
      %s121 = int_to_ptr.vmem [resolvable:$true] %s120
      %123 = dma.hbm_to_vmem [thread:$0]  %s6, 32, %s121, [#allocation12]
    $region29: #{full_model_forward.1} parent=1 // pred_fallthru
      _
    // Predicated region
    $region30: #{full_model_forward.1} parent=1 // pred_check
      _
    $region31: #{full_model_forward.1} parent=1 // pred_check_branch
      %125 = sbr.rel (0) target = $region33
    $region32: #{full_model_forward.1} parent=1 // pred_region
      %s127 = ssub.s32 32, 32
      %128 = vsyncadd [#allocation15], %s127
      %s130 = sshll.u32 [#allocation14], 4
      %s131 = int_to_ptr.vmem [resolvable:$true] %s130
      %133 = dma.hbm_to_vmem [thread:$0]  %s7, 32, %s131, [#allocation15]
    $region33: #{full_model_forward.1} parent=1 // pred_fallthru
      _
    // Predicated region
    $region34: #{full_model_forward.1} parent=1 // pred_check
      _
    $region35: #{full_model_forward.1} parent=1 // pred_check_branch
      %135 = sbr.rel (0) target = $region37
    $region36: #{full_model_forward.1} parent=1 // pred_region
      %s137 = ssub.s32 12288, 12288
      %138 = vsyncadd [#allocation15], %s137
      %s139 = sshll.u32 [#allocation16], 4
      %s140 = int_to_ptr.vmem [resolvable:$true] %s139
      %145 = dma.hbm_to_vmem [thread:$0]  %s8, 12288, %s140, [#allocation15], 768, 768, 48
    $region37: #{full_model_forward.1} parent=1 // pred_fallthru
      _
    // Predicated region
    $region38: #{full_model_forward.1} parent=1 // pred_check
      _
    $region39: #{full_model_forward.1} parent=1 // pred_check_branch
      %147 = sbr.rel (0) target = $region41
    $region40: #{full_model_forward.1} parent=1 // pred_region
      %s149 = ssub.s32 192, 192
      %150 = vsyncadd [#allocation18], %s149
      %s151 = sshll.u32 [#allocation17], 4
      %s152 = int_to_ptr.vmem [resolvable:$true] %s151
      %157 = dma.hbm_to_vmem [thread:$0]  %s9, 192, %s152, [#allocation18], 96, 96, 6
    $region41: #{full_model_forward.1} parent=1 // pred_fallthru
      _
    // Predicated region
    $region42: #{full_model_forward.1} parent=1 // pred_check
      _
    $region43: #{full_model_forward.1} parent=1 // pred_check_branch
      %159 = sbr.rel (0) target = $region45
    $region44: #{full_model_forward.1} parent=1 // pred_region
      %s161 = ssub.s32 192, 192
      %162 = vsyncadd [#allocation18], %s161
      %s163 = sshll.u32 [#allocation19], 4
      %s164 = int_to_ptr.vmem [resolvable:$true] %s163
      %169 = dma.hbm_to_vmem [thread:$0]  %s10, 192, %s164, [#allocation18], 96, 96, 6
    $region45: #{full_model_forward.1} parent=1 // pred_fallthru
      _
    // Predicated region
    $region46: #{full_model_forward.1} parent=1 // pred_check
      _
    $region47: #{full_model_forward.1} parent=1 // pred_check_branch
      %171 = sbr.rel (0) target = $region49
    $region48: #{full_model_forward.1} parent=1 // pred_region
      %s173 = ssub.s32 4096, 4096
      %174 = vsyncadd [#allocation21], %s173
      %s175 = sshll.u32 [#allocation20], 4
      %s176 = int_to_ptr.vmem [resolvable:$true] %s175
      %181 = dma.hbm_to_vmem [thread:$0]  %s11, 4096, %s176, [#allocation21], 256, 256, 16
    $region49: #{full_model_forward.1} parent=1 // pred_fallthru
      _
    // Predicated region
    $region50: #{full_model_forward.1} parent=1 // pred_check
      _
    $region51: #{full_model_forward.1} parent=1 // pred_check_branch
      %183 = sbr.rel (0) target = $region53
    $region52: #{full_model_forward.1} parent=1 // pred_region
      _
    $region53: #{full_model_forward.1} parent=1 // pred_fallthru
      _
    // Predicated region
    $region54: #{full_model_forward.1} parent=1 // pred_check
      _
    $region55: #{full_model_forward.1} parent=1 // pred_check_branch
      %185 = sbr.rel (0) target = $region57
    $region56: #{full_model_forward.1} parent=1 // pred_region
      %s187 = ssub.s32 64, 64
      %188 = vsyncadd [#allocation21], %s187
      %s189 = sshll.u32 [#allocation22], 4
      %s190 = int_to_ptr.vmem [resolvable:$true] %s189
      %195 = dma.hbm_to_vmem [thread:$0]  %s13, 64, %s190, [#allocation21], 32, 32, 2
    $region57: #{full_model_forward.1} parent=1 // pred_fallthru
      _
    // Predicated region
    $region58: #{full_model_forward.1} parent=1 // pred_check
      _
    $region59: #{full_model_forward.1} parent=1 // pred_check_branch
      %197 = sbr.rel (0) target = $region61
    $region60: #{full_model_forward.1} parent=1 // pred_region
      %s199 = ssub.s32 64, 64
      %200 = vsyncadd [#allocation24], %s199
      %s201 = sshll.u32 [#allocation23], 4
      %s202 = int_to_ptr.vmem [resolvable:$true] %s201
      %207 = dma.hbm_to_vmem [thread:$0]  %s14, 64, %s202, [#allocation24], 32, 32, 2
    $region61: #{full_model_forward.1} parent=1 // pred_fallthru
      _
    // Predicated region
    $region62: #{full_model_forward.1} parent=1 // pred_check
      _
    $region63: #{full_model_forward.1} parent=1 // pred_check_branch
      %209 = sbr.rel (0) target = $region65
    $region64: #{full_model_forward.1} parent=1 // pred_region
      %s211 = ssub.s32 64, 64
      %212 = vsyncadd [#allocation24], %s211
      %s213 = sshll.u32 [#allocation25], 4
      %s214 = int_to_ptr.vmem [resolvable:$true] %s213
      %219 = dma.hbm_to_vmem [thread:$0]  %s15, 64, %s214, [#allocation24], 32, 32, 2
    $region65: #{full_model_forward.1} parent=1 // pred_fallthru
      _
    // Predicated region
    $region66: #{full_model_forward.1} parent=1 // pred_check
      _
    $region67: #{full_model_forward.1} parent=1 // pred_check_branch
      %221 = sbr.rel (0) target = $region69
    $region68: #{full_model_forward.1} parent=1 // pred_region
      %s223 = ssub.s32 32768, 32768
      %224 = vsyncadd [#allocation27], %s223
      %s225 = sshll.u32 [#allocation26], 4
      %s226 = int_to_ptr.vmem [resolvable:$true] %s225
      %231 = dma.hbm_to_vmem [thread:$0]  %s16, 32768, %s226, [#allocation27], 2048, 2048, 128
    $region69: #{full_model_forward.1} parent=1 // pred_fallthru
      _
    // Predicated region
    $region70: #{full_model_forward.1} parent=1 // pred_check
      _
    $region71: #{full_model_forward.1} parent=1 // pred_check_branch
      %233 = sbr.rel (0) target = $region73
    $region72: #{full_model_forward.1} parent=1 // pred_region
      _
    $region73: #{full_model_forward.1} parent=1 // pred_fallthru
      _
    // Predicated region
    $region74: #{full_model_forward.1} parent=1 // pred_check
      _
    $region75: #{full_model_forward.1} parent=1 // pred_check_branch
      %235 = sbr.rel (0) target = $region77
    $region76: #{full_model_forward.1} parent=1 // pred_region
      %s237 = ssub.s32 512, 512
      %238 = vsyncadd [#allocation27], %s237
      %s239 = sshll.u32 [#allocation28], 4
      %s240 = int_to_ptr.vmem [resolvable:$true] %s239
      %245 = dma.hbm_to_vmem [thread:$0]  %s18, 512, %s240, [#allocation27], 256, 256, 16
    $region77: #{full_model_forward.1} parent=1 // pred_fallthru
      _
    // Predicated region
    $region78: #{full_model_forward.1} parent=1 // pred_check
      _
    $region79: #{full_model_forward.1} parent=1 // pred_check_branch
      %247 = sbr.rel (0) target = $region81
    $region80: #{full_model_forward.1} parent=1 // pred_region
      %s249 = ssub.s32 32768, 32768
      %250 = vsyncadd [#allocation30], %s249
      %s251 = sshll.u32 [#allocation29], 4
      %s252 = int_to_ptr.vmem [resolvable:$true] %s251
      %257 = dma.hbm_to_vmem [thread:$0]  %s19, 32768, %s252, [#allocation30], 256, 256, 16
    $region81: #{full_model_forward.1} parent=1 // pred_fallthru
      _
    // Predicated region
    $region82: #{full_model_forward.1} parent=1 // pred_check
      _
    $region83: #{full_model_forward.1} parent=1 // pred_check_branch
      %259 = sbr.rel (0) target = $region85
    $region84: #{full_model_forward.1} parent=1 // pred_region
      %s261 = ssub.s32 64, 64
      %262 = vsyncadd [#allocation30], %s261
      %s263 = sshll.u32 [#allocation31], 4
      %s264 = int_to_ptr.vmem [resolvable:$true] %s263
      %269 = dma.hbm_to_vmem [thread:$0]  %s20, 64, %s264, [#allocation30], 32, 32, 2
    $region85: #{full_model_forward.1} parent=1 // pred_fallthru
      _
    // Predicated region
    $region86: #{full_model_forward.1} parent=1 // pred_check
      _
    $region87: #{full_model_forward.1} parent=1 // pred_check_branch
      %271 = sbr.rel (0) target = $region89
    $region88: #{full_model_forward.1} parent=1 // pred_region
      %s273 = ssub.s32 64, 64
      %274 = vsyncadd [#allocation33], %s273
      %s275 = sshll.u32 [#allocation32], 4
      %s276 = int_to_ptr.vmem [resolvable:$true] %s275
      %281 = dma.hbm_to_vmem [thread:$0]  %s21, 64, %s276, [#allocation33], 32, 32, 2
    $region89: #{full_model_forward.1} parent=1 // pred_fallthru
      _
    // Predicated region
    $region90: #{full_model_forward.1} parent=1 // pred_check
      _
    $region91: #{full_model_forward.1} parent=1 // pred_check_branch
      %283 = sbr.rel (0) target = $region93
    $region92: #{full_model_forward.1} parent=1 // pred_region
      %s285 = ssub.s32 64, 64
      %286 = vsyncadd [#allocation33], %s285
      %s287 = sshll.u32 [#allocation34], 4
      %s288 = int_to_ptr.vmem [resolvable:$true] %s287
      %293 = dma.hbm_to_vmem [thread:$0]  %s22, 64, %s288, [#allocation33], 32, 32, 2
    $region93: #{full_model_forward.1} parent=1 // pred_fallthru
      _
    // Predicated region
    $region94: #{full_model_forward.1} parent=1 // pred_check
      _
    $region95: #{full_model_forward.1} parent=1 // pred_check_branch
      %295 = sbr.rel (0) target = $region97
    $region96: #{full_model_forward.1} parent=1 // pred_region
      %s297 = ssub.s32 64, 64
      %298 = vsyncadd [#allocation36], %s297
      %s299 = sshll.u32 [#allocation35], 4
      %s300 = int_to_ptr.vmem [resolvable:$true] %s299
      %305 = dma.hbm_to_vmem [thread:$0]  %s23, 64, %s300, [#allocation36], 32, 32, 2
    $region97: #{full_model_forward.1} parent=1 // pred_fallthru
      _
    // Predicated region
    $region98: #{full_model_forward.1} parent=1 // pred_check
      _
    $region99: #{full_model_forward.1} parent=1 // pred_check_branch
      %307 = sbr.rel (0) target = $region101
    $region100: #{full_model_forward.1} parent=1 // pred_region
      %s309 = ssub.s32 1024, 1024
      %310 = vsyncadd [#allocation36], %s309
      %s311 = sshll.u32 [#allocation37], 4
      %s312 = int_to_ptr.vmem [resolvable:$true] %s311
      %317 = dma.hbm_to_vmem [thread:$0]  %s24, 1024, %s312, [#allocation36], 128, 128, 8
    $region101: #{full_model_forward.1} parent=1 // pred_fallthru
      _
    // Predicated region
    $region102: #{full_model_forward.1} parent=1 // pred_check
      _
    $region103: #{full_model_forward.1} parent=1 // pred_check_branch
      %319 = sbr.rel (0) target = $region105
    $region104: #{full_model_forward.1} parent=1 // pred_region
      %s321 = ssub.s32 16, 16
      %322 = vsyncadd [#allocation39], %s321
      %s324 = sshll.u32 [#allocation38], 4
      %s325 = int_to_ptr.vmem [resolvable:$true] %s324
      %327 = dma.hbm_to_vmem [thread:$0]  %s25, 16, %s325, [#allocation39]
    $region105: #{full_model_forward.1} parent=1 // pred_fallthru
      _
    // Predicated region
    $region106: #{full_model_forward.1} parent=1 // pred_check
      _
    $region107: #{full_model_forward.1} parent=1 // pred_check_branch
      %329 = sbr.rel (0) target = $region109
    $region108: #{full_model_forward.1} parent=1 // pred_region
      %s331 = ssub.s32 16, 16
      %332 = vsyncadd [#allocation39], %s331
      %s334 = sshll.u32 [#allocation40], 4
      %s335 = int_to_ptr.vmem [resolvable:$true] %s334
      %337 = dma.hbm_to_vmem [thread:$0]  %s26, 16, %s335, [#allocation39]
    $region109: #{full_model_forward.1} parent=1 // pred_fallthru
      _
    // Predicated region
    $region110: #{full_model_forward.1} parent=1 // pred_check
      _
    $region111: #{full_model_forward.1} parent=1 // pred_check_branch
      %339 = sbr.rel (0) target = $region113
    $region112: #{full_model_forward.1} parent=1 // pred_region
      %340 = dma.done [#allocation3], 1024
    $region113: #{full_model_forward.1} parent=1 // pred_fallthru
      _
    // Predicated region
    $region114: #{full_model_forward.1} parent=1 // pred_check
      _
    $region115: #{full_model_forward.1} parent=1 // pred_check_branch
      %342 = sbr.rel (0) target = $region117
    $region116: #{full_model_forward.1} parent=1 // pred_region
      %343 = dma.done [#allocation6], 1024
    $region117: #{full_model_forward.1} parent=1 // pred_fallthru
      _
    // Predicated region
    $region118: #{full_model_forward.1} parent=1 // pred_check
      _
    $region119: #{full_model_forward.1} parent=1 // pred_check_branch
      %345 = sbr.rel (0) target = $region121
    $region120: #{full_model_forward.1} parent=1 // pred_region
      %346 = dma.done [#allocation6], 4096
    $region121: #{full_model_forward.1} parent=1 // pred_fallthru
      _
    // Predicated region
    $region122: #{full_model_forward.1} parent=1 // pred_check
      _
    $region123: #{full_model_forward.1} parent=1 // pred_check_branch
      %348 = sbr.rel (0) target = $region125
    $region124: #{full_model_forward.1} parent=1 // pred_region
      %349 = dma.done [#allocation9], 32
    $region125: #{full_model_forward.1} parent=1 // pred_fallthru
      _
    // Predicated region
    $region126: #{full_model_forward.1} parent=1 // pred_check
      _
    $region127: #{full_model_forward.1} parent=1 // pred_check_branch
      %351 = sbr.rel (0) target = $region129
    $region128: #{full_model_forward.1} parent=1 // pred_region
      %352 = dma.done [#allocation9], 32
    $region129: #{full_model_forward.1} parent=1 // pred_fallthru
      _
    // Predicated region
    $region130: #{full_model_forward.1} parent=1 // pred_check
      _
    $region131: #{full_model_forward.1} parent=1 // pred_check_branch
      %354 = sbr.rel (0) target = $region133
    $region132: #{full_model_forward.1} parent=1 // pred_region
      %355 = dma.done [#allocation12], 2048
    $region133: #{full_model_forward.1} parent=1 // pred_fallthru
      _
    // Predicated region
    $region134: #{full_model_forward.1} parent=1 // pred_check
      _
    $region135: #{full_model_forward.1} parent=1 // pred_check_branch
      %357 = sbr.rel (0) target = $region137
    $region136: #{full_model_forward.1} parent=1 // pred_region
      %358 = dma.done [#allocation12], 32
    $region137: #{full_model_forward.1} parent=1 // pred_fallthru
      _
    // Predicated region
    $region138: #{full_model_forward.1} parent=1 // pred_check
      _
    $region139: #{full_model_forward.1} parent=1 // pred_check_branch
      %360 = sbr.rel (0) target = $region141
    $region140: #{full_model_forward.1} parent=1 // pred_region
      %361 = dma.done [#allocation15], 32
    $region141: #{full_model_forward.1} parent=1 // pred_fallthru
      _
    // Predicated region
    $region142: #{full_model_forward.1} parent=1 // pred_check
      _
    $region143: #{full_model_forward.1} parent=1 // pred_check_branch
      %363 = sbr.rel (0) target = $region145
    $region144: #{full_model_forward.1} parent=1 // pred_region
      %364 = dma.done [#allocation15], 12288
    $region145: #{full_model_forward.1} parent=1 // pred_fallthru
      _
    // Predicated region
    $region146: #{full_model_forward.1} parent=1 // pred_check
      _
    $region147: #{full_model_forward.1} parent=1 // pred_check_branch
      %366 = sbr.rel (0) target = $region149
    $region148: #{full_model_forward.1} parent=1 // pred_region
      %367 = dma.done [#allocation18], 192
    $region149: #{full_model_forward.1} parent=1 // pred_fallthru
      _
    // Predicated region
    $region150: #{full_model_forward.1} parent=1 // pred_check
      _
    $region151: #{full_model_forward.1} parent=1 // pred_check_branch
      %369 = sbr.rel (0) target = $region153
    $region152: #{full_model_forward.1} parent=1 // pred_region
      %370 = dma.done [#allocation18], 192
    $region153: #{full_model_forward.1} parent=1 // pred_fallthru
      _
    // Predicated region
    $region154: #{full_model_forward.1} parent=1 // pred_check
      _
    $region155: #{full_model_forward.1} parent=1 // pred_check_branch
      %372 = sbr.rel (0) target = $region157
    $region156: #{full_model_forward.1} parent=1 // pred_region
      %373 = dma.done [#allocation21], 4096
    $region157: #{full_model_forward.1} parent=1 // pred_fallthru
      _
    // Predicated region
    $region158: #{full_model_forward.1} parent=1 // pred_check
      _
    $region159: #{full_model_forward.1} parent=1 // pred_check_branch
      %375 = sbr.rel (0) target = $region161
    $region160: #{full_model_forward.1} parent=1 // pred_region
      %376 = dma.done [#allocation21], 64
    $region161: #{full_model_forward.1} parent=1 // pred_fallthru
      _
    // Predicated region
    $region162: #{full_model_forward.1} parent=1 // pred_check
      _
    $region163: #{full_model_forward.1} parent=1 // pred_check_branch
      %378 = sbr.rel (0) target = $region165
    $region164: #{full_model_forward.1} parent=1 // pred_region
      %379 = dma.done [#allocation24], 64
    $region165: #{full_model_forward.1} parent=1 // pred_fallthru
      _
    // Predicated region
    $region166: #{full_model_forward.1} parent=1 // pred_check
      _
    $region167: #{full_model_forward.1} parent=1 // pred_check_branch
      %381 = sbr.rel (0) target = $region169
    $region168: #{full_model_forward.1} parent=1 // pred_region
      %382 = dma.done [#allocation24], 64
    $region169: #{full_model_forward.1} parent=1 // pred_fallthru
      _
    // Predicated region
    $region170: #{full_model_forward.1} parent=1 // pred_check
      _
    $region171: #{full_model_forward.1} parent=1 // pred_check_branch
      %384 = sbr.rel (0) target = $region173
    $region172: #{full_model_forward.1} parent=1 // pred_region
      %385 = dma.done [#allocation27], 32768
    $region173: #{full_model_forward.1} parent=1 // pred_fallthru
      _
    // Predicated region
    $region174: #{full_model_forward.1} parent=1 // pred_check
      _
    $region175: #{full_model_forward.1} parent=1 // pred_check_branch
      %387 = sbr.rel (0) target = $region177
    $region176: #{full_model_forward.1} parent=1 // pred_region
      %388 = dma.done [#allocation27], 512
    $region177: #{full_model_forward.1} parent=1 // pred_fallthru
      _
    // Predicated region
    $region178: #{full_model_forward.1} parent=1 // pred_check
      _
    $region179: #{full_model_forward.1} parent=1 // pred_check_branch
      %390 = sbr.rel (0) target = $region181
    $region180: #{full_model_forward.1} parent=1 // pred_region
      %391 = dma.done [#allocation30], 32768
    $region181: #{full_model_forward.1} parent=1 // pred_fallthru
      _
    // Predicated region
    $region182: #{full_model_forward.1} parent=1 // pred_check
      _
    $region183: #{full_model_forward.1} parent=1 // pred_check_branch
      %393 = sbr.rel (0) target = $region185
    $region184: #{full_model_forward.1} parent=1 // pred_region
      %394 = dma.done [#allocation30], 64
    $region185: #{full_model_forward.1} parent=1 // pred_fallthru
      _
    // Predicated region
    $region186: #{full_model_forward.1} parent=1 // pred_check
      _
    $region187: #{full_model_forward.1} parent=1 // pred_check_branch
      %396 = sbr.rel (0) target = $region189
    $region188: #{full_model_forward.1} parent=1 // pred_region
      %397 = dma.done [#allocation33], 64
    $region189: #{full_model_forward.1} parent=1 // pred_fallthru
      _
    // Predicated region
    $region190: #{full_model_forward.1} parent=1 // pred_check
      _
    $region191: #{full_model_forward.1} parent=1 // pred_check_branch
      %399 = sbr.rel (0) target = $region193
    $region192: #{full_model_forward.1} parent=1 // pred_region
      %400 = dma.done [#allocation33], 64
    $region193: #{full_model_forward.1} parent=1 // pred_fallthru
      _
    // Predicated region
    $region194: #{full_model_forward.1} parent=1 // pred_check
      _
    $region195: #{full_model_forward.1} parent=1 // pred_check_branch
      %402 = sbr.rel (0) target = $region197
    $region196: #{full_model_forward.1} parent=1 // pred_region
      %403 = dma.done [#allocation36], 64
    $region197: #{full_model_forward.1} parent=1 // pred_fallthru
      _
    // Predicated region
    $region198: #{full_model_forward.1} parent=1 // pred_check
      _
    $region199: #{full_model_forward.1} parent=1 // pred_check_branch
      %405 = sbr.rel (0) target = $region201
    $region200: #{full_model_forward.1} parent=1 // pred_region
      %406 = dma.done [#allocation36], 1024
    $region201: #{full_model_forward.1} parent=1 // pred_fallthru
      _
    // Predicated region
    $region202: #{full_model_forward.1} parent=1 // pred_check
      _
    $region203: #{full_model_forward.1} parent=1 // pred_check_branch
      %408 = sbr.rel (0) target = $region205
    $region204: #{full_model_forward.1} parent=1 // pred_region
      %409 = dma.done [#allocation39], 16
    $region205: #{full_model_forward.1} parent=1 // pred_fallthru
      _
    // Predicated region
    $region206: #{full_model_forward.1} parent=1 // pred_check
      _
    $region207: #{full_model_forward.1} parent=1 // pred_check_branch
      %411 = sbr.rel (0) target = $region209
    $region208: #{full_model_forward.1} parent=1 // pred_region
      %412 = dma.done [#allocation39], 16
    $region209: #{full_model_forward.1} parent=1 // pred_fallthru
      _
    %v414 = vld [vmem:[#allocation2] sm:$0xff]
    %v415 = vld [vmem:[#allocation2 + $0x8] sm:$0xff]
    %v416 = vld [vmem:[#allocation2 + $0x10] sm:$0xff]
    %v417 = vld [vmem:[#allocation2 + $0x18] sm:$0xff]
    %v418 = vld [vmem:[#allocation2 + $0x20] sm:$0xff]
    %v419 = vld [vmem:[#allocation2 + $0x28] sm:$0xff]
    %v420 = vld [vmem:[#allocation2 + $0x30] sm:$0xff]
    %v421 = vld [vmem:[#allocation2 + $0x38] sm:$0xff]
    %v422 = vld [vmem:[#allocation5] sm:$0xff]
    %v423 = vld [vmem:[#allocation5 + $0x8] sm:$0xff]
    %v424 = vld [vmem:[#allocation5 + $0x10] sm:$0xff]
    %v425 = vld [vmem:[#allocation5 + $0x18] sm:$0xff]
    %v426 = vld [vmem:[#allocation5 + $0x20] sm:$0xff]
    %v427 = vld [vmem:[#allocation5 + $0x28] sm:$0xff]
    %v428 = vld [vmem:[#allocation5 + $0x30] sm:$0xff]
    %v429 = vld [vmem:[#allocation5 + $0x38] sm:$0xff]
    %v430 = vmul.f32 %v422, 0.1
    %v431 = vmul.f32 %v423, 0.1
    %v432 = vmul.f32 %v424, 0.1
    %v433 = vmul.f32 %v425, 0.1
    %v434 = vmul.f32 %v426, 0.1
    %v435 = vmul.f32 %v427, 0.1
    %v436 = vmul.f32 %v428, 0.1
    %v437 = vmul.f32 %v429, 0.1
    %v438 = vadd.f32 %v414, %v430
    %v439 = vadd.f32 %v415, %v431
    %v440 = vadd.f32 %v416, %v432
    %v441 = vadd.f32 %v417, %v433
    %v442 = vadd.f32 %v418, %v434
    %v443 = vadd.f32 %v419, %v435
    %v444 = vadd.f32 %v420, %v436
    %v445 = vadd.f32 %v421, %v437
    %v446 = vld [vmem:[#allocation7] sm:$0xff]
    %v447 = vld [vmem:[#allocation7 + $0x8] sm:$0xff]
    %v448 = vld [vmem:[#allocation7 + $0x10] sm:$0xff]
    %v449 = vld [vmem:[#allocation7 + $0x18] sm:$0xff]
    %v450 = vld [vmem:[#allocation7 + $0x20] sm:$0xff]
    %v451 = vld [vmem:[#allocation7 + $0x28] sm:$0xff]
    %v452 = vld [vmem:[#allocation7 + $0x30] sm:$0xff]
    %v453 = vld [vmem:[#allocation7 + $0x38] sm:$0xff]
    %v454 = vld [vmem:[#allocation7 + $0x40] sm:$0xff]
    %v455 = vld [vmem:[#allocation7 + $0x48] sm:$0xff]
    %v456 = vld [vmem:[#allocation7 + $0x50] sm:$0xff]
    %v457 = vld [vmem:[#allocation7 + $0x58] sm:$0xff]
    %v458 = vld [vmem:[#allocation7 + $0x60] sm:$0xff]
    %v459 = vld [vmem:[#allocation7 + $0x68] sm:$0xff]
    %v460 = vld [vmem:[#allocation7 + $0x70] sm:$0xff]
    %v461 = vld [vmem:[#allocation7 + $0x78] sm:$0xff]
    %v462 = vld [vmem:[#allocation7 + $0x80] sm:$0xff]
    %v463 = vld [vmem:[#allocation7 + $0x88] sm:$0xff]
    %v464 = vld [vmem:[#allocation7 + $0x90] sm:$0xff]
    %v465 = vld [vmem:[#allocation7 + $0x98] sm:$0xff]
    %v466 = vld [vmem:[#allocation7 + $0xa0] sm:$0xff]
    %v467 = vld [vmem:[#allocation7 + $0xa8] sm:$0xff]
    %v468 = vld [vmem:[#allocation7 + $0xb0] sm:$0xff]
    %v469 = vld [vmem:[#allocation7 + $0xb8] sm:$0xff]
    %v470 = vld [vmem:[#allocation7 + $0xc0] sm:$0xff]
    %v471 = vld [vmem:[#allocation7 + $0xc8] sm:$0xff]
    %v472 = vld [vmem:[#allocation7 + $0xd0] sm:$0xff]
    %v473 = vld [vmem:[#allocation7 + $0xd8] sm:$0xff]
    %v474 = vld [vmem:[#allocation7 + $0xe0] sm:$0xff]
    %v475 = vld [vmem:[#allocation7 + $0xe8] sm:$0xff]
    %v476 = vld [vmem:[#allocation7 + $0xf0] sm:$0xff]
    %v477 = vld [vmem:[#allocation7 + $0xf8] sm:$0xff]
    %v478 = vld [vmem:[#allocation8] sm:$0x3]
    %v479 = vpack.c.bf16 %v442, %v438
    %v480 = vpack.c.bf16 %v443, %v439
    %v481 = vpack.c.bf16 %v444, %v440
    %v482 = vpack.c.bf16 %v445, %v441
    %v483 = vunpack.c.l.s8.bf16 %v446
    %v484 = vunpack.c.l.s8.bf16 %v447
    %v485 = vunpack.c.h.s8.bf16 %v446
    %v486 = vunpack.c.h.s8.bf16 %v447
    %v487 = vunpack.c.l.s8.bf16 %v448
    %v488 = vunpack.c.l.s8.bf16 %v449
    %v489 = vunpack.c.h.s8.bf16 %v448
    %v490 = vunpack.c.h.s8.bf16 %v449
    %v491 = vunpack.c.l.s8.bf16 %v450
    %v492 = vunpack.c.l.s8.bf16 %v451
    %v493 = vunpack.c.h.s8.bf16 %v450
    %v494 = vunpack.c.h.s8.bf16 %v451
    %v495 = vunpack.c.l.s8.bf16 %v452
    %v496 = vunpack.c.l.s8.bf16 %v453
    %v497 = vunpack.c.h.s8.bf16 %v452
    %v498 = vunpack.c.h.s8.bf16 %v453
    %v499 = vunpack.c.l.s8.bf16 %v454
    %v500 = vunpack.c.l.s8.bf16 %v455
    %v501 = vunpack.c.h.s8.bf16 %v454
    %v502 = vunpack.c.h.s8.bf16 %v455
    %v503 = vunpack.c.l.s8.bf16 %v456
    %v504 = vunpack.c.l.s8.bf16 %v457
    %v505 = vunpack.c.h.s8.bf16 %v456
    %v506 = vunpack.c.h.s8.bf16 %v457
    %v507 = vunpack.c.l.s8.bf16 %v458
    %v508 = vunpack.c.l.s8.bf16 %v459
    %v509 = vunpack.c.h.s8.bf16 %v458
    %v510 = vunpack.c.h.s8.bf16 %v459
    %v511 = vunpack.c.l.s8.bf16 %v460
    %v512 = vunpack.c.l.s8.bf16 %v461
    %v513 = vunpack.c.h.s8.bf16 %v460
    %v514 = vunpack.c.h.s8.bf16 %v461
    %v515 = vunpack.c.l.s8.bf16 %v462
    %v516 = vunpack.c.l.s8.bf16 %v463
    %v517 = vunpack.c.h.s8.bf16 %v462
    %v518 = vunpack.c.h.s8.bf16 %v463
    %v519 = vunpack.c.l.s8.bf16 %v464
    %v520 = vunpack.c.l.s8.bf16 %v465
    %v521 = vunpack.c.h.s8.bf16 %v464
    %v522 = vunpack.c.h.s8.bf16 %v465
    %v523 = vunpack.c.l.s8.bf16 %v466
    %v524 = vunpack.c.l.s8.bf16 %v467
    %v525 = vunpack.c.h.s8.bf16 %v466
    %v526 = vunpack.c.h.s8.bf16 %v467
    %v527 = vunpack.c.l.s8.bf16 %v468
    %v528 = vunpack.c.l.s8.bf16 %v469
    %v529 = vunpack.c.h.s8.bf16 %v468
    %v530 = vunpack.c.h.s8.bf16 %v469
    %v531 = vunpack.c.l.s8.bf16 %v470
    %v532 = vunpack.c.l.s8.bf16 %v471
    %v533 = vunpack.c.h.s8.bf16 %v470
    %v534 = vunpack.c.h.s8.bf16 %v471
    %v535 = vunpack.c.l.s8.bf16 %v472
    %v536 = vunpack.c.l.s8.bf16 %v473
    %v537 = vunpack.c.h.s8.bf16 %v472
    %v538 = vunpack.c.h.s8.bf16 %v473
    %v539 = vunpack.c.l.s8.bf16 %v474
    %v540 = vunpack.c.l.s8.bf16 %v475
    %v541 = vunpack.c.h.s8.bf16 %v474
    %v542 = vunpack.c.h.s8.bf16 %v475
    %v543 = vunpack.c.l.s8.bf16 %v476
    %v544 = vunpack.c.l.s8.bf16 %v477
    %v545 = vunpack.c.h.s8.bf16 %v476
    %v546 = vunpack.c.h.s8.bf16 %v477
    %547 = vmatprep.subr.bf16.mxu0 %v498
    %548 = vmatpush1.bf16.msra.mxu0 %v497
    %549 = vmatprep.subr.bf16.mxu0 %v496
    %550 = vmatpush1.bf16.msra.mxu0 %v495
    %551 = vmatprep.subr.bf16.mxu0 %v494
    %552 = vmatpush1.bf16.msra.mxu0 %v493
    %553 = vmatprep.subr.bf16.mxu0 %v492
    %554 = vmatpush1.bf16.msra.mxu0 %v491
    %555 = vmatprep.subr.bf16.mxu0 %v490
    %556 = vmatpush1.bf16.msra.mxu0 %v489
    %557 = vmatprep.subr.bf16.mxu0 %v488
    %558 = vmatpush1.bf16.msra.mxu0 %v487
    %559 = vmatprep.subr.bf16.mxu0 %v486
    %560 = vmatpush1.bf16.msra.mxu0 %v485
    %561 = vmatprep.subr.bf16.mxu0 %v484
    %562 = vmatpush1.bf16.msra.mxu0 %v483
    %563 = vmatprep.subr.bf16.mxu0 %v514
    %564 = vmatpush2.bf16.msra.mxu0 %v513
    %565 = vmatprep.subr.bf16.mxu0 %v512
    %566 = vmatpush2.bf16.msra.mxu0 %v511
    %567 = vmatprep.subr.bf16.mxu0 %v510
    %568 = vmatpush2.bf16.msra.mxu0 %v509
    %569 = vmatprep.subr.bf16.mxu0 %v508
    %570 = vmatpush2.bf16.msra.mxu0 %v507
    %571 = vmatprep.subr.bf16.mxu0 %v506
    %572 = vmatpush2.bf16.msra.mxu0 %v505
    %573 = vmatprep.subr.bf16.mxu0 %v504
    %574 = vmatpush2.bf16.msra.mxu0 %v503
    %575 = vmatprep.subr.bf16.mxu0 %v502
    %576 = vmatpush2.bf16.msra.mxu0 %v501
    %577 = vmatprep.subr.bf16.mxu0 %v500
    %578 = vmatpush2.bf16.msra.mxu0 %v499
    %579 = vmatprep.mubr.bf16.mxu0 %v480
    %580 = vmatmul.mubr.bf16.gmra.mxu0 %v479
    %v581 = vpop.f32.mrf.mxu0
    %v582 = vadd.f32 0.0, %v581
    %v583 = vpop.f32.mrf.mxu0
    %v584 = vadd.f32 0.0, %v583
    %v585 = vpop.f32.mrf.mxu0
    %v586 = vadd.f32 0.0, %v585
    %v587 = vpop.f32.mrf.mxu0
    %v588 = vadd.f32 0.0, %v587
    %589 = vdwg.mxu0
    %590 = vmatprep.subr.bf16.mxu0 %v530
    %591 = vmatpush1.bf16.msra.mxu0 %v529
    %592 = vmatprep.subr.bf16.mxu0 %v528
    %593 = vmatpush1.bf16.msra.mxu0 %v527
    %594 = vmatprep.subr.bf16.mxu0 %v526
    %595 = vmatpush1.bf16.msra.mxu0 %v525
    %596 = vmatprep.subr.bf16.mxu0 %v524
    %597 = vmatpush1.bf16.msra.mxu0 %v523
    %598 = vmatprep.subr.bf16.mxu0 %v522
    %599 = vmatpush1.bf16.msra.mxu0 %v521
    %600 = vmatprep.subr.bf16.mxu0 %v520
    %601 = vmatpush1.bf16.msra.mxu0 %v519
    %602 = vmatprep.subr.bf16.mxu0 %v518
    %603 = vmatpush1.bf16.msra.mxu0 %v517
    %604 = vmatprep.subr.bf16.mxu0 %v516
    %605 = vmatpush1.bf16.msra.mxu0 %v515
    %606 = vmatprep.subr.bf16.mxu0 %v546
    %607 = vmatpush2.bf16.msra.mxu0 %v545
    %608 = vmatprep.subr.bf16.mxu0 %v544
    %609 = vmatpush2.bf16.msra.mxu0 %v543
    %610 = vmatprep.subr.bf16.mxu0 %v542
    %611 = vmatpush2.bf16.msra.mxu0 %v541
    %612 = vmatprep.subr.bf16.mxu0 %v540
    %613 = vmatpush2.bf16.msra.mxu0 %v539
    %614 = vmatprep.subr.bf16.mxu0 %v538
    %615 = vmatpush2.bf16.msra.mxu0 %v537
    %616 = vmatprep.subr.bf16.mxu0 %v536
    %617 = vmatpush2.bf16.msra.mxu0 %v535
    %618 = vmatprep.subr.bf16.mxu0 %v534
    %619 = vmatpush2.bf16.msra.mxu0 %v533
    %620 = vmatprep.subr.bf16.mxu0 %v532
    %621 = vmatpush2.bf16.msra.mxu0 %v531
    %622 = vmatprep.mubr.bf16.mxu0 %v482
    %623 = vmatmul.mubr.bf16.gmra.mxu0 %v481
    %v624 = vpop.f32.mrf.mxu0
    %v625 = vadd.f32 %v582, %v624
    %v626 = vpop.f32.mrf.mxu0
    %v627 = vadd.f32 %v584, %v626
    %v628 = vpop.f32.mrf.mxu0
    %v629 = vadd.f32 %v586, %v628
    %v630 = vpop.f32.mrf.mxu0
    %v631 = vadd.f32 %v588, %v630
    %632 = vdwg.mxu0
    %v634 = vlaneseq
    %v635 = vshrl.u32 %v634, 7
    %v636 = vsub.s32 0, %v635
    %v637 = vrot.slane %v478, %v636
    %v638 = vlaneseq
    %v639 = vshrl.u32 %v638, 7
    %v640 = vsub.s32 1, %v639
    %v641 = vrot.slane %v478, %v640
    %v644 = vmul.f32 %v625, %v637
    %v645 = vmul.f32 %v627, %v641
    %v646 = vmul.f32 %v629, %v637
    %v647 = vmul.f32 %v631, %v641
    %v648 = vld [vmem:[#allocation10] sm:$0x3]
    %v650 = vlaneseq
    %v651 = vshrl.u32 %v650, 7
    %v652 = vsub.s32 0, %v651
    %v653 = vrot.slane %v648, %v652
    %v654 = vlaneseq
    %v655 = vshrl.u32 %v654, 7
    %v656 = vsub.s32 1, %v655
    %v657 = vrot.slane %v648, %v656
    %v660 = vadd.f32 %v644, %v653
    %v661 = vadd.f32 %v645, %v657
    %v662 = vadd.f32 %v646, %v653
    %v663 = vadd.f32 %v647, %v657
    %v664 = vmax.f32 %v660, 0.0
    %v665 = vmax.f32 %v661, 0.0
    %v666 = vmax.f32 %v662, 0.0
    %v667 = vmax.f32 %v663, 0.0
    %v668 = vld [vmem:[#allocation11] sm:$0xff]
    %v669 = vld [vmem:[#allocation11 + $0x8] sm:$0xff]
    %v670 = vld [vmem:[#allocation11 + $0x10] sm:$0xff]
    %v671 = vld [vmem:[#allocation11 + $0x18] sm:$0xff]
    %v672 = vld [vmem:[#allocation11 + $0x20] sm:$0xff]
    %v673 = vld [vmem:[#allocation11 + $0x28] sm:$0xff]
    %v674 = vld [vmem:[#allocation11 + $0x30] sm:$0xff]
    %v675 = vld [vmem:[#allocation11 + $0x38] sm:$0xff]
    %v676 = vld [vmem:[#allocation11 + $0x40] sm:$0xff]
    %v677 = vld [vmem:[#allocation11 + $0x48] sm:$0xff]
    %v678 = vld [vmem:[#allocation11 + $0x50] sm:$0xff]
    %v679 = vld [vmem:[#allocation11 + $0x58] sm:$0xff]
    %v680 = vld [vmem:[#allocation11 + $0x60] sm:$0xff]
    %v681 = vld [vmem:[#allocation11 + $0x68] sm:$0xff]
    %v682 = vld [vmem:[#allocation11 + $0x70] sm:$0xff]
    %v683 = vld [vmem:[#allocation11 + $0x78] sm:$0xff]
    %v684 = vld [vmem:[#allocation13] sm:$0x3]
    %v685 = vpack.c.bf16 %v666, %v664
    %v686 = vpack.c.bf16 %v667, %v665
    %v687 = vunpack.c.l.s8.bf16 %v668
    %v688 = vunpack.c.l.s8.bf16 %v669
    %v689 = vunpack.c.h.s8.bf16 %v668
    %v690 = vunpack.c.h.s8.bf16 %v669
    %v691 = vunpack.c.l.s8.bf16 %v670
    %v692 = vunpack.c.l.s8.bf16 %v671
    %v693 = vunpack.c.h.s8.bf16 %v670
    %v694 = vunpack.c.h.s8.bf16 %v671
    %v695 = vunpack.c.l.s8.bf16 %v672
    %v696 = vunpack.c.l.s8.bf16 %v673
    %v697 = vunpack.c.h.s8.bf16 %v672
    %v698 = vunpack.c.h.s8.bf16 %v673
    %v699 = vunpack.c.l.s8.bf16 %v674
    %v700 = vunpack.c.l.s8.bf16 %v675
    %v701 = vunpack.c.h.s8.bf16 %v674
    %v702 = vunpack.c.h.s8.bf16 %v675
    %v703 = vunpack.c.l.s8.bf16 %v676
    %v704 = vunpack.c.l.s8.bf16 %v677
    %v705 = vunpack.c.h.s8.bf16 %v676
    %v706 = vunpack.c.h.s8.bf16 %v677
    %v707 = vunpack.c.l.s8.bf16 %v678
    %v708 = vunpack.c.l.s8.bf16 %v679
    %v709 = vunpack.c.h.s8.bf16 %v678
    %v710 = vunpack.c.h.s8.bf16 %v679
    %v711 = vunpack.c.l.s8.bf16 %v680
    %v712 = vunpack.c.l.s8.bf16 %v681
    %v713 = vunpack.c.h.s8.bf16 %v680
    %v714 = vunpack.c.h.s8.bf16 %v681
    %v715 = vunpack.c.l.s8.bf16 %v682
    %v716 = vunpack.c.l.s8.bf16 %v683
    %v717 = vunpack.c.h.s8.bf16 %v682
    %v718 = vunpack.c.h.s8.bf16 %v683
    %719 = vmatprep.subr.bf16.mxu0 %v702
    %720 = vmatpush1.bf16.msra.mxu0 %v701
    %721 = vmatprep.subr.bf16.mxu0 %v700
    %722 = vmatpush1.bf16.msra.mxu0 %v699
    %723 = vmatprep.subr.bf16.mxu0 %v698
    %724 = vmatpush1.bf16.msra.mxu0 %v697
    %725 = vmatprep.subr.bf16.mxu0 %v696
    %726 = vmatpush1.bf16.msra.mxu0 %v695
    %727 = vmatprep.subr.bf16.mxu0 %v694
    %728 = vmatpush1.bf16.msra.mxu0 %v693
    %729 = vmatprep.subr.bf16.mxu0 %v692
    %730 = vmatpush1.bf16.msra.mxu0 %v691
    %731 = vmatprep.subr.bf16.mxu0 %v690
    %732 = vmatpush1.bf16.msra.mxu0 %v689
    %733 = vmatprep.subr.bf16.mxu0 %v688
    %734 = vmatpush1.bf16.msra.mxu0 %v687
    %735 = vmatprep.subr.bf16.mxu0 %v718
    %736 = vmatpush2.bf16.msra.mxu0 %v717
    %737 = vmatprep.subr.bf16.mxu0 %v716
    %738 = vmatpush2.bf16.msra.mxu0 %v715
    %739 = vmatprep.subr.bf16.mxu0 %v714
    %740 = vmatpush2.bf16.msra.mxu0 %v713
    %741 = vmatprep.subr.bf16.mxu0 %v712
    %742 = vmatpush2.bf16.msra.mxu0 %v711
    %743 = vmatprep.subr.bf16.mxu0 %v710
    %744 = vmatpush2.bf16.msra.mxu0 %v709
    %745 = vmatprep.subr.bf16.mxu0 %v708
    %746 = vmatpush2.bf16.msra.mxu0 %v707
    %747 = vmatprep.subr.bf16.mxu0 %v706
    %748 = vmatpush2.bf16.msra.mxu0 %v705
    %749 = vmatprep.subr.bf16.mxu0 %v704
    %750 = vmatpush2.bf16.msra.mxu0 %v703
    %751 = vmatprep.mubr.bf16.mxu0 %v686
    %752 = vmatmul.mubr.bf16.gmra.mxu0 %v685
    %v753 = vpop.f32.mrf.mxu0
    %v754 = vadd.f32 0.0, %v753
    %v755 = vpop.f32.mrf.mxu0
    %v756 = vadd.f32 0.0, %v755
    %v757 = vpop.f32.mrf.mxu0
    %v758 = vadd.f32 0.0, %v757
    %v759 = vpop.f32.mrf.mxu0
    %v760 = vadd.f32 0.0, %v759
    %761 = vdwg.mxu0
    %v763 = vlaneseq
    %v764 = vshrl.u32 %v763, 7
    %v765 = vsub.s32 0, %v764
    %v766 = vrot.slane %v684, %v765
    %v767 = vlaneseq
    %v768 = vshrl.u32 %v767, 7
    %v769 = vsub.s32 1, %v768
    %v770 = vrot.slane %v684, %v769
    %v773 = vmul.f32 %v754, %v766
    %v774 = vmul.f32 %v756, %v770
    %v775 = vmul.f32 %v758, %v766
    %v776 = vmul.f32 %v760, %v770
    %v777 = vld [vmem:[#allocation14] sm:$0x3]
    %v779 = vlaneseq
    %v780 = vshrl.u32 %v779, 7
    %v781 = vsub.s32 0, %v780
    %v782 = vrot.slane %v777, %v781
    %v783 = vlaneseq
    %v784 = vshrl.u32 %v783, 7
    %v785 = vsub.s32 1, %v784
    %v786 = vrot.slane %v777, %v785
    %v789 = vadd.f32 %v773, %v782
    %v790 = vadd.f32 %v774, %v786
    %v791 = vadd.f32 %v775, %v782
    %v792 = vadd.f32 %v776, %v786
    %v793 = vld [vmem:[#allocation16] sm:$0xff]
    %v794 = vld [vmem:[#allocation16 + $0x8] sm:$0xff]
    %v795 = vld [vmem:[#allocation16 + $0x10] sm:$0xff]
    %v796 = vld [vmem:[#allocation16 + $0x18] sm:$0xff]
    %v797 = vld [vmem:[#allocation16 + $0x20] sm:$0xff]
    %v798 = vld [vmem:[#allocation16 + $0x28] sm:$0xff]
    %v799 = vld [vmem:[#allocation16 + $0x30] sm:$0xff]
    %v800 = vld [vmem:[#allocation16 + $0x38] sm:$0xff]
    %v801 = vld [vmem:[#allocation16 + $0x40] sm:$0xff]
    %v802 = vld [vmem:[#allocation16 + $0x48] sm:$0xff]
    %v803 = vld [vmem:[#allocation16 + $0x50] sm:$0xff]
    %v804 = vld [vmem:[#allocation16 + $0x58] sm:$0xff]
    %v805 = vld [vmem:[#allocation16 + $0x60] sm:$0xff]
    %v806 = vld [vmem:[#allocation16 + $0x68] sm:$0xff]
    %v807 = vld [vmem:[#allocation16 + $0x70] sm:$0xff]
    %v808 = vld [vmem:[#allocation16 + $0x78] sm:$0xff]
    %v809 = vld [vmem:[#allocation16 + $0x80] sm:$0xff]
    %v810 = vld [vmem:[#allocation16 + $0x88] sm:$0xff]
    %v811 = vld [vmem:[#allocation16 + $0x90] sm:$0xff]
    %v812 = vld [vmem:[#allocation16 + $0x98] sm:$0xff]
    %v813 = vld [vmem:[#allocation16 + $0xa0] sm:$0xff]
    %v814 = vld [vmem:[#allocation16 + $0xa8] sm:$0xff]
    %v815 = vld [vmem:[#allocation16 + $0xb0] sm:$0xff]
    %v816 = vld [vmem:[#allocation16 + $0xb8] sm:$0xff]
    %v817 = vld [vmem:[#allocation16 + $0xc0] sm:$0xff]
    %v818 = vld [vmem:[#allocation16 + $0xc8] sm:$0xff]
    %v819 = vld [vmem:[#allocation16 + $0xd0] sm:$0xff]
    %v820 = vld [vmem:[#allocation16 + $0xd8] sm:$0xff]
    %v821 = vld [vmem:[#allocation16 + $0xe0] sm:$0xff]
    %v822 = vld [vmem:[#allocation16 + $0xe8] sm:$0xff]
    %v823 = vld [vmem:[#allocation16 + $0xf0] sm:$0xff]
    %v824 = vld [vmem:[#allocation16 + $0xf8] sm:$0xff]
    %v825 = vld [vmem:[#allocation16 + $0x100] sm:$0xff]
    %v826 = vld [vmem:[#allocation16 + $0x108] sm:$0xff]
    %v827 = vld [vmem:[#allocation16 + $0x110] sm:$0xff]
    %v828 = vld [vmem:[#allocation16 + $0x118] sm:$0xff]
    %v829 = vld [vmem:[#allocation16 + $0x120] sm:$0xff]
    %v830 = vld [vmem:[#allocation16 + $0x128] sm:$0xff]
    %v831 = vld [vmem:[#allocation16 + $0x130] sm:$0xff]
    %v832 = vld [vmem:[#allocation16 + $0x138] sm:$0xff]
    %v833 = vld [vmem:[#allocation16 + $0x140] sm:$0xff]
    %v834 = vld [vmem:[#allocation16 + $0x148] sm:$0xff]
    %v835 = vld [vmem:[#allocation16 + $0x150] sm:$0xff]
    %v836 = vld [vmem:[#allocation16 + $0x158] sm:$0xff]
    %v837 = vld [vmem:[#allocation16 + $0x160] sm:$0xff]
    %v838 = vld [vmem:[#allocation16 + $0x168] sm:$0xff]
    %v839 = vld [vmem:[#allocation16 + $0x170] sm:$0xff]
    %v840 = vld [vmem:[#allocation16 + $0x178] sm:$0xff]
    %v841 = vld [vmem:[#allocation17] sm:$0x3f]
    %v842 = vpack.c.bf16 %v791, %v789
    %v843 = vpack.c.bf16 %v792, %v790
    %v844 = vunpack.c.l.s8.bf16 %v793
    %v845 = vunpack.c.l.s8.bf16 %v794
    %v846 = vunpack.c.l.s8.bf16 %v795
    %v847 = vunpack.c.l.s8.bf16 %v796
    %v848 = vunpack.c.l.s8.bf16 %v797
    %v849 = vunpack.c.l.s8.bf16 %v798
    %v850 = vunpack.c.h.s8.bf16 %v793
    %v851 = vunpack.c.h.s8.bf16 %v794
    %v852 = vunpack.c.h.s8.bf16 %v795
    %v853 = vunpack.c.h.s8.bf16 %v796
    %v854 = vunpack.c.h.s8.bf16 %v797
    %v855 = vunpack.c.h.s8.bf16 %v798
    %v856 = vunpack.c.l.s8.bf16 %v799
    %v857 = vunpack.c.l.s8.bf16 %v800
    %v858 = vunpack.c.l.s8.bf16 %v801
    %v859 = vunpack.c.l.s8.bf16 %v802
    %v860 = vunpack.c.l.s8.bf16 %v803
    %v861 = vunpack.c.l.s8.bf16 %v804
    %v862 = vunpack.c.h.s8.bf16 %v799
    %v863 = vunpack.c.h.s8.bf16 %v800
    %v864 = vunpack.c.h.s8.bf16 %v801
    %v865 = vunpack.c.h.s8.bf16 %v802
    %v866 = vunpack.c.h.s8.bf16 %v803
    %v867 = vunpack.c.h.s8.bf16 %v804
    %v868 = vunpack.c.l.s8.bf16 %v805
    %v869 = vunpack.c.l.s8.bf16 %v806
    %v870 = vunpack.c.l.s8.bf16 %v807
    %v871 = vunpack.c.l.s8.bf16 %v808
    %v872 = vunpack.c.l.s8.bf16 %v809
    %v873 = vunpack.c.l.s8.bf16 %v810
    %v874 = vunpack.c.h.s8.bf16 %v805
    %v875 = vunpack.c.h.s8.bf16 %v806
    %v876 = vunpack.c.h.s8.bf16 %v807
    %v877 = vunpack.c.h.s8.bf16 %v808
    %v878 = vunpack.c.h.s8.bf16 %v809
    %v879 = vunpack.c.h.s8.bf16 %v810
    %v880 = vunpack.c.l.s8.bf16 %v811
    %v881 = vunpack.c.l.s8.bf16 %v812
    %v882 = vunpack.c.l.s8.bf16 %v813
    %v883 = vunpack.c.l.s8.bf16 %v814
    %v884 = vunpack.c.l.s8.bf16 %v815
    %v885 = vunpack.c.l.s8.bf16 %v816
    %v886 = vunpack.c.h.s8.bf16 %v811
    %v887 = vunpack.c.h.s8.bf16 %v812
    %v888 = vunpack.c.h.s8.bf16 %v813
    %v889 = vunpack.c.h.s8.bf16 %v814
    %v890 = vunpack.c.h.s8.bf16 %v815
    %v891 = vunpack.c.h.s8.bf16 %v816
    %v892 = vunpack.c.l.s8.bf16 %v817
    %v893 = vunpack.c.l.s8.bf16 %v818
    %v894 = vunpack.c.l.s8.bf16 %v819
    %v895 = vunpack.c.l.s8.bf16 %v820
    %v896 = vunpack.c.l.s8.bf16 %v821
    %v897 = vunpack.c.l.s8.bf16 %v822
    %v898 = vunpack.c.h.s8.bf16 %v817
    %v899 = vunpack.c.h.s8.bf16 %v818
    %v900 = vunpack.c.h.s8.bf16 %v819
    %v901 = vunpack.c.h.s8.bf16 %v820
    %v902 = vunpack.c.h.s8.bf16 %v821
    %v903 = vunpack.c.h.s8.bf16 %v822
    %v904 = vunpack.c.l.s8.bf16 %v823
    %v905 = vunpack.c.l.s8.bf16 %v824
    %v906 = vunpack.c.l.s8.bf16 %v825
    %v907 = vunpack.c.l.s8.bf16 %v826
    %v908 = vunpack.c.l.s8.bf16 %v827
    %v909 = vunpack.c.l.s8.bf16 %v828
    %v910 = vunpack.c.h.s8.bf16 %v823
    %v911 = vunpack.c.h.s8.bf16 %v824
    %v912 = vunpack.c.h.s8.bf16 %v825
    %v913 = vunpack.c.h.s8.bf16 %v826
    %v914 = vunpack.c.h.s8.bf16 %v827
    %v915 = vunpack.c.h.s8.bf16 %v828
    %v916 = vunpack.c.l.s8.bf16 %v829
    %v917 = vunpack.c.l.s8.bf16 %v830
    %v918 = vunpack.c.l.s8.bf16 %v831
    %v919 = vunpack.c.l.s8.bf16 %v832
    %v920 = vunpack.c.l.s8.bf16 %v833
    %v921 = vunpack.c.l.s8.bf16 %v834
    %v922 = vunpack.c.h.s8.bf16 %v829
    %v923 = vunpack.c.h.s8.bf16 %v830
    %v924 = vunpack.c.h.s8.bf16 %v831
    %v925 = vunpack.c.h.s8.bf16 %v832
    %v926 = vunpack.c.h.s8.bf16 %v833
    %v927 = vunpack.c.h.s8.bf16 %v834
    %v928 = vunpack.c.l.s8.bf16 %v835
    %v929 = vunpack.c.l.s8.bf16 %v836
    %v930 = vunpack.c.l.s8.bf16 %v837
    %v931 = vunpack.c.l.s8.bf16 %v838
    %v932 = vunpack.c.l.s8.bf16 %v839
    %v933 = vunpack.c.l.s8.bf16 %v840
    %v934 = vunpack.c.h.s8.bf16 %v835
    %v935 = vunpack.c.h.s8.bf16 %v836
    %v936 = vunpack.c.h.s8.bf16 %v837
    %v937 = vunpack.c.h.s8.bf16 %v838
    %v938 = vunpack.c.h.s8.bf16 %v839
    %v939 = vunpack.c.h.s8.bf16 %v840
    %940 = vmatprep.subr.bf16.mxu0 %v887
    %941 = vmatpush1.bf16.msra.mxu0 %v886
    %942 = vmatprep.subr.bf16.mxu0 %v881
    %943 = vmatpush1.bf16.msra.mxu0 %v880
    %944 = vmatprep.subr.bf16.mxu0 %v875
    %945 = vmatpush1.bf16.msra.mxu0 %v874
    %946 = vmatprep.subr.bf16.mxu0 %v869
    %947 = vmatpush1.bf16.msra.mxu0 %v868
    %948 = vmatprep.subr.bf16.mxu0 %v863
    %949 = vmatpush1.bf16.msra.mxu0 %v862
    %950 = vmatprep.subr.bf16.mxu0 %v857
    %951 = vmatpush1.bf16.msra.mxu0 %v856
    %952 = vmatprep.subr.bf16.mxu0 %v851
    %953 = vmatpush1.bf16.msra.mxu0 %v850
    %954 = vmatprep.subr.bf16.mxu0 %v845
    %955 = vmatpush1.bf16.msra.mxu0 %v844
    %956 = vmatprep.subr.bf16.mxu0 %v935
    %957 = vmatpush2.bf16.msra.mxu0 %v934
    %958 = vmatprep.subr.bf16.mxu0 %v929
    %959 = vmatpush2.bf16.msra.mxu0 %v928
    %960 = vmatprep.subr.bf16.mxu0 %v923
    %961 = vmatpush2.bf16.msra.mxu0 %v922
    %962 = vmatprep.subr.bf16.mxu0 %v917
    %963 = vmatpush2.bf16.msra.mxu0 %v916
    %964 = vmatprep.subr.bf16.mxu0 %v911
    %965 = vmatpush2.bf16.msra.mxu0 %v910
    %966 = vmatprep.subr.bf16.mxu0 %v905
    %967 = vmatpush2.bf16.msra.mxu0 %v904
    %968 = vmatprep.subr.bf16.mxu0 %v899
    %969 = vmatpush2.bf16.msra.mxu0 %v898
    %970 = vmatprep.subr.bf16.mxu0 %v893
    %971 = vmatpush2.bf16.msra.mxu0 %v892
    %972 = vmatprep.mubr.bf16.mxu0 %v843
    %973 = vmatmul.mubr.bf16.gmra.mxu0 %v842
    %v974 = vpop.f32.mrf.mxu0
    %v975 = vadd.f32 0.0, %v974
    %v976 = vpop.f32.mrf.mxu0
    %v977 = vadd.f32 0.0, %v976
    %v978 = vpop.f32.mrf.mxu0
    %v979 = vadd.f32 0.0, %v978
    %v980 = vpop.f32.mrf.mxu0
    %v981 = vadd.f32 0.0, %v980
    %982 = vdwg.mxu0
    %983 = vmatprep.subr.bf16.mxu0 %v889
    %984 = vmatpush1.bf16.msra.mxu0 %v888
    %985 = vmatprep.subr.bf16.mxu0 %v883
    %986 = vmatpush1.bf16.msra.mxu0 %v882
    %987 = vmatprep.subr.bf16.mxu0 %v877
    %988 = vmatpush1.bf16.msra.mxu0 %v876
    %989 = vmatprep.subr.bf16.mxu0 %v871
    %990 = vmatpush1.bf16.msra.mxu0 %v870
    %991 = vmatprep.subr.bf16.mxu0 %v865
    %992 = vmatpush1.bf16.msra.mxu0 %v864
    %993 = vmatprep.subr.bf16.mxu0 %v859
    %994 = vmatpush1.bf16.msra.mxu0 %v858
    %995 = vmatprep.subr.bf16.mxu0 %v853
    %996 = vmatpush1.bf16.msra.mxu0 %v852
    %997 = vmatprep.subr.bf16.mxu0 %v847
    %998 = vmatpush1.bf16.msra.mxu0 %v846
    %999 = vmatprep.subr.bf16.mxu0 %v937
    %1000 = vmatpush2.bf16.msra.mxu0 %v936
    %1001 = vmatprep.subr.bf16.mxu0 %v931
    %1002 = vmatpush2.bf16.msra.mxu0 %v930
    %1003 = vmatprep.subr.bf16.mxu0 %v925
    %1004 = vmatpush2.bf16.msra.mxu0 %v924
    %1005 = vmatprep.subr.bf16.mxu0 %v919
    %1006 = vmatpush2.bf16.msra.mxu0 %v918
    %1007 = vmatprep.subr.bf16.mxu0 %v913
    %1008 = vmatpush2.bf16.msra.mxu0 %v912
    %1009 = vmatprep.subr.bf16.mxu0 %v907
    %1010 = vmatpush2.bf16.msra.mxu0 %v906
    %1011 = vmatprep.subr.bf16.mxu0 %v901
    %1012 = vmatpush2.bf16.msra.mxu0 %v900
    %1013 = vmatprep.subr.bf16.mxu0 %v895
    %1014 = vmatpush2.bf16.msra.mxu0 %v894
    %1015 = vmatprep.mubr.bf16.mxu0 %v843
    %1016 = vmatmul.mubr.bf16.gmra.mxu0 %v842
    %v1017 = vpop.f32.mrf.mxu0
    %v1018 = vadd.f32 0.0, %v1017
    %v1019 = vpop.f32.mrf.mxu0
    %v1020 = vadd.f32 0.0, %v1019
    %v1021 = vpop.f32.mrf.mxu0
    %v1022 = vadd.f32 0.0, %v1021
    %v1023 = vpop.f32.mrf.mxu0
    %v1024 = vadd.f32 0.0, %v1023
    %1025 = vdwg.mxu0
    %1026 = vmatprep.subr.bf16.mxu0 %v891
    %1027 = vmatpush1.bf16.msra.mxu0 %v890
    %1028 = vmatprep.subr.bf16.mxu0 %v885
    %1029 = vmatpush1.bf16.msra.mxu0 %v884
    %1030 = vmatprep.subr.bf16.mxu0 %v879
    %1031 = vmatpush1.bf16.msra.mxu0 %v878
    %1032 = vmatprep.subr.bf16.mxu0 %v873
    %1033 = vmatpush1.bf16.msra.mxu0 %v872
    %1034 = vmatprep.subr.bf16.mxu0 %v867
    %1035 = vmatpush1.bf16.msra.mxu0 %v866
    %1036 = vmatprep.subr.bf16.mxu0 %v861
    %1037 = vmatpush1.bf16.msra.mxu0 %v860
    %1038 = vmatprep.subr.bf16.mxu0 %v855
    %1039 = vmatpush1.bf16.msra.mxu0 %v854
    %1040 = vmatprep.subr.bf16.mxu0 %v849
    %1041 = vmatpush1.bf16.msra.mxu0 %v848
    %1042 = vmatprep.subr.bf16.mxu0 %v939
    %1043 = vmatpush2.bf16.msra.mxu0 %v938
    %1044 = vmatprep.subr.bf16.mxu0 %v933
    %1045 = vmatpush2.bf16.msra.mxu0 %v932
    %1046 = vmatprep.subr.bf16.mxu0 %v927
    %1047 = vmatpush2.bf16.msra.mxu0 %v926
    %1048 = vmatprep.subr.bf16.mxu0 %v921
    %1049 = vmatpush2.bf16.msra.mxu0 %v920
    %1050 = vmatprep.subr.bf16.mxu0 %v915
    %1051 = vmatpush2.bf16.msra.mxu0 %v914
    %1052 = vmatprep.subr.bf16.mxu0 %v909
    %1053 = vmatpush2.bf16.msra.mxu0 %v908
    %1054 = vmatprep.subr.bf16.mxu0 %v903
    %1055 = vmatpush2.bf16.msra.mxu0 %v902
    %1056 = vmatprep.subr.bf16.mxu0 %v897
    %1057 = vmatpush2.bf16.msra.mxu0 %v896
    %1058 = vmatprep.mubr.bf16.mxu0 %v843
    %1059 = vmatmul.mubr.bf16.gmra.mxu0 %v842
    %v1060 = vpop.f32.mrf.mxu0
    %v1061 = vadd.f32 0.0, %v1060
    %v1062 = vpop.f32.mrf.mxu0
    %v1063 = vadd.f32 0.0, %v1062
    %v1064 = vpop.f32.mrf.mxu0
    %v1065 = vadd.f32 0.0, %v1064
    %v1066 = vpop.f32.mrf.mxu0
    %v1067 = vadd.f32 0.0, %v1066
    %1068 = vdwg.mxu0
    %v1070 = vlaneseq
    %v1071 = vshrl.u32 %v1070, 7
    %v1072 = vsub.s32 0, %v1071
    %v1073 = vrot.slane %v841, %v1072
    %v1074 = vlaneseq
    %v1075 = vshrl.u32 %v1074, 7
    %v1076 = vsub.s32 1, %v1075
    %v1077 = vrot.slane %v841, %v1076
    %v1078 = vlaneseq
    %v1079 = vshrl.u32 %v1078, 7
    %v1080 = vsub.s32 2, %v1079
    %v1081 = vrot.slane %v841, %v1080
    %v1082 = vlaneseq
    %v1083 = vshrl.u32 %v1082, 7
    %v1084 = vsub.s32 3, %v1083
    %v1085 = vrot.slane %v841, %v1084
    %v1086 = vlaneseq
    %v1087 = vshrl.u32 %v1086, 7
    %v1088 = vsub.s32 4, %v1087
    %v1089 = vrot.slane %v841, %v1088
    %v1090 = vlaneseq
    %v1091 = vshrl.u32 %v1090, 7
    %v1092 = vsub.s32 5, %v1091
    %v1093 = vrot.slane %v841, %v1092
    %v1100 = vmul.f32 %v975, %v1073
    %v1101 = vmul.f32 %v977, %v1077
    %v1102 = vmul.f32 %v1018, %v1081
    %v1103 = vmul.f32 %v1020, %v1085
    %v1104 = vmul.f32 %v1061, %v1089
    %v1105 = vmul.f32 %v1063, %v1093
    %v1106 = vmul.f32 %v979, %v1073
    %v1107 = vmul.f32 %v981, %v1077
    %v1108 = vmul.f32 %v1022, %v1081
    %v1109 = vmul.f32 %v1024, %v1085
    %v1110 = vmul.f32 %v1065, %v1089
    %v1111 = vmul.f32 %v1067, %v1093
    %v1112 = vld [vmem:[#allocation19] sm:$0x3f]
    %v1114 = vlaneseq
    %v1115 = vshrl.u32 %v1114, 7
    %v1116 = vsub.s32 0, %v1115
    %v1117 = vrot.slane %v1112, %v1116
    %v1118 = vlaneseq
    %v1119 = vshrl.u32 %v1118, 7
    %v1120 = vsub.s32 1, %v1119
    %v1121 = vrot.slane %v1112, %v1120
    %v1122 = vlaneseq
    %v1123 = vshrl.u32 %v1122, 7
    %v1124 = vsub.s32 2, %v1123
    %v1125 = vrot.slane %v1112, %v1124
    %v1126 = vlaneseq
    %v1127 = vshrl.u32 %v1126, 7
    %v1128 = vsub.s32 3, %v1127
    %v1129 = vrot.slane %v1112, %v1128
    %v1130 = vlaneseq
    %v1131 = vshrl.u32 %v1130, 7
    %v1132 = vsub.s32 4, %v1131
    %v1133 = vrot.slane %v1112, %v1132
    %v1134 = vlaneseq
    %v1135 = vshrl.u32 %v1134, 7
    %v1136 = vsub.s32 5, %v1135
    %v1137 = vrot.slane %v1112, %v1136
    %v1144 = vadd.f32 %v1100, %v1117
    %v1145 = vadd.f32 %v1101, %v1121
    %v1146 = vadd.f32 %v1102, %v1125
    %v1147 = vadd.f32 %v1103, %v1129
    %v1148 = vadd.f32 %v1104, %v1133
    %v1149 = vadd.f32 %v1105, %v1137
    %v1150 = vadd.f32 %v1106, %v1117
    %v1151 = vadd.f32 %v1107, %v1121
    %v1152 = vadd.f32 %v1108, %v1125
    %v1153 = vadd.f32 %v1109, %v1129
    %v1154 = vadd.f32 %v1110, %v1133
    %v1155 = vadd.f32 %v1111, %v1137
    %v1156 = vpack.c.bf16 %v1144, %v1144
    %v1157 = vpack.c.bf16 %v1150, %v1150
    %v1158 = vpack.c.bf16 %v1146, %v1146
    %v1159 = vpack.c.bf16 %v1152, %v1152
    %v1160 = vpack.c.bf16 %v1148, %v1148
    %v1161 = vpack.c.bf16 %v1154, %v1154
    %vm1162 = vcmask 261120
    %v1164 = vsel %vm1162, %v1156, 0
    %v1167 = vsel %vm1162, %v1158, 0
    %1169 = vmatprep.subr.bf16.mxu0 0
    %1170 = vmatpush1.bf16.xpose.msra.mxu0 0
    %1171 = vmatprep.subr.bf16.mxu0 0
    %1172 = vmatpush1.bf16.xpose.msra.mxu0 0
    %1173 = vmatprep.subr.bf16.mxu0 0
    %1174 = vmatpush1.bf16.xpose.msra.mxu0 0
    %1175 = vmatprep.subr.bf16.mxu0 0
    %1176 = vmatpush1.bf16.xpose.msra.mxu0 0
    %1177 = vmatprep.subr.bf16.mxu0 0
    %1178 = vmatpush1.bf16.xpose.msra.mxu0 0
    %1179 = vmatprep.subr.bf16.mxu0 0
    %1180 = vmatpush1.bf16.xpose.msra.mxu0 0
    %1181 = vmatprep.subr.bf16.mxu0 0
    %1182 = vmatpush1.bf16.xpose.msra.mxu0 0
    %1183 = vmatprep.subr.bf16.mxu0 0
    %1184 = vmatpush1.bf16.xpose.msra.mxu0 %v1167
    %1185 = vmatprep.subr.bf16.mxu0 0
    %1186 = vmatpush2.bf16.xpose.msra.mxu0 0
    %1187 = vmatprep.subr.bf16.mxu0 0
    %1188 = vmatpush2.bf16.xpose.msra.mxu0 0
    %1189 = vmatprep.subr.bf16.mxu0 0
    %1190 = vmatpush2.bf16.xpose.msra.mxu0 0
    %1191 = vmatprep.subr.bf16.mxu0 0
    %1192 = vmatpush2.bf16.xpose.msra.mxu0 0
    %1193 = vmatprep.subr.bf16.mxu0 0
    %1194 = vmatpush2.bf16.xpose.msra.mxu0 0
    %1195 = vmatprep.subr.bf16.mxu0 0
    %1196 = vmatpush2.bf16.xpose.msra.mxu0 0
    %1197 = vmatprep.subr.bf16.mxu0 0
    %1198 = vmatpush2.bf16.xpose.msra.mxu0 0
    %1199 = vmatprep.subr.bf16.mxu0 0
    %1200 = vmatpush2.bf16.xpose.msra.mxu0 0
    %1201 = vmatprep.mubr.bf16.mxu0 0
    %1202 = vmatmul.mubr.bf16.gmra.mxu0 %v1164
    %v1203 = vpop.f32.mrf.mxu0
    %v1204 = vadd.f32 0.0, %v1203
    %v1205 = vpop.f32.mrf.mxu0
    %v1206 = vpop.f32.mrf.mxu0
    %v1207 = vpop.f32.mrf.mxu0
    %1208 = vdwg.mxu0
    %v1210 = vsel %vm1162, %v1157, 0
    %v1213 = vsel %vm1162, %v1159, 0
    %1215 = vmatprep.subr.bf16.mxu0 0
    %1216 = vmatpush1.bf16.xpose.msra.mxu0 0
    %1217 = vmatprep.subr.bf16.mxu0 0
    %1218 = vmatpush1.bf16.xpose.msra.mxu0 0
    %1219 = vmatprep.subr.bf16.mxu0 0
    %1220 = vmatpush1.bf16.xpose.msra.mxu0 0
    %1221 = vmatprep.subr.bf16.mxu0 0
    %1222 = vmatpush1.bf16.xpose.msra.mxu0 0
    %1223 = vmatprep.subr.bf16.mxu0 0
    %1224 = vmatpush1.bf16.xpose.msra.mxu0 0
    %1225 = vmatprep.subr.bf16.mxu0 0
    %1226 = vmatpush1.bf16.xpose.msra.mxu0 0
    %1227 = vmatprep.subr.bf16.mxu0 0
    %1228 = vmatpush1.bf16.xpose.msra.mxu0 0
    %1229 = vmatprep.subr.bf16.mxu0 0
    %1230 = vmatpush1.bf16.xpose.msra.mxu0 %v1213
    %1231 = vmatprep.subr.bf16.mxu0 0
    %1232 = vmatpush2.bf16.xpose.msra.mxu0 0
    %1233 = vmatprep.subr.bf16.mxu0 0
    %1234 = vmatpush2.bf16.xpose.msra.mxu0 0
    %1235 = vmatprep.subr.bf16.mxu0 0
    %1236 = vmatpush2.bf16.xpose.msra.mxu0 0
    %1237 = vmatprep.subr.bf16.mxu0 0
    %1238 = vmatpush2.bf16.xpose.msra.mxu0 0
    %1239 = vmatprep.subr.bf16.mxu0 0
    %1240 = vmatpush2.bf16.xpose.msra.mxu0 0
    %1241 = vmatprep.subr.bf16.mxu0 0
    %1242 = vmatpush2.bf16.xpose.msra.mxu0 0
    %1243 = vmatprep.subr.bf16.mxu0 0
    %1244 = vmatpush2.bf16.xpose.msra.mxu0 0
    %1245 = vmatprep.subr.bf16.mxu0 0
    %1246 = vmatpush2.bf16.xpose.msra.mxu0 0
    %1247 = vmatprep.mubr.bf16.mxu0 0
    %1248 = vmatmul.mubr.bf16.gmra.mxu0 %v1210
    %v1249 = vpop.f32.mrf.mxu0
    %v1250 = vadd.f32 0.0, %v1249
    %v1251 = vpop.f32.mrf.mxu0
    %v1252 = vpop.f32.mrf.mxu0
    %v1253 = vpop.f32.mrf.mxu0
    %1254 = vdwg.mxu0
    %vm1255 = vcmask 64512
    %v1256 = vsel %vm1255, %v1204, -inf
    %1257 = vmax.xlane.f32.xlu0 %v1256
    %v1258 = vpop.xlane.xlu0 %1257
    %v1259 = vsel %vm1255, %v1250, -inf
    %1260 = vmax.xlane.f32.xlu0 %v1259
    %v1261 = vpop.xlane.xlu0 %1260
    %v1262 = vsub.f32 %v1204, %v1258
    %v1263 = vsub.f32 %v1250, %v1261
    %v1264 = vmul.f32 %v1262, 1.442695
    %v1265 = vpow.pop %v1264
    %v1266 = vmul.f32 %v1263, 1.442695
    %v1267 = vpow.pop %v1266
    %v1268 = vsel %vm1255, %v1265, 0.0
    %1269 = vadd.xlane.f32.xlu0 %v1268
    %v1270 = vpop.xlane.xlu0 %1269
    %v1271 = vsel %vm1255, %v1267, 0.0
    %1272 = vadd.xlane.f32.xlu0 %v1271
    %v1273 = vpop.xlane.xlu0 %1272
    %v1274 = vrcp.pop %v1270
    %v1275 = vmul.f32 %v1265, %v1274
    %v1276 = vrcp.pop %v1273
    %v1277 = vmul.f32 %v1267, %v1276
    %v1278 = vpack.c.bf16 %v1275, %v1275
    %v1279 = vpack.c.bf16 %v1277, %v1277
    %v1281 = vsel %vm1255, %v1278, 0
    %vm1283 = vcmask 1043456
    %v1285 = vsel %vm1283, %v1160, 0
    %1287 = vmatprep.subr.bf16.mxu0 0
    %1288 = vmatpush1.bf16.msra.mxu0 0
    %1289 = vmatprep.subr.bf16.mxu0 0
    %1290 = vmatpush1.bf16.msra.mxu0 0
    %1291 = vmatprep.subr.bf16.mxu0 0
    %1292 = vmatpush1.bf16.msra.mxu0 0
    %1293 = vmatprep.subr.bf16.mxu0 0
    %1294 = vmatpush1.bf16.msra.mxu0 0
    %1295 = vmatprep.subr.bf16.mxu0 0
    %1296 = vmatpush1.bf16.msra.mxu0 0
    %1297 = vmatprep.subr.bf16.mxu0 0
    %1298 = vmatpush1.bf16.msra.mxu0 0
    %1299 = vmatprep.subr.bf16.mxu0 0
    %1300 = vmatpush1.bf16.msra.mxu0 0
    %1301 = vmatprep.subr.bf16.mxu0 0
    %1302 = vmatpush1.bf16.msra.mxu0 %v1285
    %1303 = vmatprep.subr.bf16.mxu0 0
    %1304 = vmatpush2.bf16.msra.mxu0 0
    %1305 = vmatprep.subr.bf16.mxu0 0
    %1306 = vmatpush2.bf16.msra.mxu0 0
    %1307 = vmatprep.subr.bf16.mxu0 0
    %1308 = vmatpush2.bf16.msra.mxu0 0
    %1309 = vmatprep.subr.bf16.mxu0 0
    %1310 = vmatpush2.bf16.msra.mxu0 0
    %1311 = vmatprep.subr.bf16.mxu0 0
    %1312 = vmatpush2.bf16.msra.mxu0 0
    %1313 = vmatprep.subr.bf16.mxu0 0
    %1314 = vmatpush2.bf16.msra.mxu0 0
    %1315 = vmatprep.subr.bf16.mxu0 0
    %1316 = vmatpush2.bf16.msra.mxu0 0
    %1317 = vmatprep.subr.bf16.mxu0 0
    %1318 = vmatpush2.bf16.msra.mxu0 0
    %1319 = vmatprep.mubr.bf16.mxu0 0
    %1320 = vmatmul.mubr.bf16.gmra.mxu0 %v1281
    %v1321 = vpop.f32.mrf.mxu0
    %v1322 = vadd.f32 0.0, %v1321
    %v1323 = vpop.f32.mrf.mxu0
    %v1324 = vpop.f32.mrf.mxu0
    %v1325 = vpop.f32.mrf.mxu0
    %1326 = vdwg.mxu0
    %v1328 = vsel %vm1255, %v1279, 0
    %v1331 = vsel %vm1283, %v1161, 0
    %1333 = vmatprep.subr.bf16.mxu0 0
    %1334 = vmatpush1.bf16.msra.mxu0 0
    %1335 = vmatprep.subr.bf16.mxu0 0
    %1336 = vmatpush1.bf16.msra.mxu0 0
    %1337 = vmatprep.subr.bf16.mxu0 0
    %1338 = vmatpush1.bf16.msra.mxu0 0
    %1339 = vmatprep.subr.bf16.mxu0 0
    %1340 = vmatpush1.bf16.msra.mxu0 0
    %1341 = vmatprep.subr.bf16.mxu0 0
    %1342 = vmatpush1.bf16.msra.mxu0 0
    %1343 = vmatprep.subr.bf16.mxu0 0
    %1344 = vmatpush1.bf16.msra.mxu0 0
    %1345 = vmatprep.subr.bf16.mxu0 0
    %1346 = vmatpush1.bf16.msra.mxu0 0
    %1347 = vmatprep.subr.bf16.mxu0 0
    %1348 = vmatpush1.bf16.msra.mxu0 %v1331
    %1349 = vmatprep.subr.bf16.mxu0 0
    %1350 = vmatpush2.bf16.msra.mxu0 0
    %1351 = vmatprep.subr.bf16.mxu0 0
    %1352 = vmatpush2.bf16.msra.mxu0 0
    %1353 = vmatprep.subr.bf16.mxu0 0
    %1354 = vmatpush2.bf16.msra.mxu0 0
    %1355 = vmatprep.subr.bf16.mxu0 0
    %1356 = vmatpush2.bf16.msra.mxu0 0
    %1357 = vmatprep.subr.bf16.mxu0 0
    %1358 = vmatpush2.bf16.msra.mxu0 0
    %1359 = vmatprep.subr.bf16.mxu0 0
    %1360 = vmatpush2.bf16.msra.mxu0 0
    %1361 = vmatprep.subr.bf16.mxu0 0
    %1362 = vmatpush2.bf16.msra.mxu0 0
    %1363 = vmatprep.subr.bf16.mxu0 0
    %1364 = vmatpush2.bf16.msra.mxu0 0
    %1365 = vmatprep.mubr.bf16.mxu0 0
    %1366 = vmatmul.mubr.bf16.gmra.mxu0 %v1328
    %v1367 = vpop.f32.mrf.mxu0
    %v1368 = vadd.f32 0.0, %v1367
    %v1369 = vpop.f32.mrf.mxu0
    %v1370 = vpop.f32.mrf.mxu0
    %v1371 = vpop.f32.mrf.mxu0
    %1372 = vdwg.mxu0
    %1374 = vrot.lane.b32.xlu0 %v1156, 96
    %v1375 = vpop.permute.xlu0 %1374
    %1377 = vrot.lane.b32.xlu0 %v1158, 96
    %v1378 = vpop.permute.xlu0 %1377
    %v1380 = vsel %vm1162, %v1375, 0
    %v1383 = vsel %vm1162, %v1378, 0
    %1385 = vmatprep.subr.bf16.mxu0 0
    %1386 = vmatpush1.bf16.xpose.msra.mxu0 0
    %1387 = vmatprep.subr.bf16.mxu0 0
    %1388 = vmatpush1.bf16.xpose.msra.mxu0 0
    %1389 = vmatprep.subr.bf16.mxu0 0
    %1390 = vmatpush1.bf16.xpose.msra.mxu0 0
    %1391 = vmatprep.subr.bf16.mxu0 0
    %1392 = vmatpush1.bf16.xpose.msra.mxu0 0
    %1393 = vmatprep.subr.bf16.mxu0 0
    %1394 = vmatpush1.bf16.xpose.msra.mxu0 0
    %1395 = vmatprep.subr.bf16.mxu0 0
    %1396 = vmatpush1.bf16.xpose.msra.mxu0 0
    %1397 = vmatprep.subr.bf16.mxu0 0
    %1398 = vmatpush1.bf16.xpose.msra.mxu0 0
    %1399 = vmatprep.subr.bf16.mxu0 0
    %1400 = vmatpush1.bf16.xpose.msra.mxu0 %v1383
    %1401 = vmatprep.subr.bf16.mxu0 0
    %1402 = vmatpush2.bf16.xpose.msra.mxu0 0
    %1403 = vmatprep.subr.bf16.mxu0 0
    %1404 = vmatpush2.bf16.xpose.msra.mxu0 0
    %1405 = vmatprep.subr.bf16.mxu0 0
    %1406 = vmatpush2.bf16.xpose.msra.mxu0 0
    %1407 = vmatprep.subr.bf16.mxu0 0
    %1408 = vmatpush2.bf16.xpose.msra.mxu0 0
    %1409 = vmatprep.subr.bf16.mxu0 0
    %1410 = vmatpush2.bf16.xpose.msra.mxu0 0
    %1411 = vmatprep.subr.bf16.mxu0 0
    %1412 = vmatpush2.bf16.xpose.msra.mxu0 0
    %1413 = vmatprep.subr.bf16.mxu0 0
    %1414 = vmatpush2.bf16.xpose.msra.mxu0 0
    %1415 = vmatprep.subr.bf16.mxu0 0
    %1416 = vmatpush2.bf16.xpose.msra.mxu0 0
    %1417 = vmatprep.mubr.bf16.mxu0 0
    %1418 = vmatmul.mubr.bf16.gmra.mxu0 %v1380
    %v1419 = vpop.f32.mrf.mxu0
    %v1420 = vadd.f32 0.0, %v1419
    %v1421 = vpop.f32.mrf.mxu0
    %v1422 = vpop.f32.mrf.mxu0
    %v1423 = vpop.f32.mrf.mxu0
    %1424 = vdwg.mxu0
    %1426 = vrot.lane.b32.xlu0 %v1157, 96
    %v1427 = vpop.permute.xlu0 %1426
    %1429 = vrot.lane.b32.xlu0 %v1159, 96
    %v1430 = vpop.permute.xlu0 %1429
    %v1432 = vsel %vm1162, %v1427, 0
    %v1435 = vsel %vm1162, %v1430, 0
    %1437 = vmatprep.subr.bf16.mxu0 0
    %1438 = vmatpush1.bf16.xpose.msra.mxu0 0
    %1439 = vmatprep.subr.bf16.mxu0 0
    %1440 = vmatpush1.bf16.xpose.msra.mxu0 0
    %1441 = vmatprep.subr.bf16.mxu0 0
    %1442 = vmatpush1.bf16.xpose.msra.mxu0 0
    %1443 = vmatprep.subr.bf16.mxu0 0
    %1444 = vmatpush1.bf16.xpose.msra.mxu0 0
    %1445 = vmatprep.subr.bf16.mxu0 0
    %1446 = vmatpush1.bf16.xpose.msra.mxu0 0
    %1447 = vmatprep.subr.bf16.mxu0 0
    %1448 = vmatpush1.bf16.xpose.msra.mxu0 0
    %1449 = vmatprep.subr.bf16.mxu0 0
    %1450 = vmatpush1.bf16.xpose.msra.mxu0 0
    %1451 = vmatprep.subr.bf16.mxu0 0
    %1452 = vmatpush1.bf16.xpose.msra.mxu0 %v1435
    %1453 = vmatprep.subr.bf16.mxu0 0
    %1454 = vmatpush2.bf16.xpose.msra.mxu0 0
    %1455 = vmatprep.subr.bf16.mxu0 0
    %1456 = vmatpush2.bf16.xpose.msra.mxu0 0
    %1457 = vmatprep.subr.bf16.mxu0 0
    %1458 = vmatpush2.bf16.xpose.msra.mxu0 0
    %1459 = vmatprep.subr.bf16.mxu0 0
    %1460 = vmatpush2.bf16.xpose.msra.mxu0 0
    %1461 = vmatprep.subr.bf16.mxu0 0
    %1462 = vmatpush2.bf16.xpose.msra.mxu0 0
    %1463 = vmatprep.subr.bf16.mxu0 0
    %1464 = vmatpush2.bf16.xpose.msra.mxu0 0
    %1465 = vmatprep.subr.bf16.mxu0 0
    %1466 = vmatpush2.bf16.xpose.msra.mxu0 0
    %1467 = vmatprep.subr.bf16.mxu0 0
    %1468 = vmatpush2.bf16.xpose.msra.mxu0 0
    %1469 = vmatprep.mubr.bf16.mxu0 0
    %1470 = vmatmul.mubr.bf16.gmra.mxu0 %v1432
    %v1471 = vpop.f32.mrf.mxu0
    %v1472 = vadd.f32 0.0, %v1471
    %v1473 = vpop.f32.mrf.mxu0
    %v1474 = vpop.f32.mrf.mxu0
    %v1475 = vpop.f32.mrf.mxu0
    %1476 = vdwg.mxu0
    %v1477 = vsel %vm1255, %v1420, -inf
    %1478 = vmax.xlane.f32.xlu0 %v1477
    %v1479 = vpop.xlane.xlu0 %1478
    %v1480 = vsel %vm1255, %v1472, -inf
    %1481 = vmax.xlane.f32.xlu0 %v1480
    %v1482 = vpop.xlane.xlu0 %1481
    %v1483 = vsub.f32 %v1420, %v1479
    %v1484 = vsub.f32 %v1472, %v1482
    %v1485 = vmul.f32 %v1483, 1.442695
    %v1486 = vpow.pop %v1485
    %v1487 = vmul.f32 %v1484, 1.442695
    %v1488 = vpow.pop %v1487
    %v1489 = vsel %vm1255, %v1486, 0.0
    %1490 = vadd.xlane.f32.xlu0 %v1489
    %v1491 = vpop.xlane.xlu0 %1490
    %v1492 = vsel %vm1255, %v1488, 0.0
    %1493 = vadd.xlane.f32.xlu0 %v1492
    %v1494 = vpop.xlane.xlu0 %1493
    %v1495 = vrcp.pop %v1491
    %v1496 = vmul.f32 %v1486, %v1495
    %v1497 = vrcp.pop %v1494
    %v1498 = vmul.f32 %v1488, %v1497
    %v1499 = vpack.c.bf16 %v1496, %v1496
    %v1500 = vpack.c.bf16 %v1498, %v1498
    %1502 = vrot.lane.b32.xlu0 %v1160, 96
    %v1503 = vpop.permute.xlu0 %1502
    %v1505 = vsel %vm1255, %v1499, 0
    %v1508 = vsel %vm1283, %v1503, 0
    %1510 = vmatprep.subr.bf16.mxu0 0
    %1511 = vmatpush1.bf16.msra.mxu0 0
    %1512 = vmatprep.subr.bf16.mxu0 0
    %1513 = vmatpush1.bf16.msra.mxu0 0
    %1514 = vmatprep.subr.bf16.mxu0 0
    %1515 = vmatpush1.bf16.msra.mxu0 0
    %1516 = vmatprep.subr.bf16.mxu0 0
    %1517 = vmatpush1.bf16.msra.mxu0 0
    %1518 = vmatprep.subr.bf16.mxu0 0
    %1519 = vmatpush1.bf16.msra.mxu0 0
    %1520 = vmatprep.subr.bf16.mxu0 0
    %1521 = vmatpush1.bf16.msra.mxu0 0
    %1522 = vmatprep.subr.bf16.mxu0 0
    %1523 = vmatpush1.bf16.msra.mxu0 0
    %1524 = vmatprep.subr.bf16.mxu0 0
    %1525 = vmatpush1.bf16.msra.mxu0 %v1508
    %1526 = vmatprep.subr.bf16.mxu0 0
    %1527 = vmatpush2.bf16.msra.mxu0 0
    %1528 = vmatprep.subr.bf16.mxu0 0
    %1529 = vmatpush2.bf16.msra.mxu0 0
    %1530 = vmatprep.subr.bf16.mxu0 0
    %1531 = vmatpush2.bf16.msra.mxu0 0
    %1532 = vmatprep.subr.bf16.mxu0 0
    %1533 = vmatpush2.bf16.msra.mxu0 0
    %1534 = vmatprep.subr.bf16.mxu0 0
    %1535 = vmatpush2.bf16.msra.mxu0 0
    %1536 = vmatprep.subr.bf16.mxu0 0
    %1537 = vmatpush2.bf16.msra.mxu0 0
    %1538 = vmatprep.subr.bf16.mxu0 0
    %1539 = vmatpush2.bf16.msra.mxu0 0
    %1540 = vmatprep.subr.bf16.mxu0 0
    %1541 = vmatpush2.bf16.msra.mxu0 0
    %1542 = vmatprep.mubr.bf16.mxu0 0
    %1543 = vmatmul.mubr.bf16.gmra.mxu0 %v1505
    %v1544 = vpop.f32.mrf.mxu0
    %v1545 = vadd.f32 0.0, %v1544
    %v1546 = vpop.f32.mrf.mxu0
    %v1547 = vpop.f32.mrf.mxu0
    %v1548 = vpop.f32.mrf.mxu0
    %1549 = vdwg.mxu0
    %1551 = vrot.lane.b32.xlu0 %v1161, 96
    %v1552 = vpop.permute.xlu0 %1551
    %v1554 = vsel %vm1255, %v1500, 0
    %v1557 = vsel %vm1283, %v1552, 0
    %1559 = vmatprep.subr.bf16.mxu0 0
    %1560 = vmatpush1.bf16.msra.mxu0 0
    %1561 = vmatprep.subr.bf16.mxu0 0
    %1562 = vmatpush1.bf16.msra.mxu0 0
    %1563 = vmatprep.subr.bf16.mxu0 0
    %1564 = vmatpush1.bf16.msra.mxu0 0
    %1565 = vmatprep.subr.bf16.mxu0 0
    %1566 = vmatpush1.bf16.msra.mxu0 0
    %1567 = vmatprep.subr.bf16.mxu0 0
    %1568 = vmatpush1.bf16.msra.mxu0 0
    %1569 = vmatprep.subr.bf16.mxu0 0
    %1570 = vmatpush1.bf16.msra.mxu0 0
    %1571 = vmatprep.subr.bf16.mxu0 0
    %1572 = vmatpush1.bf16.msra.mxu0 0
    %1573 = vmatprep.subr.bf16.mxu0 0
    %1574 = vmatpush1.bf16.msra.mxu0 %v1557
    %1575 = vmatprep.subr.bf16.mxu0 0
    %1576 = vmatpush2.bf16.msra.mxu0 0
    %1577 = vmatprep.subr.bf16.mxu0 0
    %1578 = vmatpush2.bf16.msra.mxu0 0
    %1579 = vmatprep.subr.bf16.mxu0 0
    %1580 = vmatpush2.bf16.msra.mxu0 0
    %1581 = vmatprep.subr.bf16.mxu0 0
    %1582 = vmatpush2.bf16.msra.mxu0 0
    %1583 = vmatprep.subr.bf16.mxu0 0
    %1584 = vmatpush2.bf16.msra.mxu0 0
    %1585 = vmatprep.subr.bf16.mxu0 0
    %1586 = vmatpush2.bf16.msra.mxu0 0
    %1587 = vmatprep.subr.bf16.mxu0 0
    %1588 = vmatpush2.bf16.msra.mxu0 0
    %1589 = vmatprep.subr.bf16.mxu0 0
    %1590 = vmatpush2.bf16.msra.mxu0 0
    %1591 = vmatprep.mubr.bf16.mxu0 0
    %1592 = vmatmul.mubr.bf16.gmra.mxu0 %v1554
    %v1593 = vpop.f32.mrf.mxu0
    %v1594 = vadd.f32 0.0, %v1593
    %v1595 = vpop.f32.mrf.mxu0
    %v1596 = vpop.f32.mrf.mxu0
    %v1597 = vpop.f32.mrf.mxu0
    %1598 = vdwg.mxu0
    %1599 = vrot.lane.b32.xlu0 %v1156, 64
    %v1600 = vpop.permute.xlu0 %1599
    %1601 = vrot.lane.b32.xlu0 %v1158, 64
    %v1602 = vpop.permute.xlu0 %1601
    %v1604 = vsel %vm1162, %v1600, 0
    %v1607 = vsel %vm1162, %v1602, 0
    %1609 = vmatprep.subr.bf16.mxu0 0
    %1610 = vmatpush1.bf16.xpose.msra.mxu0 0
    %1611 = vmatprep.subr.bf16.mxu0 0
    %1612 = vmatpush1.bf16.xpose.msra.mxu0 0
    %1613 = vmatprep.subr.bf16.mxu0 0
    %1614 = vmatpush1.bf16.xpose.msra.mxu0 0
    %1615 = vmatprep.subr.bf16.mxu0 0
    %1616 = vmatpush1.bf16.xpose.msra.mxu0 0
    %1617 = vmatprep.subr.bf16.mxu0 0
    %1618 = vmatpush1.bf16.xpose.msra.mxu0 0
    %1619 = vmatprep.subr.bf16.mxu0 0
    %1620 = vmatpush1.bf16.xpose.msra.mxu0 0
    %1621 = vmatprep.subr.bf16.mxu0 0
    %1622 = vmatpush1.bf16.xpose.msra.mxu0 0
    %1623 = vmatprep.subr.bf16.mxu0 0
    %1624 = vmatpush1.bf16.xpose.msra.mxu0 %v1607
    %1625 = vmatprep.subr.bf16.mxu0 0
    %1626 = vmatpush2.bf16.xpose.msra.mxu0 0
    %1627 = vmatprep.subr.bf16.mxu0 0
    %1628 = vmatpush2.bf16.xpose.msra.mxu0 0
    %1629 = vmatprep.subr.bf16.mxu0 0
    %1630 = vmatpush2.bf16.xpose.msra.mxu0 0
    %1631 = vmatprep.subr.bf16.mxu0 0
    %1632 = vmatpush2.bf16.xpose.msra.mxu0 0
    %1633 = vmatprep.subr.bf16.mxu0 0
    %1634 = vmatpush2.bf16.xpose.msra.mxu0 0
    %1635 = vmatprep.subr.bf16.mxu0 0
    %1636 = vmatpush2.bf16.xpose.msra.mxu0 0
    %1637 = vmatprep.subr.bf16.mxu0 0
    %1638 = vmatpush2.bf16.xpose.msra.mxu0 0
    %1639 = vmatprep.subr.bf16.mxu0 0
    %1640 = vmatpush2.bf16.xpose.msra.mxu0 0
    %1641 = vmatprep.mubr.bf16.mxu0 0
    %1642 = vmatmul.mubr.bf16.gmra.mxu0 %v1604
    %v1643 = vpop.f32.mrf.mxu0
    %v1644 = vadd.f32 0.0, %v1643
    %v1645 = vpop.f32.mrf.mxu0
    %v1646 = vpop.f32.mrf.mxu0
    %v1647 = vpop.f32.mrf.mxu0
    %1648 = vdwg.mxu0
    %1649 = vrot.lane.b32.xlu0 %v1157, 64
    %v1650 = vpop.permute.xlu0 %1649
    %1651 = vrot.lane.b32.xlu0 %v1159, 64
    %v1652 = vpop.permute.xlu0 %1651
    %v1654 = vsel %vm1162, %v1650, 0
    %v1657 = vsel %vm1162, %v1652, 0
    %1659 = vmatprep.subr.bf16.mxu0 0
    %1660 = vmatpush1.bf16.xpose.msra.mxu0 0
    %1661 = vmatprep.subr.bf16.mxu0 0
    %1662 = vmatpush1.bf16.xpose.msra.mxu0 0
    %1663 = vmatprep.subr.bf16.mxu0 0
    %1664 = vmatpush1.bf16.xpose.msra.mxu0 0
    %1665 = vmatprep.subr.bf16.mxu0 0
    %1666 = vmatpush1.bf16.xpose.msra.mxu0 0
    %1667 = vmatprep.subr.bf16.mxu0 0
    %1668 = vmatpush1.bf16.xpose.msra.mxu0 0
    %1669 = vmatprep.subr.bf16.mxu0 0
    %1670 = vmatpush1.bf16.xpose.msra.mxu0 0
    %1671 = vmatprep.subr.bf16.mxu0 0
    %1672 = vmatpush1.bf16.xpose.msra.mxu0 0
    %1673 = vmatprep.subr.bf16.mxu0 0
    %1674 = vmatpush1.bf16.xpose.msra.mxu0 %v1657
    %1675 = vmatprep.subr.bf16.mxu0 0
    %1676 = vmatpush2.bf16.xpose.msra.mxu0 0
    %1677 = vmatprep.subr.bf16.mxu0 0
    %1678 = vmatpush2.bf16.xpose.msra.mxu0 0
    %1679 = vmatprep.subr.bf16.mxu0 0
    %1680 = vmatpush2.bf16.xpose.msra.mxu0 0
    %1681 = vmatprep.subr.bf16.mxu0 0
    %1682 = vmatpush2.bf16.xpose.msra.mxu0 0
    %1683 = vmatprep.subr.bf16.mxu0 0
    %1684 = vmatpush2.bf16.xpose.msra.mxu0 0
    %1685 = vmatprep.subr.bf16.mxu0 0
    %1686 = vmatpush2.bf16.xpose.msra.mxu0 0
    %1687 = vmatprep.subr.bf16.mxu0 0
    %1688 = vmatpush2.bf16.xpose.msra.mxu0 0
    %1689 = vmatprep.subr.bf16.mxu0 0
    %1690 = vmatpush2.bf16.xpose.msra.mxu0 0
    %1691 = vmatprep.mubr.bf16.mxu0 0
    %1692 = vmatmul.mubr.bf16.gmra.mxu0 %v1654
    %v1693 = vpop.f32.mrf.mxu0
    %v1694 = vadd.f32 0.0, %v1693
    %v1695 = vpop.f32.mrf.mxu0
    %v1696 = vpop.f32.mrf.mxu0
    %v1697 = vpop.f32.mrf.mxu0
    %1698 = vdwg.mxu0
    %v1699 = vsel %vm1255, %v1644, -inf
    %1700 = vmax.xlane.f32.xlu0 %v1699
    %v1701 = vpop.xlane.xlu0 %1700
    %v1702 = vsel %vm1255, %v1694, -inf
    %1703 = vmax.xlane.f32.xlu0 %v1702
    %v1704 = vpop.xlane.xlu0 %1703
    %v1705 = vsub.f32 %v1644, %v1701
    %v1706 = vsub.f32 %v1694, %v1704
    %v1707 = vmul.f32 %v1705, 1.442695
    %v1708 = vpow.pop %v1707
    %v1709 = vmul.f32 %v1706, 1.442695
    %v1710 = vpow.pop %v1709
    %v1711 = vsel %vm1255, %v1708, 0.0
    %1712 = vadd.xlane.f32.xlu0 %v1711
    %v1713 = vpop.xlane.xlu0 %1712
    %v1714 = vsel %vm1255, %v1710, 0.0
    %1715 = vadd.xlane.f32.xlu0 %v1714
    %v1716 = vpop.xlane.xlu0 %1715
    %v1717 = vrcp.pop %v1713
    %v1718 = vmul.f32 %v1708, %v1717
    %v1719 = vrcp.pop %v1716
    %v1720 = vmul.f32 %v1710, %v1719
    %v1721 = vpack.c.bf16 %v1718, %v1718
    %v1722 = vpack.c.bf16 %v1720, %v1720
    %1723 = vrot.lane.b32.xlu0 %v1160, 64
    %v1724 = vpop.permute.xlu0 %1723
    %v1726 = vsel %vm1255, %v1721, 0
    %v1729 = vsel %vm1283, %v1724, 0
    %1731 = vmatprep.subr.bf16.mxu0 0
    %1732 = vmatpush1.bf16.msra.mxu0 0
    %1733 = vmatprep.subr.bf16.mxu0 0
    %1734 = vmatpush1.bf16.msra.mxu0 0
    %1735 = vmatprep.subr.bf16.mxu0 0
    %1736 = vmatpush1.bf16.msra.mxu0 0
    %1737 = vmatprep.subr.bf16.mxu0 0
    %1738 = vmatpush1.bf16.msra.mxu0 0
    %1739 = vmatprep.subr.bf16.mxu0 0
    %1740 = vmatpush1.bf16.msra.mxu0 0
    %1741 = vmatprep.subr.bf16.mxu0 0
    %1742 = vmatpush1.bf16.msra.mxu0 0
    %1743 = vmatprep.subr.bf16.mxu0 0
    %1744 = vmatpush1.bf16.msra.mxu0 0
    %1745 = vmatprep.subr.bf16.mxu0 0
    %1746 = vmatpush1.bf16.msra.mxu0 %v1729
    %1747 = vmatprep.subr.bf16.mxu0 0
    %1748 = vmatpush2.bf16.msra.mxu0 0
    %1749 = vmatprep.subr.bf16.mxu0 0
    %1750 = vmatpush2.bf16.msra.mxu0 0
    %1751 = vmatprep.subr.bf16.mxu0 0
    %1752 = vmatpush2.bf16.msra.mxu0 0
    %1753 = vmatprep.subr.bf16.mxu0 0
    %1754 = vmatpush2.bf16.msra.mxu0 0
    %1755 = vmatprep.subr.bf16.mxu0 0
    %1756 = vmatpush2.bf16.msra.mxu0 0
    %1757 = vmatprep.subr.bf16.mxu0 0
    %1758 = vmatpush2.bf16.msra.mxu0 0
    %1759 = vmatprep.subr.bf16.mxu0 0
    %1760 = vmatpush2.bf16.msra.mxu0 0
    %1761 = vmatprep.subr.bf16.mxu0 0
    %1762 = vmatpush2.bf16.msra.mxu0 0
    %1763 = vmatprep.mubr.bf16.mxu0 0
    %1764 = vmatmul.mubr.bf16.gmra.mxu0 %v1726
    %v1765 = vpop.f32.mrf.mxu0
    %v1766 = vadd.f32 0.0, %v1765
    %v1767 = vpop.f32.mrf.mxu0
    %v1768 = vpop.f32.mrf.mxu0
    %v1769 = vpop.f32.mrf.mxu0
    %1770 = vdwg.mxu0
    %1771 = vrot.lane.b32.xlu0 %v1161, 64
    %v1772 = vpop.permute.xlu0 %1771
    %v1774 = vsel %vm1255, %v1722, 0
    %v1777 = vsel %vm1283, %v1772, 0
    %1779 = vmatprep.subr.bf16.mxu0 0
    %1780 = vmatpush1.bf16.msra.mxu0 0
    %1781 = vmatprep.subr.bf16.mxu0 0
    %1782 = vmatpush1.bf16.msra.mxu0 0
    %1783 = vmatprep.subr.bf16.mxu0 0
    %1784 = vmatpush1.bf16.msra.mxu0 0
    %1785 = vmatprep.subr.bf16.mxu0 0
    %1786 = vmatpush1.bf16.msra.mxu0 0
    %1787 = vmatprep.subr.bf16.mxu0 0
    %1788 = vmatpush1.bf16.msra.mxu0 0
    %1789 = vmatprep.subr.bf16.mxu0 0
    %1790 = vmatpush1.bf16.msra.mxu0 0
    %1791 = vmatprep.subr.bf16.mxu0 0
    %1792 = vmatpush1.bf16.msra.mxu0 0
    %1793 = vmatprep.subr.bf16.mxu0 0
    %1794 = vmatpush1.bf16.msra.mxu0 %v1777
    %1795 = vmatprep.subr.bf16.mxu0 0
    %1796 = vmatpush2.bf16.msra.mxu0 0
    %1797 = vmatprep.subr.bf16.mxu0 0
    %1798 = vmatpush2.bf16.msra.mxu0 0
    %1799 = vmatprep.subr.bf16.mxu0 0
    %1800 = vmatpush2.bf16.msra.mxu0 0
    %1801 = vmatprep.subr.bf16.mxu0 0
    %1802 = vmatpush2.bf16.msra.mxu0 0
    %1803 = vmatprep.subr.bf16.mxu0 0
    %1804 = vmatpush2.bf16.msra.mxu0 0
    %1805 = vmatprep.subr.bf16.mxu0 0
    %1806 = vmatpush2.bf16.msra.mxu0 0
    %1807 = vmatprep.subr.bf16.mxu0 0
    %1808 = vmatpush2.bf16.msra.mxu0 0
    %1809 = vmatprep.subr.bf16.mxu0 0
    %1810 = vmatpush2.bf16.msra.mxu0 0
    %1811 = vmatprep.mubr.bf16.mxu0 0
    %1812 = vmatmul.mubr.bf16.gmra.mxu0 %v1774
    %v1813 = vpop.f32.mrf.mxu0
    %v1814 = vadd.f32 0.0, %v1813
    %v1815 = vpop.f32.mrf.mxu0
    %v1816 = vpop.f32.mrf.mxu0
    %v1817 = vpop.f32.mrf.mxu0
    %1818 = vdwg.mxu0
    %1819 = vrot.lane.b32.xlu0 %v1156, 32
    %v1820 = vpop.permute.xlu0 %1819
    %1821 = vrot.lane.b32.xlu0 %v1158, 32
    %v1822 = vpop.permute.xlu0 %1821
    %v1824 = vsel %vm1162, %v1820, 0
    %v1827 = vsel %vm1162, %v1822, 0
    %1829 = vmatprep.subr.bf16.mxu0 0
    %1830 = vmatpush1.bf16.xpose.msra.mxu0 0
    %1831 = vmatprep.subr.bf16.mxu0 0
    %1832 = vmatpush1.bf16.xpose.msra.mxu0 0
    %1833 = vmatprep.subr.bf16.mxu0 0
    %1834 = vmatpush1.bf16.xpose.msra.mxu0 0
    %1835 = vmatprep.subr.bf16.mxu0 0
    %1836 = vmatpush1.bf16.xpose.msra.mxu0 0
    %1837 = vmatprep.subr.bf16.mxu0 0
    %1838 = vmatpush1.bf16.xpose.msra.mxu0 0
    %1839 = vmatprep.subr.bf16.mxu0 0
    %1840 = vmatpush1.bf16.xpose.msra.mxu0 0
    %1841 = vmatprep.subr.bf16.mxu0 0
    %1842 = vmatpush1.bf16.xpose.msra.mxu0 0
    %1843 = vmatprep.subr.bf16.mxu0 0
    %1844 = vmatpush1.bf16.xpose.msra.mxu0 %v1827
    %1845 = vmatprep.subr.bf16.mxu0 0
    %1846 = vmatpush2.bf16.xpose.msra.mxu0 0
    %1847 = vmatprep.subr.bf16.mxu0 0
    %1848 = vmatpush2.bf16.xpose.msra.mxu0 0
    %1849 = vmatprep.subr.bf16.mxu0 0
    %1850 = vmatpush2.bf16.xpose.msra.mxu0 0
    %1851 = vmatprep.subr.bf16.mxu0 0
    %1852 = vmatpush2.bf16.xpose.msra.mxu0 0
    %1853 = vmatprep.subr.bf16.mxu0 0
    %1854 = vmatpush2.bf16.xpose.msra.mxu0 0
    %1855 = vmatprep.subr.bf16.mxu0 0
    %1856 = vmatpush2.bf16.xpose.msra.mxu0 0
    %1857 = vmatprep.subr.bf16.mxu0 0
    %1858 = vmatpush2.bf16.xpose.msra.mxu0 0
    %1859 = vmatprep.subr.bf16.mxu0 0
    %1860 = vmatpush2.bf16.xpose.msra.mxu0 0
    %1861 = vmatprep.mubr.bf16.mxu0 0
    %1862 = vmatmul.mubr.bf16.gmra.mxu0 %v1824
    %v1863 = vpop.f32.mrf.mxu0
    %v1864 = vadd.f32 0.0, %v1863
    %v1865 = vpop.f32.mrf.mxu0
    %v1866 = vpop.f32.mrf.mxu0
    %v1867 = vpop.f32.mrf.mxu0
    %1868 = vdwg.mxu0
    %1869 = vrot.lane.b32.xlu0 %v1157, 32
    %v1870 = vpop.permute.xlu0 %1869
    %1871 = vrot.lane.b32.xlu0 %v1159, 32
    %v1872 = vpop.permute.xlu0 %1871
    %v1874 = vsel %vm1162, %v1870, 0
    %v1877 = vsel %vm1162, %v1872, 0
    %1879 = vmatprep.subr.bf16.mxu0 0
    %1880 = vmatpush1.bf16.xpose.msra.mxu0 0
    %1881 = vmatprep.subr.bf16.mxu0 0
    %1882 = vmatpush1.bf16.xpose.msra.mxu0 0
    %1883 = vmatprep.subr.bf16.mxu0 0
    %1884 = vmatpush1.bf16.xpose.msra.mxu0 0
    %1885 = vmatprep.subr.bf16.mxu0 0
    %1886 = vmatpush1.bf16.xpose.msra.mxu0 0
    %1887 = vmatprep.subr.bf16.mxu0 0
    %1888 = vmatpush1.bf16.xpose.msra.mxu0 0
    %1889 = vmatprep.subr.bf16.mxu0 0
    %1890 = vmatpush1.bf16.xpose.msra.mxu0 0
    %1891 = vmatprep.subr.bf16.mxu0 0
    %1892 = vmatpush1.bf16.xpose.msra.mxu0 0
    %1893 = vmatprep.subr.bf16.mxu0 0
    %1894 = vmatpush1.bf16.xpose.msra.mxu0 %v1877
    %1895 = vmatprep.subr.bf16.mxu0 0
    %1896 = vmatpush2.bf16.xpose.msra.mxu0 0
    %1897 = vmatprep.subr.bf16.mxu0 0
    %1898 = vmatpush2.bf16.xpose.msra.mxu0 0
    %1899 = vmatprep.subr.bf16.mxu0 0
    %1900 = vmatpush2.bf16.xpose.msra.mxu0 0
    %1901 = vmatprep.subr.bf16.mxu0 0
    %1902 = vmatpush2.bf16.xpose.msra.mxu0 0
    %1903 = vmatprep.subr.bf16.mxu0 0
    %1904 = vmatpush2.bf16.xpose.msra.mxu0 0
    %1905 = vmatprep.subr.bf16.mxu0 0
    %1906 = vmatpush2.bf16.xpose.msra.mxu0 0
    %1907 = vmatprep.subr.bf16.mxu0 0
    %1908 = vmatpush2.bf16.xpose.msra.mxu0 0
    %1909 = vmatprep.subr.bf16.mxu0 0
    %1910 = vmatpush2.bf16.xpose.msra.mxu0 0
    %1911 = vmatprep.mubr.bf16.mxu0 0
    %1912 = vmatmul.mubr.bf16.gmra.mxu0 %v1874
    %v1913 = vpop.f32.mrf.mxu0
    %v1914 = vadd.f32 0.0, %v1913
    %v1915 = vpop.f32.mrf.mxu0
    %v1916 = vpop.f32.mrf.mxu0
    %v1917 = vpop.f32.mrf.mxu0
    %1918 = vdwg.mxu0
    %v1919 = vsel %vm1255, %v1864, -inf
    %1920 = vmax.xlane.f32.xlu0 %v1919
    %v1921 = vpop.xlane.xlu0 %1920
    %v1922 = vsel %vm1255, %v1914, -inf
    %1923 = vmax.xlane.f32.xlu0 %v1922
    %v1924 = vpop.xlane.xlu0 %1923
    %v1925 = vsub.f32 %v1864, %v1921
    %v1926 = vsub.f32 %v1914, %v1924
    %v1927 = vmul.f32 %v1925, 1.442695
    %v1928 = vpow.pop %v1927
    %v1929 = vmul.f32 %v1926, 1.442695
    %v1930 = vpow.pop %v1929
    %v1931 = vsel %vm1255, %v1928, 0.0
    %1932 = vadd.xlane.f32.xlu0 %v1931
    %v1933 = vpop.xlane.xlu0 %1932
    %v1934 = vsel %vm1255, %v1930, 0.0
    %1935 = vadd.xlane.f32.xlu0 %v1934
    %v1936 = vpop.xlane.xlu0 %1935
    %v1937 = vrcp.pop %v1933
    %v1938 = vmul.f32 %v1928, %v1937
    %v1939 = vrcp.pop %v1936
    %v1940 = vmul.f32 %v1930, %v1939
    %v1941 = vpack.c.bf16 %v1938, %v1938
    %v1942 = vpack.c.bf16 %v1940, %v1940
    %1943 = vrot.lane.b32.xlu0 %v1160, 32
    %v1944 = vpop.permute.xlu0 %1943
    %v1946 = vsel %vm1255, %v1941, 0
    %v1949 = vsel %vm1283, %v1944, 0
    %1951 = vmatprep.subr.bf16.mxu0 0
    %1952 = vmatpush1.bf16.msra.mxu0 0
    %1953 = vmatprep.subr.bf16.mxu0 0
    %1954 = vmatpush1.bf16.msra.mxu0 0
    %1955 = vmatprep.subr.bf16.mxu0 0
    %1956 = vmatpush1.bf16.msra.mxu0 0
    %1957 = vmatprep.subr.bf16.mxu0 0
    %1958 = vmatpush1.bf16.msra.mxu0 0
    %1959 = vmatprep.subr.bf16.mxu0 0
    %1960 = vmatpush1.bf16.msra.mxu0 0
    %1961 = vmatprep.subr.bf16.mxu0 0
    %1962 = vmatpush1.bf16.msra.mxu0 0
    %1963 = vmatprep.subr.bf16.mxu0 0
    %1964 = vmatpush1.bf16.msra.mxu0 0
    %1965 = vmatprep.subr.bf16.mxu0 0
    %1966 = vmatpush1.bf16.msra.mxu0 %v1949
    %1967 = vmatprep.subr.bf16.mxu0 0
    %1968 = vmatpush2.bf16.msra.mxu0 0
    %1969 = vmatprep.subr.bf16.mxu0 0
    %1970 = vmatpush2.bf16.msra.mxu0 0
    %1971 = vmatprep.subr.bf16.mxu0 0
    %1972 = vmatpush2.bf16.msra.mxu0 0
    %1973 = vmatprep.subr.bf16.mxu0 0
    %1974 = vmatpush2.bf16.msra.mxu0 0
    %1975 = vmatprep.subr.bf16.mxu0 0
    %1976 = vmatpush2.bf16.msra.mxu0 0
    %1977 = vmatprep.subr.bf16.mxu0 0
    %1978 = vmatpush2.bf16.msra.mxu0 0
    %1979 = vmatprep.subr.bf16.mxu0 0
    %1980 = vmatpush2.bf16.msra.mxu0 0
    %1981 = vmatprep.subr.bf16.mxu0 0
    %1982 = vmatpush2.bf16.msra.mxu0 0
    %1983 = vmatprep.mubr.bf16.mxu0 0
    %1984 = vmatmul.mubr.bf16.gmra.mxu0 %v1946
    %v1985 = vpop.f32.mrf.mxu0
    %v1986 = vadd.f32 0.0, %v1985
    %v1987 = vpop.f32.mrf.mxu0
    %v1988 = vpop.f32.mrf.mxu0
    %v1989 = vpop.f32.mrf.mxu0
    %1990 = vdwg.mxu0
    %1991 = vrot.lane.b32.xlu0 %v1161, 32
    %v1992 = vpop.permute.xlu0 %1991
    %v1994 = vsel %vm1255, %v1942, 0
    %v1997 = vsel %vm1283, %v1992, 0
    %1999 = vmatprep.subr.bf16.mxu0 0
    %2000 = vmatpush1.bf16.msra.mxu0 0
    %2001 = vmatprep.subr.bf16.mxu0 0
    %2002 = vmatpush1.bf16.msra.mxu0 0
    %2003 = vmatprep.subr.bf16.mxu0 0
    %2004 = vmatpush1.bf16.msra.mxu0 0
    %2005 = vmatprep.subr.bf16.mxu0 0
    %2006 = vmatpush1.bf16.msra.mxu0 0
    %2007 = vmatprep.subr.bf16.mxu0 0
    %2008 = vmatpush1.bf16.msra.mxu0 0
    %2009 = vmatprep.subr.bf16.mxu0 0
    %2010 = vmatpush1.bf16.msra.mxu0 0
    %2011 = vmatprep.subr.bf16.mxu0 0
    %2012 = vmatpush1.bf16.msra.mxu0 0
    %2013 = vmatprep.subr.bf16.mxu0 0
    %2014 = vmatpush1.bf16.msra.mxu0 %v1997
    %2015 = vmatprep.subr.bf16.mxu0 0
    %2016 = vmatpush2.bf16.msra.mxu0 0
    %2017 = vmatprep.subr.bf16.mxu0 0
    %2018 = vmatpush2.bf16.msra.mxu0 0
    %2019 = vmatprep.subr.bf16.mxu0 0
    %2020 = vmatpush2.bf16.msra.mxu0 0
    %2021 = vmatprep.subr.bf16.mxu0 0
    %2022 = vmatpush2.bf16.msra.mxu0 0
    %2023 = vmatprep.subr.bf16.mxu0 0
    %2024 = vmatpush2.bf16.msra.mxu0 0
    %2025 = vmatprep.subr.bf16.mxu0 0
    %2026 = vmatpush2.bf16.msra.mxu0 0
    %2027 = vmatprep.subr.bf16.mxu0 0
    %2028 = vmatpush2.bf16.msra.mxu0 0
    %2029 = vmatprep.subr.bf16.mxu0 0
    %2030 = vmatpush2.bf16.msra.mxu0 0
    %2031 = vmatprep.mubr.bf16.mxu0 0
    %2032 = vmatmul.mubr.bf16.gmra.mxu0 %v1994
    %v2033 = vpop.f32.mrf.mxu0
    %v2034 = vadd.f32 0.0, %v2033
    %v2035 = vpop.f32.mrf.mxu0
    %v2036 = vpop.f32.mrf.mxu0
    %v2037 = vpop.f32.mrf.mxu0
    %2038 = vdwg.mxu0
    %v2039 = vpack.c.bf16 %v1145, %v1145
    %v2040 = vpack.c.bf16 %v1151, %v1151
    %v2041 = vpack.c.bf16 %v1147, %v1147
    %v2042 = vpack.c.bf16 %v1153, %v1153
    %v2043 = vpack.c.bf16 %v1149, %v1149
    %v2044 = vpack.c.bf16 %v1155, %v1155
    %v2046 = vsel %vm1162, %v2039, 0
    %v2049 = vsel %vm1162, %v2041, 0
    %2051 = vmatprep.subr.bf16.mxu0 0
    %2052 = vmatpush1.bf16.xpose.msra.mxu0 0
    %2053 = vmatprep.subr.bf16.mxu0 0
    %2054 = vmatpush1.bf16.xpose.msra.mxu0 0
    %2055 = vmatprep.subr.bf16.mxu0 0
    %2056 = vmatpush1.bf16.xpose.msra.mxu0 0
    %2057 = vmatprep.subr.bf16.mxu0 0
    %2058 = vmatpush1.bf16.xpose.msra.mxu0 0
    %2059 = vmatprep.subr.bf16.mxu0 0
    %2060 = vmatpush1.bf16.xpose.msra.mxu0 0
    %2061 = vmatprep.subr.bf16.mxu0 0
    %2062 = vmatpush1.bf16.xpose.msra.mxu0 0
    %2063 = vmatprep.subr.bf16.mxu0 0
    %2064 = vmatpush1.bf16.xpose.msra.mxu0 0
    %2065 = vmatprep.subr.bf16.mxu0 0
    %2066 = vmatpush1.bf16.xpose.msra.mxu0 %v2049
    %2067 = vmatprep.subr.bf16.mxu0 0
    %2068 = vmatpush2.bf16.xpose.msra.mxu0 0
    %2069 = vmatprep.subr.bf16.mxu0 0
    %2070 = vmatpush2.bf16.xpose.msra.mxu0 0
    %2071 = vmatprep.subr.bf16.mxu0 0
    %2072 = vmatpush2.bf16.xpose.msra.mxu0 0
    %2073 = vmatprep.subr.bf16.mxu0 0
    %2074 = vmatpush2.bf16.xpose.msra.mxu0 0
    %2075 = vmatprep.subr.bf16.mxu0 0
    %2076 = vmatpush2.bf16.xpose.msra.mxu0 0
    %2077 = vmatprep.subr.bf16.mxu0 0
    %2078 = vmatpush2.bf16.xpose.msra.mxu0 0
    %2079 = vmatprep.subr.bf16.mxu0 0
    %2080 = vmatpush2.bf16.xpose.msra.mxu0 0
    %2081 = vmatprep.subr.bf16.mxu0 0
    %2082 = vmatpush2.bf16.xpose.msra.mxu0 0
    %2083 = vmatprep.mubr.bf16.mxu0 0
    %2084 = vmatmul.mubr.bf16.gmra.mxu0 %v2046
    %v2085 = vpop.f32.mrf.mxu0
    %v2086 = vadd.f32 0.0, %v2085
    %v2087 = vpop.f32.mrf.mxu0
    %v2088 = vpop.f32.mrf.mxu0
    %v2089 = vpop.f32.mrf.mxu0
    %2090 = vdwg.mxu0
    %v2092 = vsel %vm1162, %v2040, 0
    %v2095 = vsel %vm1162, %v2042, 0
    %2097 = vmatprep.subr.bf16.mxu0 0
    %2098 = vmatpush1.bf16.xpose.msra.mxu0 0
    %2099 = vmatprep.subr.bf16.mxu0 0
    %2100 = vmatpush1.bf16.xpose.msra.mxu0 0
    %2101 = vmatprep.subr.bf16.mxu0 0
    %2102 = vmatpush1.bf16.xpose.msra.mxu0 0
    %2103 = vmatprep.subr.bf16.mxu0 0
    %2104 = vmatpush1.bf16.xpose.msra.mxu0 0
    %2105 = vmatprep.subr.bf16.mxu0 0
    %2106 = vmatpush1.bf16.xpose.msra.mxu0 0
    %2107 = vmatprep.subr.bf16.mxu0 0
    %2108 = vmatpush1.bf16.xpose.msra.mxu0 0
    %2109 = vmatprep.subr.bf16.mxu0 0
    %2110 = vmatpush1.bf16.xpose.msra.mxu0 0
    %2111 = vmatprep.subr.bf16.mxu0 0
    %2112 = vmatpush1.bf16.xpose.msra.mxu0 %v2095
    %2113 = vmatprep.subr.bf16.mxu0 0
    %2114 = vmatpush2.bf16.xpose.msra.mxu0 0
    %2115 = vmatprep.subr.bf16.mxu0 0
    %2116 = vmatpush2.bf16.xpose.msra.mxu0 0
    %2117 = vmatprep.subr.bf16.mxu0 0
    %2118 = vmatpush2.bf16.xpose.msra.mxu0 0
    %2119 = vmatprep.subr.bf16.mxu0 0
    %2120 = vmatpush2.bf16.xpose.msra.mxu0 0
    %2121 = vmatprep.subr.bf16.mxu0 0
    %2122 = vmatpush2.bf16.xpose.msra.mxu0 0
    %2123 = vmatprep.subr.bf16.mxu0 0
    %2124 = vmatpush2.bf16.xpose.msra.mxu0 0
    %2125 = vmatprep.subr.bf16.mxu0 0
    %2126 = vmatpush2.bf16.xpose.msra.mxu0 0
    %2127 = vmatprep.subr.bf16.mxu0 0
    %2128 = vmatpush2.bf16.xpose.msra.mxu0 0
    %2129 = vmatprep.mubr.bf16.mxu0 0
    %2130 = vmatmul.mubr.bf16.gmra.mxu0 %v2092
    %v2131 = vpop.f32.mrf.mxu0
    %v2132 = vadd.f32 0.0, %v2131
    %v2133 = vpop.f32.mrf.mxu0
    %v2134 = vpop.f32.mrf.mxu0
    %v2135 = vpop.f32.mrf.mxu0
    %2136 = vdwg.mxu0
    %v2137 = vsel %vm1255, %v2086, -inf
    %2138 = vmax.xlane.f32.xlu0 %v2137
    %v2139 = vpop.xlane.xlu0 %2138
    %v2140 = vsel %vm1255, %v2132, -inf
    %2141 = vmax.xlane.f32.xlu0 %v2140
    %v2142 = vpop.xlane.xlu0 %2141
    %v2143 = vsub.f32 %v2086, %v2139
    %v2144 = vsub.f32 %v2132, %v2142
    %v2145 = vmul.f32 %v2143, 1.442695
    %v2146 = vpow.pop %v2145
    %v2147 = vmul.f32 %v2144, 1.442695
    %v2148 = vpow.pop %v2147
    %v2149 = vsel %vm1255, %v2146, 0.0
    %2150 = vadd.xlane.f32.xlu0 %v2149
    %v2151 = vpop.xlane.xlu0 %2150
    %v2152 = vsel %vm1255, %v2148, 0.0
    %2153 = vadd.xlane.f32.xlu0 %v2152
    %v2154 = vpop.xlane.xlu0 %2153
    %v2155 = vrcp.pop %v2151
    %v2156 = vmul.f32 %v2146, %v2155
    %v2157 = vrcp.pop %v2154
    %v2158 = vmul.f32 %v2148, %v2157
    %v2159 = vpack.c.bf16 %v2156, %v2156
    %v2160 = vpack.c.bf16 %v2158, %v2158
    %v2162 = vsel %vm1255, %v2159, 0
    %v2165 = vsel %vm1283, %v2043, 0
    %2167 = vmatprep.subr.bf16.mxu0 0
    %2168 = vmatpush1.bf16.msra.mxu0 0
    %2169 = vmatprep.subr.bf16.mxu0 0
    %2170 = vmatpush1.bf16.msra.mxu0 0
    %2171 = vmatprep.subr.bf16.mxu0 0
    %2172 = vmatpush1.bf16.msra.mxu0 0
    %2173 = vmatprep.subr.bf16.mxu0 0
    %2174 = vmatpush1.bf16.msra.mxu0 0
    %2175 = vmatprep.subr.bf16.mxu0 0
    %2176 = vmatpush1.bf16.msra.mxu0 0
    %2177 = vmatprep.subr.bf16.mxu0 0
    %2178 = vmatpush1.bf16.msra.mxu0 0
    %2179 = vmatprep.subr.bf16.mxu0 0
    %2180 = vmatpush1.bf16.msra.mxu0 0
    %2181 = vmatprep.subr.bf16.mxu0 0
    %2182 = vmatpush1.bf16.msra.mxu0 %v2165
    %2183 = vmatprep.subr.bf16.mxu0 0
    %2184 = vmatpush2.bf16.msra.mxu0 0
    %2185 = vmatprep.subr.bf16.mxu0 0
    %2186 = vmatpush2.bf16.msra.mxu0 0
    %2187 = vmatprep.subr.bf16.mxu0 0
    %2188 = vmatpush2.bf16.msra.mxu0 0
    %2189 = vmatprep.subr.bf16.mxu0 0
    %2190 = vmatpush2.bf16.msra.mxu0 0
    %2191 = vmatprep.subr.bf16.mxu0 0
    %2192 = vmatpush2.bf16.msra.mxu0 0
    %2193 = vmatprep.subr.bf16.mxu0 0
    %2194 = vmatpush2.bf16.msra.mxu0 0
    %2195 = vmatprep.subr.bf16.mxu0 0
    %2196 = vmatpush2.bf16.msra.mxu0 0
    %2197 = vmatprep.subr.bf16.mxu0 0
    %2198 = vmatpush2.bf16.msra.mxu0 0
    %2199 = vmatprep.mubr.bf16.mxu0 0
    %2200 = vmatmul.mubr.bf16.gmra.mxu0 %v2162
    %v2201 = vpop.f32.mrf.mxu0
    %v2202 = vadd.f32 0.0, %v2201
    %v2203 = vpop.f32.mrf.mxu0
    %v2204 = vpop.f32.mrf.mxu0
    %v2205 = vpop.f32.mrf.mxu0
    %2206 = vdwg.mxu0
    %v2208 = vsel %vm1255, %v2160, 0
    %v2211 = vsel %vm1283, %v2044, 0
    %2213 = vmatprep.subr.bf16.mxu0 0
    %2214 = vmatpush1.bf16.msra.mxu0 0
    %2215 = vmatprep.subr.bf16.mxu0 0
    %2216 = vmatpush1.bf16.msra.mxu0 0
    %2217 = vmatprep.subr.bf16.mxu0 0
    %2218 = vmatpush1.bf16.msra.mxu0 0
    %2219 = vmatprep.subr.bf16.mxu0 0
    %2220 = vmatpush1.bf16.msra.mxu0 0
    %2221 = vmatprep.subr.bf16.mxu0 0
    %2222 = vmatpush1.bf16.msra.mxu0 0
    %2223 = vmatprep.subr.bf16.mxu0 0
    %2224 = vmatpush1.bf16.msra.mxu0 0
    %2225 = vmatprep.subr.bf16.mxu0 0
    %2226 = vmatpush1.bf16.msra.mxu0 0
    %2227 = vmatprep.subr.bf16.mxu0 0
    %2228 = vmatpush1.bf16.msra.mxu0 %v2211
    %2229 = vmatprep.subr.bf16.mxu0 0
    %2230 = vmatpush2.bf16.msra.mxu0 0
    %2231 = vmatprep.subr.bf16.mxu0 0
    %2232 = vmatpush2.bf16.msra.mxu0 0
    %2233 = vmatprep.subr.bf16.mxu0 0
    %2234 = vmatpush2.bf16.msra.mxu0 0
    %2235 = vmatprep.subr.bf16.mxu0 0
    %2236 = vmatpush2.bf16.msra.mxu0 0
    %2237 = vmatprep.subr.bf16.mxu0 0
    %2238 = vmatpush2.bf16.msra.mxu0 0
    %2239 = vmatprep.subr.bf16.mxu0 0
    %2240 = vmatpush2.bf16.msra.mxu0 0
    %2241 = vmatprep.subr.bf16.mxu0 0
    %2242 = vmatpush2.bf16.msra.mxu0 0
    %2243 = vmatprep.subr.bf16.mxu0 0
    %2244 = vmatpush2.bf16.msra.mxu0 0
    %2245 = vmatprep.mubr.bf16.mxu0 0
    %2246 = vmatmul.mubr.bf16.gmra.mxu0 %v2208
    %v2247 = vpop.f32.mrf.mxu0
    %v2248 = vadd.f32 0.0, %v2247
    %v2249 = vpop.f32.mrf.mxu0
    %v2250 = vpop.f32.mrf.mxu0
    %v2251 = vpop.f32.mrf.mxu0
    %2252 = vdwg.mxu0
    %2254 = vrot.lane.b32.xlu0 %v2039, 96
    %v2255 = vpop.permute.xlu0 %2254
    %2257 = vrot.lane.b32.xlu0 %v2041, 96
    %v2258 = vpop.permute.xlu0 %2257
    %v2260 = vsel %vm1162, %v2255, 0
    %v2263 = vsel %vm1162, %v2258, 0
    %2265 = vmatprep.subr.bf16.mxu0 0
    %2266 = vmatpush1.bf16.xpose.msra.mxu0 0
    %2267 = vmatprep.subr.bf16.mxu0 0
    %2268 = vmatpush1.bf16.xpose.msra.mxu0 0
    %2269 = vmatprep.subr.bf16.mxu0 0
    %2270 = vmatpush1.bf16.xpose.msra.mxu0 0
    %2271 = vmatprep.subr.bf16.mxu0 0
    %2272 = vmatpush1.bf16.xpose.msra.mxu0 0
    %2273 = vmatprep.subr.bf16.mxu0 0
    %2274 = vmatpush1.bf16.xpose.msra.mxu0 0
    %2275 = vmatprep.subr.bf16.mxu0 0
    %2276 = vmatpush1.bf16.xpose.msra.mxu0 0
    %2277 = vmatprep.subr.bf16.mxu0 0
    %2278 = vmatpush1.bf16.xpose.msra.mxu0 0
    %2279 = vmatprep.subr.bf16.mxu0 0
    %2280 = vmatpush1.bf16.xpose.msra.mxu0 %v2263
    %2281 = vmatprep.subr.bf16.mxu0 0
    %2282 = vmatpush2.bf16.xpose.msra.mxu0 0
    %2283 = vmatprep.subr.bf16.mxu0 0
    %2284 = vmatpush2.bf16.xpose.msra.mxu0 0
    %2285 = vmatprep.subr.bf16.mxu0 0
    %2286 = vmatpush2.bf16.xpose.msra.mxu0 0
    %2287 = vmatprep.subr.bf16.mxu0 0
    %2288 = vmatpush2.bf16.xpose.msra.mxu0 0
    %2289 = vmatprep.subr.bf16.mxu0 0
    %2290 = vmatpush2.bf16.xpose.msra.mxu0 0
    %2291 = vmatprep.subr.bf16.mxu0 0
    %2292 = vmatpush2.bf16.xpose.msra.mxu0 0
    %2293 = vmatprep.subr.bf16.mxu0 0
    %2294 = vmatpush2.bf16.xpose.msra.mxu0 0
    %2295 = vmatprep.subr.bf16.mxu0 0
    %2296 = vmatpush2.bf16.xpose.msra.mxu0 0
    %2297 = vmatprep.mubr.bf16.mxu0 0
    %2298 = vmatmul.mubr.bf16.gmra.mxu0 %v2260
    %v2299 = vpop.f32.mrf.mxu0
    %v2300 = vadd.f32 0.0, %v2299
    %v2301 = vpop.f32.mrf.mxu0
    %v2302 = vpop.f32.mrf.mxu0
    %v2303 = vpop.f32.mrf.mxu0
    %2304 = vdwg.mxu0
    %2306 = vrot.lane.b32.xlu0 %v2040, 96
    %v2307 = vpop.permute.xlu0 %2306
    %2309 = vrot.lane.b32.xlu0 %v2042, 96
    %v2310 = vpop.permute.xlu0 %2309
    %v2312 = vsel %vm1162, %v2307, 0
    %v2315 = vsel %vm1162, %v2310, 0
    %2317 = vmatprep.subr.bf16.mxu0 0
    %2318 = vmatpush1.bf16.xpose.msra.mxu0 0
    %2319 = vmatprep.subr.bf16.mxu0 0
    %2320 = vmatpush1.bf16.xpose.msra.mxu0 0
    %2321 = vmatprep.subr.bf16.mxu0 0
    %2322 = vmatpush1.bf16.xpose.msra.mxu0 0
    %2323 = vmatprep.subr.bf16.mxu0 0
    %2324 = vmatpush1.bf16.xpose.msra.mxu0 0
    %2325 = vmatprep.subr.bf16.mxu0 0
    %2326 = vmatpush1.bf16.xpose.msra.mxu0 0
    %2327 = vmatprep.subr.bf16.mxu0 0
    %2328 = vmatpush1.bf16.xpose.msra.mxu0 0
    %2329 = vmatprep.subr.bf16.mxu0 0
    %2330 = vmatpush1.bf16.xpose.msra.mxu0 0
    %2331 = vmatprep.subr.bf16.mxu0 0
    %2332 = vmatpush1.bf16.xpose.msra.mxu0 %v2315
    %2333 = vmatprep.subr.bf16.mxu0 0
    %2334 = vmatpush2.bf16.xpose.msra.mxu0 0
    %2335 = vmatprep.subr.bf16.mxu0 0
    %2336 = vmatpush2.bf16.xpose.msra.mxu0 0
    %2337 = vmatprep.subr.bf16.mxu0 0
    %2338 = vmatpush2.bf16.xpose.msra.mxu0 0
    %2339 = vmatprep.subr.bf16.mxu0 0
    %2340 = vmatpush2.bf16.xpose.msra.mxu0 0
    %2341 = vmatprep.subr.bf16.mxu0 0
    %2342 = vmatpush2.bf16.xpose.msra.mxu0 0
    %2343 = vmatprep.subr.bf16.mxu0 0
    %2344 = vmatpush2.bf16.xpose.msra.mxu0 0
    %2345 = vmatprep.subr.bf16.mxu0 0
    %2346 = vmatpush2.bf16.xpose.msra.mxu0 0
    %2347 = vmatprep.subr.bf16.mxu0 0
    %2348 = vmatpush2.bf16.xpose.msra.mxu0 0
    %2349 = vmatprep.mubr.bf16.mxu0 0
    %2350 = vmatmul.mubr.bf16.gmra.mxu0 %v2312
    %v2351 = vpop.f32.mrf.mxu0
    %v2352 = vadd.f32 0.0, %v2351
    %v2353 = vpop.f32.mrf.mxu0
    %v2354 = vpop.f32.mrf.mxu0
    %v2355 = vpop.f32.mrf.mxu0
    %2356 = vdwg.mxu0
    %v2357 = vsel %vm1255, %v2300, -inf
    %2358 = vmax.xlane.f32.xlu0 %v2357
    %v2359 = vpop.xlane.xlu0 %2358
    %v2360 = vsel %vm1255, %v2352, -inf
    %2361 = vmax.xlane.f32.xlu0 %v2360
    %v2362 = vpop.xlane.xlu0 %2361
    %v2363 = vsub.f32 %v2300, %v2359
    %v2364 = vsub.f32 %v2352, %v2362
    %v2365 = vmul.f32 %v2363, 1.442695
    %v2366 = vpow.pop %v2365
    %v2367 = vmul.f32 %v2364, 1.442695
    %v2368 = vpow.pop %v2367
    %v2369 = vsel %vm1255, %v2366, 0.0
    %2370 = vadd.xlane.f32.xlu0 %v2369
    %v2371 = vpop.xlane.xlu0 %2370
    %v2372 = vsel %vm1255, %v2368, 0.0
    %2373 = vadd.xlane.f32.xlu0 %v2372
    %v2374 = vpop.xlane.xlu0 %2373
    %v2375 = vrcp.pop %v2371
    %v2376 = vmul.f32 %v2366, %v2375
    %v2377 = vrcp.pop %v2374
    %v2378 = vmul.f32 %v2368, %v2377
    %v2379 = vpack.c.bf16 %v2376, %v2376
    %v2380 = vpack.c.bf16 %v2378, %v2378
    %2382 = vrot.lane.b32.xlu0 %v2043, 96
    %v2383 = vpop.permute.xlu0 %2382
    %v2385 = vsel %vm1255, %v2379, 0
    %v2388 = vsel %vm1283, %v2383, 0
    %2390 = vmatprep.subr.bf16.mxu0 0
    %2391 = vmatpush1.bf16.msra.mxu0 0
    %2392 = vmatprep.subr.bf16.mxu0 0
    %2393 = vmatpush1.bf16.msra.mxu0 0
    %2394 = vmatprep.subr.bf16.mxu0 0
    %2395 = vmatpush1.bf16.msra.mxu0 0
    %2396 = vmatprep.subr.bf16.mxu0 0
    %2397 = vmatpush1.bf16.msra.mxu0 0
    %2398 = vmatprep.subr.bf16.mxu0 0
    %2399 = vmatpush1.bf16.msra.mxu0 0
    %2400 = vmatprep.subr.bf16.mxu0 0
    %2401 = vmatpush1.bf16.msra.mxu0 0
    %2402 = vmatprep.subr.bf16.mxu0 0
    %2403 = vmatpush1.bf16.msra.mxu0 0
    %2404 = vmatprep.subr.bf16.mxu0 0
    %2405 = vmatpush1.bf16.msra.mxu0 %v2388
    %2406 = vmatprep.subr.bf16.mxu0 0
    %2407 = vmatpush2.bf16.msra.mxu0 0
    %2408 = vmatprep.subr.bf16.mxu0 0
    %2409 = vmatpush2.bf16.msra.mxu0 0
    %2410 = vmatprep.subr.bf16.mxu0 0
    %2411 = vmatpush2.bf16.msra.mxu0 0
    %2412 = vmatprep.subr.bf16.mxu0 0
    %2413 = vmatpush2.bf16.msra.mxu0 0
    %2414 = vmatprep.subr.bf16.mxu0 0
    %2415 = vmatpush2.bf16.msra.mxu0 0
    %2416 = vmatprep.subr.bf16.mxu0 0
    %2417 = vmatpush2.bf16.msra.mxu0 0
    %2418 = vmatprep.subr.bf16.mxu0 0
    %2419 = vmatpush2.bf16.msra.mxu0 0
    %2420 = vmatprep.subr.bf16.mxu0 0
    %2421 = vmatpush2.bf16.msra.mxu0 0
    %2422 = vmatprep.mubr.bf16.mxu0 0
    %2423 = vmatmul.mubr.bf16.gmra.mxu0 %v2385
    %v2424 = vpop.f32.mrf.mxu0
    %v2425 = vadd.f32 0.0, %v2424
    %v2426 = vpop.f32.mrf.mxu0
    %v2427 = vpop.f32.mrf.mxu0
    %v2428 = vpop.f32.mrf.mxu0
    %2429 = vdwg.mxu0
    %2431 = vrot.lane.b32.xlu0 %v2044, 96
    %v2432 = vpop.permute.xlu0 %2431
    %v2434 = vsel %vm1255, %v2380, 0
    %v2437 = vsel %vm1283, %v2432, 0
    %2439 = vmatprep.subr.bf16.mxu0 0
    %2440 = vmatpush1.bf16.msra.mxu0 0
    %2441 = vmatprep.subr.bf16.mxu0 0
    %2442 = vmatpush1.bf16.msra.mxu0 0
    %2443 = vmatprep.subr.bf16.mxu0 0
    %2444 = vmatpush1.bf16.msra.mxu0 0
    %2445 = vmatprep.subr.bf16.mxu0 0
    %2446 = vmatpush1.bf16.msra.mxu0 0
    %2447 = vmatprep.subr.bf16.mxu0 0
    %2448 = vmatpush1.bf16.msra.mxu0 0
    %2449 = vmatprep.subr.bf16.mxu0 0
    %2450 = vmatpush1.bf16.msra.mxu0 0
    %2451 = vmatprep.subr.bf16.mxu0 0
    %2452 = vmatpush1.bf16.msra.mxu0 0
    %2453 = vmatprep.subr.bf16.mxu0 0
    %2454 = vmatpush1.bf16.msra.mxu0 %v2437
    %2455 = vmatprep.subr.bf16.mxu0 0
    %2456 = vmatpush2.bf16.msra.mxu0 0
    %2457 = vmatprep.subr.bf16.mxu0 0
    %2458 = vmatpush2.bf16.msra.mxu0 0
    %2459 = vmatprep.subr.bf16.mxu0 0
    %2460 = vmatpush2.bf16.msra.mxu0 0
    %2461 = vmatprep.subr.bf16.mxu0 0
    %2462 = vmatpush2.bf16.msra.mxu0 0
    %2463 = vmatprep.subr.bf16.mxu0 0
    %2464 = vmatpush2.bf16.msra.mxu0 0
    %2465 = vmatprep.subr.bf16.mxu0 0
    %2466 = vmatpush2.bf16.msra.mxu0 0
    %2467 = vmatprep.subr.bf16.mxu0 0
    %2468 = vmatpush2.bf16.msra.mxu0 0
    %2469 = vmatprep.subr.bf16.mxu0 0
    %2470 = vmatpush2.bf16.msra.mxu0 0
    %2471 = vmatprep.mubr.bf16.mxu0 0
    %2472 = vmatmul.mubr.bf16.gmra.mxu0 %v2434
    %v2473 = vpop.f32.mrf.mxu0
    %v2474 = vadd.f32 0.0, %v2473
    %v2475 = vpop.f32.mrf.mxu0
    %v2476 = vpop.f32.mrf.mxu0
    %v2477 = vpop.f32.mrf.mxu0
    %2478 = vdwg.mxu0
    %2479 = vrot.lane.b32.xlu0 %v2039, 64
    %v2480 = vpop.permute.xlu0 %2479
    %2481 = vrot.lane.b32.xlu0 %v2041, 64
    %v2482 = vpop.permute.xlu0 %2481
    %v2484 = vsel %vm1162, %v2480, 0
    %v2487 = vsel %vm1162, %v2482, 0
    %2489 = vmatprep.subr.bf16.mxu0 0
    %2490 = vmatpush1.bf16.xpose.msra.mxu0 0
    %2491 = vmatprep.subr.bf16.mxu0 0
    %2492 = vmatpush1.bf16.xpose.msra.mxu0 0
    %2493 = vmatprep.subr.bf16.mxu0 0
    %2494 = vmatpush1.bf16.xpose.msra.mxu0 0
    %2495 = vmatprep.subr.bf16.mxu0 0
    %2496 = vmatpush1.bf16.xpose.msra.mxu0 0
    %2497 = vmatprep.subr.bf16.mxu0 0
    %2498 = vmatpush1.bf16.xpose.msra.mxu0 0
    %2499 = vmatprep.subr.bf16.mxu0 0
    %2500 = vmatpush1.bf16.xpose.msra.mxu0 0
    %2501 = vmatprep.subr.bf16.mxu0 0
    %2502 = vmatpush1.bf16.xpose.msra.mxu0 0
    %2503 = vmatprep.subr.bf16.mxu0 0
    %2504 = vmatpush1.bf16.xpose.msra.mxu0 %v2487
    %2505 = vmatprep.subr.bf16.mxu0 0
    %2506 = vmatpush2.bf16.xpose.msra.mxu0 0
    %2507 = vmatprep.subr.bf16.mxu0 0
    %2508 = vmatpush2.bf16.xpose.msra.mxu0 0
    %2509 = vmatprep.subr.bf16.mxu0 0
    %2510 = vmatpush2.bf16.xpose.msra.mxu0 0
    %2511 = vmatprep.subr.bf16.mxu0 0
    %2512 = vmatpush2.bf16.xpose.msra.mxu0 0
    %2513 = vmatprep.subr.bf16.mxu0 0
    %2514 = vmatpush2.bf16.xpose.msra.mxu0 0
    %2515 = vmatprep.subr.bf16.mxu0 0
    %2516 = vmatpush2.bf16.xpose.msra.mxu0 0
    %2517 = vmatprep.subr.bf16.mxu0 0
    %2518 = vmatpush2.bf16.xpose.msra.mxu0 0
    %2519 = vmatprep.subr.bf16.mxu0 0
    %2520 = vmatpush2.bf16.xpose.msra.mxu0 0
    %2521 = vmatprep.mubr.bf16.mxu0 0
    %2522 = vmatmul.mubr.bf16.gmra.mxu0 %v2484
    %v2523 = vpop.f32.mrf.mxu0
    %v2524 = vadd.f32 0.0, %v2523
    %v2525 = vpop.f32.mrf.mxu0
    %v2526 = vpop.f32.mrf.mxu0
    %v2527 = vpop.f32.mrf.mxu0
    %2528 = vdwg.mxu0
    %2529 = vrot.lane.b32.xlu0 %v2040, 64
    %v2530 = vpop.permute.xlu0 %2529
    %2531 = vrot.lane.b32.xlu0 %v2042, 64
    %v2532 = vpop.permute.xlu0 %2531
    %v2534 = vsel %vm1162, %v2530, 0
    %v2537 = vsel %vm1162, %v2532, 0
    %2539 = vmatprep.subr.bf16.mxu0 0
    %2540 = vmatpush1.bf16.xpose.msra.mxu0 0
    %2541 = vmatprep.subr.bf16.mxu0 0
    %2542 = vmatpush1.bf16.xpose.msra.mxu0 0
    %2543 = vmatprep.subr.bf16.mxu0 0
    %2544 = vmatpush1.bf16.xpose.msra.mxu0 0
    %2545 = vmatprep.subr.bf16.mxu0 0
    %2546 = vmatpush1.bf16.xpose.msra.mxu0 0
    %2547 = vmatprep.subr.bf16.mxu0 0
    %2548 = vmatpush1.bf16.xpose.msra.mxu0 0
    %2549 = vmatprep.subr.bf16.mxu0 0
    %2550 = vmatpush1.bf16.xpose.msra.mxu0 0
    %2551 = vmatprep.subr.bf16.mxu0 0
    %2552 = vmatpush1.bf16.xpose.msra.mxu0 0
    %2553 = vmatprep.subr.bf16.mxu0 0
    %2554 = vmatpush1.bf16.xpose.msra.mxu0 %v2537
    %2555 = vmatprep.subr.bf16.mxu0 0
    %2556 = vmatpush2.bf16.xpose.msra.mxu0 0
    %2557 = vmatprep.subr.bf16.mxu0 0
    %2558 = vmatpush2.bf16.xpose.msra.mxu0 0
    %2559 = vmatprep.subr.bf16.mxu0 0
    %2560 = vmatpush2.bf16.xpose.msra.mxu0 0
    %2561 = vmatprep.subr.bf16.mxu0 0
    %2562 = vmatpush2.bf16.xpose.msra.mxu0 0
    %2563 = vmatprep.subr.bf16.mxu0 0
    %2564 = vmatpush2.bf16.xpose.msra.mxu0 0
    %2565 = vmatprep.subr.bf16.mxu0 0
    %2566 = vmatpush2.bf16.xpose.msra.mxu0 0
    %2567 = vmatprep.subr.bf16.mxu0 0
    %2568 = vmatpush2.bf16.xpose.msra.mxu0 0
    %2569 = vmatprep.subr.bf16.mxu0 0
    %2570 = vmatpush2.bf16.xpose.msra.mxu0 0
    %2571 = vmatprep.mubr.bf16.mxu0 0
    %2572 = vmatmul.mubr.bf16.gmra.mxu0 %v2534
    %v2573 = vpop.f32.mrf.mxu0
    %v2574 = vadd.f32 0.0, %v2573
    %v2575 = vpop.f32.mrf.mxu0
    %v2576 = vpop.f32.mrf.mxu0
    %v2577 = vpop.f32.mrf.mxu0
    %2578 = vdwg.mxu0
    %v2579 = vsel %vm1255, %v2524, -inf
    %2580 = vmax.xlane.f32.xlu0 %v2579
    %v2581 = vpop.xlane.xlu0 %2580
    %v2582 = vsel %vm1255, %v2574, -inf
    %2583 = vmax.xlane.f32.xlu0 %v2582
    %v2584 = vpop.xlane.xlu0 %2583
    %v2585 = vsub.f32 %v2524, %v2581
    %v2586 = vsub.f32 %v2574, %v2584
    %v2587 = vmul.f32 %v2585, 1.442695
    %v2588 = vpow.pop %v2587
    %v2589 = vmul.f32 %v2586, 1.442695
    %v2590 = vpow.pop %v2589
    %v2591 = vsel %vm1255, %v2588, 0.0
    %2592 = vadd.xlane.f32.xlu0 %v2591
    %v2593 = vpop.xlane.xlu0 %2592
    %v2594 = vsel %vm1255, %v2590, 0.0
    %2595 = vadd.xlane.f32.xlu0 %v2594
    %v2596 = vpop.xlane.xlu0 %2595
    %v2597 = vrcp.pop %v2593
    %v2598 = vmul.f32 %v2588, %v2597
    %v2599 = vrcp.pop %v2596
    %v2600 = vmul.f32 %v2590, %v2599
    %v2601 = vpack.c.bf16 %v2598, %v2598
    %v2602 = vpack.c.bf16 %v2600, %v2600
    %2603 = vrot.lane.b32.xlu0 %v2043, 64
    %v2604 = vpop.permute.xlu0 %2603
    %v2606 = vsel %vm1255, %v2601, 0
    %v2609 = vsel %vm1283, %v2604, 0
    %2611 = vmatprep.subr.bf16.mxu0 0
    %2612 = vmatpush1.bf16.msra.mxu0 0
    %2613 = vmatprep.subr.bf16.mxu0 0
    %2614 = vmatpush1.bf16.msra.mxu0 0
    %2615 = vmatprep.subr.bf16.mxu0 0
    %2616 = vmatpush1.bf16.msra.mxu0 0
    %2617 = vmatprep.subr.bf16.mxu0 0
    %2618 = vmatpush1.bf16.msra.mxu0 0
    %2619 = vmatprep.subr.bf16.mxu0 0
    %2620 = vmatpush1.bf16.msra.mxu0 0
    %2621 = vmatprep.subr.bf16.mxu0 0
    %2622 = vmatpush1.bf16.msra.mxu0 0
    %2623 = vmatprep.subr.bf16.mxu0 0
    %2624 = vmatpush1.bf16.msra.mxu0 0
    %2625 = vmatprep.subr.bf16.mxu0 0
    %2626 = vmatpush1.bf16.msra.mxu0 %v2609
    %2627 = vmatprep.subr.bf16.mxu0 0
    %2628 = vmatpush2.bf16.msra.mxu0 0
    %2629 = vmatprep.subr.bf16.mxu0 0
    %2630 = vmatpush2.bf16.msra.mxu0 0
    %2631 = vmatprep.subr.bf16.mxu0 0
    %2632 = vmatpush2.bf16.msra.mxu0 0
    %2633 = vmatprep.subr.bf16.mxu0 0
    %2634 = vmatpush2.bf16.msra.mxu0 0
    %2635 = vmatprep.subr.bf16.mxu0 0
    %2636 = vmatpush2.bf16.msra.mxu0 0
    %2637 = vmatprep.subr.bf16.mxu0 0
    %2638 = vmatpush2.bf16.msra.mxu0 0
    %2639 = vmatprep.subr.bf16.mxu0 0
    %2640 = vmatpush2.bf16.msra.mxu0 0
    %2641 = vmatprep.subr.bf16.mxu0 0
    %2642 = vmatpush2.bf16.msra.mxu0 0
    %2643 = vmatprep.mubr.bf16.mxu0 0
    %2644 = vmatmul.mubr.bf16.gmra.mxu0 %v2606
    %v2645 = vpop.f32.mrf.mxu0
    %v2646 = vadd.f32 0.0, %v2645
    %v2647 = vpop.f32.mrf.mxu0
    %v2648 = vpop.f32.mrf.mxu0
    %v2649 = vpop.f32.mrf.mxu0
    %2650 = vdwg.mxu0
    %2651 = vrot.lane.b32.xlu0 %v2044, 64
    %v2652 = vpop.permute.xlu0 %2651
    %v2654 = vsel %vm1255, %v2602, 0
    %v2657 = vsel %vm1283, %v2652, 0
    %2659 = vmatprep.subr.bf16.mxu0 0
    %2660 = vmatpush1.bf16.msra.mxu0 0
    %2661 = vmatprep.subr.bf16.mxu0 0
    %2662 = vmatpush1.bf16.msra.mxu0 0
    %2663 = vmatprep.subr.bf16.mxu0 0
    %2664 = vmatpush1.bf16.msra.mxu0 0
    %2665 = vmatprep.subr.bf16.mxu0 0
    %2666 = vmatpush1.bf16.msra.mxu0 0
    %2667 = vmatprep.subr.bf16.mxu0 0
    %2668 = vmatpush1.bf16.msra.mxu0 0
    %2669 = vmatprep.subr.bf16.mxu0 0
    %2670 = vmatpush1.bf16.msra.mxu0 0
    %2671 = vmatprep.subr.bf16.mxu0 0
    %2672 = vmatpush1.bf16.msra.mxu0 0
    %2673 = vmatprep.subr.bf16.mxu0 0
    %2674 = vmatpush1.bf16.msra.mxu0 %v2657
    %2675 = vmatprep.subr.bf16.mxu0 0
    %2676 = vmatpush2.bf16.msra.mxu0 0
    %2677 = vmatprep.subr.bf16.mxu0 0
    %2678 = vmatpush2.bf16.msra.mxu0 0
    %2679 = vmatprep.subr.bf16.mxu0 0
    %2680 = vmatpush2.bf16.msra.mxu0 0
    %2681 = vmatprep.subr.bf16.mxu0 0
    %2682 = vmatpush2.bf16.msra.mxu0 0
    %2683 = vmatprep.subr.bf16.mxu0 0
    %2684 = vmatpush2.bf16.msra.mxu0 0
    %2685 = vmatprep.subr.bf16.mxu0 0
    %2686 = vmatpush2.bf16.msra.mxu0 0
    %2687 = vmatprep.subr.bf16.mxu0 0
    %2688 = vmatpush2.bf16.msra.mxu0 0
    %2689 = vmatprep.subr.bf16.mxu0 0
    %2690 = vmatpush2.bf16.msra.mxu0 0
    %2691 = vmatprep.mubr.bf16.mxu0 0
    %2692 = vmatmul.mubr.bf16.gmra.mxu0 %v2654
    %v2693 = vpop.f32.mrf.mxu0
    %v2694 = vadd.f32 0.0, %v2693
    %v2695 = vpop.f32.mrf.mxu0
    %v2696 = vpop.f32.mrf.mxu0
    %v2697 = vpop.f32.mrf.mxu0
    %2698 = vdwg.mxu0
    %2699 = vrot.lane.b32.xlu0 %v2039, 32
    %v2700 = vpop.permute.xlu0 %2699
    %2701 = vrot.lane.b32.xlu0 %v2041, 32
    %v2702 = vpop.permute.xlu0 %2701
    %v2704 = vsel %vm1162, %v2700, 0
    %v2707 = vsel %vm1162, %v2702, 0
    %2709 = vmatprep.subr.bf16.mxu0 0
    %2710 = vmatpush1.bf16.xpose.msra.mxu0 0
    %2711 = vmatprep.subr.bf16.mxu0 0
    %2712 = vmatpush1.bf16.xpose.msra.mxu0 0
    %2713 = vmatprep.subr.bf16.mxu0 0
    %2714 = vmatpush1.bf16.xpose.msra.mxu0 0
    %2715 = vmatprep.subr.bf16.mxu0 0
    %2716 = vmatpush1.bf16.xpose.msra.mxu0 0
    %2717 = vmatprep.subr.bf16.mxu0 0
    %2718 = vmatpush1.bf16.xpose.msra.mxu0 0
    %2719 = vmatprep.subr.bf16.mxu0 0
    %2720 = vmatpush1.bf16.xpose.msra.mxu0 0
    %2721 = vmatprep.subr.bf16.mxu0 0
    %2722 = vmatpush1.bf16.xpose.msra.mxu0 0
    %2723 = vmatprep.subr.bf16.mxu0 0
    %2724 = vmatpush1.bf16.xpose.msra.mxu0 %v2707
    %2725 = vmatprep.subr.bf16.mxu0 0
    %2726 = vmatpush2.bf16.xpose.msra.mxu0 0
    %2727 = vmatprep.subr.bf16.mxu0 0
    %2728 = vmatpush2.bf16.xpose.msra.mxu0 0
    %2729 = vmatprep.subr.bf16.mxu0 0
    %2730 = vmatpush2.bf16.xpose.msra.mxu0 0
    %2731 = vmatprep.subr.bf16.mxu0 0
    %2732 = vmatpush2.bf16.xpose.msra.mxu0 0
    %2733 = vmatprep.subr.bf16.mxu0 0
    %2734 = vmatpush2.bf16.xpose.msra.mxu0 0
    %2735 = vmatprep.subr.bf16.mxu0 0
    %2736 = vmatpush2.bf16.xpose.msra.mxu0 0
    %2737 = vmatprep.subr.bf16.mxu0 0
    %2738 = vmatpush2.bf16.xpose.msra.mxu0 0
    %2739 = vmatprep.subr.bf16.mxu0 0
    %2740 = vmatpush2.bf16.xpose.msra.mxu0 0
    %2741 = vmatprep.mubr.bf16.mxu0 0
    %2742 = vmatmul.mubr.bf16.gmra.mxu0 %v2704
    %v2743 = vpop.f32.mrf.mxu0
    %v2744 = vadd.f32 0.0, %v2743
    %v2745 = vpop.f32.mrf.mxu0
    %v2746 = vpop.f32.mrf.mxu0
    %v2747 = vpop.f32.mrf.mxu0
    %2748 = vdwg.mxu0
    %2749 = vrot.lane.b32.xlu0 %v2040, 32
    %v2750 = vpop.permute.xlu0 %2749
    %2751 = vrot.lane.b32.xlu0 %v2042, 32
    %v2752 = vpop.permute.xlu0 %2751
    %v2754 = vsel %vm1162, %v2750, 0
    %v2757 = vsel %vm1162, %v2752, 0
    %2759 = vmatprep.subr.bf16.mxu0 0
    %2760 = vmatpush1.bf16.xpose.msra.mxu0 0
    %2761 = vmatprep.subr.bf16.mxu0 0
    %2762 = vmatpush1.bf16.xpose.msra.mxu0 0
    %2763 = vmatprep.subr.bf16.mxu0 0
    %2764 = vmatpush1.bf16.xpose.msra.mxu0 0
    %2765 = vmatprep.subr.bf16.mxu0 0
    %2766 = vmatpush1.bf16.xpose.msra.mxu0 0
    %2767 = vmatprep.subr.bf16.mxu0 0
    %2768 = vmatpush1.bf16.xpose.msra.mxu0 0
    %2769 = vmatprep.subr.bf16.mxu0 0
    %2770 = vmatpush1.bf16.xpose.msra.mxu0 0
    %2771 = vmatprep.subr.bf16.mxu0 0
    %2772 = vmatpush1.bf16.xpose.msra.mxu0 0
    %2773 = vmatprep.subr.bf16.mxu0 0
    %2774 = vmatpush1.bf16.xpose.msra.mxu0 %v2757
    %2775 = vmatprep.subr.bf16.mxu0 0
    %2776 = vmatpush2.bf16.xpose.msra.mxu0 0
    %2777 = vmatprep.subr.bf16.mxu0 0
    %2778 = vmatpush2.bf16.xpose.msra.mxu0 0
    %2779 = vmatprep.subr.bf16.mxu0 0
    %2780 = vmatpush2.bf16.xpose.msra.mxu0 0
    %2781 = vmatprep.subr.bf16.mxu0 0
    %2782 = vmatpush2.bf16.xpose.msra.mxu0 0
    %2783 = vmatprep.subr.bf16.mxu0 0
    %2784 = vmatpush2.bf16.xpose.msra.mxu0 0
    %2785 = vmatprep.subr.bf16.mxu0 0
    %2786 = vmatpush2.bf16.xpose.msra.mxu0 0
    %2787 = vmatprep.subr.bf16.mxu0 0
    %2788 = vmatpush2.bf16.xpose.msra.mxu0 0
    %2789 = vmatprep.subr.bf16.mxu0 0
    %2790 = vmatpush2.bf16.xpose.msra.mxu0 0
    %2791 = vmatprep.mubr.bf16.mxu0 0
    %2792 = vmatmul.mubr.bf16.gmra.mxu0 %v2754
    %v2793 = vpop.f32.mrf.mxu0
    %v2794 = vadd.f32 0.0, %v2793
    %v2795 = vpop.f32.mrf.mxu0
    %v2796 = vpop.f32.mrf.mxu0
    %v2797 = vpop.f32.mrf.mxu0
    %2798 = vdwg.mxu0
    %v2799 = vsel %vm1255, %v2744, -inf
    %2800 = vmax.xlane.f32.xlu0 %v2799
    %v2801 = vpop.xlane.xlu0 %2800
    %v2802 = vsel %vm1255, %v2794, -inf
    %2803 = vmax.xlane.f32.xlu0 %v2802
    %v2804 = vpop.xlane.xlu0 %2803
    %v2805 = vsub.f32 %v2744, %v2801
    %v2806 = vsub.f32 %v2794, %v2804
    %v2807 = vmul.f32 %v2805, 1.442695
    %v2808 = vpow.pop %v2807
    %v2809 = vmul.f32 %v2806, 1.442695
    %v2810 = vpow.pop %v2809
    %v2811 = vsel %vm1255, %v2808, 0.0
    %2812 = vadd.xlane.f32.xlu0 %v2811
    %v2813 = vpop.xlane.xlu0 %2812
    %v2814 = vsel %vm1255, %v2810, 0.0
    %2815 = vadd.xlane.f32.xlu0 %v2814
    %v2816 = vpop.xlane.xlu0 %2815
    %v2817 = vrcp.pop %v2813
    %v2818 = vmul.f32 %v2808, %v2817
    %v2819 = vrcp.pop %v2816
    %v2820 = vmul.f32 %v2810, %v2819
    %v2821 = vpack.c.bf16 %v2818, %v2818
    %v2822 = vpack.c.bf16 %v2820, %v2820
    %2823 = vrot.lane.b32.xlu0 %v2043, 32
    %v2824 = vpop.permute.xlu0 %2823
    %v2826 = vsel %vm1255, %v2821, 0
    %v2829 = vsel %vm1283, %v2824, 0
    %2831 = vmatprep.subr.bf16.mxu0 0
    %2832 = vmatpush1.bf16.msra.mxu0 0
    %2833 = vmatprep.subr.bf16.mxu0 0
    %2834 = vmatpush1.bf16.msra.mxu0 0
    %2835 = vmatprep.subr.bf16.mxu0 0
    %2836 = vmatpush1.bf16.msra.mxu0 0
    %2837 = vmatprep.subr.bf16.mxu0 0
    %2838 = vmatpush1.bf16.msra.mxu0 0
    %2839 = vmatprep.subr.bf16.mxu0 0
    %2840 = vmatpush1.bf16.msra.mxu0 0
    %2841 = vmatprep.subr.bf16.mxu0 0
    %2842 = vmatpush1.bf16.msra.mxu0 0
    %2843 = vmatprep.subr.bf16.mxu0 0
    %2844 = vmatpush1.bf16.msra.mxu0 0
    %2845 = vmatprep.subr.bf16.mxu0 0
    %2846 = vmatpush1.bf16.msra.mxu0 %v2829
    %2847 = vmatprep.subr.bf16.mxu0 0
    %2848 = vmatpush2.bf16.msra.mxu0 0
    %2849 = vmatprep.subr.bf16.mxu0 0
    %2850 = vmatpush2.bf16.msra.mxu0 0
    %2851 = vmatprep.subr.bf16.mxu0 0
    %2852 = vmatpush2.bf16.msra.mxu0 0
    %2853 = vmatprep.subr.bf16.mxu0 0
    %2854 = vmatpush2.bf16.msra.mxu0 0
    %2855 = vmatprep.subr.bf16.mxu0 0
    %2856 = vmatpush2.bf16.msra.mxu0 0
    %2857 = vmatprep.subr.bf16.mxu0 0
    %2858 = vmatpush2.bf16.msra.mxu0 0
    %2859 = vmatprep.subr.bf16.mxu0 0
    %2860 = vmatpush2.bf16.msra.mxu0 0
    %2861 = vmatprep.subr.bf16.mxu0 0
    %2862 = vmatpush2.bf16.msra.mxu0 0
    %2863 = vmatprep.mubr.bf16.mxu0 0
    %2864 = vmatmul.mubr.bf16.gmra.mxu0 %v2826
    %v2865 = vpop.f32.mrf.mxu0
    %v2866 = vadd.f32 0.0, %v2865
    %v2867 = vpop.f32.mrf.mxu0
    %v2868 = vpop.f32.mrf.mxu0
    %v2869 = vpop.f32.mrf.mxu0
    %2870 = vdwg.mxu0
    %2871 = vrot.lane.b32.xlu0 %v2044, 32
    %v2872 = vpop.permute.xlu0 %2871
    %v2874 = vsel %vm1255, %v2822, 0
    %v2877 = vsel %vm1283, %v2872, 0
    %2879 = vmatprep.subr.bf16.mxu0 0
    %2880 = vmatpush1.bf16.msra.mxu0 0
    %2881 = vmatprep.subr.bf16.mxu0 0
    %2882 = vmatpush1.bf16.msra.mxu0 0
    %2883 = vmatprep.subr.bf16.mxu0 0
    %2884 = vmatpush1.bf16.msra.mxu0 0
    %2885 = vmatprep.subr.bf16.mxu0 0
    %2886 = vmatpush1.bf16.msra.mxu0 0
    %2887 = vmatprep.subr.bf16.mxu0 0
    %2888 = vmatpush1.bf16.msra.mxu0 0
    %2889 = vmatprep.subr.bf16.mxu0 0
    %2890 = vmatpush1.bf16.msra.mxu0 0
    %2891 = vmatprep.subr.bf16.mxu0 0
    %2892 = vmatpush1.bf16.msra.mxu0 0
    %2893 = vmatprep.subr.bf16.mxu0 0
    %2894 = vmatpush1.bf16.msra.mxu0 %v2877
    %2895 = vmatprep.subr.bf16.mxu0 0
    %2896 = vmatpush2.bf16.msra.mxu0 0
    %2897 = vmatprep.subr.bf16.mxu0 0
    %2898 = vmatpush2.bf16.msra.mxu0 0
    %2899 = vmatprep.subr.bf16.mxu0 0
    %2900 = vmatpush2.bf16.msra.mxu0 0
    %2901 = vmatprep.subr.bf16.mxu0 0
    %2902 = vmatpush2.bf16.msra.mxu0 0
    %2903 = vmatprep.subr.bf16.mxu0 0
    %2904 = vmatpush2.bf16.msra.mxu0 0
    %2905 = vmatprep.subr.bf16.mxu0 0
    %2906 = vmatpush2.bf16.msra.mxu0 0
    %2907 = vmatprep.subr.bf16.mxu0 0
    %2908 = vmatpush2.bf16.msra.mxu0 0
    %2909 = vmatprep.subr.bf16.mxu0 0
    %2910 = vmatpush2.bf16.msra.mxu0 0
    %2911 = vmatprep.mubr.bf16.mxu0 0
    %2912 = vmatmul.mubr.bf16.gmra.mxu0 %v2874
    %v2913 = vpop.f32.mrf.mxu0
    %v2914 = vadd.f32 0.0, %v2913
    %v2915 = vpop.f32.mrf.mxu0
    %v2916 = vpop.f32.mrf.mxu0
    %v2917 = vpop.f32.mrf.mxu0
    %2918 = vdwg.mxu0
    %2921 = vrot.lane.b32.xlu0 %v1545, 32
    %v2922 = vpop.permute.xlu0 %2921
    %2923 = vrot.lane.b32.xlu0 %v1594, 32
    %v2924 = vpop.permute.xlu0 %2923
    %2929 = vrot.lane.b32.xlu0 %v1766, 64
    %v2930 = vpop.permute.xlu0 %2929
    %2931 = vrot.lane.b32.xlu0 %v1814, 64
    %v2932 = vpop.permute.xlu0 %2931
    %2937 = vrot.lane.b32.xlu0 %v1986, 96
    %v2938 = vpop.permute.xlu0 %2937
    %2939 = vrot.lane.b32.xlu0 %v2034, 96
    %v2940 = vpop.permute.xlu0 %2939
    %2945 = vrot.lane.b32.xlu0 %v2425, 32
    %v2946 = vpop.permute.xlu0 %2945
    %2947 = vrot.lane.b32.xlu0 %v2474, 32
    %v2948 = vpop.permute.xlu0 %2947
    %2953 = vrot.lane.b32.xlu0 %v2646, 64
    %v2954 = vpop.permute.xlu0 %2953
    %2955 = vrot.lane.b32.xlu0 %v2694, 64
    %v2956 = vpop.permute.xlu0 %2955
    %2961 = vrot.lane.b32.xlu0 %v2866, 96
    %v2962 = vpop.permute.xlu0 %2961
    %2963 = vrot.lane.b32.xlu0 %v2914, 96
    %v2964 = vpop.permute.xlu0 %2963
    %v2967 = vsel %vm1162, %v1322, %v2922
    %v2968 = vsel %vm1162, %v1368, %v2924
    %vm2969 = vcmask 523264
    %v2970 = vsel %vm2969, %v2967, %v2930
    %v2971 = vsel %vm2969, %v2968, %v2932
    %vm2972 = vcmask 785408
    %v2973 = vsel %vm2972, %v2970, %v2938
    %v2974 = vsel %vm2972, %v2971, %v2940
    %v2975 = vsel %vm1162, %v2202, %v2946
    %v2976 = vsel %vm1162, %v2248, %v2948
    %v2977 = vsel %vm2969, %v2975, %v2954
    %v2978 = vsel %vm2969, %v2976, %v2956
    %v2979 = vsel %vm2972, %v2977, %v2962
    %v2980 = vsel %vm2972, %v2978, %v2964
    %v2981 = vld [vmem:[#allocation20] sm:$0xff]
    %v2982 = vld [vmem:[#allocation20 + $0x8] sm:$0xff]
    %v2983 = vld [vmem:[#allocation20 + $0x10] sm:$0xff]
    %v2984 = vld [vmem:[#allocation20 + $0x18] sm:$0xff]
    %v2985 = vld [vmem:[#allocation20 + $0x20] sm:$0xff]
    %v2986 = vld [vmem:[#allocation20 + $0x28] sm:$0xff]
    %v2987 = vld [vmem:[#allocation20 + $0x30] sm:$0xff]
    %v2988 = vld [vmem:[#allocation20 + $0x38] sm:$0xff]
    %v2989 = vld [vmem:[#allocation20 + $0x40] sm:$0xff]
    %v2990 = vld [vmem:[#allocation20 + $0x48] sm:$0xff]
    %v2991 = vld [vmem:[#allocation20 + $0x50] sm:$0xff]
    %v2992 = vld [vmem:[#allocation20 + $0x58] sm:$0xff]
    %v2993 = vld [vmem:[#allocation20 + $0x60] sm:$0xff]
    %v2994 = vld [vmem:[#allocation20 + $0x68] sm:$0xff]
    %v2995 = vld [vmem:[#allocation20 + $0x70] sm:$0xff]
    %v2996 = vld [vmem:[#allocation20 + $0x78] sm:$0xff]
    %v2997 = vld [vmem:[%s12] sm:$0x3]
    %v2998 = vpack.c.bf16 %v2974, %v2973
    %v2999 = vpack.c.bf16 %v2980, %v2979
    %v3000 = vunpack.c.l.s8.bf16 %v2981
    %v3001 = vunpack.c.l.s8.bf16 %v2982
    %v3002 = vunpack.c.h.s8.bf16 %v2981
    %v3003 = vunpack.c.h.s8.bf16 %v2982
    %v3004 = vunpack.c.l.s8.bf16 %v2983
    %v3005 = vunpack.c.l.s8.bf16 %v2984
    %v3006 = vunpack.c.h.s8.bf16 %v2983
    %v3007 = vunpack.c.h.s8.bf16 %v2984
    %v3008 = vunpack.c.l.s8.bf16 %v2985
    %v3009 = vunpack.c.l.s8.bf16 %v2986
    %v3010 = vunpack.c.h.s8.bf16 %v2985
    %v3011 = vunpack.c.h.s8.bf16 %v2986
    %v3012 = vunpack.c.l.s8.bf16 %v2987
    %v3013 = vunpack.c.l.s8.bf16 %v2988
    %v3014 = vunpack.c.h.s8.bf16 %v2987
    %v3015 = vunpack.c.h.s8.bf16 %v2988
    %v3016 = vunpack.c.l.s8.bf16 %v2989
    %v3017 = vunpack.c.l.s8.bf16 %v2990
    %v3018 = vunpack.c.h.s8.bf16 %v2989
    %v3019 = vunpack.c.h.s8.bf16 %v2990
    %v3020 = vunpack.c.l.s8.bf16 %v2991
    %v3021 = vunpack.c.l.s8.bf16 %v2992
    %v3022 = vunpack.c.h.s8.bf16 %v2991
    %v3023 = vunpack.c.h.s8.bf16 %v2992
    %v3024 = vunpack.c.l.s8.bf16 %v2993
    %v3025 = vunpack.c.l.s8.bf16 %v2994
    %v3026 = vunpack.c.h.s8.bf16 %v2993
    %v3027 = vunpack.c.h.s8.bf16 %v2994
    %v3028 = vunpack.c.l.s8.bf16 %v2995
    %v3029 = vunpack.c.l.s8.bf16 %v2996
    %v3030 = vunpack.c.h.s8.bf16 %v2995
    %v3031 = vunpack.c.h.s8.bf16 %v2996
    %3032 = vmatprep.subr.bf16.mxu0 %v3015
    %3033 = vmatpush1.bf16.msra.mxu0 %v3014
    %3034 = vmatprep.subr.bf16.mxu0 %v3013
    %3035 = vmatpush1.bf16.msra.mxu0 %v3012
    %3036 = vmatprep.subr.bf16.mxu0 %v3011
    %3037 = vmatpush1.bf16.msra.mxu0 %v3010
    %3038 = vmatprep.subr.bf16.mxu0 %v3009
    %3039 = vmatpush1.bf16.msra.mxu0 %v3008
    %3040 = vmatprep.subr.bf16.mxu0 %v3007
    %3041 = vmatpush1.bf16.msra.mxu0 %v3006
    %3042 = vmatprep.subr.bf16.mxu0 %v3005
    %3043 = vmatpush1.bf16.msra.mxu0 %v3004
    %3044 = vmatprep.subr.bf16.mxu0 %v3003
    %3045 = vmatpush1.bf16.msra.mxu0 %v3002
    %3046 = vmatprep.subr.bf16.mxu0 %v3001
    %3047 = vmatpush1.bf16.msra.mxu0 %v3000
    %3048 = vmatprep.subr.bf16.mxu0 %v3031
    %3049 = vmatpush2.bf16.msra.mxu0 %v3030
    %3050 = vmatprep.subr.bf16.mxu0 %v3029
    %3051 = vmatpush2.bf16.msra.mxu0 %v3028
    %3052 = vmatprep.subr.bf16.mxu0 %v3027
    %3053 = vmatpush2.bf16.msra.mxu0 %v3026
    %3054 = vmatprep.subr.bf16.mxu0 %v3025
    %3055 = vmatpush2.bf16.msra.mxu0 %v3024
    %3056 = vmatprep.subr.bf16.mxu0 %v3023
    %3057 = vmatpush2.bf16.msra.mxu0 %v3022
    %3058 = vmatprep.subr.bf16.mxu0 %v3021
    %3059 = vmatpush2.bf16.msra.mxu0 %v3020
    %3060 = vmatprep.subr.bf16.mxu0 %v3019
    %3061 = vmatpush2.bf16.msra.mxu0 %v3018
    %3062 = vmatprep.subr.bf16.mxu0 %v3017
    %3063 = vmatpush2.bf16.msra.mxu0 %v3016
    %3064 = vmatprep.mubr.bf16.mxu0 %v2999
    %3065 = vmatmul.mubr.bf16.gmra.mxu0 %v2998
    %v3066 = vpop.f32.mrf.mxu0
    %v3067 = vadd.f32 0.0, %v3066
    %v3068 = vpop.f32.mrf.mxu0
    %v3069 = vadd.f32 0.0, %v3068
    %v3070 = vpop.f32.mrf.mxu0
    %v3071 = vadd.f32 0.0, %v3070
    %v3072 = vpop.f32.mrf.mxu0
    %v3073 = vadd.f32 0.0, %v3072
    %3074 = vdwg.mxu0
    %v3076 = vlaneseq
    %v3077 = vshrl.u32 %v3076, 7
    %v3078 = vsub.s32 0, %v3077
    %v3079 = vrot.slane %v2997, %v3078
    %v3080 = vlaneseq
    %v3081 = vshrl.u32 %v3080, 7
    %v3082 = vsub.s32 1, %v3081
    %v3083 = vrot.slane %v2997, %v3082
    %v3086 = vmul.f32 %v3067, %v3079
    %v3087 = vmul.f32 %v3069, %v3083
    %v3088 = vmul.f32 %v3071, %v3079
    %v3089 = vmul.f32 %v3073, %v3083
    %v3090 = vld [vmem:[#allocation22] sm:$0x3]
    %v3092 = vlaneseq
    %v3093 = vshrl.u32 %v3092, 7
    %v3094 = vsub.s32 0, %v3093
    %v3095 = vrot.slane %v3090, %v3094
    %v3096 = vlaneseq
    %v3097 = vshrl.u32 %v3096, 7
    %v3098 = vsub.s32 1, %v3097
    %v3099 = vrot.slane %v3090, %v3098
    %v3102 = vadd.f32 %v3086, %v3095
    %v3103 = vadd.f32 %v3087, %v3099
    %v3104 = vadd.f32 %v3088, %v3095
    %v3105 = vadd.f32 %v3089, %v3099
    %v3106 = vadd.f32 %v789, %v3102
    %v3107 = vadd.f32 %v790, %v3103
    %v3108 = vadd.f32 %v791, %v3104
    %v3109 = vadd.f32 %v792, %v3105
    %v3110 = vld [vmem:[#allocation23] sm:$0x3]
    %v3111 = vld [vmem:[#allocation25] sm:$0x3]
    %v3112 = vadd.f32 %v3106, %v3107
    %3113 = vadd.xlane.f32.xlu0 %v3112
    %v3114 = vpop.xlane.xlu0 %3113
    %v3115 = vadd.f32 %v3108, %v3109
    %3116 = vadd.xlane.f32.xlu0 %v3115
    %v3117 = vpop.xlane.xlu0 %3116
    %v3118 = vrcp.pop 256.0
    %v3119 = vmul.f32 %v3114, %v3118
    %v3120 = vmul.f32 %v3117, %v3118
    %v3121 = vsub.f32 %v3106, %v3119
    %v3122 = vsub.f32 %v3107, %v3119
    %v3123 = vsub.f32 %v3108, %v3120
    %v3124 = vsub.f32 %v3109, %v3120
    %v3125 = vmul.f32 %v3121, %v3121
    %v3126 = vmul.f32 %v3122, %v3122
    %v3127 = vmul.f32 %v3123, %v3123
    %v3128 = vmul.f32 %v3124, %v3124
    %v3129 = vadd.f32 %v3125, %v3126
    %3130 = vadd.xlane.f32.xlu0 %v3129
    %v3131 = vpop.xlane.xlu0 %3130
    %v3132 = vadd.f32 %v3127, %v3128
    %3133 = vadd.xlane.f32.xlu0 %v3132
    %v3134 = vpop.xlane.xlu0 %3133
    %v3135 = vmul.f32 %v3131, %v3118
    %v3136 = vmul.f32 %v3134, %v3118
    %v3137 = vadd.f32 %v3135, 1e-05
    %v3138 = vadd.f32 %v3136, 1e-05
    %v3139 = vrsqrt.pop %v3137
    %v3140 = vrsqrt.pop %v3138
    %v3141 = vmul.f32 %v3121, %v3139
    %v3142 = vmul.f32 %v3122, %v3139
    %v3143 = vmul.f32 %v3123, %v3140
    %v3144 = vmul.f32 %v3124, %v3140
    %v3146 = vlaneseq
    %v3147 = vshrl.u32 %v3146, 7
    %v3148 = vsub.s32 0, %v3147
    %v3149 = vrot.slane %v3110, %v3148
    %v3150 = vlaneseq
    %v3151 = vshrl.u32 %v3150, 7
    %v3152 = vsub.s32 1, %v3151
    %v3153 = vrot.slane %v3110, %v3152
    %v3156 = vmul.f32 %v3141, %v3149
    %v3157 = vmul.f32 %v3142, %v3153
    %v3158 = vmul.f32 %v3143, %v3149
    %v3159 = vmul.f32 %v3144, %v3153
    %v3161 = vlaneseq
    %v3162 = vshrl.u32 %v3161, 7
    %v3163 = vsub.s32 0, %v3162
    %v3164 = vrot.slane %v3111, %v3163
    %v3165 = vlaneseq
    %v3166 = vshrl.u32 %v3165, 7
    %v3167 = vsub.s32 1, %v3166
    %v3168 = vrot.slane %v3111, %v3167
    %v3171 = vadd.f32 %v3156, %v3164
    %v3172 = vadd.f32 %v3157, %v3168
    %v3173 = vadd.f32 %v3158, %v3164
    %v3174 = vadd.f32 %v3159, %v3168
    %v3175 = vld [vmem:[#allocation26] sm:$0xff]
    %v3176 = vld [vmem:[#allocation26 + $0x8] sm:$0xff]
    %v3177 = vld [vmem:[#allocation26 + $0x10] sm:$0xff]
    %v3178 = vld [vmem:[#allocation26 + $0x18] sm:$0xff]
    %v3179 = vld [vmem:[#allocation26 + $0x20] sm:$0xff]
    %v3180 = vld [vmem:[#allocation26 + $0x28] sm:$0xff]
    %v3181 = vld [vmem:[#allocation26 + $0x30] sm:$0xff]
    %v3182 = vld [vmem:[#allocation26 + $0x38] sm:$0xff]
    %v3183 = vld [vmem:[#allocation26 + $0x40] sm:$0xff]
    %v3184 = vld [vmem:[#allocation26 + $0x48] sm:$0xff]
    %v3185 = vld [vmem:[#allocation26 + $0x50] sm:$0xff]
    %v3186 = vld [vmem:[#allocation26 + $0x58] sm:$0xff]
    %v3187 = vld [vmem:[#allocation26 + $0x60] sm:$0xff]
    %v3188 = vld [vmem:[#allocation26 + $0x68] sm:$0xff]
    %v3189 = vld [vmem:[#allocation26 + $0x70] sm:$0xff]
    %v3190 = vld [vmem:[#allocation26 + $0x78] sm:$0xff]
    %v3191 = vld [vmem:[#allocation26 + $0x80] sm:$0xff]
    %v3192 = vld [vmem:[#allocation26 + $0x88] sm:$0xff]
    %v3193 = vld [vmem:[#allocation26 + $0x90] sm:$0xff]
    %v3194 = vld [vmem:[#allocation26 + $0x98] sm:$0xff]
    %v3195 = vld [vmem:[#allocation26 + $0xa0] sm:$0xff]
    %v3196 = vld [vmem:[#allocation26 + $0xa8] sm:$0xff]
    %v3197 = vld [vmem:[#allocation26 + $0xb0] sm:$0xff]
    %v3198 = vld [vmem:[#allocation26 + $0xb8] sm:$0xff]
    %v3199 = vld [vmem:[#allocation26 + $0xc0] sm:$0xff]
    %v3200 = vld [vmem:[#allocation26 + $0xc8] sm:$0xff]
    %v3201 = vld [vmem:[#allocation26 + $0xd0] sm:$0xff]
    %v3202 = vld [vmem:[#allocation26 + $0xd8] sm:$0xff]
    %v3203 = vld [vmem:[#allocation26 + $0xe0] sm:$0xff]
    %v3204 = vld [vmem:[#allocation26 + $0xe8] sm:$0xff]
    %v3205 = vld [vmem:[#allocation26 + $0xf0] sm:$0xff]
    %v3206 = vld [vmem:[#allocation26 + $0xf8] sm:$0xff]
    %v3207 = vld [vmem:[#allocation26 + $0x100] sm:$0xff]
    %v3208 = vld [vmem:[#allocation26 + $0x108] sm:$0xff]
    %v3209 = vld [vmem:[#allocation26 + $0x110] sm:$0xff]
    %v3210 = vld [vmem:[#allocation26 + $0x118] sm:$0xff]
    %v3211 = vld [vmem:[#allocation26 + $0x120] sm:$0xff]
    %v3212 = vld [vmem:[#allocation26 + $0x128] sm:$0xff]
    %v3213 = vld [vmem:[#allocation26 + $0x130] sm:$0xff]
    %v3214 = vld [vmem:[#allocation26 + $0x138] sm:$0xff]
    %v3215 = vld [vmem:[#allocation26 + $0x140] sm:$0xff]
    %v3216 = vld [vmem:[#allocation26 + $0x148] sm:$0xff]
    %v3217 = vld [vmem:[#allocation26 + $0x150] sm:$0xff]
    %v3218 = vld [vmem:[#allocation26 + $0x158] sm:$0xff]
    %v3219 = vld [vmem:[#allocation26 + $0x160] sm:$0xff]
    %v3220 = vld [vmem:[#allocation26 + $0x168] sm:$0xff]
    %v3221 = vld [vmem:[#allocation26 + $0x170] sm:$0xff]
    %v3222 = vld [vmem:[#allocation26 + $0x178] sm:$0xff]
    %v3223 = vld [vmem:[#allocation26 + $0x180] sm:$0xff]
    %v3224 = vld [vmem:[#allocation26 + $0x188] sm:$0xff]
    %v3225 = vld [vmem:[#allocation26 + $0x190] sm:$0xff]
    %v3226 = vld [vmem:[#allocation26 + $0x198] sm:$0xff]
    %v3227 = vld [vmem:[#allocation26 + $0x1a0] sm:$0xff]
    %v3228 = vld [vmem:[#allocation26 + $0x1a8] sm:$0xff]
    %v3229 = vld [vmem:[#allocation26 + $0x1b0] sm:$0xff]
    %v3230 = vld [vmem:[#allocation26 + $0x1b8] sm:$0xff]
    %v3231 = vld [vmem:[#allocation26 + $0x1c0] sm:$0xff]
    %v3232 = vld [vmem:[#allocation26 + $0x1c8] sm:$0xff]
    %v3233 = vld [vmem:[#allocation26 + $0x1d0] sm:$0xff]
    %v3234 = vld [vmem:[#allocation26 + $0x1d8] sm:$0xff]
    %v3235 = vld [vmem:[#allocation26 + $0x1e0] sm:$0xff]
    %v3236 = vld [vmem:[#allocation26 + $0x1e8] sm:$0xff]
    %v3237 = vld [vmem:[#allocation26 + $0x1f0] sm:$0xff]
    %v3238 = vld [vmem:[#allocation26 + $0x1f8] sm:$0xff]
    %v3239 = vld [vmem:[#allocation26 + $0x200] sm:$0xff]
    %v3240 = vld [vmem:[#allocation26 + $0x208] sm:$0xff]
    %v3241 = vld [vmem:[#allocation26 + $0x210] sm:$0xff]
    %v3242 = vld [vmem:[#allocation26 + $0x218] sm:$0xff]
    %v3243 = vld [vmem:[#allocation26 + $0x220] sm:$0xff]
    %v3244 = vld [vmem:[#allocation26 + $0x228] sm:$0xff]
    %v3245 = vld [vmem:[#allocation26 + $0x230] sm:$0xff]
    %v3246 = vld [vmem:[#allocation26 + $0x238] sm:$0xff]
    %v3247 = vld [vmem:[#allocation26 + $0x240] sm:$0xff]
    %v3248 = vld [vmem:[#allocation26 + $0x248] sm:$0xff]
    %v3249 = vld [vmem:[#allocation26 + $0x250] sm:$0xff]
    %v3250 = vld [vmem:[#allocation26 + $0x258] sm:$0xff]
    %v3251 = vld [vmem:[#allocation26 + $0x260] sm:$0xff]
    %v3252 = vld [vmem:[#allocation26 + $0x268] sm:$0xff]
    %v3253 = vld [vmem:[#allocation26 + $0x270] sm:$0xff]
    %v3254 = vld [vmem:[#allocation26 + $0x278] sm:$0xff]
    %v3255 = vld [vmem:[#allocation26 + $0x280] sm:$0xff]
    %v3256 = vld [vmem:[#allocation26 + $0x288] sm:$0xff]
    %v3257 = vld [vmem:[#allocation26 + $0x290] sm:$0xff]
    %v3258 = vld [vmem:[#allocation26 + $0x298] sm:$0xff]
    %v3259 = vld [vmem:[#allocation26 + $0x2a0] sm:$0xff]
    %v3260 = vld [vmem:[#allocation26 + $0x2a8] sm:$0xff]
    %v3261 = vld [vmem:[#allocation26 + $0x2b0] sm:$0xff]
    %v3262 = vld [vmem:[#allocation26 + $0x2b8] sm:$0xff]
    %v3263 = vld [vmem:[#allocation26 + $0x2c0] sm:$0xff]
    %v3264 = vld [vmem:[#allocation26 + $0x2c8] sm:$0xff]
    %v3265 = vld [vmem:[#allocation26 + $0x2d0] sm:$0xff]
    %v3266 = vld [vmem:[#allocation26 + $0x2d8] sm:$0xff]
    %v3267 = vld [vmem:[#allocation26 + $0x2e0] sm:$0xff]
    %v3268 = vld [vmem:[#allocation26 + $0x2e8] sm:$0xff]
    %v3269 = vld [vmem:[#allocation26 + $0x2f0] sm:$0xff]
    %v3270 = vld [vmem:[#allocation26 + $0x2f8] sm:$0xff]
    %v3271 = vld [vmem:[#allocation26 + $0x300] sm:$0xff]
    %v3272 = vld [vmem:[#allocation26 + $0x308] sm:$0xff]
    %v3273 = vld [vmem:[#allocation26 + $0x310] sm:$0xff]
    %v3274 = vld [vmem:[#allocation26 + $0x318] sm:$0xff]
    %v3275 = vld [vmem:[#allocation26 + $0x320] sm:$0xff]
    %v3276 = vld [vmem:[#allocation26 + $0x328] sm:$0xff]
    %v3277 = vld [vmem:[#allocation26 + $0x330] sm:$0xff]
    %v3278 = vld [vmem:[#allocation26 + $0x338] sm:$0xff]
    %v3279 = vld [vmem:[#allocation26 + $0x340] sm:$0xff]
    %v3280 = vld [vmem:[#allocation26 + $0x348] sm:$0xff]
    %v3281 = vld [vmem:[#allocation26 + $0x350] sm:$0xff]
    %v3282 = vld [vmem:[#allocation26 + $0x358] sm:$0xff]
    %v3283 = vld [vmem:[#allocation26 + $0x360] sm:$0xff]
    %v3284 = vld [vmem:[#allocation26 + $0x368] sm:$0xff]
    %v3285 = vld [vmem:[#allocation26 + $0x370] sm:$0xff]
    %v3286 = vld [vmem:[#allocation26 + $0x378] sm:$0xff]
    %v3287 = vld [vmem:[#allocation26 + $0x380] sm:$0xff]
    %v3288 = vld [vmem:[#allocation26 + $0x388] sm:$0xff]
    %v3289 = vld [vmem:[#allocation26 + $0x390] sm:$0xff]
    %v3290 = vld [vmem:[#allocation26 + $0x398] sm:$0xff]
    %v3291 = vld [vmem:[#allocation26 + $0x3a0] sm:$0xff]
    %v3292 = vld [vmem:[#allocation26 + $0x3a8] sm:$0xff]
    %v3293 = vld [vmem:[#allocation26 + $0x3b0] sm:$0xff]
    %v3294 = vld [vmem:[#allocation26 + $0x3b8] sm:$0xff]
    %v3295 = vld [vmem:[#allocation26 + $0x3c0] sm:$0xff]
    %v3296 = vld [vmem:[#allocation26 + $0x3c8] sm:$0xff]
    %v3297 = vld [vmem:[#allocation26 + $0x3d0] sm:$0xff]
    %v3298 = vld [vmem:[#allocation26 + $0x3d8] sm:$0xff]
    %v3299 = vld [vmem:[#allocation26 + $0x3e0] sm:$0xff]
    %v3300 = vld [vmem:[#allocation26 + $0x3e8] sm:$0xff]
    %v3301 = vld [vmem:[#allocation26 + $0x3f0] sm:$0xff]
    %v3302 = vld [vmem:[#allocation26 + $0x3f8] sm:$0xff]
    %v3303 = vld [vmem:[%s17] sm:$0xff]
    %v3304 = vld [vmem:[%s17 + $0x8] sm:$0xff]
    %v3305 = vpack.c.bf16 %v3173, %v3171
    %v3306 = vpack.c.bf16 %v3174, %v3172
    %v3307 = vunpack.c.l.s8.bf16 %v3175
    %v3308 = vunpack.c.l.s8.bf16 %v3176
    %v3309 = vunpack.c.l.s8.bf16 %v3177
    %v3310 = vunpack.c.l.s8.bf16 %v3178
    %v3311 = vunpack.c.l.s8.bf16 %v3179
    %v3312 = vunpack.c.l.s8.bf16 %v3180
    %v3313 = vunpack.c.l.s8.bf16 %v3181
    %v3314 = vunpack.c.l.s8.bf16 %v3182
    %v3315 = vunpack.c.l.s8.bf16 %v3183
    %v3316 = vunpack.c.l.s8.bf16 %v3184
    %v3317 = vunpack.c.l.s8.bf16 %v3185
    %v3318 = vunpack.c.l.s8.bf16 %v3186
    %v3319 = vunpack.c.l.s8.bf16 %v3187
    %v3320 = vunpack.c.l.s8.bf16 %v3188
    %v3321 = vunpack.c.l.s8.bf16 %v3189
    %v3322 = vunpack.c.l.s8.bf16 %v3190
    %v3323 = vunpack.c.h.s8.bf16 %v3175
    %v3324 = vunpack.c.h.s8.bf16 %v3176
    %v3325 = vunpack.c.h.s8.bf16 %v3177
    %v3326 = vunpack.c.h.s8.bf16 %v3178
    %v3327 = vunpack.c.h.s8.bf16 %v3179
    %v3328 = vunpack.c.h.s8.bf16 %v3180
    %v3329 = vunpack.c.h.s8.bf16 %v3181
    %v3330 = vunpack.c.h.s8.bf16 %v3182
    %v3331 = vunpack.c.h.s8.bf16 %v3183
    %v3332 = vunpack.c.h.s8.bf16 %v3184
    %v3333 = vunpack.c.h.s8.bf16 %v3185
    %v3334 = vunpack.c.h.s8.bf16 %v3186
    %v3335 = vunpack.c.h.s8.bf16 %v3187
    %v3336 = vunpack.c.h.s8.bf16 %v3188
    %v3337 = vunpack.c.h.s8.bf16 %v3189
    %v3338 = vunpack.c.h.s8.bf16 %v3190
    %v3339 = vunpack.c.l.s8.bf16 %v3191
    %v3340 = vunpack.c.l.s8.bf16 %v3192
    %v3341 = vunpack.c.l.s8.bf16 %v3193
    %v3342 = vunpack.c.l.s8.bf16 %v3194
    %v3343 = vunpack.c.l.s8.bf16 %v3195
    %v3344 = vunpack.c.l.s8.bf16 %v3196
    %v3345 = vunpack.c.l.s8.bf16 %v3197
    %v3346 = vunpack.c.l.s8.bf16 %v3198
    %v3347 = vunpack.c.l.s8.bf16 %v3199
    %v3348 = vunpack.c.l.s8.bf16 %v3200
    %v3349 = vunpack.c.l.s8.bf16 %v3201
    %v3350 = vunpack.c.l.s8.bf16 %v3202
    %v3351 = vunpack.c.l.s8.bf16 %v3203
    %v3352 = vunpack.c.l.s8.bf16 %v3204
    %v3353 = vunpack.c.l.s8.bf16 %v3205
    %v3354 = vunpack.c.l.s8.bf16 %v3206
    %v3355 = vunpack.c.h.s8.bf16 %v3191
    %v3356 = vunpack.c.h.s8.bf16 %v3192
    %v3357 = vunpack.c.h.s8.bf16 %v3193
    %v3358 = vunpack.c.h.s8.bf16 %v3194
    %v3359 = vunpack.c.h.s8.bf16 %v3195
    %v3360 = vunpack.c.h.s8.bf16 %v3196
    %v3361 = vunpack.c.h.s8.bf16 %v3197
    %v3362 = vunpack.c.h.s8.bf16 %v3198
    %v3363 = vunpack.c.h.s8.bf16 %v3199
    %v3364 = vunpack.c.h.s8.bf16 %v3200
    %v3365 = vunpack.c.h.s8.bf16 %v3201
    %v3366 = vunpack.c.h.s8.bf16 %v3202
    %v3367 = vunpack.c.h.s8.bf16 %v3203
    %v3368 = vunpack.c.h.s8.bf16 %v3204
    %v3369 = vunpack.c.h.s8.bf16 %v3205
    %v3370 = vunpack.c.h.s8.bf16 %v3206
    %v3371 = vunpack.c.l.s8.bf16 %v3207
    %v3372 = vunpack.c.l.s8.bf16 %v3208
    %v3373 = vunpack.c.l.s8.bf16 %v3209
    %v3374 = vunpack.c.l.s8.bf16 %v3210
    %v3375 = vunpack.c.l.s8.bf16 %v3211
    %v3376 = vunpack.c.l.s8.bf16 %v3212
    %v3377 = vunpack.c.l.s8.bf16 %v3213
    %v3378 = vunpack.c.l.s8.bf16 %v3214
    %v3379 = vunpack.c.l.s8.bf16 %v3215
    %v3380 = vunpack.c.l.s8.bf16 %v3216
    %v3381 = vunpack.c.l.s8.bf16 %v3217
    %v3382 = vunpack.c.l.s8.bf16 %v3218
    %v3383 = vunpack.c.l.s8.bf16 %v3219
    %v3384 = vunpack.c.l.s8.bf16 %v3220
    %v3385 = vunpack.c.l.s8.bf16 %v3221
    %v3386 = vunpack.c.l.s8.bf16 %v3222
    %v3387 = vunpack.c.h.s8.bf16 %v3207
    %v3388 = vunpack.c.h.s8.bf16 %v3208
    %v3389 = vunpack.c.h.s8.bf16 %v3209
    %v3390 = vunpack.c.h.s8.bf16 %v3210
    %v3391 = vunpack.c.h.s8.bf16 %v3211
    %v3392 = vunpack.c.h.s8.bf16 %v3212
    %v3393 = vunpack.c.h.s8.bf16 %v3213
    %v3394 = vunpack.c.h.s8.bf16 %v3214
    %v3395 = vunpack.c.h.s8.bf16 %v3215
    %v3396 = vunpack.c.h.s8.bf16 %v3216
    %v3397 = vunpack.c.h.s8.bf16 %v3217
    %v3398 = vunpack.c.h.s8.bf16 %v3218
    %v3399 = vunpack.c.h.s8.bf16 %v3219
    %v3400 = vunpack.c.h.s8.bf16 %v3220
    %v3401 = vunpack.c.h.s8.bf16 %v3221
    %v3402 = vunpack.c.h.s8.bf16 %v3222
    %v3403 = vunpack.c.l.s8.bf16 %v3223
    %v3404 = vunpack.c.l.s8.bf16 %v3224
    %v3405 = vunpack.c.l.s8.bf16 %v3225
    %v3406 = vunpack.c.l.s8.bf16 %v3226
    %v3407 = vunpack.c.l.s8.bf16 %v3227
    %v3408 = vunpack.c.l.s8.bf16 %v3228
    %v3409 = vunpack.c.l.s8.bf16 %v3229
    %v3410 = vunpack.c.l.s8.bf16 %v3230
    %v3411 = vunpack.c.l.s8.bf16 %v3231
    %v3412 = vunpack.c.l.s8.bf16 %v3232
    %v3413 = vunpack.c.l.s8.bf16 %v3233
    %v3414 = vunpack.c.l.s8.bf16 %v3234
    %v3415 = vunpack.c.l.s8.bf16 %v3235
    %v3416 = vunpack.c.l.s8.bf16 %v3236
    %v3417 = vunpack.c.l.s8.bf16 %v3237
    %v3418 = vunpack.c.l.s8.bf16 %v3238
    %v3419 = vunpack.c.h.s8.bf16 %v3223
    %v3420 = vunpack.c.h.s8.bf16 %v3224
    %v3421 = vunpack.c.h.s8.bf16 %v3225
    %v3422 = vunpack.c.h.s8.bf16 %v3226
    %v3423 = vunpack.c.h.s8.bf16 %v3227
    %v3424 = vunpack.c.h.s8.bf16 %v3228
    %v3425 = vunpack.c.h.s8.bf16 %v3229
    %v3426 = vunpack.c.h.s8.bf16 %v3230
    %v3427 = vunpack.c.h.s8.bf16 %v3231
    %v3428 = vunpack.c.h.s8.bf16 %v3232
    %v3429 = vunpack.c.h.s8.bf16 %v3233
    %v3430 = vunpack.c.h.s8.bf16 %v3234
    %v3431 = vunpack.c.h.s8.bf16 %v3235
    %v3432 = vunpack.c.h.s8.bf16 %v3236
    %v3433 = vunpack.c.h.s8.bf16 %v3237
    %v3434 = vunpack.c.h.s8.bf16 %v3238
    %v3435 = vunpack.c.l.s8.bf16 %v3239
    %v3436 = vunpack.c.l.s8.bf16 %v3240
    %v3437 = vunpack.c.l.s8.bf16 %v3241
    %v3438 = vunpack.c.l.s8.bf16 %v3242
    %v3439 = vunpack.c.l.s8.bf16 %v3243
    %v3440 = vunpack.c.l.s8.bf16 %v3244
    %v3441 = vunpack.c.l.s8.bf16 %v3245
    %v3442 = vunpack.c.l.s8.bf16 %v3246
    %v3443 = vunpack.c.l.s8.bf16 %v3247
    %v3444 = vunpack.c.l.s8.bf16 %v3248
    %v3445 = vunpack.c.l.s8.bf16 %v3249
    %v3446 = vunpack.c.l.s8.bf16 %v3250
    %v3447 = vunpack.c.l.s8.bf16 %v3251
    %v3448 = vunpack.c.l.s8.bf16 %v3252
    %v3449 = vunpack.c.l.s8.bf16 %v3253
    %v3450 = vunpack.c.l.s8.bf16 %v3254
    %v3451 = vunpack.c.h.s8.bf16 %v3239
    %v3452 = vunpack.c.h.s8.bf16 %v3240
    %v3453 = vunpack.c.h.s8.bf16 %v3241
    %v3454 = vunpack.c.h.s8.bf16 %v3242
    %v3455 = vunpack.c.h.s8.bf16 %v3243
    %v3456 = vunpack.c.h.s8.bf16 %v3244
    %v3457 = vunpack.c.h.s8.bf16 %v3245
    %v3458 = vunpack.c.h.s8.bf16 %v3246
    %v3459 = vunpack.c.h.s8.bf16 %v3247
    %v3460 = vunpack.c.h.s8.bf16 %v3248
    %v3461 = vunpack.c.h.s8.bf16 %v3249
    %v3462 = vunpack.c.h.s8.bf16 %v3250
    %v3463 = vunpack.c.h.s8.bf16 %v3251
    %v3464 = vunpack.c.h.s8.bf16 %v3252
    %v3465 = vunpack.c.h.s8.bf16 %v3253
    %v3466 = vunpack.c.h.s8.bf16 %v3254
    %v3467 = vunpack.c.l.s8.bf16 %v3255
    %v3468 = vunpack.c.l.s8.bf16 %v3256
    %v3469 = vunpack.c.l.s8.bf16 %v3257
    %v3470 = vunpack.c.l.s8.bf16 %v3258
    %v3471 = vunpack.c.l.s8.bf16 %v3259
    %v3472 = vunpack.c.l.s8.bf16 %v3260
    %v3473 = vunpack.c.l.s8.bf16 %v3261
    %v3474 = vunpack.c.l.s8.bf16 %v3262
    %v3475 = vunpack.c.l.s8.bf16 %v3263
    %v3476 = vunpack.c.l.s8.bf16 %v3264
    %v3477 = vunpack.c.l.s8.bf16 %v3265
    %v3478 = vunpack.c.l.s8.bf16 %v3266
    %v3479 = vunpack.c.l.s8.bf16 %v3267
    %v3480 = vunpack.c.l.s8.bf16 %v3268
    %v3481 = vunpack.c.l.s8.bf16 %v3269
    %v3482 = vunpack.c.l.s8.bf16 %v3270
    %v3483 = vunpack.c.h.s8.bf16 %v3255
    %v3484 = vunpack.c.h.s8.bf16 %v3256
    %v3485 = vunpack.c.h.s8.bf16 %v3257
    %v3486 = vunpack.c.h.s8.bf16 %v3258
    %v3487 = vunpack.c.h.s8.bf16 %v3259
    %v3488 = vunpack.c.h.s8.bf16 %v3260
    %v3489 = vunpack.c.h.s8.bf16 %v3261
    %v3490 = vunpack.c.h.s8.bf16 %v3262
    %v3491 = vunpack.c.h.s8.bf16 %v3263
    %v3492 = vunpack.c.h.s8.bf16 %v3264
    %v3493 = vunpack.c.h.s8.bf16 %v3265
    %v3494 = vunpack.c.h.s8.bf16 %v3266
    %v3495 = vunpack.c.h.s8.bf16 %v3267
    %v3496 = vunpack.c.h.s8.bf16 %v3268
    %v3497 = vunpack.c.h.s8.bf16 %v3269
    %v3498 = vunpack.c.h.s8.bf16 %v3270
    %v3499 = vunpack.c.l.s8.bf16 %v3271
    %v3500 = vunpack.c.l.s8.bf16 %v3272
    %v3501 = vunpack.c.l.s8.bf16 %v3273
    %v3502 = vunpack.c.l.s8.bf16 %v3274
    %v3503 = vunpack.c.l.s8.bf16 %v3275
    %v3504 = vunpack.c.l.s8.bf16 %v3276
    %v3505 = vunpack.c.l.s8.bf16 %v3277
    %v3506 = vunpack.c.l.s8.bf16 %v3278
    %v3507 = vunpack.c.l.s8.bf16 %v3279
    %v3508 = vunpack.c.l.s8.bf16 %v3280
    %v3509 = vunpack.c.l.s8.bf16 %v3281
    %v3510 = vunpack.c.l.s8.bf16 %v3282
    %v3511 = vunpack.c.l.s8.bf16 %v3283
    %v3512 = vunpack.c.l.s8.bf16 %v3284
    %v3513 = vunpack.c.l.s8.bf16 %v3285
    %v3514 = vunpack.c.l.s8.bf16 %v3286
    %v3515 = vunpack.c.h.s8.bf16 %v3271
    %v3516 = vunpack.c.h.s8.bf16 %v3272
    %v3517 = vunpack.c.h.s8.bf16 %v3273
    %v3518 = vunpack.c.h.s8.bf16 %v3274
    %v3519 = vunpack.c.h.s8.bf16 %v3275
    %v3520 = vunpack.c.h.s8.bf16 %v3276
    %v3521 = vunpack.c.h.s8.bf16 %v3277
    %v3522 = vunpack.c.h.s8.bf16 %v3278
    %v3523 = vunpack.c.h.s8.bf16 %v3279
    %v3524 = vunpack.c.h.s8.bf16 %v3280
    %v3525 = vunpack.c.h.s8.bf16 %v3281
    %v3526 = vunpack.c.h.s8.bf16 %v3282
    %v3527 = vunpack.c.h.s8.bf16 %v3283
    %v3528 = vunpack.c.h.s8.bf16 %v3284
    %v3529 = vunpack.c.h.s8.bf16 %v3285
    %v3530 = vunpack.c.h.s8.bf16 %v3286
    %v3531 = vunpack.c.l.s8.bf16 %v3287
    %v3532 = vunpack.c.l.s8.bf16 %v3288
    %v3533 = vunpack.c.l.s8.bf16 %v3289
    %v3534 = vunpack.c.l.s8.bf16 %v3290
    %v3535 = vunpack.c.l.s8.bf16 %v3291
    %v3536 = vunpack.c.l.s8.bf16 %v3292
    %v3537 = vunpack.c.l.s8.bf16 %v3293
    %v3538 = vunpack.c.l.s8.bf16 %v3294
    %v3539 = vunpack.c.l.s8.bf16 %v3295
    %v3540 = vunpack.c.l.s8.bf16 %v3296
    %v3541 = vunpack.c.l.s8.bf16 %v3297
    %v3542 = vunpack.c.l.s8.bf16 %v3298
    %v3543 = vunpack.c.l.s8.bf16 %v3299
    %v3544 = vunpack.c.l.s8.bf16 %v3300
    %v3545 = vunpack.c.l.s8.bf16 %v3301
    %v3546 = vunpack.c.l.s8.bf16 %v3302
    %v3547 = vunpack.c.h.s8.bf16 %v3287
    %v3548 = vunpack.c.h.s8.bf16 %v3288
    %v3549 = vunpack.c.h.s8.bf16 %v3289
    %v3550 = vunpack.c.h.s8.bf16 %v3290
    %v3551 = vunpack.c.h.s8.bf16 %v3291
    %v3552 = vunpack.c.h.s8.bf16 %v3292
    %v3553 = vunpack.c.h.s8.bf16 %v3293
    %v3554 = vunpack.c.h.s8.bf16 %v3294
    %v3555 = vunpack.c.h.s8.bf16 %v3295
    %v3556 = vunpack.c.h.s8.bf16 %v3296
    %v3557 = vunpack.c.h.s8.bf16 %v3297
    %v3558 = vunpack.c.h.s8.bf16 %v3298
    %v3559 = vunpack.c.h.s8.bf16 %v3299
    %v3560 = vunpack.c.h.s8.bf16 %v3300
    %v3561 = vunpack.c.h.s8.bf16 %v3301
    %v3562 = vunpack.c.h.s8.bf16 %v3302
    %3563 = vmatprep.subr.bf16.mxu0 %v3420
    %3564 = vmatpush1.bf16.msra.mxu0 %v3419
    %3565 = vmatprep.subr.bf16.mxu0 %v3404
    %3566 = vmatpush1.bf16.msra.mxu0 %v3403
    %3567 = vmatprep.subr.bf16.mxu0 %v3388
    %3568 = vmatpush1.bf16.msra.mxu0 %v3387
    %3569 = vmatprep.subr.bf16.mxu0 %v3372
    %3570 = vmatpush1.bf16.msra.mxu0 %v3371
    %3571 = vmatprep.subr.bf16.mxu0 %v3356
    %3572 = vmatpush1.bf16.msra.mxu0 %v3355
    %3573 = vmatprep.subr.bf16.mxu0 %v3340
    %3574 = vmatpush1.bf16.msra.mxu0 %v3339
    %3575 = vmatprep.subr.bf16.mxu0 %v3324
    %3576 = vmatpush1.bf16.msra.mxu0 %v3323
    %3577 = vmatprep.subr.bf16.mxu0 %v3308
    %3578 = vmatpush1.bf16.msra.mxu0 %v3307
    %3579 = vmatprep.subr.bf16.mxu0 %v3548
    %3580 = vmatpush2.bf16.msra.mxu0 %v3547
    %3581 = vmatprep.subr.bf16.mxu0 %v3532
    %3582 = vmatpush2.bf16.msra.mxu0 %v3531
    %3583 = vmatprep.subr.bf16.mxu0 %v3516
    %3584 = vmatpush2.bf16.msra.mxu0 %v3515
    %3585 = vmatprep.subr.bf16.mxu0 %v3500
    %3586 = vmatpush2.bf16.msra.mxu0 %v3499
    %3587 = vmatprep.subr.bf16.mxu0 %v3484
    %3588 = vmatpush2.bf16.msra.mxu0 %v3483
    %3589 = vmatprep.subr.bf16.mxu0 %v3468
    %3590 = vmatpush2.bf16.msra.mxu0 %v3467
    %3591 = vmatprep.subr.bf16.mxu0 %v3452
    %3592 = vmatpush2.bf16.msra.mxu0 %v3451
    %3593 = vmatprep.subr.bf16.mxu0 %v3436
    %3594 = vmatpush2.bf16.msra.mxu0 %v3435
    %3595 = vmatprep.mubr.bf16.mxu0 %v3306
    %3596 = vmatmul.mubr.bf16.gmra.mxu0 %v3305
    %v3597 = vpop.f32.mrf.mxu0
    %v3598 = vadd.f32 0.0, %v3597
    %v3599 = vpop.f32.mrf.mxu0
    %v3600 = vadd.f32 0.0, %v3599
    %v3601 = vpop.f32.mrf.mxu0
    %v3602 = vadd.f32 0.0, %v3601
    %v3603 = vpop.f32.mrf.mxu0
    %v3604 = vadd.f32 0.0, %v3603
    %3605 = vdwg.mxu0
    %3606 = vmatprep.subr.bf16.mxu0 %v3422
    %3607 = vmatpush1.bf16.msra.mxu0 %v3421
    %3608 = vmatprep.subr.bf16.mxu0 %v3406
    %3609 = vmatpush1.bf16.msra.mxu0 %v3405
    %3610 = vmatprep.subr.bf16.mxu0 %v3390
    %3611 = vmatpush1.bf16.msra.mxu0 %v3389
    %3612 = vmatprep.subr.bf16.mxu0 %v3374
    %3613 = vmatpush1.bf16.msra.mxu0 %v3373
    %3614 = vmatprep.subr.bf16.mxu0 %v3358
    %3615 = vmatpush1.bf16.msra.mxu0 %v3357
    %3616 = vmatprep.subr.bf16.mxu0 %v3342
    %3617 = vmatpush1.bf16.msra.mxu0 %v3341
    %3618 = vmatprep.subr.bf16.mxu0 %v3326
    %3619 = vmatpush1.bf16.msra.mxu0 %v3325
    %3620 = vmatprep.subr.bf16.mxu0 %v3310
    %3621 = vmatpush1.bf16.msra.mxu0 %v3309
    %3622 = vmatprep.subr.bf16.mxu0 %v3550
    %3623 = vmatpush2.bf16.msra.mxu0 %v3549
    %3624 = vmatprep.subr.bf16.mxu0 %v3534
    %3625 = vmatpush2.bf16.msra.mxu0 %v3533
    %3626 = vmatprep.subr.bf16.mxu0 %v3518
    %3627 = vmatpush2.bf16.msra.mxu0 %v3517
    %3628 = vmatprep.subr.bf16.mxu0 %v3502
    %3629 = vmatpush2.bf16.msra.mxu0 %v3501
    %3630 = vmatprep.subr.bf16.mxu0 %v3486
    %3631 = vmatpush2.bf16.msra.mxu0 %v3485
    %3632 = vmatprep.subr.bf16.mxu0 %v3470
    %3633 = vmatpush2.bf16.msra.mxu0 %v3469
    %3634 = vmatprep.subr.bf16.mxu0 %v3454
    %3635 = vmatpush2.bf16.msra.mxu0 %v3453
    %3636 = vmatprep.subr.bf16.mxu0 %v3438
    %3637 = vmatpush2.bf16.msra.mxu0 %v3437
    %3638 = vmatprep.mubr.bf16.mxu0 %v3306
    %3639 = vmatmul.mubr.bf16.gmra.mxu0 %v3305
    %v3640 = vpop.f32.mrf.mxu0
    %v3641 = vadd.f32 0.0, %v3640
    %v3642 = vpop.f32.mrf.mxu0
    %v3643 = vadd.f32 0.0, %v3642
    %v3644 = vpop.f32.mrf.mxu0
    %v3645 = vadd.f32 0.0, %v3644
    %v3646 = vpop.f32.mrf.mxu0
    %v3647 = vadd.f32 0.0, %v3646
    %3648 = vdwg.mxu0
    %3649 = vmatprep.subr.bf16.mxu0 %v3424
    %3650 = vmatpush1.bf16.msra.mxu0 %v3423
    %3651 = vmatprep.subr.bf16.mxu0 %v3408
    %3652 = vmatpush1.bf16.msra.mxu0 %v3407
    %3653 = vmatprep.subr.bf16.mxu0 %v3392
    %3654 = vmatpush1.bf16.msra.mxu0 %v3391
    %3655 = vmatprep.subr.bf16.mxu0 %v3376
    %3656 = vmatpush1.bf16.msra.mxu0 %v3375
    %3657 = vmatprep.subr.bf16.mxu0 %v3360
    %3658 = vmatpush1.bf16.msra.mxu0 %v3359
    %3659 = vmatprep.subr.bf16.mxu0 %v3344
    %3660 = vmatpush1.bf16.msra.mxu0 %v3343
    %3661 = vmatprep.subr.bf16.mxu0 %v3328
    %3662 = vmatpush1.bf16.msra.mxu0 %v3327
    %3663 = vmatprep.subr.bf16.mxu0 %v3312
    %3664 = vmatpush1.bf16.msra.mxu0 %v3311
    %3665 = vmatprep.subr.bf16.mxu0 %v3552
    %3666 = vmatpush2.bf16.msra.mxu0 %v3551
    %3667 = vmatprep.subr.bf16.mxu0 %v3536
    %3668 = vmatpush2.bf16.msra.mxu0 %v3535
    %3669 = vmatprep.subr.bf16.mxu0 %v3520
    %3670 = vmatpush2.bf16.msra.mxu0 %v3519
    %3671 = vmatprep.subr.bf16.mxu0 %v3504
    %3672 = vmatpush2.bf16.msra.mxu0 %v3503
    %3673 = vmatprep.subr.bf16.mxu0 %v3488
    %3674 = vmatpush2.bf16.msra.mxu0 %v3487
    %3675 = vmatprep.subr.bf16.mxu0 %v3472
    %3676 = vmatpush2.bf16.msra.mxu0 %v3471
    %3677 = vmatprep.subr.bf16.mxu0 %v3456
    %3678 = vmatpush2.bf16.msra.mxu0 %v3455
    %3679 = vmatprep.subr.bf16.mxu0 %v3440
    %3680 = vmatpush2.bf16.msra.mxu0 %v3439
    %3681 = vmatprep.mubr.bf16.mxu0 %v3306
    %3682 = vmatmul.mubr.bf16.gmra.mxu0 %v3305
    %v3683 = vpop.f32.mrf.mxu0
    %v3684 = vadd.f32 0.0, %v3683
    %v3685 = vpop.f32.mrf.mxu0
    %v3686 = vadd.f32 0.0, %v3685
    %v3687 = vpop.f32.mrf.mxu0
    %v3688 = vadd.f32 0.0, %v3687
    %v3689 = vpop.f32.mrf.mxu0
    %v3690 = vadd.f32 0.0, %v3689
    %3691 = vdwg.mxu0
    %3692 = vmatprep.subr.bf16.mxu0 %v3426
    %3693 = vmatpush1.bf16.msra.mxu0 %v3425
    %3694 = vmatprep.subr.bf16.mxu0 %v3410
    %3695 = vmatpush1.bf16.msra.mxu0 %v3409
    %3696 = vmatprep.subr.bf16.mxu0 %v3394
    %3697 = vmatpush1.bf16.msra.mxu0 %v3393
    %3698 = vmatprep.subr.bf16.mxu0 %v3378
    %3699 = vmatpush1.bf16.msra.mxu0 %v3377
    %3700 = vmatprep.subr.bf16.mxu0 %v3362
    %3701 = vmatpush1.bf16.msra.mxu0 %v3361
    %3702 = vmatprep.subr.bf16.mxu0 %v3346
    %3703 = vmatpush1.bf16.msra.mxu0 %v3345
    %3704 = vmatprep.subr.bf16.mxu0 %v3330
    %3705 = vmatpush1.bf16.msra.mxu0 %v3329
    %3706 = vmatprep.subr.bf16.mxu0 %v3314
    %3707 = vmatpush1.bf16.msra.mxu0 %v3313
    %3708 = vmatprep.subr.bf16.mxu0 %v3554
    %3709 = vmatpush2.bf16.msra.mxu0 %v3553
    %3710 = vmatprep.subr.bf16.mxu0 %v3538
    %3711 = vmatpush2.bf16.msra.mxu0 %v3537
    %3712 = vmatprep.subr.bf16.mxu0 %v3522
    %3713 = vmatpush2.bf16.msra.mxu0 %v3521
    %3714 = vmatprep.subr.bf16.mxu0 %v3506
    %3715 = vmatpush2.bf16.msra.mxu0 %v3505
    %3716 = vmatprep.subr.bf16.mxu0 %v3490
    %3717 = vmatpush2.bf16.msra.mxu0 %v3489
    %3718 = vmatprep.subr.bf16.mxu0 %v3474
    %3719 = vmatpush2.bf16.msra.mxu0 %v3473
    %3720 = vmatprep.subr.bf16.mxu0 %v3458
    %3721 = vmatpush2.bf16.msra.mxu0 %v3457
    %3722 = vmatprep.subr.bf16.mxu0 %v3442
    %3723 = vmatpush2.bf16.msra.mxu0 %v3441
    %3724 = vmatprep.mubr.bf16.mxu0 %v3306
    %3725 = vmatmul.mubr.bf16.gmra.mxu0 %v3305
    %v3726 = vpop.f32.mrf.mxu0
    %v3727 = vadd.f32 0.0, %v3726
    %v3728 = vpop.f32.mrf.mxu0
    %v3729 = vadd.f32 0.0, %v3728
    %v3730 = vpop.f32.mrf.mxu0
    %v3731 = vadd.f32 0.0, %v3730
    %v3732 = vpop.f32.mrf.mxu0
    %v3733 = vadd.f32 0.0, %v3732
    %3734 = vdwg.mxu0
    %3735 = vmatprep.subr.bf16.mxu0 %v3428
    %3736 = vmatpush1.bf16.msra.mxu0 %v3427
    %3737 = vmatprep.subr.bf16.mxu0 %v3412
    %3738 = vmatpush1.bf16.msra.mxu0 %v3411
    %3739 = vmatprep.subr.bf16.mxu0 %v3396
    %3740 = vmatpush1.bf16.msra.mxu0 %v3395
    %3741 = vmatprep.subr.bf16.mxu0 %v3380
    %3742 = vmatpush1.bf16.msra.mxu0 %v3379
    %3743 = vmatprep.subr.bf16.mxu0 %v3364
    %3744 = vmatpush1.bf16.msra.mxu0 %v3363
    %3745 = vmatprep.subr.bf16.mxu0 %v3348
    %3746 = vmatpush1.bf16.msra.mxu0 %v3347
    %3747 = vmatprep.subr.bf16.mxu0 %v3332
    %3748 = vmatpush1.bf16.msra.mxu0 %v3331
    %3749 = vmatprep.subr.bf16.mxu0 %v3316
    %3750 = vmatpush1.bf16.msra.mxu0 %v3315
    %3751 = vmatprep.subr.bf16.mxu0 %v3556
    %3752 = vmatpush2.bf16.msra.mxu0 %v3555
    %3753 = vmatprep.subr.bf16.mxu0 %v3540
    %3754 = vmatpush2.bf16.msra.mxu0 %v3539
    %3755 = vmatprep.subr.bf16.mxu0 %v3524
    %3756 = vmatpush2.bf16.msra.mxu0 %v3523
    %3757 = vmatprep.subr.bf16.mxu0 %v3508
    %3758 = vmatpush2.bf16.msra.mxu0 %v3507
    %3759 = vmatprep.subr.bf16.mxu0 %v3492
    %3760 = vmatpush2.bf16.msra.mxu0 %v3491
    %3761 = vmatprep.subr.bf16.mxu0 %v3476
    %3762 = vmatpush2.bf16.msra.mxu0 %v3475
    %3763 = vmatprep.subr.bf16.mxu0 %v3460
    %3764 = vmatpush2.bf16.msra.mxu0 %v3459
    %3765 = vmatprep.subr.bf16.mxu0 %v3444
    %3766 = vmatpush2.bf16.msra.mxu0 %v3443
    %3767 = vmatprep.mubr.bf16.mxu0 %v3306
    %3768 = vmatmul.mubr.bf16.gmra.mxu0 %v3305
    %v3769 = vpop.f32.mrf.mxu0
    %v3770 = vadd.f32 0.0, %v3769
    %v3771 = vpop.f32.mrf.mxu0
    %v3772 = vadd.f32 0.0, %v3771
    %v3773 = vpop.f32.mrf.mxu0
    %v3774 = vadd.f32 0.0, %v3773
    %v3775 = vpop.f32.mrf.mxu0
    %v3776 = vadd.f32 0.0, %v3775
    %3777 = vdwg.mxu0
    %3778 = vmatprep.subr.bf16.mxu0 %v3430
    %3779 = vmatpush1.bf16.msra.mxu0 %v3429
    %3780 = vmatprep.subr.bf16.mxu0 %v3414
    %3781 = vmatpush1.bf16.msra.mxu0 %v3413
    %3782 = vmatprep.subr.bf16.mxu0 %v3398
    %3783 = vmatpush1.bf16.msra.mxu0 %v3397
    %3784 = vmatprep.subr.bf16.mxu0 %v3382
    %3785 = vmatpush1.bf16.msra.mxu0 %v3381
    %3786 = vmatprep.subr.bf16.mxu0 %v3366
    %3787 = vmatpush1.bf16.msra.mxu0 %v3365
    %3788 = vmatprep.subr.bf16.mxu0 %v3350
    %3789 = vmatpush1.bf16.msra.mxu0 %v3349
    %3790 = vmatprep.subr.bf16.mxu0 %v3334
    %3791 = vmatpush1.bf16.msra.mxu0 %v3333
    %3792 = vmatprep.subr.bf16.mxu0 %v3318
    %3793 = vmatpush1.bf16.msra.mxu0 %v3317
    %3794 = vmatprep.subr.bf16.mxu0 %v3558
    %3795 = vmatpush2.bf16.msra.mxu0 %v3557
    %3796 = vmatprep.subr.bf16.mxu0 %v3542
    %3797 = vmatpush2.bf16.msra.mxu0 %v3541
    %3798 = vmatprep.subr.bf16.mxu0 %v3526
    %3799 = vmatpush2.bf16.msra.mxu0 %v3525
    %3800 = vmatprep.subr.bf16.mxu0 %v3510
    %3801 = vmatpush2.bf16.msra.mxu0 %v3509
    %3802 = vmatprep.subr.bf16.mxu0 %v3494
    %3803 = vmatpush2.bf16.msra.mxu0 %v3493
    %3804 = vmatprep.subr.bf16.mxu0 %v3478
    %3805 = vmatpush2.bf16.msra.mxu0 %v3477
    %3806 = vmatprep.subr.bf16.mxu0 %v3462
    %3807 = vmatpush2.bf16.msra.mxu0 %v3461
    %3808 = vmatprep.subr.bf16.mxu0 %v3446
    %3809 = vmatpush2.bf16.msra.mxu0 %v3445
    %3810 = vmatprep.mubr.bf16.mxu0 %v3306
    %3811 = vmatmul.mubr.bf16.gmra.mxu0 %v3305
    %v3812 = vpop.f32.mrf.mxu0
    %v3813 = vadd.f32 0.0, %v3812
    %v3814 = vpop.f32.mrf.mxu0
    %v3815 = vadd.f32 0.0, %v3814
    %v3816 = vpop.f32.mrf.mxu0
    %v3817 = vadd.f32 0.0, %v3816
    %v3818 = vpop.f32.mrf.mxu0
    %v3819 = vadd.f32 0.0, %v3818
    %3820 = vdwg.mxu0
    %3821 = vmatprep.subr.bf16.mxu0 %v3432
    %3822 = vmatpush1.bf16.msra.mxu0 %v3431
    %3823 = vmatprep.subr.bf16.mxu0 %v3416
    %3824 = vmatpush1.bf16.msra.mxu0 %v3415
    %3825 = vmatprep.subr.bf16.mxu0 %v3400
    %3826 = vmatpush1.bf16.msra.mxu0 %v3399
    %3827 = vmatprep.subr.bf16.mxu0 %v3384
    %3828 = vmatpush1.bf16.msra.mxu0 %v3383
    %3829 = vmatprep.subr.bf16.mxu0 %v3368
    %3830 = vmatpush1.bf16.msra.mxu0 %v3367
    %3831 = vmatprep.subr.bf16.mxu0 %v3352
    %3832 = vmatpush1.bf16.msra.mxu0 %v3351
    %3833 = vmatprep.subr.bf16.mxu0 %v3336
    %3834 = vmatpush1.bf16.msra.mxu0 %v3335
    %3835 = vmatprep.subr.bf16.mxu0 %v3320
    %3836 = vmatpush1.bf16.msra.mxu0 %v3319
    %3837 = vmatprep.subr.bf16.mxu0 %v3560
    %3838 = vmatpush2.bf16.msra.mxu0 %v3559
    %3839 = vmatprep.subr.bf16.mxu0 %v3544
    %3840 = vmatpush2.bf16.msra.mxu0 %v3543
    %3841 = vmatprep.subr.bf16.mxu0 %v3528
    %3842 = vmatpush2.bf16.msra.mxu0 %v3527
    %3843 = vmatprep.subr.bf16.mxu0 %v3512
    %3844 = vmatpush2.bf16.msra.mxu0 %v3511
    %3845 = vmatprep.subr.bf16.mxu0 %v3496
    %3846 = vmatpush2.bf16.msra.mxu0 %v3495
    %3847 = vmatprep.subr.bf16.mxu0 %v3480
    %3848 = vmatpush2.bf16.msra.mxu0 %v3479
    %3849 = vmatprep.subr.bf16.mxu0 %v3464
    %3850 = vmatpush2.bf16.msra.mxu0 %v3463
    %3851 = vmatprep.subr.bf16.mxu0 %v3448
    %3852 = vmatpush2.bf16.msra.mxu0 %v3447
    %3853 = vmatprep.mubr.bf16.mxu0 %v3306
    %3854 = vmatmul.mubr.bf16.gmra.mxu0 %v3305
    %v3855 = vpop.f32.mrf.mxu0
    %v3856 = vadd.f32 0.0, %v3855
    %v3857 = vpop.f32.mrf.mxu0
    %v3858 = vadd.f32 0.0, %v3857
    %v3859 = vpop.f32.mrf.mxu0
    %v3860 = vadd.f32 0.0, %v3859
    %v3861 = vpop.f32.mrf.mxu0
    %v3862 = vadd.f32 0.0, %v3861
    %3863 = vdwg.mxu0
    %3864 = vmatprep.subr.bf16.mxu0 %v3434
    %3865 = vmatpush1.bf16.msra.mxu0 %v3433
    %3866 = vmatprep.subr.bf16.mxu0 %v3418
    %3867 = vmatpush1.bf16.msra.mxu0 %v3417
    %3868 = vmatprep.subr.bf16.mxu0 %v3402
    %3869 = vmatpush1.bf16.msra.mxu0 %v3401
    %3870 = vmatprep.subr.bf16.mxu0 %v3386
    %3871 = vmatpush1.bf16.msra.mxu0 %v3385
    %3872 = vmatprep.subr.bf16.mxu0 %v3370
    %3873 = vmatpush1.bf16.msra.mxu0 %v3369
    %3874 = vmatprep.subr.bf16.mxu0 %v3354
    %3875 = vmatpush1.bf16.msra.mxu0 %v3353
    %3876 = vmatprep.subr.bf16.mxu0 %v3338
    %3877 = vmatpush1.bf16.msra.mxu0 %v3337
    %3878 = vmatprep.subr.bf16.mxu0 %v3322
    %3879 = vmatpush1.bf16.msra.mxu0 %v3321
    %3880 = vmatprep.subr.bf16.mxu0 %v3562
    %3881 = vmatpush2.bf16.msra.mxu0 %v3561
    %3882 = vmatprep.subr.bf16.mxu0 %v3546
    %3883 = vmatpush2.bf16.msra.mxu0 %v3545
    %3884 = vmatprep.subr.bf16.mxu0 %v3530
    %3885 = vmatpush2.bf16.msra.mxu0 %v3529
    %3886 = vmatprep.subr.bf16.mxu0 %v3514
    %3887 = vmatpush2.bf16.msra.mxu0 %v3513
    %3888 = vmatprep.subr.bf16.mxu0 %v3498
    %3889 = vmatpush2.bf16.msra.mxu0 %v3497
    %3890 = vmatprep.subr.bf16.mxu0 %v3482
    %3891 = vmatpush2.bf16.msra.mxu0 %v3481
    %3892 = vmatprep.subr.bf16.mxu0 %v3466
    %3893 = vmatpush2.bf16.msra.mxu0 %v3465
    %3894 = vmatprep.subr.bf16.mxu0 %v3450
    %3895 = vmatpush2.bf16.msra.mxu0 %v3449
    %3896 = vmatprep.mubr.bf16.mxu0 %v3306
    %3897 = vmatmul.mubr.bf16.gmra.mxu0 %v3305
    %v3898 = vpop.f32.mrf.mxu0
    %v3899 = vadd.f32 0.0, %v3898
    %v3900 = vpop.f32.mrf.mxu0
    %v3901 = vadd.f32 0.0, %v3900
    %v3902 = vpop.f32.mrf.mxu0
    %v3903 = vadd.f32 0.0, %v3902
    %v3904 = vpop.f32.mrf.mxu0
    %v3905 = vadd.f32 0.0, %v3904
    %3906 = vdwg.mxu0
    %v3909 = vlaneseq
    %v3910 = vshrl.u32 %v3909, 7
    %v3911 = vsub.s32 0, %v3910
    %v3912 = vrot.slane %v3303, %v3911
    %v3913 = vlaneseq
    %v3914 = vshrl.u32 %v3913, 7
    %v3915 = vsub.s32 1, %v3914
    %v3916 = vrot.slane %v3303, %v3915
    %v3917 = vlaneseq
    %v3918 = vshrl.u32 %v3917, 7
    %v3919 = vsub.s32 2, %v3918
    %v3920 = vrot.slane %v3303, %v3919
    %v3921 = vlaneseq
    %v3922 = vshrl.u32 %v3921, 7
    %v3923 = vsub.s32 3, %v3922
    %v3924 = vrot.slane %v3303, %v3923
    %v3925 = vlaneseq
    %v3926 = vshrl.u32 %v3925, 7
    %v3927 = vsub.s32 4, %v3926
    %v3928 = vrot.slane %v3303, %v3927
    %v3929 = vlaneseq
    %v3930 = vshrl.u32 %v3929, 7
    %v3931 = vsub.s32 5, %v3930
    %v3932 = vrot.slane %v3303, %v3931
    %v3933 = vlaneseq
    %v3934 = vshrl.u32 %v3933, 7
    %v3935 = vsub.s32 6, %v3934
    %v3936 = vrot.slane %v3303, %v3935
    %v3937 = vlaneseq
    %v3938 = vshrl.u32 %v3937, 7
    %v3939 = vsub.s32 7, %v3938
    %v3940 = vrot.slane %v3303, %v3939
    %v3941 = vlaneseq
    %v3942 = vshrl.u32 %v3941, 7
    %v3943 = vsub.s32 0, %v3942
    %v3944 = vrot.slane %v3304, %v3943
    %v3945 = vlaneseq
    %v3946 = vshrl.u32 %v3945, 7
    %v3947 = vsub.s32 1, %v3946
    %v3948 = vrot.slane %v3304, %v3947
    %v3949 = vlaneseq
    %v3950 = vshrl.u32 %v3949, 7
    %v3951 = vsub.s32 2, %v3950
    %v3952 = vrot.slane %v3304, %v3951
    %v3953 = vlaneseq
    %v3954 = vshrl.u32 %v3953, 7
    %v3955 = vsub.s32 3, %v3954
    %v3956 = vrot.slane %v3304, %v3955
    %v3957 = vlaneseq
    %v3958 = vshrl.u32 %v3957, 7
    %v3959 = vsub.s32 4, %v3958
    %v3960 = vrot.slane %v3304, %v3959
    %v3961 = vlaneseq
    %v3962 = vshrl.u32 %v3961, 7
    %v3963 = vsub.s32 5, %v3962
    %v3964 = vrot.slane %v3304, %v3963
    %v3965 = vlaneseq
    %v3966 = vshrl.u32 %v3965, 7
    %v3967 = vsub.s32 6, %v3966
    %v3968 = vrot.slane %v3304, %v3967
    %v3969 = vlaneseq
    %v3970 = vshrl.u32 %v3969, 7
    %v3971 = vsub.s32 7, %v3970
    %v3972 = vrot.slane %v3304, %v3971
    %v3989 = vmul.f32 %v3598, %v3912
    %v3990 = vmul.f32 %v3600, %v3916
    %v3991 = vmul.f32 %v3641, %v3920
    %v3992 = vmul.f32 %v3643, %v3924
    %v3993 = vmul.f32 %v3684, %v3928
    %v3994 = vmul.f32 %v3686, %v3932
    %v3995 = vmul.f32 %v3727, %v3936
    %v3996 = vmul.f32 %v3729, %v3940
    %v3997 = vmul.f32 %v3770, %v3944
    %v3998 = vmul.f32 %v3772, %v3948
    %v3999 = vmul.f32 %v3813, %v3952
    %v4000 = vmul.f32 %v3815, %v3956
    %v4001 = vmul.f32 %v3856, %v3960
    %v4002 = vmul.f32 %v3858, %v3964
    %v4003 = vmul.f32 %v3899, %v3968
    %v4004 = vmul.f32 %v3901, %v3972
    %v4005 = vmul.f32 %v3602, %v3912
    %v4006 = vmul.f32 %v3604, %v3916
    %v4007 = vmul.f32 %v3645, %v3920
    %v4008 = vmul.f32 %v3647, %v3924
    %v4009 = vmul.f32 %v3688, %v3928
    %v4010 = vmul.f32 %v3690, %v3932
    %v4011 = vmul.f32 %v3731, %v3936
    %v4012 = vmul.f32 %v3733, %v3940
    %v4013 = vmul.f32 %v3774, %v3944
    %v4014 = vmul.f32 %v3776, %v3948
    %v4015 = vmul.f32 %v3817, %v3952
    %v4016 = vmul.f32 %v3819, %v3956
    %v4017 = vmul.f32 %v3860, %v3960
    %v4018 = vmul.f32 %v3862, %v3964
    %v4019 = vmul.f32 %v3903, %v3968
    %v4020 = vmul.f32 %v3905, %v3972
    %v4021 = vld [vmem:[#allocation28] sm:$0xff]
    %v4022 = vld [vmem:[#allocation28 + $0x8] sm:$0xff]
    %v4025 = vlaneseq
    %v4026 = vshrl.u32 %v4025, 7
    %v4027 = vsub.s32 0, %v4026
    %v4028 = vrot.slane %v4021, %v4027
    %v4029 = vlaneseq
    %v4030 = vshrl.u32 %v4029, 7
    %v4031 = vsub.s32 1, %v4030
    %v4032 = vrot.slane %v4021, %v4031
    %v4033 = vlaneseq
    %v4034 = vshrl.u32 %v4033, 7
    %v4035 = vsub.s32 2, %v4034
    %v4036 = vrot.slane %v4021, %v4035
    %v4037 = vlaneseq
    %v4038 = vshrl.u32 %v4037, 7
    %v4039 = vsub.s32 3, %v4038
    %v4040 = vrot.slane %v4021, %v4039
    %v4041 = vlaneseq
    %v4042 = vshrl.u32 %v4041, 7
    %v4043 = vsub.s32 4, %v4042
    %v4044 = vrot.slane %v4021, %v4043
    %v4045 = vlaneseq
    %v4046 = vshrl.u32 %v4045, 7
    %v4047 = vsub.s32 5, %v4046
    %v4048 = vrot.slane %v4021, %v4047
    %v4049 = vlaneseq
    %v4050 = vshrl.u32 %v4049, 7
    %v4051 = vsub.s32 6, %v4050
    %v4052 = vrot.slane %v4021, %v4051
    %v4053 = vlaneseq
    %v4054 = vshrl.u32 %v4053, 7
    %v4055 = vsub.s32 7, %v4054
    %v4056 = vrot.slane %v4021, %v4055
    %v4057 = vlaneseq
    %v4058 = vshrl.u32 %v4057, 7
    %v4059 = vsub.s32 0, %v4058
    %v4060 = vrot.slane %v4022, %v4059
    %v4061 = vlaneseq
    %v4062 = vshrl.u32 %v4061, 7
    %v4063 = vsub.s32 1, %v4062
    %v4064 = vrot.slane %v4022, %v4063
    %v4065 = vlaneseq
    %v4066 = vshrl.u32 %v4065, 7
    %v4067 = vsub.s32 2, %v4066
    %v4068 = vrot.slane %v4022, %v4067
    %v4069 = vlaneseq
    %v4070 = vshrl.u32 %v4069, 7
    %v4071 = vsub.s32 3, %v4070
    %v4072 = vrot.slane %v4022, %v4071
    %v4073 = vlaneseq
    %v4074 = vshrl.u32 %v4073, 7
    %v4075 = vsub.s32 4, %v4074
    %v4076 = vrot.slane %v4022, %v4075
    %v4077 = vlaneseq
    %v4078 = vshrl.u32 %v4077, 7
    %v4079 = vsub.s32 5, %v4078
    %v4080 = vrot.slane %v4022, %v4079
    %v4081 = vlaneseq
    %v4082 = vshrl.u32 %v4081, 7
    %v4083 = vsub.s32 6, %v4082
    %v4084 = vrot.slane %v4022, %v4083
    %v4085 = vlaneseq
    %v4086 = vshrl.u32 %v4085, 7
    %v4087 = vsub.s32 7, %v4086
    %v4088 = vrot.slane %v4022, %v4087
    %v4105 = vadd.f32 %v3989, %v4028
    %v4106 = vadd.f32 %v3990, %v4032
    %v4107 = vadd.f32 %v3991, %v4036
    %v4108 = vadd.f32 %v3992, %v4040
    %v4109 = vadd.f32 %v3993, %v4044
    %v4110 = vadd.f32 %v3994, %v4048
    %v4111 = vadd.f32 %v3995, %v4052
    %v4112 = vadd.f32 %v3996, %v4056
    %v4113 = vadd.f32 %v3997, %v4060
    %v4114 = vadd.f32 %v3998, %v4064
    %v4115 = vadd.f32 %v3999, %v4068
    %v4116 = vadd.f32 %v4000, %v4072
    %v4117 = vadd.f32 %v4001, %v4076
    %v4118 = vadd.f32 %v4002, %v4080
    %v4119 = vadd.f32 %v4003, %v4084
    %v4120 = vadd.f32 %v4004, %v4088
    %v4121 = vadd.f32 %v4005, %v4028
    %v4122 = vadd.f32 %v4006, %v4032
    %v4123 = vadd.f32 %v4007, %v4036
    %v4124 = vadd.f32 %v4008, %v4040
    %v4125 = vadd.f32 %v4009, %v4044
    %v4126 = vadd.f32 %v4010, %v4048
    %v4127 = vadd.f32 %v4011, %v4052
    %v4128 = vadd.f32 %v4012, %v4056
    %v4129 = vadd.f32 %v4013, %v4060
    %v4130 = vadd.f32 %v4014, %v4064
    %v4131 = vadd.f32 %v4015, %v4068
    %v4132 = vadd.f32 %v4016, %v4072
    %v4133 = vadd.f32 %v4017, %v4076
    %v4134 = vadd.f32 %v4018, %v4080
    %v4135 = vadd.f32 %v4019, %v4084
    %v4136 = vadd.f32 %v4020, %v4088
    %v4137 = vmax.f32 %v4105, 0.0
    %v4138 = vmax.f32 %v4106, 0.0
    %v4139 = vmax.f32 %v4107, 0.0
    %v4140 = vmax.f32 %v4108, 0.0
    %v4141 = vmax.f32 %v4109, 0.0
    %v4142 = vmax.f32 %v4110, 0.0
    %v4143 = vmax.f32 %v4111, 0.0
    %v4144 = vmax.f32 %v4112, 0.0
    %v4145 = vmax.f32 %v4113, 0.0
    %v4146 = vmax.f32 %v4114, 0.0
    %v4147 = vmax.f32 %v4115, 0.0
    %v4148 = vmax.f32 %v4116, 0.0
    %v4149 = vmax.f32 %v4117, 0.0
    %v4150 = vmax.f32 %v4118, 0.0
    %v4151 = vmax.f32 %v4119, 0.0
    %v4152 = vmax.f32 %v4120, 0.0
    %v4153 = vmax.f32 %v4121, 0.0
    %v4154 = vmax.f32 %v4122, 0.0
    %v4155 = vmax.f32 %v4123, 0.0
    %v4156 = vmax.f32 %v4124, 0.0
    %v4157 = vmax.f32 %v4125, 0.0
    %v4158 = vmax.f32 %v4126, 0.0
    %v4159 = vmax.f32 %v4127, 0.0
    %v4160 = vmax.f32 %v4128, 0.0
    %v4161 = vmax.f32 %v4129, 0.0
    %v4162 = vmax.f32 %v4130, 0.0
    %v4163 = vmax.f32 %v4131, 0.0
    %v4164 = vmax.f32 %v4132, 0.0
    %v4165 = vmax.f32 %v4133, 0.0
    %v4166 = vmax.f32 %v4134, 0.0
    %v4167 = vmax.f32 %v4135, 0.0
    %v4168 = vmax.f32 %v4136, 0.0
    %v4169 = vld [vmem:[#allocation29] sm:$0xff]
    %v4170 = vld [vmem:[#allocation29 + $0x8] sm:$0xff]
    %v4171 = vld [vmem:[#allocation29 + $0x10] sm:$0xff]
    %v4172 = vld [vmem:[#allocation29 + $0x18] sm:$0xff]
    %v4173 = vld [vmem:[#allocation29 + $0x20] sm:$0xff]
    %v4174 = vld [vmem:[#allocation29 + $0x28] sm:$0xff]
    %v4175 = vld [vmem:[#allocation29 + $0x30] sm:$0xff]
    %v4176 = vld [vmem:[#allocation29 + $0x38] sm:$0xff]
    %v4177 = vld [vmem:[#allocation29 + $0x40] sm:$0xff]
    %v4178 = vld [vmem:[#allocation29 + $0x48] sm:$0xff]
    %v4179 = vld [vmem:[#allocation29 + $0x50] sm:$0xff]
    %v4180 = vld [vmem:[#allocation29 + $0x58] sm:$0xff]
    %v4181 = vld [vmem:[#allocation29 + $0x60] sm:$0xff]
    %v4182 = vld [vmem:[#allocation29 + $0x68] sm:$0xff]
    %v4183 = vld [vmem:[#allocation29 + $0x70] sm:$0xff]
    %v4184 = vld [vmem:[#allocation29 + $0x78] sm:$0xff]
    %v4185 = vld [vmem:[#allocation29 + $0x80] sm:$0xff]
    %v4186 = vld [vmem:[#allocation29 + $0x88] sm:$0xff]
    %v4187 = vld [vmem:[#allocation29 + $0x90] sm:$0xff]
    %v4188 = vld [vmem:[#allocation29 + $0x98] sm:$0xff]
    %v4189 = vld [vmem:[#allocation29 + $0xa0] sm:$0xff]
    %v4190 = vld [vmem:[#allocation29 + $0xa8] sm:$0xff]
    %v4191 = vld [vmem:[#allocation29 + $0xb0] sm:$0xff]
    %v4192 = vld [vmem:[#allocation29 + $0xb8] sm:$0xff]
    %v4193 = vld [vmem:[#allocation29 + $0xc0] sm:$0xff]
    %v4194 = vld [vmem:[#allocation29 + $0xc8] sm:$0xff]
    %v4195 = vld [vmem:[#allocation29 + $0xd0] sm:$0xff]
    %v4196 = vld [vmem:[#allocation29 + $0xd8] sm:$0xff]
    %v4197 = vld [vmem:[#allocation29 + $0xe0] sm:$0xff]
    %v4198 = vld [vmem:[#allocation29 + $0xe8] sm:$0xff]
    %v4199 = vld [vmem:[#allocation29 + $0xf0] sm:$0xff]
    %v4200 = vld [vmem:[#allocation29 + $0xf8] sm:$0xff]
    %v4201 = vld [vmem:[#allocation29 + $0x100] sm:$0xff]
    %v4202 = vld [vmem:[#allocation29 + $0x108] sm:$0xff]
    %v4203 = vld [vmem:[#allocation29 + $0x110] sm:$0xff]
    %v4204 = vld [vmem:[#allocation29 + $0x118] sm:$0xff]
    %v4205 = vld [vmem:[#allocation29 + $0x120] sm:$0xff]
    %v4206 = vld [vmem:[#allocation29 + $0x128] sm:$0xff]
    %v4207 = vld [vmem:[#allocation29 + $0x130] sm:$0xff]
    %v4208 = vld [vmem:[#allocation29 + $0x138] sm:$0xff]
    %v4209 = vld [vmem:[#allocation29 + $0x140] sm:$0xff]
    %v4210 = vld [vmem:[#allocation29 + $0x148] sm:$0xff]
    %v4211 = vld [vmem:[#allocation29 + $0x150] sm:$0xff]
    %v4212 = vld [vmem:[#allocation29 + $0x158] sm:$0xff]
    %v4213 = vld [vmem:[#allocation29 + $0x160] sm:$0xff]
    %v4214 = vld [vmem:[#allocation29 + $0x168] sm:$0xff]
    %v4215 = vld [vmem:[#allocation29 + $0x170] sm:$0xff]
    %v4216 = vld [vmem:[#allocation29 + $0x178] sm:$0xff]
    %v4217 = vld [vmem:[#allocation29 + $0x180] sm:$0xff]
    %v4218 = vld [vmem:[#allocation29 + $0x188] sm:$0xff]
    %v4219 = vld [vmem:[#allocation29 + $0x190] sm:$0xff]
    %v4220 = vld [vmem:[#allocation29 + $0x198] sm:$0xff]
    %v4221 = vld [vmem:[#allocation29 + $0x1a0] sm:$0xff]
    %v4222 = vld [vmem:[#allocation29 + $0x1a8] sm:$0xff]
    %v4223 = vld [vmem:[#allocation29 + $0x1b0] sm:$0xff]
    %v4224 = vld [vmem:[#allocation29 + $0x1b8] sm:$0xff]
    %v4225 = vld [vmem:[#allocation29 + $0x1c0] sm:$0xff]
    %v4226 = vld [vmem:[#allocation29 + $0x1c8] sm:$0xff]
    %v4227 = vld [vmem:[#allocation29 + $0x1d0] sm:$0xff]
    %v4228 = vld [vmem:[#allocation29 + $0x1d8] sm:$0xff]
    %v4229 = vld [vmem:[#allocation29 + $0x1e0] sm:$0xff]
    %v4230 = vld [vmem:[#allocation29 + $0x1e8] sm:$0xff]
    %v4231 = vld [vmem:[#allocation29 + $0x1f0] sm:$0xff]
    %v4232 = vld [vmem:[#allocation29 + $0x1f8] sm:$0xff]
    %v4233 = vld [vmem:[#allocation29 + $0x200] sm:$0xff]
    %v4234 = vld [vmem:[#allocation29 + $0x208] sm:$0xff]
    %v4235 = vld [vmem:[#allocation29 + $0x210] sm:$0xff]
    %v4236 = vld [vmem:[#allocation29 + $0x218] sm:$0xff]
    %v4237 = vld [vmem:[#allocation29 + $0x220] sm:$0xff]
    %v4238 = vld [vmem:[#allocation29 + $0x228] sm:$0xff]
    %v4239 = vld [vmem:[#allocation29 + $0x230] sm:$0xff]
    %v4240 = vld [vmem:[#allocation29 + $0x238] sm:$0xff]
    %v4241 = vld [vmem:[#allocation29 + $0x240] sm:$0xff]
    %v4242 = vld [vmem:[#allocation29 + $0x248] sm:$0xff]
    %v4243 = vld [vmem:[#allocation29 + $0x250] sm:$0xff]
    %v4244 = vld [vmem:[#allocation29 + $0x258] sm:$0xff]
    %v4245 = vld [vmem:[#allocation29 + $0x260] sm:$0xff]
    %v4246 = vld [vmem:[#allocation29 + $0x268] sm:$0xff]
    %v4247 = vld [vmem:[#allocation29 + $0x270] sm:$0xff]
    %v4248 = vld [vmem:[#allocation29 + $0x278] sm:$0xff]
    %v4249 = vld [vmem:[#allocation29 + $0x280] sm:$0xff]
    %v4250 = vld [vmem:[#allocation29 + $0x288] sm:$0xff]
    %v4251 = vld [vmem:[#allocation29 + $0x290] sm:$0xff]
    %v4252 = vld [vmem:[#allocation29 + $0x298] sm:$0xff]
    %v4253 = vld [vmem:[#allocation29 + $0x2a0] sm:$0xff]
    %v4254 = vld [vmem:[#allocation29 + $0x2a8] sm:$0xff]
    %v4255 = vld [vmem:[#allocation29 + $0x2b0] sm:$0xff]
    %v4256 = vld [vmem:[#allocation29 + $0x2b8] sm:$0xff]
    %v4257 = vld [vmem:[#allocation29 + $0x2c0] sm:$0xff]
    %v4258 = vld [vmem:[#allocation29 + $0x2c8] sm:$0xff]
    %v4259 = vld [vmem:[#allocation29 + $0x2d0] sm:$0xff]
    %v4260 = vld [vmem:[#allocation29 + $0x2d8] sm:$0xff]
    %v4261 = vld [vmem:[#allocation29 + $0x2e0] sm:$0xff]
    %v4262 = vld [vmem:[#allocation29 + $0x2e8] sm:$0xff]
    %v4263 = vld [vmem:[#allocation29 + $0x2f0] sm:$0xff]
    %v4264 = vld [vmem:[#allocation29 + $0x2f8] sm:$0xff]
    %v4265 = vld [vmem:[#allocation29 + $0x300] sm:$0xff]
    %v4266 = vld [vmem:[#allocation29 + $0x308] sm:$0xff]
    %v4267 = vld [vmem:[#allocation29 + $0x310] sm:$0xff]
    %v4268 = vld [vmem:[#allocation29 + $0x318] sm:$0xff]
    %v4269 = vld [vmem:[#allocation29 + $0x320] sm:$0xff]
    %v4270 = vld [vmem:[#allocation29 + $0x328] sm:$0xff]
    %v4271 = vld [vmem:[#allocation29 + $0x330] sm:$0xff]
    %v4272 = vld [vmem:[#allocation29 + $0x338] sm:$0xff]
    %v4273 = vld [vmem:[#allocation29 + $0x340] sm:$0xff]
    %v4274 = vld [vmem:[#allocation29 + $0x348] sm:$0xff]
    %v4275 = vld [vmem:[#allocation29 + $0x350] sm:$0xff]
    %v4276 = vld [vmem:[#allocation29 + $0x358] sm:$0xff]
    %v4277 = vld [vmem:[#allocation29 + $0x360] sm:$0xff]
    %v4278 = vld [vmem:[#allocation29 + $0x368] sm:$0xff]
    %v4279 = vld [vmem:[#allocation29 + $0x370] sm:$0xff]
    %v4280 = vld [vmem:[#allocation29 + $0x378] sm:$0xff]
    %v4281 = vld [vmem:[#allocation29 + $0x380] sm:$0xff]
    %v4282 = vld [vmem:[#allocation29 + $0x388] sm:$0xff]
    %v4283 = vld [vmem:[#allocation29 + $0x390] sm:$0xff]
    %v4284 = vld [vmem:[#allocation29 + $0x398] sm:$0xff]
    %v4285 = vld [vmem:[#allocation29 + $0x3a0] sm:$0xff]
    %v4286 = vld [vmem:[#allocation29 + $0x3a8] sm:$0xff]
    %v4287 = vld [vmem:[#allocation29 + $0x3b0] sm:$0xff]
    %v4288 = vld [vmem:[#allocation29 + $0x3b8] sm:$0xff]
    %v4289 = vld [vmem:[#allocation29 + $0x3c0] sm:$0xff]
    %v4290 = vld [vmem:[#allocation29 + $0x3c8] sm:$0xff]
    %v4291 = vld [vmem:[#allocation29 + $0x3d0] sm:$0xff]
    %v4292 = vld [vmem:[#allocation29 + $0x3d8] sm:$0xff]
    %v4293 = vld [vmem:[#allocation29 + $0x3e0] sm:$0xff]
    %v4294 = vld [vmem:[#allocation29 + $0x3e8] sm:$0xff]
    %v4295 = vld [vmem:[#allocation29 + $0x3f0] sm:$0xff]
    %v4296 = vld [vmem:[#allocation29 + $0x3f8] sm:$0xff]
    %v4297 = vld [vmem:[#allocation31] sm:$0x3]
    %v4298 = vpack.c.bf16 %v4153, %v4137
    %v4299 = vpack.c.bf16 %v4154, %v4138
    %v4300 = vpack.c.bf16 %v4155, %v4139
    %v4301 = vpack.c.bf16 %v4156, %v4140
    %v4302 = vpack.c.bf16 %v4157, %v4141
    %v4303 = vpack.c.bf16 %v4158, %v4142
    %v4304 = vpack.c.bf16 %v4159, %v4143
    %v4305 = vpack.c.bf16 %v4160, %v4144
    %v4306 = vpack.c.bf16 %v4161, %v4145
    %v4307 = vpack.c.bf16 %v4162, %v4146
    %v4308 = vpack.c.bf16 %v4163, %v4147
    %v4309 = vpack.c.bf16 %v4164, %v4148
    %v4310 = vpack.c.bf16 %v4165, %v4149
    %v4311 = vpack.c.bf16 %v4166, %v4150
    %v4312 = vpack.c.bf16 %v4167, %v4151
    %v4313 = vpack.c.bf16 %v4168, %v4152
    %v4314 = vunpack.c.l.s8.bf16 %v4169
    %v4315 = vunpack.c.l.s8.bf16 %v4170
    %v4316 = vunpack.c.h.s8.bf16 %v4169
    %v4317 = vunpack.c.h.s8.bf16 %v4170
    %v4318 = vunpack.c.l.s8.bf16 %v4171
    %v4319 = vunpack.c.l.s8.bf16 %v4172
    %v4320 = vunpack.c.h.s8.bf16 %v4171
    %v4321 = vunpack.c.h.s8.bf16 %v4172
    %v4322 = vunpack.c.l.s8.bf16 %v4173
    %v4323 = vunpack.c.l.s8.bf16 %v4174
    %v4324 = vunpack.c.h.s8.bf16 %v4173
    %v4325 = vunpack.c.h.s8.bf16 %v4174
    %v4326 = vunpack.c.l.s8.bf16 %v4175
    %v4327 = vunpack.c.l.s8.bf16 %v4176
    %v4328 = vunpack.c.h.s8.bf16 %v4175
    %v4329 = vunpack.c.h.s8.bf16 %v4176
    %v4330 = vunpack.c.l.s8.bf16 %v4177
    %v4331 = vunpack.c.l.s8.bf16 %v4178
    %v4332 = vunpack.c.h.s8.bf16 %v4177
    %v4333 = vunpack.c.h.s8.bf16 %v4178
    %v4334 = vunpack.c.l.s8.bf16 %v4179
    %v4335 = vunpack.c.l.s8.bf16 %v4180
    %v4336 = vunpack.c.h.s8.bf16 %v4179
    %v4337 = vunpack.c.h.s8.bf16 %v4180
    %v4338 = vunpack.c.l.s8.bf16 %v4181
    %v4339 = vunpack.c.l.s8.bf16 %v4182
    %v4340 = vunpack.c.h.s8.bf16 %v4181
    %v4341 = vunpack.c.h.s8.bf16 %v4182
    %v4342 = vunpack.c.l.s8.bf16 %v4183
    %v4343 = vunpack.c.l.s8.bf16 %v4184
    %v4344 = vunpack.c.h.s8.bf16 %v4183
    %v4345 = vunpack.c.h.s8.bf16 %v4184
    %v4346 = vunpack.c.l.s8.bf16 %v4185
    %v4347 = vunpack.c.l.s8.bf16 %v4186
    %v4348 = vunpack.c.h.s8.bf16 %v4185
    %v4349 = vunpack.c.h.s8.bf16 %v4186
    %v4350 = vunpack.c.l.s8.bf16 %v4187
    %v4351 = vunpack.c.l.s8.bf16 %v4188
    %v4352 = vunpack.c.h.s8.bf16 %v4187
    %v4353 = vunpack.c.h.s8.bf16 %v4188
    %v4354 = vunpack.c.l.s8.bf16 %v4189
    %v4355 = vunpack.c.l.s8.bf16 %v4190
    %v4356 = vunpack.c.h.s8.bf16 %v4189
    %v4357 = vunpack.c.h.s8.bf16 %v4190
    %v4358 = vunpack.c.l.s8.bf16 %v4191
    %v4359 = vunpack.c.l.s8.bf16 %v4192
    %v4360 = vunpack.c.h.s8.bf16 %v4191
    %v4361 = vunpack.c.h.s8.bf16 %v4192
    %v4362 = vunpack.c.l.s8.bf16 %v4193
    %v4363 = vunpack.c.l.s8.bf16 %v4194
    %v4364 = vunpack.c.h.s8.bf16 %v4193
    %v4365 = vunpack.c.h.s8.bf16 %v4194
    %v4366 = vunpack.c.l.s8.bf16 %v4195
    %v4367 = vunpack.c.l.s8.bf16 %v4196
    %v4368 = vunpack.c.h.s8.bf16 %v4195
    %v4369 = vunpack.c.h.s8.bf16 %v4196
    %v4370 = vunpack.c.l.s8.bf16 %v4197
    %v4371 = vunpack.c.l.s8.bf16 %v4198
    %v4372 = vunpack.c.h.s8.bf16 %v4197
    %v4373 = vunpack.c.h.s8.bf16 %v4198
    %v4374 = vunpack.c.l.s8.bf16 %v4199
    %v4375 = vunpack.c.l.s8.bf16 %v4200
    %v4376 = vunpack.c.h.s8.bf16 %v4199
    %v4377 = vunpack.c.h.s8.bf16 %v4200
    %v4378 = vunpack.c.l.s8.bf16 %v4201
    %v4379 = vunpack.c.l.s8.bf16 %v4202
    %v4380 = vunpack.c.h.s8.bf16 %v4201
    %v4381 = vunpack.c.h.s8.bf16 %v4202
    %v4382 = vunpack.c.l.s8.bf16 %v4203
    %v4383 = vunpack.c.l.s8.bf16 %v4204
    %v4384 = vunpack.c.h.s8.bf16 %v4203
    %v4385 = vunpack.c.h.s8.bf16 %v4204
    %v4386 = vunpack.c.l.s8.bf16 %v4205
    %v4387 = vunpack.c.l.s8.bf16 %v4206
    %v4388 = vunpack.c.h.s8.bf16 %v4205
    %v4389 = vunpack.c.h.s8.bf16 %v4206
    %v4390 = vunpack.c.l.s8.bf16 %v4207
    %v4391 = vunpack.c.l.s8.bf16 %v4208
    %v4392 = vunpack.c.h.s8.bf16 %v4207
    %v4393 = vunpack.c.h.s8.bf16 %v4208
    %v4394 = vunpack.c.l.s8.bf16 %v4209
    %v4395 = vunpack.c.l.s8.bf16 %v4210
    %v4396 = vunpack.c.h.s8.bf16 %v4209
    %v4397 = vunpack.c.h.s8.bf16 %v4210
    %v4398 = vunpack.c.l.s8.bf16 %v4211
    %v4399 = vunpack.c.l.s8.bf16 %v4212
    %v4400 = vunpack.c.h.s8.bf16 %v4211
    %v4401 = vunpack.c.h.s8.bf16 %v4212
    %v4402 = vunpack.c.l.s8.bf16 %v4213
    %v4403 = vunpack.c.l.s8.bf16 %v4214
    %v4404 = vunpack.c.h.s8.bf16 %v4213
    %v4405 = vunpack.c.h.s8.bf16 %v4214
    %v4406 = vunpack.c.l.s8.bf16 %v4215
    %v4407 = vunpack.c.l.s8.bf16 %v4216
    %v4408 = vunpack.c.h.s8.bf16 %v4215
    %v4409 = vunpack.c.h.s8.bf16 %v4216
    %v4410 = vunpack.c.l.s8.bf16 %v4217
    %v4411 = vunpack.c.l.s8.bf16 %v4218
    %v4412 = vunpack.c.h.s8.bf16 %v4217
    %v4413 = vunpack.c.h.s8.bf16 %v4218
    %v4414 = vunpack.c.l.s8.bf16 %v4219
    %v4415 = vunpack.c.l.s8.bf16 %v4220
    %v4416 = vunpack.c.h.s8.bf16 %v4219
    %v4417 = vunpack.c.h.s8.bf16 %v4220
    %v4418 = vunpack.c.l.s8.bf16 %v4221
    %v4419 = vunpack.c.l.s8.bf16 %v4222
    %v4420 = vunpack.c.h.s8.bf16 %v4221
    %v4421 = vunpack.c.h.s8.bf16 %v4222
    %v4422 = vunpack.c.l.s8.bf16 %v4223
    %v4423 = vunpack.c.l.s8.bf16 %v4224
    %v4424 = vunpack.c.h.s8.bf16 %v4223
    %v4425 = vunpack.c.h.s8.bf16 %v4224
    %v4426 = vunpack.c.l.s8.bf16 %v4225
    %v4427 = vunpack.c.l.s8.bf16 %v4226
    %v4428 = vunpack.c.h.s8.bf16 %v4225
    %v4429 = vunpack.c.h.s8.bf16 %v4226
    %v4430 = vunpack.c.l.s8.bf16 %v4227
    %v4431 = vunpack.c.l.s8.bf16 %v4228
    %v4432 = vunpack.c.h.s8.bf16 %v4227
    %v4433 = vunpack.c.h.s8.bf16 %v4228
    %v4434 = vunpack.c.l.s8.bf16 %v4229
    %v4435 = vunpack.c.l.s8.bf16 %v4230
    %v4436 = vunpack.c.h.s8.bf16 %v4229
    %v4437 = vunpack.c.h.s8.bf16 %v4230
    %v4438 = vunpack.c.l.s8.bf16 %v4231
    %v4439 = vunpack.c.l.s8.bf16 %v4232
    %v4440 = vunpack.c.h.s8.bf16 %v4231
    %v4441 = vunpack.c.h.s8.bf16 %v4232
    %v4442 = vunpack.c.l.s8.bf16 %v4233
    %v4443 = vunpack.c.l.s8.bf16 %v4234
    %v4444 = vunpack.c.h.s8.bf16 %v4233
    %v4445 = vunpack.c.h.s8.bf16 %v4234
    %v4446 = vunpack.c.l.s8.bf16 %v4235
    %v4447 = vunpack.c.l.s8.bf16 %v4236
    %v4448 = vunpack.c.h.s8.bf16 %v4235
    %v4449 = vunpack.c.h.s8.bf16 %v4236
    %v4450 = vunpack.c.l.s8.bf16 %v4237
    %v4451 = vunpack.c.l.s8.bf16 %v4238
    %v4452 = vunpack.c.h.s8.bf16 %v4237
    %v4453 = vunpack.c.h.s8.bf16 %v4238
    %v4454 = vunpack.c.l.s8.bf16 %v4239
    %v4455 = vunpack.c.l.s8.bf16 %v4240
    %v4456 = vunpack.c.h.s8.bf16 %v4239
    %v4457 = vunpack.c.h.s8.bf16 %v4240
    %v4458 = vunpack.c.l.s8.bf16 %v4241
    %v4459 = vunpack.c.l.s8.bf16 %v4242
    %v4460 = vunpack.c.h.s8.bf16 %v4241
    %v4461 = vunpack.c.h.s8.bf16 %v4242
    %v4462 = vunpack.c.l.s8.bf16 %v4243
    %v4463 = vunpack.c.l.s8.bf16 %v4244
    %v4464 = vunpack.c.h.s8.bf16 %v4243
    %v4465 = vunpack.c.h.s8.bf16 %v4244
    %v4466 = vunpack.c.l.s8.bf16 %v4245
    %v4467 = vunpack.c.l.s8.bf16 %v4246
    %v4468 = vunpack.c.h.s8.bf16 %v4245
    %v4469 = vunpack.c.h.s8.bf16 %v4246
    %v4470 = vunpack.c.l.s8.bf16 %v4247
    %v4471 = vunpack.c.l.s8.bf16 %v4248
    %v4472 = vunpack.c.h.s8.bf16 %v4247
    %v4473 = vunpack.c.h.s8.bf16 %v4248
    %v4474 = vunpack.c.l.s8.bf16 %v4249
    %v4475 = vunpack.c.l.s8.bf16 %v4250
    %v4476 = vunpack.c.h.s8.bf16 %v4249
    %v4477 = vunpack.c.h.s8.bf16 %v4250
    %v4478 = vunpack.c.l.s8.bf16 %v4251
    %v4479 = vunpack.c.l.s8.bf16 %v4252
    %v4480 = vunpack.c.h.s8.bf16 %v4251
    %v4481 = vunpack.c.h.s8.bf16 %v4252
    %v4482 = vunpack.c.l.s8.bf16 %v4253
    %v4483 = vunpack.c.l.s8.bf16 %v4254
    %v4484 = vunpack.c.h.s8.bf16 %v4253
    %v4485 = vunpack.c.h.s8.bf16 %v4254
    %v4486 = vunpack.c.l.s8.bf16 %v4255
    %v4487 = vunpack.c.l.s8.bf16 %v4256
    %v4488 = vunpack.c.h.s8.bf16 %v4255
    %v4489 = vunpack.c.h.s8.bf16 %v4256
    %v4490 = vunpack.c.l.s8.bf16 %v4257
    %v4491 = vunpack.c.l.s8.bf16 %v4258
    %v4492 = vunpack.c.h.s8.bf16 %v4257
    %v4493 = vunpack.c.h.s8.bf16 %v4258
    %v4494 = vunpack.c.l.s8.bf16 %v4259
    %v4495 = vunpack.c.l.s8.bf16 %v4260
    %v4496 = vunpack.c.h.s8.bf16 %v4259
    %v4497 = vunpack.c.h.s8.bf16 %v4260
    %v4498 = vunpack.c.l.s8.bf16 %v4261
    %v4499 = vunpack.c.l.s8.bf16 %v4262
    %v4500 = vunpack.c.h.s8.bf16 %v4261
    %v4501 = vunpack.c.h.s8.bf16 %v4262
    %v4502 = vunpack.c.l.s8.bf16 %v4263
    %v4503 = vunpack.c.l.s8.bf16 %v4264
    %v4504 = vunpack.c.h.s8.bf16 %v4263
    %v4505 = vunpack.c.h.s8.bf16 %v4264
    %v4506 = vunpack.c.l.s8.bf16 %v4265
    %v4507 = vunpack.c.l.s8.bf16 %v4266
    %v4508 = vunpack.c.h.s8.bf16 %v4265
    %v4509 = vunpack.c.h.s8.bf16 %v4266
    %v4510 = vunpack.c.l.s8.bf16 %v4267
    %v4511 = vunpack.c.l.s8.bf16 %v4268
    %v4512 = vunpack.c.h.s8.bf16 %v4267
    %v4513 = vunpack.c.h.s8.bf16 %v4268
    %v4514 = vunpack.c.l.s8.bf16 %v4269
    %v4515 = vunpack.c.l.s8.bf16 %v4270
    %v4516 = vunpack.c.h.s8.bf16 %v4269
    %v4517 = vunpack.c.h.s8.bf16 %v4270
    %v4518 = vunpack.c.l.s8.bf16 %v4271
    %v4519 = vunpack.c.l.s8.bf16 %v4272
    %v4520 = vunpack.c.h.s8.bf16 %v4271
    %v4521 = vunpack.c.h.s8.bf16 %v4272
    %v4522 = vunpack.c.l.s8.bf16 %v4273
    %v4523 = vunpack.c.l.s8.bf16 %v4274
    %v4524 = vunpack.c.h.s8.bf16 %v4273
    %v4525 = vunpack.c.h.s8.bf16 %v4274
    %v4526 = vunpack.c.l.s8.bf16 %v4275
    %v4527 = vunpack.c.l.s8.bf16 %v4276
    %v4528 = vunpack.c.h.s8.bf16 %v4275
    %v4529 = vunpack.c.h.s8.bf16 %v4276
    %v4530 = vunpack.c.l.s8.bf16 %v4277
    %v4531 = vunpack.c.l.s8.bf16 %v4278
    %v4532 = vunpack.c.h.s8.bf16 %v4277
    %v4533 = vunpack.c.h.s8.bf16 %v4278
    %v4534 = vunpack.c.l.s8.bf16 %v4279
    %v4535 = vunpack.c.l.s8.bf16 %v4280
    %v4536 = vunpack.c.h.s8.bf16 %v4279
    %v4537 = vunpack.c.h.s8.bf16 %v4280
    %v4538 = vunpack.c.l.s8.bf16 %v4281
    %v4539 = vunpack.c.l.s8.bf16 %v4282
    %v4540 = vunpack.c.h.s8.bf16 %v4281
    %v4541 = vunpack.c.h.s8.bf16 %v4282
    %v4542 = vunpack.c.l.s8.bf16 %v4283
    %v4543 = vunpack.c.l.s8.bf16 %v4284
    %v4544 = vunpack.c.h.s8.bf16 %v4283
    %v4545 = vunpack.c.h.s8.bf16 %v4284
    %v4546 = vunpack.c.l.s8.bf16 %v4285
    %v4547 = vunpack.c.l.s8.bf16 %v4286
    %v4548 = vunpack.c.h.s8.bf16 %v4285
    %v4549 = vunpack.c.h.s8.bf16 %v4286
    %v4550 = vunpack.c.l.s8.bf16 %v4287
    %v4551 = vunpack.c.l.s8.bf16 %v4288
    %v4552 = vunpack.c.h.s8.bf16 %v4287
    %v4553 = vunpack.c.h.s8.bf16 %v4288
    %v4554 = vunpack.c.l.s8.bf16 %v4289
    %v4555 = vunpack.c.l.s8.bf16 %v4290
    %v4556 = vunpack.c.h.s8.bf16 %v4289
    %v4557 = vunpack.c.h.s8.bf16 %v4290
    %v4558 = vunpack.c.l.s8.bf16 %v4291
    %v4559 = vunpack.c.l.s8.bf16 %v4292
    %v4560 = vunpack.c.h.s8.bf16 %v4291
    %v4561 = vunpack.c.h.s8.bf16 %v4292
    %v4562 = vunpack.c.l.s8.bf16 %v4293
    %v4563 = vunpack.c.l.s8.bf16 %v4294
    %v4564 = vunpack.c.h.s8.bf16 %v4293
    %v4565 = vunpack.c.h.s8.bf16 %v4294
    %v4566 = vunpack.c.l.s8.bf16 %v4295
    %v4567 = vunpack.c.l.s8.bf16 %v4296
    %v4568 = vunpack.c.h.s8.bf16 %v4295
    %v4569 = vunpack.c.h.s8.bf16 %v4296
    %4570 = vmatprep.subr.bf16.mxu0 %v4329
    %4571 = vmatpush1.bf16.msra.mxu0 %v4328
    %4572 = vmatprep.subr.bf16.mxu0 %v4327
    %4573 = vmatpush1.bf16.msra.mxu0 %v4326
    %4574 = vmatprep.subr.bf16.mxu0 %v4325
    %4575 = vmatpush1.bf16.msra.mxu0 %v4324
    %4576 = vmatprep.subr.bf16.mxu0 %v4323
    %4577 = vmatpush1.bf16.msra.mxu0 %v4322
    %4578 = vmatprep.subr.bf16.mxu0 %v4321
    %4579 = vmatpush1.bf16.msra.mxu0 %v4320
    %4580 = vmatprep.subr.bf16.mxu0 %v4319
    %4581 = vmatpush1.bf16.msra.mxu0 %v4318
    %4582 = vmatprep.subr.bf16.mxu0 %v4317
    %4583 = vmatpush1.bf16.msra.mxu0 %v4316
    %4584 = vmatprep.subr.bf16.mxu0 %v4315
    %4585 = vmatpush1.bf16.msra.mxu0 %v4314
    %4586 = vmatprep.subr.bf16.mxu0 %v4345
    %4587 = vmatpush2.bf16.msra.mxu0 %v4344
    %4588 = vmatprep.subr.bf16.mxu0 %v4343
    %4589 = vmatpush2.bf16.msra.mxu0 %v4342
    %4590 = vmatprep.subr.bf16.mxu0 %v4341
    %4591 = vmatpush2.bf16.msra.mxu0 %v4340
    %4592 = vmatprep.subr.bf16.mxu0 %v4339
    %4593 = vmatpush2.bf16.msra.mxu0 %v4338
    %4594 = vmatprep.subr.bf16.mxu0 %v4337
    %4595 = vmatpush2.bf16.msra.mxu0 %v4336
    %4596 = vmatprep.subr.bf16.mxu0 %v4335
    %4597 = vmatpush2.bf16.msra.mxu0 %v4334
    %4598 = vmatprep.subr.bf16.mxu0 %v4333
    %4599 = vmatpush2.bf16.msra.mxu0 %v4332
    %4600 = vmatprep.subr.bf16.mxu0 %v4331
    %4601 = vmatpush2.bf16.msra.mxu0 %v4330
    %4602 = vmatprep.mubr.bf16.mxu0 %v4299
    %4603 = vmatmul.mubr.bf16.gmra.mxu0 %v4298
    %v4604 = vpop.f32.mrf.mxu0
    %v4605 = vadd.f32 0.0, %v4604
    %v4606 = vpop.f32.mrf.mxu0
    %v4607 = vadd.f32 0.0, %v4606
    %v4608 = vpop.f32.mrf.mxu0
    %v4609 = vadd.f32 0.0, %v4608
    %v4610 = vpop.f32.mrf.mxu0
    %v4611 = vadd.f32 0.0, %v4610
    %4612 = vdwg.mxu0
    %4613 = vmatprep.subr.bf16.mxu0 %v4361
    %4614 = vmatpush1.bf16.msra.mxu0 %v4360
    %4615 = vmatprep.subr.bf16.mxu0 %v4359
    %4616 = vmatpush1.bf16.msra.mxu0 %v4358
    %4617 = vmatprep.subr.bf16.mxu0 %v4357
    %4618 = vmatpush1.bf16.msra.mxu0 %v4356
    %4619 = vmatprep.subr.bf16.mxu0 %v4355
    %4620 = vmatpush1.bf16.msra.mxu0 %v4354
    %4621 = vmatprep.subr.bf16.mxu0 %v4353
    %4622 = vmatpush1.bf16.msra.mxu0 %v4352
    %4623 = vmatprep.subr.bf16.mxu0 %v4351
    %4624 = vmatpush1.bf16.msra.mxu0 %v4350
    %4625 = vmatprep.subr.bf16.mxu0 %v4349
    %4626 = vmatpush1.bf16.msra.mxu0 %v4348
    %4627 = vmatprep.subr.bf16.mxu0 %v4347
    %4628 = vmatpush1.bf16.msra.mxu0 %v4346
    %4629 = vmatprep.subr.bf16.mxu0 %v4377
    %4630 = vmatpush2.bf16.msra.mxu0 %v4376
    %4631 = vmatprep.subr.bf16.mxu0 %v4375
    %4632 = vmatpush2.bf16.msra.mxu0 %v4374
    %4633 = vmatprep.subr.bf16.mxu0 %v4373
    %4634 = vmatpush2.bf16.msra.mxu0 %v4372
    %4635 = vmatprep.subr.bf16.mxu0 %v4371
    %4636 = vmatpush2.bf16.msra.mxu0 %v4370
    %4637 = vmatprep.subr.bf16.mxu0 %v4369
    %4638 = vmatpush2.bf16.msra.mxu0 %v4368
    %4639 = vmatprep.subr.bf16.mxu0 %v4367
    %4640 = vmatpush2.bf16.msra.mxu0 %v4366
    %4641 = vmatprep.subr.bf16.mxu0 %v4365
    %4642 = vmatpush2.bf16.msra.mxu0 %v4364
    %4643 = vmatprep.subr.bf16.mxu0 %v4363
    %4644 = vmatpush2.bf16.msra.mxu0 %v4362
    %4645 = vmatprep.mubr.bf16.mxu0 %v4301
    %4646 = vmatmul.mubr.bf16.gmra.mxu0 %v4300
    %v4647 = vpop.f32.mrf.mxu0
    %v4648 = vadd.f32 %v4605, %v4647
    %v4649 = vpop.f32.mrf.mxu0
    %v4650 = vadd.f32 %v4607, %v4649
    %v4651 = vpop.f32.mrf.mxu0
    %v4652 = vadd.f32 %v4609, %v4651
    %v4653 = vpop.f32.mrf.mxu0
    %v4654 = vadd.f32 %v4611, %v4653
    %4655 = vdwg.mxu0
    %4656 = vmatprep.subr.bf16.mxu0 %v4393
    %4657 = vmatpush1.bf16.msra.mxu0 %v4392
    %4658 = vmatprep.subr.bf16.mxu0 %v4391
    %4659 = vmatpush1.bf16.msra.mxu0 %v4390
    %4660 = vmatprep.subr.bf16.mxu0 %v4389
    %4661 = vmatpush1.bf16.msra.mxu0 %v4388
    %4662 = vmatprep.subr.bf16.mxu0 %v4387
    %4663 = vmatpush1.bf16.msra.mxu0 %v4386
    %4664 = vmatprep.subr.bf16.mxu0 %v4385
    %4665 = vmatpush1.bf16.msra.mxu0 %v4384
    %4666 = vmatprep.subr.bf16.mxu0 %v4383
    %4667 = vmatpush1.bf16.msra.mxu0 %v4382
    %4668 = vmatprep.subr.bf16.mxu0 %v4381
    %4669 = vmatpush1.bf16.msra.mxu0 %v4380
    %4670 = vmatprep.subr.bf16.mxu0 %v4379
    %4671 = vmatpush1.bf16.msra.mxu0 %v4378
    %4672 = vmatprep.subr.bf16.mxu0 %v4409
    %4673 = vmatpush2.bf16.msra.mxu0 %v4408
    %4674 = vmatprep.subr.bf16.mxu0 %v4407
    %4675 = vmatpush2.bf16.msra.mxu0 %v4406
    %4676 = vmatprep.subr.bf16.mxu0 %v4405
    %4677 = vmatpush2.bf16.msra.mxu0 %v4404
    %4678 = vmatprep.subr.bf16.mxu0 %v4403
    %4679 = vmatpush2.bf16.msra.mxu0 %v4402
    %4680 = vmatprep.subr.bf16.mxu0 %v4401
    %4681 = vmatpush2.bf16.msra.mxu0 %v4400
    %4682 = vmatprep.subr.bf16.mxu0 %v4399
    %4683 = vmatpush2.bf16.msra.mxu0 %v4398
    %4684 = vmatprep.subr.bf16.mxu0 %v4397
    %4685 = vmatpush2.bf16.msra.mxu0 %v4396
    %4686 = vmatprep.subr.bf16.mxu0 %v4395
    %4687 = vmatpush2.bf16.msra.mxu0 %v4394
    %4688 = vmatprep.mubr.bf16.mxu0 %v4303
    %4689 = vmatmul.mubr.bf16.gmra.mxu0 %v4302
    %v4690 = vpop.f32.mrf.mxu0
    %v4691 = vadd.f32 %v4648, %v4690
    %v4692 = vpop.f32.mrf.mxu0
    %v4693 = vadd.f32 %v4650, %v4692
    %v4694 = vpop.f32.mrf.mxu0
    %v4695 = vadd.f32 %v4652, %v4694
    %v4696 = vpop.f32.mrf.mxu0
    %v4697 = vadd.f32 %v4654, %v4696
    %4698 = vdwg.mxu0
    %4699 = vmatprep.subr.bf16.mxu0 %v4425
    %4700 = vmatpush1.bf16.msra.mxu0 %v4424
    %4701 = vmatprep.subr.bf16.mxu0 %v4423
    %4702 = vmatpush1.bf16.msra.mxu0 %v4422
    %4703 = vmatprep.subr.bf16.mxu0 %v4421
    %4704 = vmatpush1.bf16.msra.mxu0 %v4420
    %4705 = vmatprep.subr.bf16.mxu0 %v4419
    %4706 = vmatpush1.bf16.msra.mxu0 %v4418
    %4707 = vmatprep.subr.bf16.mxu0 %v4417
    %4708 = vmatpush1.bf16.msra.mxu0 %v4416
    %4709 = vmatprep.subr.bf16.mxu0 %v4415
    %4710 = vmatpush1.bf16.msra.mxu0 %v4414
    %4711 = vmatprep.subr.bf16.mxu0 %v4413
    %4712 = vmatpush1.bf16.msra.mxu0 %v4412
    %4713 = vmatprep.subr.bf16.mxu0 %v4411
    %4714 = vmatpush1.bf16.msra.mxu0 %v4410
    %4715 = vmatprep.subr.bf16.mxu0 %v4441
    %4716 = vmatpush2.bf16.msra.mxu0 %v4440
    %4717 = vmatprep.subr.bf16.mxu0 %v4439
    %4718 = vmatpush2.bf16.msra.mxu0 %v4438
    %4719 = vmatprep.subr.bf16.mxu0 %v4437
    %4720 = vmatpush2.bf16.msra.mxu0 %v4436
    %4721 = vmatprep.subr.bf16.mxu0 %v4435
    %4722 = vmatpush2.bf16.msra.mxu0 %v4434
    %4723 = vmatprep.subr.bf16.mxu0 %v4433
    %4724 = vmatpush2.bf16.msra.mxu0 %v4432
    %4725 = vmatprep.subr.bf16.mxu0 %v4431
    %4726 = vmatpush2.bf16.msra.mxu0 %v4430
    %4727 = vmatprep.subr.bf16.mxu0 %v4429
    %4728 = vmatpush2.bf16.msra.mxu0 %v4428
    %4729 = vmatprep.subr.bf16.mxu0 %v4427
    %4730 = vmatpush2.bf16.msra.mxu0 %v4426
    %4731 = vmatprep.mubr.bf16.mxu0 %v4305
    %4732 = vmatmul.mubr.bf16.gmra.mxu0 %v4304
    %v4733 = vpop.f32.mrf.mxu0
    %v4734 = vadd.f32 %v4691, %v4733
    %v4735 = vpop.f32.mrf.mxu0
    %v4736 = vadd.f32 %v4693, %v4735
    %v4737 = vpop.f32.mrf.mxu0
    %v4738 = vadd.f32 %v4695, %v4737
    %v4739 = vpop.f32.mrf.mxu0
    %v4740 = vadd.f32 %v4697, %v4739
    %4741 = vdwg.mxu0
    %4742 = vmatprep.subr.bf16.mxu0 %v4457
    %4743 = vmatpush1.bf16.msra.mxu0 %v4456
    %4744 = vmatprep.subr.bf16.mxu0 %v4455
    %4745 = vmatpush1.bf16.msra.mxu0 %v4454
    %4746 = vmatprep.subr.bf16.mxu0 %v4453
    %4747 = vmatpush1.bf16.msra.mxu0 %v4452
    %4748 = vmatprep.subr.bf16.mxu0 %v4451
    %4749 = vmatpush1.bf16.msra.mxu0 %v4450
    %4750 = vmatprep.subr.bf16.mxu0 %v4449
    %4751 = vmatpush1.bf16.msra.mxu0 %v4448
    %4752 = vmatprep.subr.bf16.mxu0 %v4447
    %4753 = vmatpush1.bf16.msra.mxu0 %v4446
    %4754 = vmatprep.subr.bf16.mxu0 %v4445
    %4755 = vmatpush1.bf16.msra.mxu0 %v4444
    %4756 = vmatprep.subr.bf16.mxu0 %v4443
    %4757 = vmatpush1.bf16.msra.mxu0 %v4442
    %4758 = vmatprep.subr.bf16.mxu0 %v4473
    %4759 = vmatpush2.bf16.msra.mxu0 %v4472
    %4760 = vmatprep.subr.bf16.mxu0 %v4471
    %4761 = vmatpush2.bf16.msra.mxu0 %v4470
    %4762 = vmatprep.subr.bf16.mxu0 %v4469
    %4763 = vmatpush2.bf16.msra.mxu0 %v4468
    %4764 = vmatprep.subr.bf16.mxu0 %v4467
    %4765 = vmatpush2.bf16.msra.mxu0 %v4466
    %4766 = vmatprep.subr.bf16.mxu0 %v4465
    %4767 = vmatpush2.bf16.msra.mxu0 %v4464
    %4768 = vmatprep.subr.bf16.mxu0 %v4463
    %4769 = vmatpush2.bf16.msra.mxu0 %v4462
    %4770 = vmatprep.subr.bf16.mxu0 %v4461
    %4771 = vmatpush2.bf16.msra.mxu0 %v4460
    %4772 = vmatprep.subr.bf16.mxu0 %v4459
    %4773 = vmatpush2.bf16.msra.mxu0 %v4458
    %4774 = vmatprep.mubr.bf16.mxu0 %v4307
    %4775 = vmatmul.mubr.bf16.gmra.mxu0 %v4306
    %v4776 = vpop.f32.mrf.mxu0
    %v4777 = vadd.f32 %v4734, %v4776
    %v4778 = vpop.f32.mrf.mxu0
    %v4779 = vadd.f32 %v4736, %v4778
    %v4780 = vpop.f32.mrf.mxu0
    %v4781 = vadd.f32 %v4738, %v4780
    %v4782 = vpop.f32.mrf.mxu0
    %v4783 = vadd.f32 %v4740, %v4782
    %4784 = vdwg.mxu0
    %4785 = vmatprep.subr.bf16.mxu0 %v4489
    %4786 = vmatpush1.bf16.msra.mxu0 %v4488
    %4787 = vmatprep.subr.bf16.mxu0 %v4487
    %4788 = vmatpush1.bf16.msra.mxu0 %v4486
    %4789 = vmatprep.subr.bf16.mxu0 %v4485
    %4790 = vmatpush1.bf16.msra.mxu0 %v4484
    %4791 = vmatprep.subr.bf16.mxu0 %v4483
    %4792 = vmatpush1.bf16.msra.mxu0 %v4482
    %4793 = vmatprep.subr.bf16.mxu0 %v4481
    %4794 = vmatpush1.bf16.msra.mxu0 %v4480
    %4795 = vmatprep.subr.bf16.mxu0 %v4479
    %4796 = vmatpush1.bf16.msra.mxu0 %v4478
    %4797 = vmatprep.subr.bf16.mxu0 %v4477
    %4798 = vmatpush1.bf16.msra.mxu0 %v4476
    %4799 = vmatprep.subr.bf16.mxu0 %v4475
    %4800 = vmatpush1.bf16.msra.mxu0 %v4474
    %4801 = vmatprep.subr.bf16.mxu0 %v4505
    %4802 = vmatpush2.bf16.msra.mxu0 %v4504
    %4803 = vmatprep.subr.bf16.mxu0 %v4503
    %4804 = vmatpush2.bf16.msra.mxu0 %v4502
    %4805 = vmatprep.subr.bf16.mxu0 %v4501
    %4806 = vmatpush2.bf16.msra.mxu0 %v4500
    %4807 = vmatprep.subr.bf16.mxu0 %v4499
    %4808 = vmatpush2.bf16.msra.mxu0 %v4498
    %4809 = vmatprep.subr.bf16.mxu0 %v4497
    %4810 = vmatpush2.bf16.msra.mxu0 %v4496
    %4811 = vmatprep.subr.bf16.mxu0 %v4495
    %4812 = vmatpush2.bf16.msra.mxu0 %v4494
    %4813 = vmatprep.subr.bf16.mxu0 %v4493
    %4814 = vmatpush2.bf16.msra.mxu0 %v4492
    %4815 = vmatprep.subr.bf16.mxu0 %v4491
    %4816 = vmatpush2.bf16.msra.mxu0 %v4490
    %4817 = vmatprep.mubr.bf16.mxu0 %v4309
    %4818 = vmatmul.mubr.bf16.gmra.mxu0 %v4308
    %v4819 = vpop.f32.mrf.mxu0
    %v4820 = vadd.f32 %v4777, %v4819
    %v4821 = vpop.f32.mrf.mxu0
    %v4822 = vadd.f32 %v4779, %v4821
    %v4823 = vpop.f32.mrf.mxu0
    %v4824 = vadd.f32 %v4781, %v4823
    %v4825 = vpop.f32.mrf.mxu0
    %v4826 = vadd.f32 %v4783, %v4825
    %4827 = vdwg.mxu0
    %4828 = vmatprep.subr.bf16.mxu0 %v4521
    %4829 = vmatpush1.bf16.msra.mxu0 %v4520
    %4830 = vmatprep.subr.bf16.mxu0 %v4519
    %4831 = vmatpush1.bf16.msra.mxu0 %v4518
    %4832 = vmatprep.subr.bf16.mxu0 %v4517
    %4833 = vmatpush1.bf16.msra.mxu0 %v4516
    %4834 = vmatprep.subr.bf16.mxu0 %v4515
    %4835 = vmatpush1.bf16.msra.mxu0 %v4514
    %4836 = vmatprep.subr.bf16.mxu0 %v4513
    %4837 = vmatpush1.bf16.msra.mxu0 %v4512
    %4838 = vmatprep.subr.bf16.mxu0 %v4511
    %4839 = vmatpush1.bf16.msra.mxu0 %v4510
    %4840 = vmatprep.subr.bf16.mxu0 %v4509
    %4841 = vmatpush1.bf16.msra.mxu0 %v4508
    %4842 = vmatprep.subr.bf16.mxu0 %v4507
    %4843 = vmatpush1.bf16.msra.mxu0 %v4506
    %4844 = vmatprep.subr.bf16.mxu0 %v4537
    %4845 = vmatpush2.bf16.msra.mxu0 %v4536
    %4846 = vmatprep.subr.bf16.mxu0 %v4535
    %4847 = vmatpush2.bf16.msra.mxu0 %v4534
    %4848 = vmatprep.subr.bf16.mxu0 %v4533
    %4849 = vmatpush2.bf16.msra.mxu0 %v4532
    %4850 = vmatprep.subr.bf16.mxu0 %v4531
    %4851 = vmatpush2.bf16.msra.mxu0 %v4530
    %4852 = vmatprep.subr.bf16.mxu0 %v4529
    %4853 = vmatpush2.bf16.msra.mxu0 %v4528
    %4854 = vmatprep.subr.bf16.mxu0 %v4527
    %4855 = vmatpush2.bf16.msra.mxu0 %v4526
    %4856 = vmatprep.subr.bf16.mxu0 %v4525
    %4857 = vmatpush2.bf16.msra.mxu0 %v4524
    %4858 = vmatprep.subr.bf16.mxu0 %v4523
    %4859 = vmatpush2.bf16.msra.mxu0 %v4522
    %4860 = vmatprep.mubr.bf16.mxu0 %v4311
    %4861 = vmatmul.mubr.bf16.gmra.mxu0 %v4310
    %v4862 = vpop.f32.mrf.mxu0
    %v4863 = vadd.f32 %v4820, %v4862
    %v4864 = vpop.f32.mrf.mxu0
    %v4865 = vadd.f32 %v4822, %v4864
    %v4866 = vpop.f32.mrf.mxu0
    %v4867 = vadd.f32 %v4824, %v4866
    %v4868 = vpop.f32.mrf.mxu0
    %v4869 = vadd.f32 %v4826, %v4868
    %4870 = vdwg.mxu0
    %4871 = vmatprep.subr.bf16.mxu0 %v4553
    %4872 = vmatpush1.bf16.msra.mxu0 %v4552
    %4873 = vmatprep.subr.bf16.mxu0 %v4551
    %4874 = vmatpush1.bf16.msra.mxu0 %v4550
    %4875 = vmatprep.subr.bf16.mxu0 %v4549
    %4876 = vmatpush1.bf16.msra.mxu0 %v4548
    %4877 = vmatprep.subr.bf16.mxu0 %v4547
    %4878 = vmatpush1.bf16.msra.mxu0 %v4546
    %4879 = vmatprep.subr.bf16.mxu0 %v4545
    %4880 = vmatpush1.bf16.msra.mxu0 %v4544
    %4881 = vmatprep.subr.bf16.mxu0 %v4543
    %4882 = vmatpush1.bf16.msra.mxu0 %v4542
    %4883 = vmatprep.subr.bf16.mxu0 %v4541
    %4884 = vmatpush1.bf16.msra.mxu0 %v4540
    %4885 = vmatprep.subr.bf16.mxu0 %v4539
    %4886 = vmatpush1.bf16.msra.mxu0 %v4538
    %4887 = vmatprep.subr.bf16.mxu0 %v4569
    %4888 = vmatpush2.bf16.msra.mxu0 %v4568
    %4889 = vmatprep.subr.bf16.mxu0 %v4567
    %4890 = vmatpush2.bf16.msra.mxu0 %v4566
    %4891 = vmatprep.subr.bf16.mxu0 %v4565
    %4892 = vmatpush2.bf16.msra.mxu0 %v4564
    %4893 = vmatprep.subr.bf16.mxu0 %v4563
    %4894 = vmatpush2.bf16.msra.mxu0 %v4562
    %4895 = vmatprep.subr.bf16.mxu0 %v4561
    %4896 = vmatpush2.bf16.msra.mxu0 %v4560
    %4897 = vmatprep.subr.bf16.mxu0 %v4559
    %4898 = vmatpush2.bf16.msra.mxu0 %v4558
    %4899 = vmatprep.subr.bf16.mxu0 %v4557
    %4900 = vmatpush2.bf16.msra.mxu0 %v4556
    %4901 = vmatprep.subr.bf16.mxu0 %v4555
    %4902 = vmatpush2.bf16.msra.mxu0 %v4554
    %4903 = vmatprep.mubr.bf16.mxu0 %v4313
    %4904 = vmatmul.mubr.bf16.gmra.mxu0 %v4312
    %v4905 = vpop.f32.mrf.mxu0
    %v4906 = vadd.f32 %v4863, %v4905
    %v4907 = vpop.f32.mrf.mxu0
    %v4908 = vadd.f32 %v4865, %v4907
    %v4909 = vpop.f32.mrf.mxu0
    %v4910 = vadd.f32 %v4867, %v4909
    %v4911 = vpop.f32.mrf.mxu0
    %v4912 = vadd.f32 %v4869, %v4911
    %4913 = vdwg.mxu0
    %v4915 = vlaneseq
    %v4916 = vshrl.u32 %v4915, 7
    %v4917 = vsub.s32 0, %v4916
    %v4918 = vrot.slane %v4297, %v4917
    %v4919 = vlaneseq
    %v4920 = vshrl.u32 %v4919, 7
    %v4921 = vsub.s32 1, %v4920
    %v4922 = vrot.slane %v4297, %v4921
    %v4925 = vmul.f32 %v4906, %v4918
    %v4926 = vmul.f32 %v4908, %v4922
    %v4927 = vmul.f32 %v4910, %v4918
    %v4928 = vmul.f32 %v4912, %v4922
    %v4929 = vld [vmem:[#allocation32] sm:$0x3]
    %v4931 = vlaneseq
    %v4932 = vshrl.u32 %v4931, 7
    %v4933 = vsub.s32 0, %v4932
    %v4934 = vrot.slane %v4929, %v4933
    %v4935 = vlaneseq
    %v4936 = vshrl.u32 %v4935, 7
    %v4937 = vsub.s32 1, %v4936
    %v4938 = vrot.slane %v4929, %v4937
    %v4941 = vadd.f32 %v4925, %v4934
    %v4942 = vadd.f32 %v4926, %v4938
    %v4943 = vadd.f32 %v4927, %v4934
    %v4944 = vadd.f32 %v4928, %v4938
    %v4945 = vadd.f32 %v3171, %v4941
    %v4946 = vadd.f32 %v3172, %v4942
    %v4947 = vadd.f32 %v3173, %v4943
    %v4948 = vadd.f32 %v3174, %v4944
    %v4949 = vld [vmem:[#allocation34] sm:$0x3]
    %v4950 = vld [vmem:[#allocation35] sm:$0x3]
    %v4951 = vadd.f32 %v4945, %v4946
    %4952 = vadd.xlane.f32.xlu0 %v4951
    %v4953 = vpop.xlane.xlu0 %4952
    %v4954 = vadd.f32 %v4947, %v4948
    %4955 = vadd.xlane.f32.xlu0 %v4954
    %v4956 = vpop.xlane.xlu0 %4955
    %v4957 = vmul.f32 %v4953, %v3118
    %v4958 = vmul.f32 %v4956, %v3118
    %v4959 = vsub.f32 %v4945, %v4957
    %v4960 = vsub.f32 %v4946, %v4957
    %v4961 = vsub.f32 %v4947, %v4958
    %v4962 = vsub.f32 %v4948, %v4958
    %v4963 = vmul.f32 %v4959, %v4959
    %v4964 = vmul.f32 %v4960, %v4960
    %v4965 = vmul.f32 %v4961, %v4961
    %v4966 = vmul.f32 %v4962, %v4962
    %v4967 = vadd.f32 %v4963, %v4964
    %4968 = vadd.xlane.f32.xlu0 %v4967
    %v4969 = vpop.xlane.xlu0 %4968
    %v4970 = vadd.f32 %v4965, %v4966
    %4971 = vadd.xlane.f32.xlu0 %v4970
    %v4972 = vpop.xlane.xlu0 %4971
    %v4973 = vmul.f32 %v4969, %v3118
    %v4974 = vmul.f32 %v4972, %v3118
    %v4975 = vadd.f32 %v4973, 1e-05
    %v4976 = vadd.f32 %v4974, 1e-05
    %v4977 = vrsqrt.pop %v4975
    %v4978 = vrsqrt.pop %v4976
    %v4979 = vmul.f32 %v4959, %v4977
    %v4980 = vmul.f32 %v4960, %v4977
    %v4981 = vmul.f32 %v4961, %v4978
    %v4982 = vmul.f32 %v4962, %v4978
    %v4984 = vlaneseq
    %v4985 = vshrl.u32 %v4984, 7
    %v4986 = vsub.s32 0, %v4985
    %v4987 = vrot.slane %v4949, %v4986
    %v4988 = vlaneseq
    %v4989 = vshrl.u32 %v4988, 7
    %v4990 = vsub.s32 1, %v4989
    %v4991 = vrot.slane %v4949, %v4990
    %v4994 = vmul.f32 %v4979, %v4987
    %v4995 = vmul.f32 %v4980, %v4991
    %v4996 = vmul.f32 %v4981, %v4987
    %v4997 = vmul.f32 %v4982, %v4991
    %v4999 = vlaneseq
    %v5000 = vshrl.u32 %v4999, 7
    %v5001 = vsub.s32 0, %v5000
    %v5002 = vrot.slane %v4950, %v5001
    %v5003 = vlaneseq
    %v5004 = vshrl.u32 %v5003, 7
    %v5005 = vsub.s32 1, %v5004
    %v5006 = vrot.slane %v4950, %v5005
    %v5009 = vadd.f32 %v4994, %v5002
    %v5010 = vadd.f32 %v4995, %v5006
    %v5011 = vadd.f32 %v4996, %v5002
    %v5012 = vadd.f32 %v4997, %v5006
    %s5013 = scalar_lea.vmem [#allocation16], 384
    %v5014 = vld [vmem:[%s5013] sm:$0xff]
    %v5015 = vld [vmem:[%s5013 + $0x8] sm:$0xff]
    %v5016 = vld [vmem:[%s5013 + $0x10] sm:$0xff]
    %v5017 = vld [vmem:[%s5013 + $0x18] sm:$0xff]
    %v5018 = vld [vmem:[%s5013 + $0x20] sm:$0xff]
    %v5019 = vld [vmem:[%s5013 + $0x28] sm:$0xff]
    %v5020 = vld [vmem:[%s5013 + $0x30] sm:$0xff]
    %v5021 = vld [vmem:[%s5013 + $0x38] sm:$0xff]
    %v5022 = vld [vmem:[%s5013 + $0x40] sm:$0xff]
    %v5023 = vld [vmem:[%s5013 + $0x48] sm:$0xff]
    %v5024 = vld [vmem:[%s5013 + $0x50] sm:$0xff]
    %v5025 = vld [vmem:[%s5013 + $0x58] sm:$0xff]
    %v5026 = vld [vmem:[%s5013 + $0x60] sm:$0xff]
    %v5027 = vld [vmem:[%s5013 + $0x68] sm:$0xff]
    %v5028 = vld [vmem:[%s5013 + $0x70] sm:$0xff]
    %v5029 = vld [vmem:[%s5013 + $0x78] sm:$0xff]
    %v5030 = vld [vmem:[%s5013 + $0x80] sm:$0xff]
    %v5031 = vld [vmem:[%s5013 + $0x88] sm:$0xff]
    %v5032 = vld [vmem:[%s5013 + $0x90] sm:$0xff]
    %v5033 = vld [vmem:[%s5013 + $0x98] sm:$0xff]
    %v5034 = vld [vmem:[%s5013 + $0xa0] sm:$0xff]
    %v5035 = vld [vmem:[%s5013 + $0xa8] sm:$0xff]
    %v5036 = vld [vmem:[%s5013 + $0xb0] sm:$0xff]
    %v5037 = vld [vmem:[%s5013 + $0xb8] sm:$0xff]
    %v5038 = vld [vmem:[%s5013 + $0xc0] sm:$0xff]
    %v5039 = vld [vmem:[%s5013 + $0xc8] sm:$0xff]
    %v5040 = vld [vmem:[%s5013 + $0xd0] sm:$0xff]
    %v5041 = vld [vmem:[%s5013 + $0xd8] sm:$0xff]
    %v5042 = vld [vmem:[%s5013 + $0xe0] sm:$0xff]
    %v5043 = vld [vmem:[%s5013 + $0xe8] sm:$0xff]
    %v5044 = vld [vmem:[%s5013 + $0xf0] sm:$0xff]
    %v5045 = vld [vmem:[%s5013 + $0xf8] sm:$0xff]
    %v5046 = vld [vmem:[%s5013 + $0x100] sm:$0xff]
    %v5047 = vld [vmem:[%s5013 + $0x108] sm:$0xff]
    %v5048 = vld [vmem:[%s5013 + $0x110] sm:$0xff]
    %v5049 = vld [vmem:[%s5013 + $0x118] sm:$0xff]
    %v5050 = vld [vmem:[%s5013 + $0x120] sm:$0xff]
    %v5051 = vld [vmem:[%s5013 + $0x128] sm:$0xff]
    %v5052 = vld [vmem:[%s5013 + $0x130] sm:$0xff]
    %v5053 = vld [vmem:[%s5013 + $0x138] sm:$0xff]
    %v5054 = vld [vmem:[%s5013 + $0x140] sm:$0xff]
    %v5055 = vld [vmem:[%s5013 + $0x148] sm:$0xff]
    %v5056 = vld [vmem:[%s5013 + $0x150] sm:$0xff]
    %v5057 = vld [vmem:[%s5013 + $0x158] sm:$0xff]
    %v5058 = vld [vmem:[%s5013 + $0x160] sm:$0xff]
    %v5059 = vld [vmem:[%s5013 + $0x168] sm:$0xff]
    %v5060 = vld [vmem:[%s5013 + $0x170] sm:$0xff]
    %v5061 = vld [vmem:[%s5013 + $0x178] sm:$0xff]
    %s5062 = scalar_lea.vmem [#allocation17], 6
    %v5063 = vld [vmem:[%s5062] sm:$0x3f]
    %v5064 = vpack.c.bf16 %v5011, %v5009
    %v5065 = vpack.c.bf16 %v5012, %v5010
    %v5066 = vunpack.c.l.s8.bf16 %v5014
    %v5067 = vunpack.c.l.s8.bf16 %v5015
    %v5068 = vunpack.c.l.s8.bf16 %v5016
    %v5069 = vunpack.c.l.s8.bf16 %v5017
    %v5070 = vunpack.c.l.s8.bf16 %v5018
    %v5071 = vunpack.c.l.s8.bf16 %v5019
    %v5072 = vunpack.c.h.s8.bf16 %v5014
    %v5073 = vunpack.c.h.s8.bf16 %v5015
    %v5074 = vunpack.c.h.s8.bf16 %v5016
    %v5075 = vunpack.c.h.s8.bf16 %v5017
    %v5076 = vunpack.c.h.s8.bf16 %v5018
    %v5077 = vunpack.c.h.s8.bf16 %v5019
    %v5078 = vunpack.c.l.s8.bf16 %v5020
    %v5079 = vunpack.c.l.s8.bf16 %v5021
    %v5080 = vunpack.c.l.s8.bf16 %v5022
    %v5081 = vunpack.c.l.s8.bf16 %v5023
    %v5082 = vunpack.c.l.s8.bf16 %v5024
    %v5083 = vunpack.c.l.s8.bf16 %v5025
    %v5084 = vunpack.c.h.s8.bf16 %v5020
    %v5085 = vunpack.c.h.s8.bf16 %v5021
    %v5086 = vunpack.c.h.s8.bf16 %v5022
    %v5087 = vunpack.c.h.s8.bf16 %v5023
    %v5088 = vunpack.c.h.s8.bf16 %v5024
    %v5089 = vunpack.c.h.s8.bf16 %v5025
    %v5090 = vunpack.c.l.s8.bf16 %v5026
    %v5091 = vunpack.c.l.s8.bf16 %v5027
    %v5092 = vunpack.c.l.s8.bf16 %v5028
    %v5093 = vunpack.c.l.s8.bf16 %v5029
    %v5094 = vunpack.c.l.s8.bf16 %v5030
    %v5095 = vunpack.c.l.s8.bf16 %v5031
    %v5096 = vunpack.c.h.s8.bf16 %v5026
    %v5097 = vunpack.c.h.s8.bf16 %v5027
    %v5098 = vunpack.c.h.s8.bf16 %v5028
    %v5099 = vunpack.c.h.s8.bf16 %v5029
    %v5100 = vunpack.c.h.s8.bf16 %v5030
    %v5101 = vunpack.c.h.s8.bf16 %v5031
    %v5102 = vunpack.c.l.s8.bf16 %v5032
    %v5103 = vunpack.c.l.s8.bf16 %v5033
    %v5104 = vunpack.c.l.s8.bf16 %v5034
    %v5105 = vunpack.c.l.s8.bf16 %v5035
    %v5106 = vunpack.c.l.s8.bf16 %v5036
    %v5107 = vunpack.c.l.s8.bf16 %v5037
    %v5108 = vunpack.c.h.s8.bf16 %v5032
    %v5109 = vunpack.c.h.s8.bf16 %v5033
    %v5110 = vunpack.c.h.s8.bf16 %v5034
    %v5111 = vunpack.c.h.s8.bf16 %v5035
    %v5112 = vunpack.c.h.s8.bf16 %v5036
    %v5113 = vunpack.c.h.s8.bf16 %v5037
    %v5114 = vunpack.c.l.s8.bf16 %v5038
    %v5115 = vunpack.c.l.s8.bf16 %v5039
    %v5116 = vunpack.c.l.s8.bf16 %v5040
    %v5117 = vunpack.c.l.s8.bf16 %v5041
    %v5118 = vunpack.c.l.s8.bf16 %v5042
    %v5119 = vunpack.c.l.s8.bf16 %v5043
    %v5120 = vunpack.c.h.s8.bf16 %v5038
    %v5121 = vunpack.c.h.s8.bf16 %v5039
    %v5122 = vunpack.c.h.s8.bf16 %v5040
    %v5123 = vunpack.c.h.s8.bf16 %v5041
    %v5124 = vunpack.c.h.s8.bf16 %v5042
    %v5125 = vunpack.c.h.s8.bf16 %v5043
    %v5126 = vunpack.c.l.s8.bf16 %v5044
    %v5127 = vunpack.c.l.s8.bf16 %v5045
    %v5128 = vunpack.c.l.s8.bf16 %v5046
    %v5129 = vunpack.c.l.s8.bf16 %v5047
    %v5130 = vunpack.c.l.s8.bf16 %v5048
    %v5131 = vunpack.c.l.s8.bf16 %v5049
    %v5132 = vunpack.c.h.s8.bf16 %v5044
    %v5133 = vunpack.c.h.s8.bf16 %v5045
    %v5134 = vunpack.c.h.s8.bf16 %v5046
    %v5135 = vunpack.c.h.s8.bf16 %v5047
    %v5136 = vunpack.c.h.s8.bf16 %v5048
    %v5137 = vunpack.c.h.s8.bf16 %v5049
    %v5138 = vunpack.c.l.s8.bf16 %v5050
    %v5139 = vunpack.c.l.s8.bf16 %v5051
    %v5140 = vunpack.c.l.s8.bf16 %v5052
    %v5141 = vunpack.c.l.s8.bf16 %v5053
    %v5142 = vunpack.c.l.s8.bf16 %v5054
    %v5143 = vunpack.c.l.s8.bf16 %v5055
    %v5144 = vunpack.c.h.s8.bf16 %v5050
    %v5145 = vunpack.c.h.s8.bf16 %v5051
    %v5146 = vunpack.c.h.s8.bf16 %v5052
    %v5147 = vunpack.c.h.s8.bf16 %v5053
    %v5148 = vunpack.c.h.s8.bf16 %v5054
    %v5149 = vunpack.c.h.s8.bf16 %v5055
    %v5150 = vunpack.c.l.s8.bf16 %v5056
    %v5151 = vunpack.c.l.s8.bf16 %v5057
    %v5152 = vunpack.c.l.s8.bf16 %v5058
    %v5153 = vunpack.c.l.s8.bf16 %v5059
    %v5154 = vunpack.c.l.s8.bf16 %v5060
    %v5155 = vunpack.c.l.s8.bf16 %v5061
    %v5156 = vunpack.c.h.s8.bf16 %v5056
    %v5157 = vunpack.c.h.s8.bf16 %v5057
    %v5158 = vunpack.c.h.s8.bf16 %v5058
    %v5159 = vunpack.c.h.s8.bf16 %v5059
    %v5160 = vunpack.c.h.s8.bf16 %v5060
    %v5161 = vunpack.c.h.s8.bf16 %v5061
    %5162 = vmatprep.subr.bf16.mxu0 %v5109
    %5163 = vmatpush1.bf16.msra.mxu0 %v5108
    %5164 = vmatprep.subr.bf16.mxu0 %v5103
    %5165 = vmatpush1.bf16.msra.mxu0 %v5102
    %5166 = vmatprep.subr.bf16.mxu0 %v5097
    %5167 = vmatpush1.bf16.msra.mxu0 %v5096
    %5168 = vmatprep.subr.bf16.mxu0 %v5091
    %5169 = vmatpush1.bf16.msra.mxu0 %v5090
    %5170 = vmatprep.subr.bf16.mxu0 %v5085
    %5171 = vmatpush1.bf16.msra.mxu0 %v5084
    %5172 = vmatprep.subr.bf16.mxu0 %v5079
    %5173 = vmatpush1.bf16.msra.mxu0 %v5078
    %5174 = vmatprep.subr.bf16.mxu0 %v5073
    %5175 = vmatpush1.bf16.msra.mxu0 %v5072
    %5176 = vmatprep.subr.bf16.mxu0 %v5067
    %5177 = vmatpush1.bf16.msra.mxu0 %v5066
    %5178 = vmatprep.subr.bf16.mxu0 %v5157
    %5179 = vmatpush2.bf16.msra.mxu0 %v5156
    %5180 = vmatprep.subr.bf16.mxu0 %v5151
    %5181 = vmatpush2.bf16.msra.mxu0 %v5150
    %5182 = vmatprep.subr.bf16.mxu0 %v5145
    %5183 = vmatpush2.bf16.msra.mxu0 %v5144
    %5184 = vmatprep.subr.bf16.mxu0 %v5139
    %5185 = vmatpush2.bf16.msra.mxu0 %v5138
    %5186 = vmatprep.subr.bf16.mxu0 %v5133
    %5187 = vmatpush2.bf16.msra.mxu0 %v5132
    %5188 = vmatprep.subr.bf16.mxu0 %v5127
    %5189 = vmatpush2.bf16.msra.mxu0 %v5126
    %5190 = vmatprep.subr.bf16.mxu0 %v5121
    %5191 = vmatpush2.bf16.msra.mxu0 %v5120
    %5192 = vmatprep.subr.bf16.mxu0 %v5115
    %5193 = vmatpush2.bf16.msra.mxu0 %v5114
    %5194 = vmatprep.mubr.bf16.mxu0 %v5065
    %5195 = vmatmul.mubr.bf16.gmra.mxu0 %v5064
    %v5196 = vpop.f32.mrf.mxu0
    %v5197 = vadd.f32 0.0, %v5196
    %v5198 = vpop.f32.mrf.mxu0
    %v5199 = vadd.f32 0.0, %v5198
    %v5200 = vpop.f32.mrf.mxu0
    %v5201 = vadd.f32 0.0, %v5200
    %v5202 = vpop.f32.mrf.mxu0
    %v5203 = vadd.f32 0.0, %v5202
    %5204 = vdwg.mxu0
    %5205 = vmatprep.subr.bf16.mxu0 %v5111
    %5206 = vmatpush1.bf16.msra.mxu0 %v5110
    %5207 = vmatprep.subr.bf16.mxu0 %v5105
    %5208 = vmatpush1.bf16.msra.mxu0 %v5104
    %5209 = vmatprep.subr.bf16.mxu0 %v5099
    %5210 = vmatpush1.bf16.msra.mxu0 %v5098
    %5211 = vmatprep.subr.bf16.mxu0 %v5093
    %5212 = vmatpush1.bf16.msra.mxu0 %v5092
    %5213 = vmatprep.subr.bf16.mxu0 %v5087
    %5214 = vmatpush1.bf16.msra.mxu0 %v5086
    %5215 = vmatprep.subr.bf16.mxu0 %v5081
    %5216 = vmatpush1.bf16.msra.mxu0 %v5080
    %5217 = vmatprep.subr.bf16.mxu0 %v5075
    %5218 = vmatpush1.bf16.msra.mxu0 %v5074
    %5219 = vmatprep.subr.bf16.mxu0 %v5069
    %5220 = vmatpush1.bf16.msra.mxu0 %v5068
    %5221 = vmatprep.subr.bf16.mxu0 %v5159
    %5222 = vmatpush2.bf16.msra.mxu0 %v5158
    %5223 = vmatprep.subr.bf16.mxu0 %v5153
    %5224 = vmatpush2.bf16.msra.mxu0 %v5152
    %5225 = vmatprep.subr.bf16.mxu0 %v5147
    %5226 = vmatpush2.bf16.msra.mxu0 %v5146
    %5227 = vmatprep.subr.bf16.mxu0 %v5141
    %5228 = vmatpush2.bf16.msra.mxu0 %v5140
    %5229 = vmatprep.subr.bf16.mxu0 %v5135
    %5230 = vmatpush2.bf16.msra.mxu0 %v5134
    %5231 = vmatprep.subr.bf16.mxu0 %v5129
    %5232 = vmatpush2.bf16.msra.mxu0 %v5128
    %5233 = vmatprep.subr.bf16.mxu0 %v5123
    %5234 = vmatpush2.bf16.msra.mxu0 %v5122
    %5235 = vmatprep.subr.bf16.mxu0 %v5117
    %5236 = vmatpush2.bf16.msra.mxu0 %v5116
    %5237 = vmatprep.mubr.bf16.mxu0 %v5065
    %5238 = vmatmul.mubr.bf16.gmra.mxu0 %v5064
    %v5239 = vpop.f32.mrf.mxu0
    %v5240 = vadd.f32 0.0, %v5239
    %v5241 = vpop.f32.mrf.mxu0
    %v5242 = vadd.f32 0.0, %v5241
    %v5243 = vpop.f32.mrf.mxu0
    %v5244 = vadd.f32 0.0, %v5243
    %v5245 = vpop.f32.mrf.mxu0
    %v5246 = vadd.f32 0.0, %v5245
    %5247 = vdwg.mxu0
    %5248 = vmatprep.subr.bf16.mxu0 %v5113
    %5249 = vmatpush1.bf16.msra.mxu0 %v5112
    %5250 = vmatprep.subr.bf16.mxu0 %v5107
    %5251 = vmatpush1.bf16.msra.mxu0 %v5106
    %5252 = vmatprep.subr.bf16.mxu0 %v5101
    %5253 = vmatpush1.bf16.msra.mxu0 %v5100
    %5254 = vmatprep.subr.bf16.mxu0 %v5095
    %5255 = vmatpush1.bf16.msra.mxu0 %v5094
    %5256 = vmatprep.subr.bf16.mxu0 %v5089
    %5257 = vmatpush1.bf16.msra.mxu0 %v5088
    %5258 = vmatprep.subr.bf16.mxu0 %v5083
    %5259 = vmatpush1.bf16.msra.mxu0 %v5082
    %5260 = vmatprep.subr.bf16.mxu0 %v5077
    %5261 = vmatpush1.bf16.msra.mxu0 %v5076
    %5262 = vmatprep.subr.bf16.mxu0 %v5071
    %5263 = vmatpush1.bf16.msra.mxu0 %v5070
    %5264 = vmatprep.subr.bf16.mxu0 %v5161
    %5265 = vmatpush2.bf16.msra.mxu0 %v5160
    %5266 = vmatprep.subr.bf16.mxu0 %v5155
    %5267 = vmatpush2.bf16.msra.mxu0 %v5154
    %5268 = vmatprep.subr.bf16.mxu0 %v5149
    %5269 = vmatpush2.bf16.msra.mxu0 %v5148
    %5270 = vmatprep.subr.bf16.mxu0 %v5143
    %5271 = vmatpush2.bf16.msra.mxu0 %v5142
    %5272 = vmatprep.subr.bf16.mxu0 %v5137
    %5273 = vmatpush2.bf16.msra.mxu0 %v5136
    %5274 = vmatprep.subr.bf16.mxu0 %v5131
    %5275 = vmatpush2.bf16.msra.mxu0 %v5130
    %5276 = vmatprep.subr.bf16.mxu0 %v5125
    %5277 = vmatpush2.bf16.msra.mxu0 %v5124
    %5278 = vmatprep.subr.bf16.mxu0 %v5119
    %5279 = vmatpush2.bf16.msra.mxu0 %v5118
    %5280 = vmatprep.mubr.bf16.mxu0 %v5065
    %5281 = vmatmul.mubr.bf16.gmra.mxu0 %v5064
    %v5282 = vpop.f32.mrf.mxu0
    %v5283 = vadd.f32 0.0, %v5282
    %v5284 = vpop.f32.mrf.mxu0
    %v5285 = vadd.f32 0.0, %v5284
    %v5286 = vpop.f32.mrf.mxu0
    %v5287 = vadd.f32 0.0, %v5286
    %v5288 = vpop.f32.mrf.mxu0
    %v5289 = vadd.f32 0.0, %v5288
    %5290 = vdwg.mxu0
    %v5292 = vlaneseq
    %v5293 = vshrl.u32 %v5292, 7
    %v5294 = vsub.s32 0, %v5293
    %v5295 = vrot.slane %v5063, %v5294
    %v5296 = vlaneseq
    %v5297 = vshrl.u32 %v5296, 7
    %v5298 = vsub.s32 1, %v5297
    %v5299 = vrot.slane %v5063, %v5298
    %v5300 = vlaneseq
    %v5301 = vshrl.u32 %v5300, 7
    %v5302 = vsub.s32 2, %v5301
    %v5303 = vrot.slane %v5063, %v5302
    %v5304 = vlaneseq
    %v5305 = vshrl.u32 %v5304, 7
    %v5306 = vsub.s32 3, %v5305
    %v5307 = vrot.slane %v5063, %v5306
    %v5308 = vlaneseq
    %v5309 = vshrl.u32 %v5308, 7
    %v5310 = vsub.s32 4, %v5309
    %v5311 = vrot.slane %v5063, %v5310
    %v5312 = vlaneseq
    %v5313 = vshrl.u32 %v5312, 7
    %v5314 = vsub.s32 5, %v5313
    %v5315 = vrot.slane %v5063, %v5314
    %v5322 = vmul.f32 %v5197, %v5295
    %v5323 = vmul.f32 %v5199, %v5299
    %v5324 = vmul.f32 %v5240, %v5303
    %v5325 = vmul.f32 %v5242, %v5307
    %v5326 = vmul.f32 %v5283, %v5311
    %v5327 = vmul.f32 %v5285, %v5315
    %v5328 = vmul.f32 %v5201, %v5295
    %v5329 = vmul.f32 %v5203, %v5299
    %v5330 = vmul.f32 %v5244, %v5303
    %v5331 = vmul.f32 %v5246, %v5307
    %v5332 = vmul.f32 %v5287, %v5311
    %v5333 = vmul.f32 %v5289, %v5315
    %s5334 = scalar_lea.vmem [#allocation19], 6
    %v5335 = vld [vmem:[%s5334] sm:$0x3f]
    %v5337 = vlaneseq
    %v5338 = vshrl.u32 %v5337, 7
    %v5339 = vsub.s32 0, %v5338
    %v5340 = vrot.slane %v5335, %v5339
    %v5341 = vlaneseq
    %v5342 = vshrl.u32 %v5341, 7
    %v5343 = vsub.s32 1, %v5342
    %v5344 = vrot.slane %v5335, %v5343
    %v5345 = vlaneseq
    %v5346 = vshrl.u32 %v5345, 7
    %v5347 = vsub.s32 2, %v5346
    %v5348 = vrot.slane %v5335, %v5347
    %v5349 = vlaneseq
    %v5350 = vshrl.u32 %v5349, 7
    %v5351 = vsub.s32 3, %v5350
    %v5352 = vrot.slane %v5335, %v5351
    %v5353 = vlaneseq
    %v5354 = vshrl.u32 %v5353, 7
    %v5355 = vsub.s32 4, %v5354
    %v5356 = vrot.slane %v5335, %v5355
    %v5357 = vlaneseq
    %v5358 = vshrl.u32 %v5357, 7
    %v5359 = vsub.s32 5, %v5358
    %v5360 = vrot.slane %v5335, %v5359
    %v5367 = vadd.f32 %v5322, %v5340
    %v5368 = vadd.f32 %v5323, %v5344
    %v5369 = vadd.f32 %v5324, %v5348
    %v5370 = vadd.f32 %v5325, %v5352
    %v5371 = vadd.f32 %v5326, %v5356
    %v5372 = vadd.f32 %v5327, %v5360
    %v5373 = vadd.f32 %v5328, %v5340
    %v5374 = vadd.f32 %v5329, %v5344
    %v5375 = vadd.f32 %v5330, %v5348
    %v5376 = vadd.f32 %v5331, %v5352
    %v5377 = vadd.f32 %v5332, %v5356
    %v5378 = vadd.f32 %v5333, %v5360
    %v5379 = vpack.c.bf16 %v5367, %v5367
    %v5380 = vpack.c.bf16 %v5373, %v5373
    %v5381 = vpack.c.bf16 %v5369, %v5369
    %v5382 = vpack.c.bf16 %v5375, %v5375
    %v5383 = vpack.c.bf16 %v5371, %v5371
    %v5384 = vpack.c.bf16 %v5377, %v5377
    %v5386 = vsel %vm1162, %v5379, 0
    %v5389 = vsel %vm1162, %v5381, 0
    %5391 = vmatprep.subr.bf16.mxu0 0
    %5392 = vmatpush1.bf16.xpose.msra.mxu0 0
    %5393 = vmatprep.subr.bf16.mxu0 0
    %5394 = vmatpush1.bf16.xpose.msra.mxu0 0
    %5395 = vmatprep.subr.bf16.mxu0 0
    %5396 = vmatpush1.bf16.xpose.msra.mxu0 0
    %5397 = vmatprep.subr.bf16.mxu0 0
    %5398 = vmatpush1.bf16.xpose.msra.mxu0 0
    %5399 = vmatprep.subr.bf16.mxu0 0
    %5400 = vmatpush1.bf16.xpose.msra.mxu0 0
    %5401 = vmatprep.subr.bf16.mxu0 0
    %5402 = vmatpush1.bf16.xpose.msra.mxu0 0
    %5403 = vmatprep.subr.bf16.mxu0 0
    %5404 = vmatpush1.bf16.xpose.msra.mxu0 0
    %5405 = vmatprep.subr.bf16.mxu0 0
    %5406 = vmatpush1.bf16.xpose.msra.mxu0 %v5389
    %5407 = vmatprep.subr.bf16.mxu0 0
    %5408 = vmatpush2.bf16.xpose.msra.mxu0 0
    %5409 = vmatprep.subr.bf16.mxu0 0
    %5410 = vmatpush2.bf16.xpose.msra.mxu0 0
    %5411 = vmatprep.subr.bf16.mxu0 0
    %5412 = vmatpush2.bf16.xpose.msra.mxu0 0
    %5413 = vmatprep.subr.bf16.mxu0 0
    %5414 = vmatpush2.bf16.xpose.msra.mxu0 0
    %5415 = vmatprep.subr.bf16.mxu0 0
    %5416 = vmatpush2.bf16.xpose.msra.mxu0 0
    %5417 = vmatprep.subr.bf16.mxu0 0
    %5418 = vmatpush2.bf16.xpose.msra.mxu0 0
    %5419 = vmatprep.subr.bf16.mxu0 0
    %5420 = vmatpush2.bf16.xpose.msra.mxu0 0
    %5421 = vmatprep.subr.bf16.mxu0 0
    %5422 = vmatpush2.bf16.xpose.msra.mxu0 0
    %5423 = vmatprep.mubr.bf16.mxu0 0
    %5424 = vmatmul.mubr.bf16.gmra.mxu0 %v5386
    %v5425 = vpop.f32.mrf.mxu0
    %v5426 = vadd.f32 0.0, %v5425
    %v5427 = vpop.f32.mrf.mxu0
    %v5428 = vpop.f32.mrf.mxu0
    %v5429 = vpop.f32.mrf.mxu0
    %5430 = vdwg.mxu0
    %v5432 = vsel %vm1162, %v5380, 0
    %v5435 = vsel %vm1162, %v5382, 0
    %5437 = vmatprep.subr.bf16.mxu0 0
    %5438 = vmatpush1.bf16.xpose.msra.mxu0 0
    %5439 = vmatprep.subr.bf16.mxu0 0
    %5440 = vmatpush1.bf16.xpose.msra.mxu0 0
    %5441 = vmatprep.subr.bf16.mxu0 0
    %5442 = vmatpush1.bf16.xpose.msra.mxu0 0
    %5443 = vmatprep.subr.bf16.mxu0 0
    %5444 = vmatpush1.bf16.xpose.msra.mxu0 0
    %5445 = vmatprep.subr.bf16.mxu0 0
    %5446 = vmatpush1.bf16.xpose.msra.mxu0 0
    %5447 = vmatprep.subr.bf16.mxu0 0
    %5448 = vmatpush1.bf16.xpose.msra.mxu0 0
    %5449 = vmatprep.subr.bf16.mxu0 0
    %5450 = vmatpush1.bf16.xpose.msra.mxu0 0
    %5451 = vmatprep.subr.bf16.mxu0 0
    %5452 = vmatpush1.bf16.xpose.msra.mxu0 %v5435
    %5453 = vmatprep.subr.bf16.mxu0 0
    %5454 = vmatpush2.bf16.xpose.msra.mxu0 0
    %5455 = vmatprep.subr.bf16.mxu0 0
    %5456 = vmatpush2.bf16.xpose.msra.mxu0 0
    %5457 = vmatprep.subr.bf16.mxu0 0
    %5458 = vmatpush2.bf16.xpose.msra.mxu0 0
    %5459 = vmatprep.subr.bf16.mxu0 0
    %5460 = vmatpush2.bf16.xpose.msra.mxu0 0
    %5461 = vmatprep.subr.bf16.mxu0 0
    %5462 = vmatpush2.bf16.xpose.msra.mxu0 0
    %5463 = vmatprep.subr.bf16.mxu0 0
    %5464 = vmatpush2.bf16.xpose.msra.mxu0 0
    %5465 = vmatprep.subr.bf16.mxu0 0
    %5466 = vmatpush2.bf16.xpose.msra.mxu0 0
    %5467 = vmatprep.subr.bf16.mxu0 0
    %5468 = vmatpush2.bf16.xpose.msra.mxu0 0
    %5469 = vmatprep.mubr.bf16.mxu0 0
    %5470 = vmatmul.mubr.bf16.gmra.mxu0 %v5432
    %v5471 = vpop.f32.mrf.mxu0
    %v5472 = vadd.f32 0.0, %v5471
    %v5473 = vpop.f32.mrf.mxu0
    %v5474 = vpop.f32.mrf.mxu0
    %v5475 = vpop.f32.mrf.mxu0
    %5476 = vdwg.mxu0
    %v5477 = vsel %vm1255, %v5426, -inf
    %5478 = vmax.xlane.f32.xlu0 %v5477
    %v5479 = vpop.xlane.xlu0 %5478
    %v5480 = vsel %vm1255, %v5472, -inf
    %5481 = vmax.xlane.f32.xlu0 %v5480
    %v5482 = vpop.xlane.xlu0 %5481
    %v5483 = vsub.f32 %v5426, %v5479
    %v5484 = vsub.f32 %v5472, %v5482
    %v5485 = vmul.f32 %v5483, 1.442695
    %v5486 = vpow.pop %v5485
    %v5487 = vmul.f32 %v5484, 1.442695
    %v5488 = vpow.pop %v5487
    %v5489 = vsel %vm1255, %v5486, 0.0
    %5490 = vadd.xlane.f32.xlu0 %v5489
    %v5491 = vpop.xlane.xlu0 %5490
    %v5492 = vsel %vm1255, %v5488, 0.0
    %5493 = vadd.xlane.f32.xlu0 %v5492
    %v5494 = vpop.xlane.xlu0 %5493
    %v5495 = vrcp.pop %v5491
    %v5496 = vmul.f32 %v5486, %v5495
    %v5497 = vrcp.pop %v5494
    %v5498 = vmul.f32 %v5488, %v5497
    %v5499 = vpack.c.bf16 %v5496, %v5496
    %v5500 = vpack.c.bf16 %v5498, %v5498
    %v5502 = vsel %vm1255, %v5499, 0
    %v5505 = vsel %vm1283, %v5383, 0
    %5507 = vmatprep.subr.bf16.mxu0 0
    %5508 = vmatpush1.bf16.msra.mxu0 0
    %5509 = vmatprep.subr.bf16.mxu0 0
    %5510 = vmatpush1.bf16.msra.mxu0 0
    %5511 = vmatprep.subr.bf16.mxu0 0
    %5512 = vmatpush1.bf16.msra.mxu0 0
    %5513 = vmatprep.subr.bf16.mxu0 0
    %5514 = vmatpush1.bf16.msra.mxu0 0
    %5515 = vmatprep.subr.bf16.mxu0 0
    %5516 = vmatpush1.bf16.msra.mxu0 0
    %5517 = vmatprep.subr.bf16.mxu0 0
    %5518 = vmatpush1.bf16.msra.mxu0 0
    %5519 = vmatprep.subr.bf16.mxu0 0
    %5520 = vmatpush1.bf16.msra.mxu0 0
    %5521 = vmatprep.subr.bf16.mxu0 0
    %5522 = vmatpush1.bf16.msra.mxu0 %v5505
    %5523 = vmatprep.subr.bf16.mxu0 0
    %5524 = vmatpush2.bf16.msra.mxu0 0
    %5525 = vmatprep.subr.bf16.mxu0 0
    %5526 = vmatpush2.bf16.msra.mxu0 0
    %5527 = vmatprep.subr.bf16.mxu0 0
    %5528 = vmatpush2.bf16.msra.mxu0 0
    %5529 = vmatprep.subr.bf16.mxu0 0
    %5530 = vmatpush2.bf16.msra.mxu0 0
    %5531 = vmatprep.subr.bf16.mxu0 0
    %5532 = vmatpush2.bf16.msra.mxu0 0
    %5533 = vmatprep.subr.bf16.mxu0 0
    %5534 = vmatpush2.bf16.msra.mxu0 0
    %5535 = vmatprep.subr.bf16.mxu0 0
    %5536 = vmatpush2.bf16.msra.mxu0 0
    %5537 = vmatprep.subr.bf16.mxu0 0
    %5538 = vmatpush2.bf16.msra.mxu0 0
    %5539 = vmatprep.mubr.bf16.mxu0 0
    %5540 = vmatmul.mubr.bf16.gmra.mxu0 %v5502
    %v5541 = vpop.f32.mrf.mxu0
    %v5542 = vadd.f32 0.0, %v5541
    %v5543 = vpop.f32.mrf.mxu0
    %v5544 = vpop.f32.mrf.mxu0
    %v5545 = vpop.f32.mrf.mxu0
    %5546 = vdwg.mxu0
    %v5548 = vsel %vm1255, %v5500, 0
    %v5551 = vsel %vm1283, %v5384, 0
    %5553 = vmatprep.subr.bf16.mxu0 0
    %5554 = vmatpush1.bf16.msra.mxu0 0
    %5555 = vmatprep.subr.bf16.mxu0 0
    %5556 = vmatpush1.bf16.msra.mxu0 0
    %5557 = vmatprep.subr.bf16.mxu0 0
    %5558 = vmatpush1.bf16.msra.mxu0 0
    %5559 = vmatprep.subr.bf16.mxu0 0
    %5560 = vmatpush1.bf16.msra.mxu0 0
    %5561 = vmatprep.subr.bf16.mxu0 0
    %5562 = vmatpush1.bf16.msra.mxu0 0
    %5563 = vmatprep.subr.bf16.mxu0 0
    %5564 = vmatpush1.bf16.msra.mxu0 0
    %5565 = vmatprep.subr.bf16.mxu0 0
    %5566 = vmatpush1.bf16.msra.mxu0 0
    %5567 = vmatprep.subr.bf16.mxu0 0
    %5568 = vmatpush1.bf16.msra.mxu0 %v5551
    %5569 = vmatprep.subr.bf16.mxu0 0
    %5570 = vmatpush2.bf16.msra.mxu0 0
    %5571 = vmatprep.subr.bf16.mxu0 0
    %5572 = vmatpush2.bf16.msra.mxu0 0
    %5573 = vmatprep.subr.bf16.mxu0 0
    %5574 = vmatpush2.bf16.msra.mxu0 0
    %5575 = vmatprep.subr.bf16.mxu0 0
    %5576 = vmatpush2.bf16.msra.mxu0 0
    %5577 = vmatprep.subr.bf16.mxu0 0
    %5578 = vmatpush2.bf16.msra.mxu0 0
    %5579 = vmatprep.subr.bf16.mxu0 0
    %5580 = vmatpush2.bf16.msra.mxu0 0
    %5581 = vmatprep.subr.bf16.mxu0 0
    %5582 = vmatpush2.bf16.msra.mxu0 0
    %5583 = vmatprep.subr.bf16.mxu0 0
    %5584 = vmatpush2.bf16.msra.mxu0 0
    %5585 = vmatprep.mubr.bf16.mxu0 0
    %5586 = vmatmul.mubr.bf16.gmra.mxu0 %v5548
    %v5587 = vpop.f32.mrf.mxu0
    %v5588 = vadd.f32 0.0, %v5587
    %v5589 = vpop.f32.mrf.mxu0
    %v5590 = vpop.f32.mrf.mxu0
    %v5591 = vpop.f32.mrf.mxu0
    %5592 = vdwg.mxu0
    %5594 = vrot.lane.b32.xlu0 %v5379, 96
    %v5595 = vpop.permute.xlu0 %5594
    %5597 = vrot.lane.b32.xlu0 %v5381, 96
    %v5598 = vpop.permute.xlu0 %5597
    %v5600 = vsel %vm1162, %v5595, 0
    %v5603 = vsel %vm1162, %v5598, 0
    %5605 = vmatprep.subr.bf16.mxu0 0
    %5606 = vmatpush1.bf16.xpose.msra.mxu0 0
    %5607 = vmatprep.subr.bf16.mxu0 0
    %5608 = vmatpush1.bf16.xpose.msra.mxu0 0
    %5609 = vmatprep.subr.bf16.mxu0 0
    %5610 = vmatpush1.bf16.xpose.msra.mxu0 0
    %5611 = vmatprep.subr.bf16.mxu0 0
    %5612 = vmatpush1.bf16.xpose.msra.mxu0 0
    %5613 = vmatprep.subr.bf16.mxu0 0
    %5614 = vmatpush1.bf16.xpose.msra.mxu0 0
    %5615 = vmatprep.subr.bf16.mxu0 0
    %5616 = vmatpush1.bf16.xpose.msra.mxu0 0
    %5617 = vmatprep.subr.bf16.mxu0 0
    %5618 = vmatpush1.bf16.xpose.msra.mxu0 0
    %5619 = vmatprep.subr.bf16.mxu0 0
    %5620 = vmatpush1.bf16.xpose.msra.mxu0 %v5603
    %5621 = vmatprep.subr.bf16.mxu0 0
    %5622 = vmatpush2.bf16.xpose.msra.mxu0 0
    %5623 = vmatprep.subr.bf16.mxu0 0
    %5624 = vmatpush2.bf16.xpose.msra.mxu0 0
    %5625 = vmatprep.subr.bf16.mxu0 0
    %5626 = vmatpush2.bf16.xpose.msra.mxu0 0
    %5627 = vmatprep.subr.bf16.mxu0 0
    %5628 = vmatpush2.bf16.xpose.msra.mxu0 0
    %5629 = vmatprep.subr.bf16.mxu0 0
    %5630 = vmatpush2.bf16.xpose.msra.mxu0 0
    %5631 = vmatprep.subr.bf16.mxu0 0
    %5632 = vmatpush2.bf16.xpose.msra.mxu0 0
    %5633 = vmatprep.subr.bf16.mxu0 0
    %5634 = vmatpush2.bf16.xpose.msra.mxu0 0
    %5635 = vmatprep.subr.bf16.mxu0 0
    %5636 = vmatpush2.bf16.xpose.msra.mxu0 0
    %5637 = vmatprep.mubr.bf16.mxu0 0
    %5638 = vmatmul.mubr.bf16.gmra.mxu0 %v5600
    %v5639 = vpop.f32.mrf.mxu0
    %v5640 = vadd.f32 0.0, %v5639
    %v5641 = vpop.f32.mrf.mxu0
    %v5642 = vpop.f32.mrf.mxu0
    %v5643 = vpop.f32.mrf.mxu0
    %5644 = vdwg.mxu0
    %5646 = vrot.lane.b32.xlu0 %v5380, 96
    %v5647 = vpop.permute.xlu0 %5646
    %5649 = vrot.lane.b32.xlu0 %v5382, 96
    %v5650 = vpop.permute.xlu0 %5649
    %v5652 = vsel %vm1162, %v5647, 0
    %v5655 = vsel %vm1162, %v5650, 0
    %5657 = vmatprep.subr.bf16.mxu0 0
    %5658 = vmatpush1.bf16.xpose.msra.mxu0 0
    %5659 = vmatprep.subr.bf16.mxu0 0
    %5660 = vmatpush1.bf16.xpose.msra.mxu0 0
    %5661 = vmatprep.subr.bf16.mxu0 0
    %5662 = vmatpush1.bf16.xpose.msra.mxu0 0
    %5663 = vmatprep.subr.bf16.mxu0 0
    %5664 = vmatpush1.bf16.xpose.msra.mxu0 0
    %5665 = vmatprep.subr.bf16.mxu0 0
    %5666 = vmatpush1.bf16.xpose.msra.mxu0 0
    %5667 = vmatprep.subr.bf16.mxu0 0
    %5668 = vmatpush1.bf16.xpose.msra.mxu0 0
    %5669 = vmatprep.subr.bf16.mxu0 0
    %5670 = vmatpush1.bf16.xpose.msra.mxu0 0
    %5671 = vmatprep.subr.bf16.mxu0 0
    %5672 = vmatpush1.bf16.xpose.msra.mxu0 %v5655
    %5673 = vmatprep.subr.bf16.mxu0 0
    %5674 = vmatpush2.bf16.xpose.msra.mxu0 0
    %5675 = vmatprep.subr.bf16.mxu0 0
    %5676 = vmatpush2.bf16.xpose.msra.mxu0 0
    %5677 = vmatprep.subr.bf16.mxu0 0
    %5678 = vmatpush2.bf16.xpose.msra.mxu0 0
    %5679 = vmatprep.subr.bf16.mxu0 0
    %5680 = vmatpush2.bf16.xpose.msra.mxu0 0
    %5681 = vmatprep.subr.bf16.mxu0 0
    %5682 = vmatpush2.bf16.xpose.msra.mxu0 0
    %5683 = vmatprep.subr.bf16.mxu0 0
    %5684 = vmatpush2.bf16.xpose.msra.mxu0 0
    %5685 = vmatprep.subr.bf16.mxu0 0
    %5686 = vmatpush2.bf16.xpose.msra.mxu0 0
    %5687 = vmatprep.subr.bf16.mxu0 0
    %5688 = vmatpush2.bf16.xpose.msra.mxu0 0
    %5689 = vmatprep.mubr.bf16.mxu0 0
    %5690 = vmatmul.mubr.bf16.gmra.mxu0 %v5652
    %v5691 = vpop.f32.mrf.mxu0
    %v5692 = vadd.f32 0.0, %v5691
    %v5693 = vpop.f32.mrf.mxu0
    %v5694 = vpop.f32.mrf.mxu0
    %v5695 = vpop.f32.mrf.mxu0
    %5696 = vdwg.mxu0
    %v5697 = vsel %vm1255, %v5640, -inf
    %5698 = vmax.xlane.f32.xlu0 %v5697
    %v5699 = vpop.xlane.xlu0 %5698
    %v5700 = vsel %vm1255, %v5692, -inf
    %5701 = vmax.xlane.f32.xlu0 %v5700
    %v5702 = vpop.xlane.xlu0 %5701
    %v5703 = vsub.f32 %v5640, %v5699
    %v5704 = vsub.f32 %v5692, %v5702
    %v5705 = vmul.f32 %v5703, 1.442695
    %v5706 = vpow.pop %v5705
    %v5707 = vmul.f32 %v5704, 1.442695
    %v5708 = vpow.pop %v5707
    %v5709 = vsel %vm1255, %v5706, 0.0
    %5710 = vadd.xlane.f32.xlu0 %v5709
    %v5711 = vpop.xlane.xlu0 %5710
    %v5712 = vsel %vm1255, %v5708, 0.0
    %5713 = vadd.xlane.f32.xlu0 %v5712
    %v5714 = vpop.xlane.xlu0 %5713
    %v5715 = vrcp.pop %v5711
    %v5716 = vmul.f32 %v5706, %v5715
    %v5717 = vrcp.pop %v5714
    %v5718 = vmul.f32 %v5708, %v5717
    %v5719 = vpack.c.bf16 %v5716, %v5716
    %v5720 = vpack.c.bf16 %v5718, %v5718
    %5722 = vrot.lane.b32.xlu0 %v5383, 96
    %v5723 = vpop.permute.xlu0 %5722
    %v5725 = vsel %vm1255, %v5719, 0
    %v5728 = vsel %vm1283, %v5723, 0
    %5730 = vmatprep.subr.bf16.mxu0 0
    %5731 = vmatpush1.bf16.msra.mxu0 0
    %5732 = vmatprep.subr.bf16.mxu0 0
    %5733 = vmatpush1.bf16.msra.mxu0 0
    %5734 = vmatprep.subr.bf16.mxu0 0
    %5735 = vmatpush1.bf16.msra.mxu0 0
    %5736 = vmatprep.subr.bf16.mxu0 0
    %5737 = vmatpush1.bf16.msra.mxu0 0
    %5738 = vmatprep.subr.bf16.mxu0 0
    %5739 = vmatpush1.bf16.msra.mxu0 0
    %5740 = vmatprep.subr.bf16.mxu0 0
    %5741 = vmatpush1.bf16.msra.mxu0 0
    %5742 = vmatprep.subr.bf16.mxu0 0
    %5743 = vmatpush1.bf16.msra.mxu0 0
    %5744 = vmatprep.subr.bf16.mxu0 0
    %5745 = vmatpush1.bf16.msra.mxu0 %v5728
    %5746 = vmatprep.subr.bf16.mxu0 0
    %5747 = vmatpush2.bf16.msra.mxu0 0
    %5748 = vmatprep.subr.bf16.mxu0 0
    %5749 = vmatpush2.bf16.msra.mxu0 0
    %5750 = vmatprep.subr.bf16.mxu0 0
    %5751 = vmatpush2.bf16.msra.mxu0 0
    %5752 = vmatprep.subr.bf16.mxu0 0
    %5753 = vmatpush2.bf16.msra.mxu0 0
    %5754 = vmatprep.subr.bf16.mxu0 0
    %5755 = vmatpush2.bf16.msra.mxu0 0
    %5756 = vmatprep.subr.bf16.mxu0 0
    %5757 = vmatpush2.bf16.msra.mxu0 0
    %5758 = vmatprep.subr.bf16.mxu0 0
    %5759 = vmatpush2.bf16.msra.mxu0 0
    %5760 = vmatprep.subr.bf16.mxu0 0
    %5761 = vmatpush2.bf16.msra.mxu0 0
    %5762 = vmatprep.mubr.bf16.mxu0 0
    %5763 = vmatmul.mubr.bf16.gmra.mxu0 %v5725
    %v5764 = vpop.f32.mrf.mxu0
    %v5765 = vadd.f32 0.0, %v5764
    %v5766 = vpop.f32.mrf.mxu0
    %v5767 = vpop.f32.mrf.mxu0
    %v5768 = vpop.f32.mrf.mxu0
    %5769 = vdwg.mxu0
    %5771 = vrot.lane.b32.xlu0 %v5384, 96
    %v5772 = vpop.permute.xlu0 %5771
    %v5774 = vsel %vm1255, %v5720, 0
    %v5777 = vsel %vm1283, %v5772, 0
    %5779 = vmatprep.subr.bf16.mxu0 0
    %5780 = vmatpush1.bf16.msra.mxu0 0
    %5781 = vmatprep.subr.bf16.mxu0 0
    %5782 = vmatpush1.bf16.msra.mxu0 0
    %5783 = vmatprep.subr.bf16.mxu0 0
    %5784 = vmatpush1.bf16.msra.mxu0 0
    %5785 = vmatprep.subr.bf16.mxu0 0
    %5786 = vmatpush1.bf16.msra.mxu0 0
    %5787 = vmatprep.subr.bf16.mxu0 0
    %5788 = vmatpush1.bf16.msra.mxu0 0
    %5789 = vmatprep.subr.bf16.mxu0 0
    %5790 = vmatpush1.bf16.msra.mxu0 0
    %5791 = vmatprep.subr.bf16.mxu0 0
    %5792 = vmatpush1.bf16.msra.mxu0 0
    %5793 = vmatprep.subr.bf16.mxu0 0
    %5794 = vmatpush1.bf16.msra.mxu0 %v5777
    %5795 = vmatprep.subr.bf16.mxu0 0
    %5796 = vmatpush2.bf16.msra.mxu0 0
    %5797 = vmatprep.subr.bf16.mxu0 0
    %5798 = vmatpush2.bf16.msra.mxu0 0
    %5799 = vmatprep.subr.bf16.mxu0 0
    %5800 = vmatpush2.bf16.msra.mxu0 0
    %5801 = vmatprep.subr.bf16.mxu0 0
    %5802 = vmatpush2.bf16.msra.mxu0 0
    %5803 = vmatprep.subr.bf16.mxu0 0
    %5804 = vmatpush2.bf16.msra.mxu0 0
    %5805 = vmatprep.subr.bf16.mxu0 0
    %5806 = vmatpush2.bf16.msra.mxu0 0
    %5807 = vmatprep.subr.bf16.mxu0 0
    %5808 = vmatpush2.bf16.msra.mxu0 0
    %5809 = vmatprep.subr.bf16.mxu0 0
    %5810 = vmatpush2.bf16.msra.mxu0 0
    %5811 = vmatprep.mubr.bf16.mxu0 0
    %5812 = vmatmul.mubr.bf16.gmra.mxu0 %v5774
    %v5813 = vpop.f32.mrf.mxu0
    %v5814 = vadd.f32 0.0, %v5813
    %v5815 = vpop.f32.mrf.mxu0
    %v5816 = vpop.f32.mrf.mxu0
    %v5817 = vpop.f32.mrf.mxu0
    %5818 = vdwg.mxu0
    %5819 = vrot.lane.b32.xlu0 %v5379, 64
    %v5820 = vpop.permute.xlu0 %5819
    %5821 = vrot.lane.b32.xlu0 %v5381, 64
    %v5822 = vpop.permute.xlu0 %5821
    %v5824 = vsel %vm1162, %v5820, 0
    %v5827 = vsel %vm1162, %v5822, 0
    %5829 = vmatprep.subr.bf16.mxu0 0
    %5830 = vmatpush1.bf16.xpose.msra.mxu0 0
    %5831 = vmatprep.subr.bf16.mxu0 0
    %5832 = vmatpush1.bf16.xpose.msra.mxu0 0
    %5833 = vmatprep.subr.bf16.mxu0 0
    %5834 = vmatpush1.bf16.xpose.msra.mxu0 0
    %5835 = vmatprep.subr.bf16.mxu0 0
    %5836 = vmatpush1.bf16.xpose.msra.mxu0 0
    %5837 = vmatprep.subr.bf16.mxu0 0
    %5838 = vmatpush1.bf16.xpose.msra.mxu0 0
    %5839 = vmatprep.subr.bf16.mxu0 0
    %5840 = vmatpush1.bf16.xpose.msra.mxu0 0
    %5841 = vmatprep.subr.bf16.mxu0 0
    %5842 = vmatpush1.bf16.xpose.msra.mxu0 0
    %5843 = vmatprep.subr.bf16.mxu0 0
    %5844 = vmatpush1.bf16.xpose.msra.mxu0 %v5827
    %5845 = vmatprep.subr.bf16.mxu0 0
    %5846 = vmatpush2.bf16.xpose.msra.mxu0 0
    %5847 = vmatprep.subr.bf16.mxu0 0
    %5848 = vmatpush2.bf16.xpose.msra.mxu0 0
    %5849 = vmatprep.subr.bf16.mxu0 0
    %5850 = vmatpush2.bf16.xpose.msra.mxu0 0
    %5851 = vmatprep.subr.bf16.mxu0 0
    %5852 = vmatpush2.bf16.xpose.msra.mxu0 0
    %5853 = vmatprep.subr.bf16.mxu0 0
    %5854 = vmatpush2.bf16.xpose.msra.mxu0 0
    %5855 = vmatprep.subr.bf16.mxu0 0
    %5856 = vmatpush2.bf16.xpose.msra.mxu0 0
    %5857 = vmatprep.subr.bf16.mxu0 0
    %5858 = vmatpush2.bf16.xpose.msra.mxu0 0
    %5859 = vmatprep.subr.bf16.mxu0 0
    %5860 = vmatpush2.bf16.xpose.msra.mxu0 0
    %5861 = vmatprep.mubr.bf16.mxu0 0
    %5862 = vmatmul.mubr.bf16.gmra.mxu0 %v5824
    %v5863 = vpop.f32.mrf.mxu0
    %v5864 = vadd.f32 0.0, %v5863
    %v5865 = vpop.f32.mrf.mxu0
    %v5866 = vpop.f32.mrf.mxu0
    %v5867 = vpop.f32.mrf.mxu0
    %5868 = vdwg.mxu0
    %5869 = vrot.lane.b32.xlu0 %v5380, 64
    %v5870 = vpop.permute.xlu0 %5869
    %5871 = vrot.lane.b32.xlu0 %v5382, 64
    %v5872 = vpop.permute.xlu0 %5871
    %v5874 = vsel %vm1162, %v5870, 0
    %v5877 = vsel %vm1162, %v5872, 0
    %5879 = vmatprep.subr.bf16.mxu0 0
    %5880 = vmatpush1.bf16.xpose.msra.mxu0 0
    %5881 = vmatprep.subr.bf16.mxu0 0
    %5882 = vmatpush1.bf16.xpose.msra.mxu0 0
    %5883 = vmatprep.subr.bf16.mxu0 0
    %5884 = vmatpush1.bf16.xpose.msra.mxu0 0
    %5885 = vmatprep.subr.bf16.mxu0 0
    %5886 = vmatpush1.bf16.xpose.msra.mxu0 0
    %5887 = vmatprep.subr.bf16.mxu0 0
    %5888 = vmatpush1.bf16.xpose.msra.mxu0 0
    %5889 = vmatprep.subr.bf16.mxu0 0
    %5890 = vmatpush1.bf16.xpose.msra.mxu0 0
    %5891 = vmatprep.subr.bf16.mxu0 0
    %5892 = vmatpush1.bf16.xpose.msra.mxu0 0
    %5893 = vmatprep.subr.bf16.mxu0 0
    %5894 = vmatpush1.bf16.xpose.msra.mxu0 %v5877
    %5895 = vmatprep.subr.bf16.mxu0 0
    %5896 = vmatpush2.bf16.xpose.msra.mxu0 0
    %5897 = vmatprep.subr.bf16.mxu0 0
    %5898 = vmatpush2.bf16.xpose.msra.mxu0 0
    %5899 = vmatprep.subr.bf16.mxu0 0
    %5900 = vmatpush2.bf16.xpose.msra.mxu0 0
    %5901 = vmatprep.subr.bf16.mxu0 0
    %5902 = vmatpush2.bf16.xpose.msra.mxu0 0
    %5903 = vmatprep.subr.bf16.mxu0 0
    %5904 = vmatpush2.bf16.xpose.msra.mxu0 0
    %5905 = vmatprep.subr.bf16.mxu0 0
    %5906 = vmatpush2.bf16.xpose.msra.mxu0 0
    %5907 = vmatprep.subr.bf16.mxu0 0
    %5908 = vmatpush2.bf16.xpose.msra.mxu0 0
    %5909 = vmatprep.subr.bf16.mxu0 0
    %5910 = vmatpush2.bf16.xpose.msra.mxu0 0
    %5911 = vmatprep.mubr.bf16.mxu0 0
    %5912 = vmatmul.mubr.bf16.gmra.mxu0 %v5874
    %v5913 = vpop.f32.mrf.mxu0
    %v5914 = vadd.f32 0.0, %v5913
    %v5915 = vpop.f32.mrf.mxu0
    %v5916 = vpop.f32.mrf.mxu0
    %v5917 = vpop.f32.mrf.mxu0
    %5918 = vdwg.mxu0
    %v5919 = vsel %vm1255, %v5864, -inf
    %5920 = vmax.xlane.f32.xlu0 %v5919
    %v5921 = vpop.xlane.xlu0 %5920
    %v5922 = vsel %vm1255, %v5914, -inf
    %5923 = vmax.xlane.f32.xlu0 %v5922
    %v5924 = vpop.xlane.xlu0 %5923
    %v5925 = vsub.f32 %v5864, %v5921
    %v5926 = vsub.f32 %v5914, %v5924
    %v5927 = vmul.f32 %v5925, 1.442695
    %v5928 = vpow.pop %v5927
    %v5929 = vmul.f32 %v5926, 1.442695
    %v5930 = vpow.pop %v5929
    %v5931 = vsel %vm1255, %v5928, 0.0
    %5932 = vadd.xlane.f32.xlu0 %v5931
    %v5933 = vpop.xlane.xlu0 %5932
    %v5934 = vsel %vm1255, %v5930, 0.0
    %5935 = vadd.xlane.f32.xlu0 %v5934
    %v5936 = vpop.xlane.xlu0 %5935
    %v5937 = vrcp.pop %v5933
    %v5938 = vmul.f32 %v5928, %v5937
    %v5939 = vrcp.pop %v5936
    %v5940 = vmul.f32 %v5930, %v5939
    %v5941 = vpack.c.bf16 %v5938, %v5938
    %v5942 = vpack.c.bf16 %v5940, %v5940
    %5943 = vrot.lane.b32.xlu0 %v5383, 64
    %v5944 = vpop.permute.xlu0 %5943
    %v5946 = vsel %vm1255, %v5941, 0
    %v5949 = vsel %vm1283, %v5944, 0
    %5951 = vmatprep.subr.bf16.mxu0 0
    %5952 = vmatpush1.bf16.msra.mxu0 0
    %5953 = vmatprep.subr.bf16.mxu0 0
    %5954 = vmatpush1.bf16.msra.mxu0 0
    %5955 = vmatprep.subr.bf16.mxu0 0
    %5956 = vmatpush1.bf16.msra.mxu0 0
    %5957 = vmatprep.subr.bf16.mxu0 0
    %5958 = vmatpush1.bf16.msra.mxu0 0
    %5959 = vmatprep.subr.bf16.mxu0 0
    %5960 = vmatpush1.bf16.msra.mxu0 0
    %5961 = vmatprep.subr.bf16.mxu0 0
    %5962 = vmatpush1.bf16.msra.mxu0 0
    %5963 = vmatprep.subr.bf16.mxu0 0
    %5964 = vmatpush1.bf16.msra.mxu0 0
    %5965 = vmatprep.subr.bf16.mxu0 0
    %5966 = vmatpush1.bf16.msra.mxu0 %v5949
    %5967 = vmatprep.subr.bf16.mxu0 0
    %5968 = vmatpush2.bf16.msra.mxu0 0
    %5969 = vmatprep.subr.bf16.mxu0 0
    %5970 = vmatpush2.bf16.msra.mxu0 0
    %5971 = vmatprep.subr.bf16.mxu0 0
    %5972 = vmatpush2.bf16.msra.mxu0 0
    %5973 = vmatprep.subr.bf16.mxu0 0
    %5974 = vmatpush2.bf16.msra.mxu0 0
    %5975 = vmatprep.subr.bf16.mxu0 0
    %5976 = vmatpush2.bf16.msra.mxu0 0
    %5977 = vmatprep.subr.bf16.mxu0 0
    %5978 = vmatpush2.bf16.msra.mxu0 0
    %5979 = vmatprep.subr.bf16.mxu0 0
    %5980 = vmatpush2.bf16.msra.mxu0 0
    %5981 = vmatprep.subr.bf16.mxu0 0
    %5982 = vmatpush2.bf16.msra.mxu0 0
    %5983 = vmatprep.mubr.bf16.mxu0 0
    %5984 = vmatmul.mubr.bf16.gmra.mxu0 %v5946
    %v5985 = vpop.f32.mrf.mxu0
    %v5986 = vadd.f32 0.0, %v5985
    %v5987 = vpop.f32.mrf.mxu0
    %v5988 = vpop.f32.mrf.mxu0
    %v5989 = vpop.f32.mrf.mxu0
    %5990 = vdwg.mxu0
    %5991 = vrot.lane.b32.xlu0 %v5384, 64
    %v5992 = vpop.permute.xlu0 %5991
    %v5994 = vsel %vm1255, %v5942, 0
    %v5997 = vsel %vm1283, %v5992, 0
    %5999 = vmatprep.subr.bf16.mxu0 0
    %6000 = vmatpush1.bf16.msra.mxu0 0
    %6001 = vmatprep.subr.bf16.mxu0 0
    %6002 = vmatpush1.bf16.msra.mxu0 0
    %6003 = vmatprep.subr.bf16.mxu0 0
    %6004 = vmatpush1.bf16.msra.mxu0 0
    %6005 = vmatprep.subr.bf16.mxu0 0
    %6006 = vmatpush1.bf16.msra.mxu0 0
    %6007 = vmatprep.subr.bf16.mxu0 0
    %6008 = vmatpush1.bf16.msra.mxu0 0
    %6009 = vmatprep.subr.bf16.mxu0 0
    %6010 = vmatpush1.bf16.msra.mxu0 0
    %6011 = vmatprep.subr.bf16.mxu0 0
    %6012 = vmatpush1.bf16.msra.mxu0 0
    %6013 = vmatprep.subr.bf16.mxu0 0
    %6014 = vmatpush1.bf16.msra.mxu0 %v5997
    %6015 = vmatprep.subr.bf16.mxu0 0
    %6016 = vmatpush2.bf16.msra.mxu0 0
    %6017 = vmatprep.subr.bf16.mxu0 0
    %6018 = vmatpush2.bf16.msra.mxu0 0
    %6019 = vmatprep.subr.bf16.mxu0 0
    %6020 = vmatpush2.bf16.msra.mxu0 0
    %6021 = vmatprep.subr.bf16.mxu0 0
    %6022 = vmatpush2.bf16.msra.mxu0 0
    %6023 = vmatprep.subr.bf16.mxu0 0
    %6024 = vmatpush2.bf16.msra.mxu0 0
    %6025 = vmatprep.subr.bf16.mxu0 0
    %6026 = vmatpush2.bf16.msra.mxu0 0
    %6027 = vmatprep.subr.bf16.mxu0 0
    %6028 = vmatpush2.bf16.msra.mxu0 0
    %6029 = vmatprep.subr.bf16.mxu0 0
    %6030 = vmatpush2.bf16.msra.mxu0 0
    %6031 = vmatprep.mubr.bf16.mxu0 0
    %6032 = vmatmul.mubr.bf16.gmra.mxu0 %v5994
    %v6033 = vpop.f32.mrf.mxu0
    %v6034 = vadd.f32 0.0, %v6033
    %v6035 = vpop.f32.mrf.mxu0
    %v6036 = vpop.f32.mrf.mxu0
    %v6037 = vpop.f32.mrf.mxu0
    %6038 = vdwg.mxu0
    %6039 = vrot.lane.b32.xlu0 %v5379, 32
    %v6040 = vpop.permute.xlu0 %6039
    %6041 = vrot.lane.b32.xlu0 %v5381, 32
    %v6042 = vpop.permute.xlu0 %6041
    %v6044 = vsel %vm1162, %v6040, 0
    %v6047 = vsel %vm1162, %v6042, 0
    %6049 = vmatprep.subr.bf16.mxu0 0
    %6050 = vmatpush1.bf16.xpose.msra.mxu0 0
    %6051 = vmatprep.subr.bf16.mxu0 0
    %6052 = vmatpush1.bf16.xpose.msra.mxu0 0
    %6053 = vmatprep.subr.bf16.mxu0 0
    %6054 = vmatpush1.bf16.xpose.msra.mxu0 0
    %6055 = vmatprep.subr.bf16.mxu0 0
    %6056 = vmatpush1.bf16.xpose.msra.mxu0 0
    %6057 = vmatprep.subr.bf16.mxu0 0
    %6058 = vmatpush1.bf16.xpose.msra.mxu0 0
    %6059 = vmatprep.subr.bf16.mxu0 0
    %6060 = vmatpush1.bf16.xpose.msra.mxu0 0
    %6061 = vmatprep.subr.bf16.mxu0 0
    %6062 = vmatpush1.bf16.xpose.msra.mxu0 0
    %6063 = vmatprep.subr.bf16.mxu0 0
    %6064 = vmatpush1.bf16.xpose.msra.mxu0 %v6047
    %6065 = vmatprep.subr.bf16.mxu0 0
    %6066 = vmatpush2.bf16.xpose.msra.mxu0 0
    %6067 = vmatprep.subr.bf16.mxu0 0
    %6068 = vmatpush2.bf16.xpose.msra.mxu0 0
    %6069 = vmatprep.subr.bf16.mxu0 0
    %6070 = vmatpush2.bf16.xpose.msra.mxu0 0
    %6071 = vmatprep.subr.bf16.mxu0 0
    %6072 = vmatpush2.bf16.xpose.msra.mxu0 0
    %6073 = vmatprep.subr.bf16.mxu0 0
    %6074 = vmatpush2.bf16.xpose.msra.mxu0 0
    %6075 = vmatprep.subr.bf16.mxu0 0
    %6076 = vmatpush2.bf16.xpose.msra.mxu0 0
    %6077 = vmatprep.subr.bf16.mxu0 0
    %6078 = vmatpush2.bf16.xpose.msra.mxu0 0
    %6079 = vmatprep.subr.bf16.mxu0 0
    %6080 = vmatpush2.bf16.xpose.msra.mxu0 0
    %6081 = vmatprep.mubr.bf16.mxu0 0
    %6082 = vmatmul.mubr.bf16.gmra.mxu0 %v6044
    %v6083 = vpop.f32.mrf.mxu0
    %v6084 = vadd.f32 0.0, %v6083
    %v6085 = vpop.f32.mrf.mxu0
    %v6086 = vpop.f32.mrf.mxu0
    %v6087 = vpop.f32.mrf.mxu0
    %6088 = vdwg.mxu0
    %6089 = vrot.lane.b32.xlu0 %v5380, 32
    %v6090 = vpop.permute.xlu0 %6089
    %6091 = vrot.lane.b32.xlu0 %v5382, 32
    %v6092 = vpop.permute.xlu0 %6091
    %v6094 = vsel %vm1162, %v6090, 0
    %v6097 = vsel %vm1162, %v6092, 0
    %6099 = vmatprep.subr.bf16.mxu0 0
    %6100 = vmatpush1.bf16.xpose.msra.mxu0 0
    %6101 = vmatprep.subr.bf16.mxu0 0
    %6102 = vmatpush1.bf16.xpose.msra.mxu0 0
    %6103 = vmatprep.subr.bf16.mxu0 0
    %6104 = vmatpush1.bf16.xpose.msra.mxu0 0
    %6105 = vmatprep.subr.bf16.mxu0 0
    %6106 = vmatpush1.bf16.xpose.msra.mxu0 0
    %6107 = vmatprep.subr.bf16.mxu0 0
    %6108 = vmatpush1.bf16.xpose.msra.mxu0 0
    %6109 = vmatprep.subr.bf16.mxu0 0
    %6110 = vmatpush1.bf16.xpose.msra.mxu0 0
    %6111 = vmatprep.subr.bf16.mxu0 0
    %6112 = vmatpush1.bf16.xpose.msra.mxu0 0
    %6113 = vmatprep.subr.bf16.mxu0 0
    %6114 = vmatpush1.bf16.xpose.msra.mxu0 %v6097
    %6115 = vmatprep.subr.bf16.mxu0 0
    %6116 = vmatpush2.bf16.xpose.msra.mxu0 0
    %6117 = vmatprep.subr.bf16.mxu0 0
    %6118 = vmatpush2.bf16.xpose.msra.mxu0 0
    %6119 = vmatprep.subr.bf16.mxu0 0
    %6120 = vmatpush2.bf16.xpose.msra.mxu0 0
    %6121 = vmatprep.subr.bf16.mxu0 0
    %6122 = vmatpush2.bf16.xpose.msra.mxu0 0
    %6123 = vmatprep.subr.bf16.mxu0 0
    %6124 = vmatpush2.bf16.xpose.msra.mxu0 0
    %6125 = vmatprep.subr.bf16.mxu0 0
    %6126 = vmatpush2.bf16.xpose.msra.mxu0 0
    %6127 = vmatprep.subr.bf16.mxu0 0
    %6128 = vmatpush2.bf16.xpose.msra.mxu0 0
    %6129 = vmatprep.subr.bf16.mxu0 0
    %6130 = vmatpush2.bf16.xpose.msra.mxu0 0
    %6131 = vmatprep.mubr.bf16.mxu0 0
    %6132 = vmatmul.mubr.bf16.gmra.mxu0 %v6094
    %v6133 = vpop.f32.mrf.mxu0
    %v6134 = vadd.f32 0.0, %v6133
    %v6135 = vpop.f32.mrf.mxu0
    %v6136 = vpop.f32.mrf.mxu0
    %v6137 = vpop.f32.mrf.mxu0
    %6138 = vdwg.mxu0
    %v6139 = vsel %vm1255, %v6084, -inf
    %6140 = vmax.xlane.f32.xlu0 %v6139
    %v6141 = vpop.xlane.xlu0 %6140
    %v6142 = vsel %vm1255, %v6134, -inf
    %6143 = vmax.xlane.f32.xlu0 %v6142
    %v6144 = vpop.xlane.xlu0 %6143
    %v6145 = vsub.f32 %v6084, %v6141
    %v6146 = vsub.f32 %v6134, %v6144
    %v6147 = vmul.f32 %v6145, 1.442695
    %v6148 = vpow.pop %v6147
    %v6149 = vmul.f32 %v6146, 1.442695
    %v6150 = vpow.pop %v6149
    %v6151 = vsel %vm1255, %v6148, 0.0
    %6152 = vadd.xlane.f32.xlu0 %v6151
    %v6153 = vpop.xlane.xlu0 %6152
    %v6154 = vsel %vm1255, %v6150, 0.0
    %6155 = vadd.xlane.f32.xlu0 %v6154
    %v6156 = vpop.xlane.xlu0 %6155
    %v6157 = vrcp.pop %v6153
    %v6158 = vmul.f32 %v6148, %v6157
    %v6159 = vrcp.pop %v6156
    %v6160 = vmul.f32 %v6150, %v6159
    %v6161 = vpack.c.bf16 %v6158, %v6158
    %v6162 = vpack.c.bf16 %v6160, %v6160
    %6163 = vrot.lane.b32.xlu0 %v5383, 32
    %v6164 = vpop.permute.xlu0 %6163
    %v6166 = vsel %vm1255, %v6161, 0
    %v6169 = vsel %vm1283, %v6164, 0
    %6171 = vmatprep.subr.bf16.mxu0 0
    %6172 = vmatpush1.bf16.msra.mxu0 0
    %6173 = vmatprep.subr.bf16.mxu0 0
    %6174 = vmatpush1.bf16.msra.mxu0 0
    %6175 = vmatprep.subr.bf16.mxu0 0
    %6176 = vmatpush1.bf16.msra.mxu0 0
    %6177 = vmatprep.subr.bf16.mxu0 0
    %6178 = vmatpush1.bf16.msra.mxu0 0
    %6179 = vmatprep.subr.bf16.mxu0 0
    %6180 = vmatpush1.bf16.msra.mxu0 0
    %6181 = vmatprep.subr.bf16.mxu0 0
    %6182 = vmatpush1.bf16.msra.mxu0 0
    %6183 = vmatprep.subr.bf16.mxu0 0
    %6184 = vmatpush1.bf16.msra.mxu0 0
    %6185 = vmatprep.subr.bf16.mxu0 0
    %6186 = vmatpush1.bf16.msra.mxu0 %v6169
    %6187 = vmatprep.subr.bf16.mxu0 0
    %6188 = vmatpush2.bf16.msra.mxu0 0
    %6189 = vmatprep.subr.bf16.mxu0 0
    %6190 = vmatpush2.bf16.msra.mxu0 0
    %6191 = vmatprep.subr.bf16.mxu0 0
    %6192 = vmatpush2.bf16.msra.mxu0 0
    %6193 = vmatprep.subr.bf16.mxu0 0
    %6194 = vmatpush2.bf16.msra.mxu0 0
    %6195 = vmatprep.subr.bf16.mxu0 0
    %6196 = vmatpush2.bf16.msra.mxu0 0
    %6197 = vmatprep.subr.bf16.mxu0 0
    %6198 = vmatpush2.bf16.msra.mxu0 0
    %6199 = vmatprep.subr.bf16.mxu0 0
    %6200 = vmatpush2.bf16.msra.mxu0 0
    %6201 = vmatprep.subr.bf16.mxu0 0
    %6202 = vmatpush2.bf16.msra.mxu0 0
    %6203 = vmatprep.mubr.bf16.mxu0 0
    %6204 = vmatmul.mubr.bf16.gmra.mxu0 %v6166
    %v6205 = vpop.f32.mrf.mxu0
    %v6206 = vadd.f32 0.0, %v6205
    %v6207 = vpop.f32.mrf.mxu0
    %v6208 = vpop.f32.mrf.mxu0
    %v6209 = vpop.f32.mrf.mxu0
    %6210 = vdwg.mxu0
    %6211 = vrot.lane.b32.xlu0 %v5384, 32
    %v6212 = vpop.permute.xlu0 %6211
    %v6214 = vsel %vm1255, %v6162, 0
    %v6217 = vsel %vm1283, %v6212, 0
    %6219 = vmatprep.subr.bf16.mxu0 0
    %6220 = vmatpush1.bf16.msra.mxu0 0
    %6221 = vmatprep.subr.bf16.mxu0 0
    %6222 = vmatpush1.bf16.msra.mxu0 0
    %6223 = vmatprep.subr.bf16.mxu0 0
    %6224 = vmatpush1.bf16.msra.mxu0 0
    %6225 = vmatprep.subr.bf16.mxu0 0
    %6226 = vmatpush1.bf16.msra.mxu0 0
    %6227 = vmatprep.subr.bf16.mxu0 0
    %6228 = vmatpush1.bf16.msra.mxu0 0
    %6229 = vmatprep.subr.bf16.mxu0 0
    %6230 = vmatpush1.bf16.msra.mxu0 0
    %6231 = vmatprep.subr.bf16.mxu0 0
    %6232 = vmatpush1.bf16.msra.mxu0 0
    %6233 = vmatprep.subr.bf16.mxu0 0
    %6234 = vmatpush1.bf16.msra.mxu0 %v6217
    %6235 = vmatprep.subr.bf16.mxu0 0
    %6236 = vmatpush2.bf16.msra.mxu0 0
    %6237 = vmatprep.subr.bf16.mxu0 0
    %6238 = vmatpush2.bf16.msra.mxu0 0
    %6239 = vmatprep.subr.bf16.mxu0 0
    %6240 = vmatpush2.bf16.msra.mxu0 0
    %6241 = vmatprep.subr.bf16.mxu0 0
    %6242 = vmatpush2.bf16.msra.mxu0 0
    %6243 = vmatprep.subr.bf16.mxu0 0
    %6244 = vmatpush2.bf16.msra.mxu0 0
    %6245 = vmatprep.subr.bf16.mxu0 0
    %6246 = vmatpush2.bf16.msra.mxu0 0
    %6247 = vmatprep.subr.bf16.mxu0 0
    %6248 = vmatpush2.bf16.msra.mxu0 0
    %6249 = vmatprep.subr.bf16.mxu0 0
    %6250 = vmatpush2.bf16.msra.mxu0 0
    %6251 = vmatprep.mubr.bf16.mxu0 0
    %6252 = vmatmul.mubr.bf16.gmra.mxu0 %v6214
    %v6253 = vpop.f32.mrf.mxu0
    %v6254 = vadd.f32 0.0, %v6253
    %v6255 = vpop.f32.mrf.mxu0
    %v6256 = vpop.f32.mrf.mxu0
    %v6257 = vpop.f32.mrf.mxu0
    %6258 = vdwg.mxu0
    %v6259 = vpack.c.bf16 %v5368, %v5368
    %v6260 = vpack.c.bf16 %v5374, %v5374
    %v6261 = vpack.c.bf16 %v5370, %v5370
    %v6262 = vpack.c.bf16 %v5376, %v5376
    %v6263 = vpack.c.bf16 %v5372, %v5372
    %v6264 = vpack.c.bf16 %v5378, %v5378
    %v6266 = vsel %vm1162, %v6259, 0
    %v6269 = vsel %vm1162, %v6261, 0
    %6271 = vmatprep.subr.bf16.mxu0 0
    %6272 = vmatpush1.bf16.xpose.msra.mxu0 0
    %6273 = vmatprep.subr.bf16.mxu0 0
    %6274 = vmatpush1.bf16.xpose.msra.mxu0 0
    %6275 = vmatprep.subr.bf16.mxu0 0
    %6276 = vmatpush1.bf16.xpose.msra.mxu0 0
    %6277 = vmatprep.subr.bf16.mxu0 0
    %6278 = vmatpush1.bf16.xpose.msra.mxu0 0
    %6279 = vmatprep.subr.bf16.mxu0 0
    %6280 = vmatpush1.bf16.xpose.msra.mxu0 0
    %6281 = vmatprep.subr.bf16.mxu0 0
    %6282 = vmatpush1.bf16.xpose.msra.mxu0 0
    %6283 = vmatprep.subr.bf16.mxu0 0
    %6284 = vmatpush1.bf16.xpose.msra.mxu0 0
    %6285 = vmatprep.subr.bf16.mxu0 0
    %6286 = vmatpush1.bf16.xpose.msra.mxu0 %v6269
    %6287 = vmatprep.subr.bf16.mxu0 0
    %6288 = vmatpush2.bf16.xpose.msra.mxu0 0
    %6289 = vmatprep.subr.bf16.mxu0 0
    %6290 = vmatpush2.bf16.xpose.msra.mxu0 0
    %6291 = vmatprep.subr.bf16.mxu0 0
    %6292 = vmatpush2.bf16.xpose.msra.mxu0 0
    %6293 = vmatprep.subr.bf16.mxu0 0
    %6294 = vmatpush2.bf16.xpose.msra.mxu0 0
    %6295 = vmatprep.subr.bf16.mxu0 0
    %6296 = vmatpush2.bf16.xpose.msra.mxu0 0
    %6297 = vmatprep.subr.bf16.mxu0 0
    %6298 = vmatpush2.bf16.xpose.msra.mxu0 0
    %6299 = vmatprep.subr.bf16.mxu0 0
    %6300 = vmatpush2.bf16.xpose.msra.mxu0 0
    %6301 = vmatprep.subr.bf16.mxu0 0
    %6302 = vmatpush2.bf16.xpose.msra.mxu0 0
    %6303 = vmatprep.mubr.bf16.mxu0 0
    %6304 = vmatmul.mubr.bf16.gmra.mxu0 %v6266
    %v6305 = vpop.f32.mrf.mxu0
    %v6306 = vadd.f32 0.0, %v6305
    %v6307 = vpop.f32.mrf.mxu0
    %v6308 = vpop.f32.mrf.mxu0
    %v6309 = vpop.f32.mrf.mxu0
    %6310 = vdwg.mxu0
    %v6312 = vsel %vm1162, %v6260, 0
    %v6315 = vsel %vm1162, %v6262, 0
    %6317 = vmatprep.subr.bf16.mxu0 0
    %6318 = vmatpush1.bf16.xpose.msra.mxu0 0
    %6319 = vmatprep.subr.bf16.mxu0 0
    %6320 = vmatpush1.bf16.xpose.msra.mxu0 0
    %6321 = vmatprep.subr.bf16.mxu0 0
    %6322 = vmatpush1.bf16.xpose.msra.mxu0 0
    %6323 = vmatprep.subr.bf16.mxu0 0
    %6324 = vmatpush1.bf16.xpose.msra.mxu0 0
    %6325 = vmatprep.subr.bf16.mxu0 0
    %6326 = vmatpush1.bf16.xpose.msra.mxu0 0
    %6327 = vmatprep.subr.bf16.mxu0 0
    %6328 = vmatpush1.bf16.xpose.msra.mxu0 0
    %6329 = vmatprep.subr.bf16.mxu0 0
    %6330 = vmatpush1.bf16.xpose.msra.mxu0 0
    %6331 = vmatprep.subr.bf16.mxu0 0
    %6332 = vmatpush1.bf16.xpose.msra.mxu0 %v6315
    %6333 = vmatprep.subr.bf16.mxu0 0
    %6334 = vmatpush2.bf16.xpose.msra.mxu0 0
    %6335 = vmatprep.subr.bf16.mxu0 0
    %6336 = vmatpush2.bf16.xpose.msra.mxu0 0
    %6337 = vmatprep.subr.bf16.mxu0 0
    %6338 = vmatpush2.bf16.xpose.msra.mxu0 0
    %6339 = vmatprep.subr.bf16.mxu0 0
    %6340 = vmatpush2.bf16.xpose.msra.mxu0 0
    %6341 = vmatprep.subr.bf16.mxu0 0
    %6342 = vmatpush2.bf16.xpose.msra.mxu0 0
    %6343 = vmatprep.subr.bf16.mxu0 0
    %6344 = vmatpush2.bf16.xpose.msra.mxu0 0
    %6345 = vmatprep.subr.bf16.mxu0 0
    %6346 = vmatpush2.bf16.xpose.msra.mxu0 0
    %6347 = vmatprep.subr.bf16.mxu0 0
    %6348 = vmatpush2.bf16.xpose.msra.mxu0 0
    %6349 = vmatprep.mubr.bf16.mxu0 0
    %6350 = vmatmul.mubr.bf16.gmra.mxu0 %v6312
    %v6351 = vpop.f32.mrf.mxu0
    %v6352 = vadd.f32 0.0, %v6351
    %v6353 = vpop.f32.mrf.mxu0
    %v6354 = vpop.f32.mrf.mxu0
    %v6355 = vpop.f32.mrf.mxu0
    %6356 = vdwg.mxu0
    %v6357 = vsel %vm1255, %v6306, -inf
    %6358 = vmax.xlane.f32.xlu0 %v6357
    %v6359 = vpop.xlane.xlu0 %6358
    %v6360 = vsel %vm1255, %v6352, -inf
    %6361 = vmax.xlane.f32.xlu0 %v6360
    %v6362 = vpop.xlane.xlu0 %6361
    %v6363 = vsub.f32 %v6306, %v6359
    %v6364 = vsub.f32 %v6352, %v6362
    %v6365 = vmul.f32 %v6363, 1.442695
    %v6366 = vpow.pop %v6365
    %v6367 = vmul.f32 %v6364, 1.442695
    %v6368 = vpow.pop %v6367
    %v6369 = vsel %vm1255, %v6366, 0.0
    %6370 = vadd.xlane.f32.xlu0 %v6369
    %v6371 = vpop.xlane.xlu0 %6370
    %v6372 = vsel %vm1255, %v6368, 0.0
    %6373 = vadd.xlane.f32.xlu0 %v6372
    %v6374 = vpop.xlane.xlu0 %6373
    %v6375 = vrcp.pop %v6371
    %v6376 = vmul.f32 %v6366, %v6375
    %v6377 = vrcp.pop %v6374
    %v6378 = vmul.f32 %v6368, %v6377
    %v6379 = vpack.c.bf16 %v6376, %v6376
    %v6380 = vpack.c.bf16 %v6378, %v6378
    %v6382 = vsel %vm1255, %v6379, 0
    %v6385 = vsel %vm1283, %v6263, 0
    %6387 = vmatprep.subr.bf16.mxu0 0
    %6388 = vmatpush1.bf16.msra.mxu0 0
    %6389 = vmatprep.subr.bf16.mxu0 0
    %6390 = vmatpush1.bf16.msra.mxu0 0
    %6391 = vmatprep.subr.bf16.mxu0 0
    %6392 = vmatpush1.bf16.msra.mxu0 0
    %6393 = vmatprep.subr.bf16.mxu0 0
    %6394 = vmatpush1.bf16.msra.mxu0 0
    %6395 = vmatprep.subr.bf16.mxu0 0
    %6396 = vmatpush1.bf16.msra.mxu0 0
    %6397 = vmatprep.subr.bf16.mxu0 0
    %6398 = vmatpush1.bf16.msra.mxu0 0
    %6399 = vmatprep.subr.bf16.mxu0 0
    %6400 = vmatpush1.bf16.msra.mxu0 0
    %6401 = vmatprep.subr.bf16.mxu0 0
    %6402 = vmatpush1.bf16.msra.mxu0 %v6385
    %6403 = vmatprep.subr.bf16.mxu0 0
    %6404 = vmatpush2.bf16.msra.mxu0 0
    %6405 = vmatprep.subr.bf16.mxu0 0
    %6406 = vmatpush2.bf16.msra.mxu0 0
    %6407 = vmatprep.subr.bf16.mxu0 0
    %6408 = vmatpush2.bf16.msra.mxu0 0
    %6409 = vmatprep.subr.bf16.mxu0 0
    %6410 = vmatpush2.bf16.msra.mxu0 0
    %6411 = vmatprep.subr.bf16.mxu0 0
    %6412 = vmatpush2.bf16.msra.mxu0 0
    %6413 = vmatprep.subr.bf16.mxu0 0
    %6414 = vmatpush2.bf16.msra.mxu0 0
    %6415 = vmatprep.subr.bf16.mxu0 0
    %6416 = vmatpush2.bf16.msra.mxu0 0
    %6417 = vmatprep.subr.bf16.mxu0 0
    %6418 = vmatpush2.bf16.msra.mxu0 0
    %6419 = vmatprep.mubr.bf16.mxu0 0
    %6420 = vmatmul.mubr.bf16.gmra.mxu0 %v6382
    %v6421 = vpop.f32.mrf.mxu0
    %v6422 = vadd.f32 0.0, %v6421
    %v6423 = vpop.f32.mrf.mxu0
    %v6424 = vpop.f32.mrf.mxu0
    %v6425 = vpop.f32.mrf.mxu0
    %6426 = vdwg.mxu0
    %v6428 = vsel %vm1255, %v6380, 0
    %v6431 = vsel %vm1283, %v6264, 0
    %6433 = vmatprep.subr.bf16.mxu0 0
    %6434 = vmatpush1.bf16.msra.mxu0 0
    %6435 = vmatprep.subr.bf16.mxu0 0
    %6436 = vmatpush1.bf16.msra.mxu0 0
    %6437 = vmatprep.subr.bf16.mxu0 0
    %6438 = vmatpush1.bf16.msra.mxu0 0
    %6439 = vmatprep.subr.bf16.mxu0 0
    %6440 = vmatpush1.bf16.msra.mxu0 0
    %6441 = vmatprep.subr.bf16.mxu0 0
    %6442 = vmatpush1.bf16.msra.mxu0 0
    %6443 = vmatprep.subr.bf16.mxu0 0
    %6444 = vmatpush1.bf16.msra.mxu0 0
    %6445 = vmatprep.subr.bf16.mxu0 0
    %6446 = vmatpush1.bf16.msra.mxu0 0
    %6447 = vmatprep.subr.bf16.mxu0 0
    %6448 = vmatpush1.bf16.msra.mxu0 %v6431
    %6449 = vmatprep.subr.bf16.mxu0 0
    %6450 = vmatpush2.bf16.msra.mxu0 0
    %6451 = vmatprep.subr.bf16.mxu0 0
    %6452 = vmatpush2.bf16.msra.mxu0 0
    %6453 = vmatprep.subr.bf16.mxu0 0
    %6454 = vmatpush2.bf16.msra.mxu0 0
    %6455 = vmatprep.subr.bf16.mxu0 0
    %6456 = vmatpush2.bf16.msra.mxu0 0
    %6457 = vmatprep.subr.bf16.mxu0 0
    %6458 = vmatpush2.bf16.msra.mxu0 0
    %6459 = vmatprep.subr.bf16.mxu0 0
    %6460 = vmatpush2.bf16.msra.mxu0 0
    %6461 = vmatprep.subr.bf16.mxu0 0
    %6462 = vmatpush2.bf16.msra.mxu0 0
    %6463 = vmatprep.subr.bf16.mxu0 0
    %6464 = vmatpush2.bf16.msra.mxu0 0
    %6465 = vmatprep.mubr.bf16.mxu0 0
    %6466 = vmatmul.mubr.bf16.gmra.mxu0 %v6428
    %v6467 = vpop.f32.mrf.mxu0
    %v6468 = vadd.f32 0.0, %v6467
    %v6469 = vpop.f32.mrf.mxu0
    %v6470 = vpop.f32.mrf.mxu0
    %v6471 = vpop.f32.mrf.mxu0
    %6472 = vdwg.mxu0
    %6474 = vrot.lane.b32.xlu0 %v6259, 96
    %v6475 = vpop.permute.xlu0 %6474
    %6477 = vrot.lane.b32.xlu0 %v6261, 96
    %v6478 = vpop.permute.xlu0 %6477
    %v6480 = vsel %vm1162, %v6475, 0
    %v6483 = vsel %vm1162, %v6478, 0
    %6485 = vmatprep.subr.bf16.mxu0 0
    %6486 = vmatpush1.bf16.xpose.msra.mxu0 0
    %6487 = vmatprep.subr.bf16.mxu0 0
    %6488 = vmatpush1.bf16.xpose.msra.mxu0 0
    %6489 = vmatprep.subr.bf16.mxu0 0
    %6490 = vmatpush1.bf16.xpose.msra.mxu0 0
    %6491 = vmatprep.subr.bf16.mxu0 0
    %6492 = vmatpush1.bf16.xpose.msra.mxu0 0
    %6493 = vmatprep.subr.bf16.mxu0 0
    %6494 = vmatpush1.bf16.xpose.msra.mxu0 0
    %6495 = vmatprep.subr.bf16.mxu0 0
    %6496 = vmatpush1.bf16.xpose.msra.mxu0 0
    %6497 = vmatprep.subr.bf16.mxu0 0
    %6498 = vmatpush1.bf16.xpose.msra.mxu0 0
    %6499 = vmatprep.subr.bf16.mxu0 0
    %6500 = vmatpush1.bf16.xpose.msra.mxu0 %v6483
    %6501 = vmatprep.subr.bf16.mxu0 0
    %6502 = vmatpush2.bf16.xpose.msra.mxu0 0
    %6503 = vmatprep.subr.bf16.mxu0 0
    %6504 = vmatpush2.bf16.xpose.msra.mxu0 0
    %6505 = vmatprep.subr.bf16.mxu0 0
    %6506 = vmatpush2.bf16.xpose.msra.mxu0 0
    %6507 = vmatprep.subr.bf16.mxu0 0
    %6508 = vmatpush2.bf16.xpose.msra.mxu0 0
    %6509 = vmatprep.subr.bf16.mxu0 0
    %6510 = vmatpush2.bf16.xpose.msra.mxu0 0
    %6511 = vmatprep.subr.bf16.mxu0 0
    %6512 = vmatpush2.bf16.xpose.msra.mxu0 0
    %6513 = vmatprep.subr.bf16.mxu0 0
    %6514 = vmatpush2.bf16.xpose.msra.mxu0 0
    %6515 = vmatprep.subr.bf16.mxu0 0
    %6516 = vmatpush2.bf16.xpose.msra.mxu0 0
    %6517 = vmatprep.mubr.bf16.mxu0 0
    %6518 = vmatmul.mubr.bf16.gmra.mxu0 %v6480
    %v6519 = vpop.f32.mrf.mxu0
    %v6520 = vadd.f32 0.0, %v6519
    %v6521 = vpop.f32.mrf.mxu0
    %v6522 = vpop.f32.mrf.mxu0
    %v6523 = vpop.f32.mrf.mxu0
    %6524 = vdwg.mxu0
    %6526 = vrot.lane.b32.xlu0 %v6260, 96
    %v6527 = vpop.permute.xlu0 %6526
    %6529 = vrot.lane.b32.xlu0 %v6262, 96
    %v6530 = vpop.permute.xlu0 %6529
    %v6532 = vsel %vm1162, %v6527, 0
    %v6535 = vsel %vm1162, %v6530, 0
    %6537 = vmatprep.subr.bf16.mxu0 0
    %6538 = vmatpush1.bf16.xpose.msra.mxu0 0
    %6539 = vmatprep.subr.bf16.mxu0 0
    %6540 = vmatpush1.bf16.xpose.msra.mxu0 0
    %6541 = vmatprep.subr.bf16.mxu0 0
    %6542 = vmatpush1.bf16.xpose.msra.mxu0 0
    %6543 = vmatprep.subr.bf16.mxu0 0
    %6544 = vmatpush1.bf16.xpose.msra.mxu0 0
    %6545 = vmatprep.subr.bf16.mxu0 0
    %6546 = vmatpush1.bf16.xpose.msra.mxu0 0
    %6547 = vmatprep.subr.bf16.mxu0 0
    %6548 = vmatpush1.bf16.xpose.msra.mxu0 0
    %6549 = vmatprep.subr.bf16.mxu0 0
    %6550 = vmatpush1.bf16.xpose.msra.mxu0 0
    %6551 = vmatprep.subr.bf16.mxu0 0
    %6552 = vmatpush1.bf16.xpose.msra.mxu0 %v6535
    %6553 = vmatprep.subr.bf16.mxu0 0
    %6554 = vmatpush2.bf16.xpose.msra.mxu0 0
    %6555 = vmatprep.subr.bf16.mxu0 0
    %6556 = vmatpush2.bf16.xpose.msra.mxu0 0
    %6557 = vmatprep.subr.bf16.mxu0 0
    %6558 = vmatpush2.bf16.xpose.msra.mxu0 0
    %6559 = vmatprep.subr.bf16.mxu0 0
    %6560 = vmatpush2.bf16.xpose.msra.mxu0 0
    %6561 = vmatprep.subr.bf16.mxu0 0
    %6562 = vmatpush2.bf16.xpose.msra.mxu0 0
    %6563 = vmatprep.subr.bf16.mxu0 0
    %6564 = vmatpush2.bf16.xpose.msra.mxu0 0
    %6565 = vmatprep.subr.bf16.mxu0 0
    %6566 = vmatpush2.bf16.xpose.msra.mxu0 0
    %6567 = vmatprep.subr.bf16.mxu0 0
    %6568 = vmatpush2.bf16.xpose.msra.mxu0 0
    %6569 = vmatprep.mubr.bf16.mxu0 0
    %6570 = vmatmul.mubr.bf16.gmra.mxu0 %v6532
    %v6571 = vpop.f32.mrf.mxu0
    %v6572 = vadd.f32 0.0, %v6571
    %v6573 = vpop.f32.mrf.mxu0
    %v6574 = vpop.f32.mrf.mxu0
    %v6575 = vpop.f32.mrf.mxu0
    %6576 = vdwg.mxu0
    %v6577 = vsel %vm1255, %v6520, -inf
    %6578 = vmax.xlane.f32.xlu0 %v6577
    %v6579 = vpop.xlane.xlu0 %6578
    %v6580 = vsel %vm1255, %v6572, -inf
    %6581 = vmax.xlane.f32.xlu0 %v6580
    %v6582 = vpop.xlane.xlu0 %6581
    %v6583 = vsub.f32 %v6520, %v6579
    %v6584 = vsub.f32 %v6572, %v6582
    %v6585 = vmul.f32 %v6583, 1.442695
    %v6586 = vpow.pop %v6585
    %v6587 = vmul.f32 %v6584, 1.442695
    %v6588 = vpow.pop %v6587
    %v6589 = vsel %vm1255, %v6586, 0.0
    %6590 = vadd.xlane.f32.xlu0 %v6589
    %v6591 = vpop.xlane.xlu0 %6590
    %v6592 = vsel %vm1255, %v6588, 0.0
    %6593 = vadd.xlane.f32.xlu0 %v6592
    %v6594 = vpop.xlane.xlu0 %6593
    %v6595 = vrcp.pop %v6591
    %v6596 = vmul.f32 %v6586, %v6595
    %v6597 = vrcp.pop %v6594
    %v6598 = vmul.f32 %v6588, %v6597
    %v6599 = vpack.c.bf16 %v6596, %v6596
    %v6600 = vpack.c.bf16 %v6598, %v6598
    %6602 = vrot.lane.b32.xlu0 %v6263, 96
    %v6603 = vpop.permute.xlu0 %6602
    %v6605 = vsel %vm1255, %v6599, 0
    %v6608 = vsel %vm1283, %v6603, 0
    %6610 = vmatprep.subr.bf16.mxu0 0
    %6611 = vmatpush1.bf16.msra.mxu0 0
    %6612 = vmatprep.subr.bf16.mxu0 0
    %6613 = vmatpush1.bf16.msra.mxu0 0
    %6614 = vmatprep.subr.bf16.mxu0 0
    %6615 = vmatpush1.bf16.msra.mxu0 0
    %6616 = vmatprep.subr.bf16.mxu0 0
    %6617 = vmatpush1.bf16.msra.mxu0 0
    %6618 = vmatprep.subr.bf16.mxu0 0
    %6619 = vmatpush1.bf16.msra.mxu0 0
    %6620 = vmatprep.subr.bf16.mxu0 0
    %6621 = vmatpush1.bf16.msra.mxu0 0
    %6622 = vmatprep.subr.bf16.mxu0 0
    %6623 = vmatpush1.bf16.msra.mxu0 0
    %6624 = vmatprep.subr.bf16.mxu0 0
    %6625 = vmatpush1.bf16.msra.mxu0 %v6608
    %6626 = vmatprep.subr.bf16.mxu0 0
    %6627 = vmatpush2.bf16.msra.mxu0 0
    %6628 = vmatprep.subr.bf16.mxu0 0
    %6629 = vmatpush2.bf16.msra.mxu0 0
    %6630 = vmatprep.subr.bf16.mxu0 0
    %6631 = vmatpush2.bf16.msra.mxu0 0
    %6632 = vmatprep.subr.bf16.mxu0 0
    %6633 = vmatpush2.bf16.msra.mxu0 0
    %6634 = vmatprep.subr.bf16.mxu0 0
    %6635 = vmatpush2.bf16.msra.mxu0 0
    %6636 = vmatprep.subr.bf16.mxu0 0
    %6637 = vmatpush2.bf16.msra.mxu0 0
    %6638 = vmatprep.subr.bf16.mxu0 0
    %6639 = vmatpush2.bf16.msra.mxu0 0
    %6640 = vmatprep.subr.bf16.mxu0 0
    %6641 = vmatpush2.bf16.msra.mxu0 0
    %6642 = vmatprep.mubr.bf16.mxu0 0
    %6643 = vmatmul.mubr.bf16.gmra.mxu0 %v6605
    %v6644 = vpop.f32.mrf.mxu0
    %v6645 = vadd.f32 0.0, %v6644
    %v6646 = vpop.f32.mrf.mxu0
    %v6647 = vpop.f32.mrf.mxu0
    %v6648 = vpop.f32.mrf.mxu0
    %6649 = vdwg.mxu0
    %6651 = vrot.lane.b32.xlu0 %v6264, 96
    %v6652 = vpop.permute.xlu0 %6651
    %v6654 = vsel %vm1255, %v6600, 0
    %v6657 = vsel %vm1283, %v6652, 0
    %6659 = vmatprep.subr.bf16.mxu0 0
    %6660 = vmatpush1.bf16.msra.mxu0 0
    %6661 = vmatprep.subr.bf16.mxu0 0
    %6662 = vmatpush1.bf16.msra.mxu0 0
    %6663 = vmatprep.subr.bf16.mxu0 0
    %6664 = vmatpush1.bf16.msra.mxu0 0
    %6665 = vmatprep.subr.bf16.mxu0 0
    %6666 = vmatpush1.bf16.msra.mxu0 0
    %6667 = vmatprep.subr.bf16.mxu0 0
    %6668 = vmatpush1.bf16.msra.mxu0 0
    %6669 = vmatprep.subr.bf16.mxu0 0
    %6670 = vmatpush1.bf16.msra.mxu0 0
    %6671 = vmatprep.subr.bf16.mxu0 0
    %6672 = vmatpush1.bf16.msra.mxu0 0
    %6673 = vmatprep.subr.bf16.mxu0 0
    %6674 = vmatpush1.bf16.msra.mxu0 %v6657
    %6675 = vmatprep.subr.bf16.mxu0 0
    %6676 = vmatpush2.bf16.msra.mxu0 0
    %6677 = vmatprep.subr.bf16.mxu0 0
    %6678 = vmatpush2.bf16.msra.mxu0 0
    %6679 = vmatprep.subr.bf16.mxu0 0
    %6680 = vmatpush2.bf16.msra.mxu0 0
    %6681 = vmatprep.subr.bf16.mxu0 0
    %6682 = vmatpush2.bf16.msra.mxu0 0
    %6683 = vmatprep.subr.bf16.mxu0 0
    %6684 = vmatpush2.bf16.msra.mxu0 0
    %6685 = vmatprep.subr.bf16.mxu0 0
    %6686 = vmatpush2.bf16.msra.mxu0 0
    %6687 = vmatprep.subr.bf16.mxu0 0
    %6688 = vmatpush2.bf16.msra.mxu0 0
    %6689 = vmatprep.subr.bf16.mxu0 0
    %6690 = vmatpush2.bf16.msra.mxu0 0
    %6691 = vmatprep.mubr.bf16.mxu0 0
    %6692 = vmatmul.mubr.bf16.gmra.mxu0 %v6654
    %v6693 = vpop.f32.mrf.mxu0
    %v6694 = vadd.f32 0.0, %v6693
    %v6695 = vpop.f32.mrf.mxu0
    %v6696 = vpop.f32.mrf.mxu0
    %v6697 = vpop.f32.mrf.mxu0
    %6698 = vdwg.mxu0
    %6699 = vrot.lane.b32.xlu0 %v6259, 64
    %v6700 = vpop.permute.xlu0 %6699
    %6701 = vrot.lane.b32.xlu0 %v6261, 64
    %v6702 = vpop.permute.xlu0 %6701
    %v6704 = vsel %vm1162, %v6700, 0
    %v6707 = vsel %vm1162, %v6702, 0
    %6709 = vmatprep.subr.bf16.mxu0 0
    %6710 = vmatpush1.bf16.xpose.msra.mxu0 0
    %6711 = vmatprep.subr.bf16.mxu0 0
    %6712 = vmatpush1.bf16.xpose.msra.mxu0 0
    %6713 = vmatprep.subr.bf16.mxu0 0
    %6714 = vmatpush1.bf16.xpose.msra.mxu0 0
    %6715 = vmatprep.subr.bf16.mxu0 0
    %6716 = vmatpush1.bf16.xpose.msra.mxu0 0
    %6717 = vmatprep.subr.bf16.mxu0 0
    %6718 = vmatpush1.bf16.xpose.msra.mxu0 0
    %6719 = vmatprep.subr.bf16.mxu0 0
    %6720 = vmatpush1.bf16.xpose.msra.mxu0 0
    %6721 = vmatprep.subr.bf16.mxu0 0
    %6722 = vmatpush1.bf16.xpose.msra.mxu0 0
    %6723 = vmatprep.subr.bf16.mxu0 0
    %6724 = vmatpush1.bf16.xpose.msra.mxu0 %v6707
    %6725 = vmatprep.subr.bf16.mxu0 0
    %6726 = vmatpush2.bf16.xpose.msra.mxu0 0
    %6727 = vmatprep.subr.bf16.mxu0 0
    %6728 = vmatpush2.bf16.xpose.msra.mxu0 0
    %6729 = vmatprep.subr.bf16.mxu0 0
    %6730 = vmatpush2.bf16.xpose.msra.mxu0 0
    %6731 = vmatprep.subr.bf16.mxu0 0
    %6732 = vmatpush2.bf16.xpose.msra.mxu0 0
    %6733 = vmatprep.subr.bf16.mxu0 0
    %6734 = vmatpush2.bf16.xpose.msra.mxu0 0
    %6735 = vmatprep.subr.bf16.mxu0 0
    %6736 = vmatpush2.bf16.xpose.msra.mxu0 0
    %6737 = vmatprep.subr.bf16.mxu0 0
    %6738 = vmatpush2.bf16.xpose.msra.mxu0 0
    %6739 = vmatprep.subr.bf16.mxu0 0
    %6740 = vmatpush2.bf16.xpose.msra.mxu0 0
    %6741 = vmatprep.mubr.bf16.mxu0 0
    %6742 = vmatmul.mubr.bf16.gmra.mxu0 %v6704
    %v6743 = vpop.f32.mrf.mxu0
    %v6744 = vadd.f32 0.0, %v6743
    %v6745 = vpop.f32.mrf.mxu0
    %v6746 = vpop.f32.mrf.mxu0
    %v6747 = vpop.f32.mrf.mxu0
    %6748 = vdwg.mxu0
    %6749 = vrot.lane.b32.xlu0 %v6260, 64
    %v6750 = vpop.permute.xlu0 %6749
    %6751 = vrot.lane.b32.xlu0 %v6262, 64
    %v6752 = vpop.permute.xlu0 %6751
    %v6754 = vsel %vm1162, %v6750, 0
    %v6757 = vsel %vm1162, %v6752, 0
    %6759 = vmatprep.subr.bf16.mxu0 0
    %6760 = vmatpush1.bf16.xpose.msra.mxu0 0
    %6761 = vmatprep.subr.bf16.mxu0 0
    %6762 = vmatpush1.bf16.xpose.msra.mxu0 0
    %6763 = vmatprep.subr.bf16.mxu0 0
    %6764 = vmatpush1.bf16.xpose.msra.mxu0 0
    %6765 = vmatprep.subr.bf16.mxu0 0
    %6766 = vmatpush1.bf16.xpose.msra.mxu0 0
    %6767 = vmatprep.subr.bf16.mxu0 0
    %6768 = vmatpush1.bf16.xpose.msra.mxu0 0
    %6769 = vmatprep.subr.bf16.mxu0 0
    %6770 = vmatpush1.bf16.xpose.msra.mxu0 0
    %6771 = vmatprep.subr.bf16.mxu0 0
    %6772 = vmatpush1.bf16.xpose.msra.mxu0 0
    %6773 = vmatprep.subr.bf16.mxu0 0
    %6774 = vmatpush1.bf16.xpose.msra.mxu0 %v6757
    %6775 = vmatprep.subr.bf16.mxu0 0
    %6776 = vmatpush2.bf16.xpose.msra.mxu0 0
    %6777 = vmatprep.subr.bf16.mxu0 0
    %6778 = vmatpush2.bf16.xpose.msra.mxu0 0
    %6779 = vmatprep.subr.bf16.mxu0 0
    %6780 = vmatpush2.bf16.xpose.msra.mxu0 0
    %6781 = vmatprep.subr.bf16.mxu0 0
    %6782 = vmatpush2.bf16.xpose.msra.mxu0 0
    %6783 = vmatprep.subr.bf16.mxu0 0
    %6784 = vmatpush2.bf16.xpose.msra.mxu0 0
    %6785 = vmatprep.subr.bf16.mxu0 0
    %6786 = vmatpush2.bf16.xpose.msra.mxu0 0
    %6787 = vmatprep.subr.bf16.mxu0 0
    %6788 = vmatpush2.bf16.xpose.msra.mxu0 0
    %6789 = vmatprep.subr.bf16.mxu0 0
    %6790 = vmatpush2.bf16.xpose.msra.mxu0 0
    %6791 = vmatprep.mubr.bf16.mxu0 0
    %6792 = vmatmul.mubr.bf16.gmra.mxu0 %v6754
    %v6793 = vpop.f32.mrf.mxu0
    %v6794 = vadd.f32 0.0, %v6793
    %v6795 = vpop.f32.mrf.mxu0
    %v6796 = vpop.f32.mrf.mxu0
    %v6797 = vpop.f32.mrf.mxu0
    %6798 = vdwg.mxu0
    %v6799 = vsel %vm1255, %v6744, -inf
    %6800 = vmax.xlane.f32.xlu0 %v6799
    %v6801 = vpop.xlane.xlu0 %6800
    %v6802 = vsel %vm1255, %v6794, -inf
    %6803 = vmax.xlane.f32.xlu0 %v6802
    %v6804 = vpop.xlane.xlu0 %6803
    %v6805 = vsub.f32 %v6744, %v6801
    %v6806 = vsub.f32 %v6794, %v6804
    %v6807 = vmul.f32 %v6805, 1.442695
    %v6808 = vpow.pop %v6807
    %v6809 = vmul.f32 %v6806, 1.442695
    %v6810 = vpow.pop %v6809
    %v6811 = vsel %vm1255, %v6808, 0.0
    %6812 = vadd.xlane.f32.xlu0 %v6811
    %v6813 = vpop.xlane.xlu0 %6812
    %v6814 = vsel %vm1255, %v6810, 0.0
    %6815 = vadd.xlane.f32.xlu0 %v6814
    %v6816 = vpop.xlane.xlu0 %6815
    %v6817 = vrcp.pop %v6813
    %v6818 = vmul.f32 %v6808, %v6817
    %v6819 = vrcp.pop %v6816
    %v6820 = vmul.f32 %v6810, %v6819
    %v6821 = vpack.c.bf16 %v6818, %v6818
    %v6822 = vpack.c.bf16 %v6820, %v6820
    %6823 = vrot.lane.b32.xlu0 %v6263, 64
    %v6824 = vpop.permute.xlu0 %6823
    %v6826 = vsel %vm1255, %v6821, 0
    %v6829 = vsel %vm1283, %v6824, 0
    %6831 = vmatprep.subr.bf16.mxu0 0
    %6832 = vmatpush1.bf16.msra.mxu0 0
    %6833 = vmatprep.subr.bf16.mxu0 0
    %6834 = vmatpush1.bf16.msra.mxu0 0
    %6835 = vmatprep.subr.bf16.mxu0 0
    %6836 = vmatpush1.bf16.msra.mxu0 0
    %6837 = vmatprep.subr.bf16.mxu0 0
    %6838 = vmatpush1.bf16.msra.mxu0 0
    %6839 = vmatprep.subr.bf16.mxu0 0
    %6840 = vmatpush1.bf16.msra.mxu0 0
    %6841 = vmatprep.subr.bf16.mxu0 0
    %6842 = vmatpush1.bf16.msra.mxu0 0
    %6843 = vmatprep.subr.bf16.mxu0 0
    %6844 = vmatpush1.bf16.msra.mxu0 0
    %6845 = vmatprep.subr.bf16.mxu0 0
    %6846 = vmatpush1.bf16.msra.mxu0 %v6829
    %6847 = vmatprep.subr.bf16.mxu0 0
    %6848 = vmatpush2.bf16.msra.mxu0 0
    %6849 = vmatprep.subr.bf16.mxu0 0
    %6850 = vmatpush2.bf16.msra.mxu0 0
    %6851 = vmatprep.subr.bf16.mxu0 0
    %6852 = vmatpush2.bf16.msra.mxu0 0
    %6853 = vmatprep.subr.bf16.mxu0 0
    %6854 = vmatpush2.bf16.msra.mxu0 0
    %6855 = vmatprep.subr.bf16.mxu0 0
    %6856 = vmatpush2.bf16.msra.mxu0 0
    %6857 = vmatprep.subr.bf16.mxu0 0
    %6858 = vmatpush2.bf16.msra.mxu0 0
    %6859 = vmatprep.subr.bf16.mxu0 0
    %6860 = vmatpush2.bf16.msra.mxu0 0
    %6861 = vmatprep.subr.bf16.mxu0 0
    %6862 = vmatpush2.bf16.msra.mxu0 0
    %6863 = vmatprep.mubr.bf16.mxu0 0
    %6864 = vmatmul.mubr.bf16.gmra.mxu0 %v6826
    %v6865 = vpop.f32.mrf.mxu0
    %v6866 = vadd.f32 0.0, %v6865
    %v6867 = vpop.f32.mrf.mxu0
    %v6868 = vpop.f32.mrf.mxu0
    %v6869 = vpop.f32.mrf.mxu0
    %6870 = vdwg.mxu0
    %6871 = vrot.lane.b32.xlu0 %v6264, 64
    %v6872 = vpop.permute.xlu0 %6871
    %v6874 = vsel %vm1255, %v6822, 0
    %v6877 = vsel %vm1283, %v6872, 0
    %6879 = vmatprep.subr.bf16.mxu0 0
    %6880 = vmatpush1.bf16.msra.mxu0 0
    %6881 = vmatprep.subr.bf16.mxu0 0
    %6882 = vmatpush1.bf16.msra.mxu0 0
    %6883 = vmatprep.subr.bf16.mxu0 0
    %6884 = vmatpush1.bf16.msra.mxu0 0
    %6885 = vmatprep.subr.bf16.mxu0 0
    %6886 = vmatpush1.bf16.msra.mxu0 0
    %6887 = vmatprep.subr.bf16.mxu0 0
    %6888 = vmatpush1.bf16.msra.mxu0 0
    %6889 = vmatprep.subr.bf16.mxu0 0
    %6890 = vmatpush1.bf16.msra.mxu0 0
    %6891 = vmatprep.subr.bf16.mxu0 0
    %6892 = vmatpush1.bf16.msra.mxu0 0
    %6893 = vmatprep.subr.bf16.mxu0 0
    %6894 = vmatpush1.bf16.msra.mxu0 %v6877
    %6895 = vmatprep.subr.bf16.mxu0 0
    %6896 = vmatpush2.bf16.msra.mxu0 0
    %6897 = vmatprep.subr.bf16.mxu0 0
    %6898 = vmatpush2.bf16.msra.mxu0 0
    %6899 = vmatprep.subr.bf16.mxu0 0
    %6900 = vmatpush2.bf16.msra.mxu0 0
    %6901 = vmatprep.subr.bf16.mxu0 0
    %6902 = vmatpush2.bf16.msra.mxu0 0
    %6903 = vmatprep.subr.bf16.mxu0 0
    %6904 = vmatpush2.bf16.msra.mxu0 0
    %6905 = vmatprep.subr.bf16.mxu0 0
    %6906 = vmatpush2.bf16.msra.mxu0 0
    %6907 = vmatprep.subr.bf16.mxu0 0
    %6908 = vmatpush2.bf16.msra.mxu0 0
    %6909 = vmatprep.subr.bf16.mxu0 0
    %6910 = vmatpush2.bf16.msra.mxu0 0
    %6911 = vmatprep.mubr.bf16.mxu0 0
    %6912 = vmatmul.mubr.bf16.gmra.mxu0 %v6874
    %v6913 = vpop.f32.mrf.mxu0
    %v6914 = vadd.f32 0.0, %v6913
    %v6915 = vpop.f32.mrf.mxu0
    %v6916 = vpop.f32.mrf.mxu0
    %v6917 = vpop.f32.mrf.mxu0
    %6918 = vdwg.mxu0
    %6919 = vrot.lane.b32.xlu0 %v6259, 32
    %v6920 = vpop.permute.xlu0 %6919
    %6921 = vrot.lane.b32.xlu0 %v6261, 32
    %v6922 = vpop.permute.xlu0 %6921
    %v6924 = vsel %vm1162, %v6920, 0
    %v6927 = vsel %vm1162, %v6922, 0
    %6929 = vmatprep.subr.bf16.mxu0 0
    %6930 = vmatpush1.bf16.xpose.msra.mxu0 0
    %6931 = vmatprep.subr.bf16.mxu0 0
    %6932 = vmatpush1.bf16.xpose.msra.mxu0 0
    %6933 = vmatprep.subr.bf16.mxu0 0
    %6934 = vmatpush1.bf16.xpose.msra.mxu0 0
    %6935 = vmatprep.subr.bf16.mxu0 0
    %6936 = vmatpush1.bf16.xpose.msra.mxu0 0
    %6937 = vmatprep.subr.bf16.mxu0 0
    %6938 = vmatpush1.bf16.xpose.msra.mxu0 0
    %6939 = vmatprep.subr.bf16.mxu0 0
    %6940 = vmatpush1.bf16.xpose.msra.mxu0 0
    %6941 = vmatprep.subr.bf16.mxu0 0
    %6942 = vmatpush1.bf16.xpose.msra.mxu0 0
    %6943 = vmatprep.subr.bf16.mxu0 0
    %6944 = vmatpush1.bf16.xpose.msra.mxu0 %v6927
    %6945 = vmatprep.subr.bf16.mxu0 0
    %6946 = vmatpush2.bf16.xpose.msra.mxu0 0
    %6947 = vmatprep.subr.bf16.mxu0 0
    %6948 = vmatpush2.bf16.xpose.msra.mxu0 0
    %6949 = vmatprep.subr.bf16.mxu0 0
    %6950 = vmatpush2.bf16.xpose.msra.mxu0 0
    %6951 = vmatprep.subr.bf16.mxu0 0
    %6952 = vmatpush2.bf16.xpose.msra.mxu0 0
    %6953 = vmatprep.subr.bf16.mxu0 0
    %6954 = vmatpush2.bf16.xpose.msra.mxu0 0
    %6955 = vmatprep.subr.bf16.mxu0 0
    %6956 = vmatpush2.bf16.xpose.msra.mxu0 0
    %6957 = vmatprep.subr.bf16.mxu0 0
    %6958 = vmatpush2.bf16.xpose.msra.mxu0 0
    %6959 = vmatprep.subr.bf16.mxu0 0
    %6960 = vmatpush2.bf16.xpose.msra.mxu0 0
    %6961 = vmatprep.mubr.bf16.mxu0 0
    %6962 = vmatmul.mubr.bf16.gmra.mxu0 %v6924
    %v6963 = vpop.f32.mrf.mxu0
    %v6964 = vadd.f32 0.0, %v6963
    %v6965 = vpop.f32.mrf.mxu0
    %v6966 = vpop.f32.mrf.mxu0
    %v6967 = vpop.f32.mrf.mxu0
    %6968 = vdwg.mxu0
    %6969 = vrot.lane.b32.xlu0 %v6260, 32
    %v6970 = vpop.permute.xlu0 %6969
    %6971 = vrot.lane.b32.xlu0 %v6262, 32
    %v6972 = vpop.permute.xlu0 %6971
    %v6974 = vsel %vm1162, %v6970, 0
    %v6977 = vsel %vm1162, %v6972, 0
    %6979 = vmatprep.subr.bf16.mxu0 0
    %6980 = vmatpush1.bf16.xpose.msra.mxu0 0
    %6981 = vmatprep.subr.bf16.mxu0 0
    %6982 = vmatpush1.bf16.xpose.msra.mxu0 0
    %6983 = vmatprep.subr.bf16.mxu0 0
    %6984 = vmatpush1.bf16.xpose.msra.mxu0 0
    %6985 = vmatprep.subr.bf16.mxu0 0
    %6986 = vmatpush1.bf16.xpose.msra.mxu0 0
    %6987 = vmatprep.subr.bf16.mxu0 0
    %6988 = vmatpush1.bf16.xpose.msra.mxu0 0
    %6989 = vmatprep.subr.bf16.mxu0 0
    %6990 = vmatpush1.bf16.xpose.msra.mxu0 0
    %6991 = vmatprep.subr.bf16.mxu0 0
    %6992 = vmatpush1.bf16.xpose.msra.mxu0 0
    %6993 = vmatprep.subr.bf16.mxu0 0
    %6994 = vmatpush1.bf16.xpose.msra.mxu0 %v6977
    %6995 = vmatprep.subr.bf16.mxu0 0
    %6996 = vmatpush2.bf16.xpose.msra.mxu0 0
    %6997 = vmatprep.subr.bf16.mxu0 0
    %6998 = vmatpush2.bf16.xpose.msra.mxu0 0
    %6999 = vmatprep.subr.bf16.mxu0 0
    %7000 = vmatpush2.bf16.xpose.msra.mxu0 0
    %7001 = vmatprep.subr.bf16.mxu0 0
    %7002 = vmatpush2.bf16.xpose.msra.mxu0 0
    %7003 = vmatprep.subr.bf16.mxu0 0
    %7004 = vmatpush2.bf16.xpose.msra.mxu0 0
    %7005 = vmatprep.subr.bf16.mxu0 0
    %7006 = vmatpush2.bf16.xpose.msra.mxu0 0
    %7007 = vmatprep.subr.bf16.mxu0 0
    %7008 = vmatpush2.bf16.xpose.msra.mxu0 0
    %7009 = vmatprep.subr.bf16.mxu0 0
    %7010 = vmatpush2.bf16.xpose.msra.mxu0 0
    %7011 = vmatprep.mubr.bf16.mxu0 0
    %7012 = vmatmul.mubr.bf16.gmra.mxu0 %v6974
    %v7013 = vpop.f32.mrf.mxu0
    %v7014 = vadd.f32 0.0, %v7013
    %v7015 = vpop.f32.mrf.mxu0
    %v7016 = vpop.f32.mrf.mxu0
    %v7017 = vpop.f32.mrf.mxu0
    %7018 = vdwg.mxu0
    %v7019 = vsel %vm1255, %v6964, -inf
    %7020 = vmax.xlane.f32.xlu0 %v7019
    %v7021 = vpop.xlane.xlu0 %7020
    %v7022 = vsel %vm1255, %v7014, -inf
    %7023 = vmax.xlane.f32.xlu0 %v7022
    %v7024 = vpop.xlane.xlu0 %7023
    %v7025 = vsub.f32 %v6964, %v7021
    %v7026 = vsub.f32 %v7014, %v7024
    %v7027 = vmul.f32 %v7025, 1.442695
    %v7028 = vpow.pop %v7027
    %v7029 = vmul.f32 %v7026, 1.442695
    %v7030 = vpow.pop %v7029
    %v7031 = vsel %vm1255, %v7028, 0.0
    %7032 = vadd.xlane.f32.xlu0 %v7031
    %v7033 = vpop.xlane.xlu0 %7032
    %v7034 = vsel %vm1255, %v7030, 0.0
    %7035 = vadd.xlane.f32.xlu0 %v7034
    %v7036 = vpop.xlane.xlu0 %7035
    %v7037 = vrcp.pop %v7033
    %v7038 = vmul.f32 %v7028, %v7037
    %v7039 = vrcp.pop %v7036
    %v7040 = vmul.f32 %v7030, %v7039
    %v7041 = vpack.c.bf16 %v7038, %v7038
    %v7042 = vpack.c.bf16 %v7040, %v7040
    %7043 = vrot.lane.b32.xlu0 %v6263, 32
    %v7044 = vpop.permute.xlu0 %7043
    %v7046 = vsel %vm1255, %v7041, 0
    %v7049 = vsel %vm1283, %v7044, 0
    %7051 = vmatprep.subr.bf16.mxu0 0
    %7052 = vmatpush1.bf16.msra.mxu0 0
    %7053 = vmatprep.subr.bf16.mxu0 0
    %7054 = vmatpush1.bf16.msra.mxu0 0
    %7055 = vmatprep.subr.bf16.mxu0 0
    %7056 = vmatpush1.bf16.msra.mxu0 0
    %7057 = vmatprep.subr.bf16.mxu0 0
    %7058 = vmatpush1.bf16.msra.mxu0 0
    %7059 = vmatprep.subr.bf16.mxu0 0
    %7060 = vmatpush1.bf16.msra.mxu0 0
    %7061 = vmatprep.subr.bf16.mxu0 0
    %7062 = vmatpush1.bf16.msra.mxu0 0
    %7063 = vmatprep.subr.bf16.mxu0 0
    %7064 = vmatpush1.bf16.msra.mxu0 0
    %7065 = vmatprep.subr.bf16.mxu0 0
    %7066 = vmatpush1.bf16.msra.mxu0 %v7049
    %7067 = vmatprep.subr.bf16.mxu0 0
    %7068 = vmatpush2.bf16.msra.mxu0 0
    %7069 = vmatprep.subr.bf16.mxu0 0
    %7070 = vmatpush2.bf16.msra.mxu0 0
    %7071 = vmatprep.subr.bf16.mxu0 0
    %7072 = vmatpush2.bf16.msra.mxu0 0
    %7073 = vmatprep.subr.bf16.mxu0 0
    %7074 = vmatpush2.bf16.msra.mxu0 0
    %7075 = vmatprep.subr.bf16.mxu0 0
    %7076 = vmatpush2.bf16.msra.mxu0 0
    %7077 = vmatprep.subr.bf16.mxu0 0
    %7078 = vmatpush2.bf16.msra.mxu0 0
    %7079 = vmatprep.subr.bf16.mxu0 0
    %7080 = vmatpush2.bf16.msra.mxu0 0
    %7081 = vmatprep.subr.bf16.mxu0 0
    %7082 = vmatpush2.bf16.msra.mxu0 0
    %7083 = vmatprep.mubr.bf16.mxu0 0
    %7084 = vmatmul.mubr.bf16.gmra.mxu0 %v7046
    %v7085 = vpop.f32.mrf.mxu0
    %v7086 = vadd.f32 0.0, %v7085
    %v7087 = vpop.f32.mrf.mxu0
    %v7088 = vpop.f32.mrf.mxu0
    %v7089 = vpop.f32.mrf.mxu0
    %7090 = vdwg.mxu0
    %7091 = vrot.lane.b32.xlu0 %v6264, 32
    %v7092 = vpop.permute.xlu0 %7091
    %v7094 = vsel %vm1255, %v7042, 0
    %v7097 = vsel %vm1283, %v7092, 0
    %7099 = vmatprep.subr.bf16.mxu0 0
    %7100 = vmatpush1.bf16.msra.mxu0 0
    %7101 = vmatprep.subr.bf16.mxu0 0
    %7102 = vmatpush1.bf16.msra.mxu0 0
    %7103 = vmatprep.subr.bf16.mxu0 0
    %7104 = vmatpush1.bf16.msra.mxu0 0
    %7105 = vmatprep.subr.bf16.mxu0 0
    %7106 = vmatpush1.bf16.msra.mxu0 0
    %7107 = vmatprep.subr.bf16.mxu0 0
    %7108 = vmatpush1.bf16.msra.mxu0 0
    %7109 = vmatprep.subr.bf16.mxu0 0
    %7110 = vmatpush1.bf16.msra.mxu0 0
    %7111 = vmatprep.subr.bf16.mxu0 0
    %7112 = vmatpush1.bf16.msra.mxu0 0
    %7113 = vmatprep.subr.bf16.mxu0 0
    %7114 = vmatpush1.bf16.msra.mxu0 %v7097
    %7115 = vmatprep.subr.bf16.mxu0 0
    %7116 = vmatpush2.bf16.msra.mxu0 0
    %7117 = vmatprep.subr.bf16.mxu0 0
    %7118 = vmatpush2.bf16.msra.mxu0 0
    %7119 = vmatprep.subr.bf16.mxu0 0
    %7120 = vmatpush2.bf16.msra.mxu0 0
    %7121 = vmatprep.subr.bf16.mxu0 0
    %7122 = vmatpush2.bf16.msra.mxu0 0
    %7123 = vmatprep.subr.bf16.mxu0 0
    %7124 = vmatpush2.bf16.msra.mxu0 0
    %7125 = vmatprep.subr.bf16.mxu0 0
    %7126 = vmatpush2.bf16.msra.mxu0 0
    %7127 = vmatprep.subr.bf16.mxu0 0
    %7128 = vmatpush2.bf16.msra.mxu0 0
    %7129 = vmatprep.subr.bf16.mxu0 0
    %7130 = vmatpush2.bf16.msra.mxu0 0
    %7131 = vmatprep.mubr.bf16.mxu0 0
    %7132 = vmatmul.mubr.bf16.gmra.mxu0 %v7094
    %v7133 = vpop.f32.mrf.mxu0
    %v7134 = vadd.f32 0.0, %v7133
    %v7135 = vpop.f32.mrf.mxu0
    %v7136 = vpop.f32.mrf.mxu0
    %v7137 = vpop.f32.mrf.mxu0
    %7138 = vdwg.mxu0
    %7141 = vrot.lane.b32.xlu0 %v5765, 32
    %v7142 = vpop.permute.xlu0 %7141
    %7143 = vrot.lane.b32.xlu0 %v5814, 32
    %v7144 = vpop.permute.xlu0 %7143
    %7149 = vrot.lane.b32.xlu0 %v5986, 64
    %v7150 = vpop.permute.xlu0 %7149
    %7151 = vrot.lane.b32.xlu0 %v6034, 64
    %v7152 = vpop.permute.xlu0 %7151
    %7157 = vrot.lane.b32.xlu0 %v6206, 96
    %v7158 = vpop.permute.xlu0 %7157
    %7159 = vrot.lane.b32.xlu0 %v6254, 96
    %v7160 = vpop.permute.xlu0 %7159
    %7165 = vrot.lane.b32.xlu0 %v6645, 32
    %v7166 = vpop.permute.xlu0 %7165
    %7167 = vrot.lane.b32.xlu0 %v6694, 32
    %v7168 = vpop.permute.xlu0 %7167
    %7173 = vrot.lane.b32.xlu0 %v6866, 64
    %v7174 = vpop.permute.xlu0 %7173
    %7175 = vrot.lane.b32.xlu0 %v6914, 64
    %v7176 = vpop.permute.xlu0 %7175
    %7181 = vrot.lane.b32.xlu0 %v7086, 96
    %v7182 = vpop.permute.xlu0 %7181
    %7183 = vrot.lane.b32.xlu0 %v7134, 96
    %v7184 = vpop.permute.xlu0 %7183
    %v7187 = vsel %vm1162, %v5542, %v7142
    %v7188 = vsel %vm1162, %v5588, %v7144
    %v7189 = vsel %vm2969, %v7187, %v7150
    %v7190 = vsel %vm2969, %v7188, %v7152
    %v7191 = vsel %vm2972, %v7189, %v7158
    %v7192 = vsel %vm2972, %v7190, %v7160
    %v7193 = vsel %vm1162, %v6422, %v7166
    %v7194 = vsel %vm1162, %v6468, %v7168
    %v7195 = vsel %vm2969, %v7193, %v7174
    %v7196 = vsel %vm2969, %v7194, %v7176
    %v7197 = vsel %vm2972, %v7195, %v7182
    %v7198 = vsel %vm2972, %v7196, %v7184
    %s7199 = scalar_lea.vmem [#allocation20], 128
    %v7200 = vld [vmem:[%s7199] sm:$0xff]
    %v7201 = vld [vmem:[%s7199 + $0x8] sm:$0xff]
    %v7202 = vld [vmem:[%s7199 + $0x10] sm:$0xff]
    %v7203 = vld [vmem:[%s7199 + $0x18] sm:$0xff]
    %v7204 = vld [vmem:[%s7199 + $0x20] sm:$0xff]
    %v7205 = vld [vmem:[%s7199 + $0x28] sm:$0xff]
    %v7206 = vld [vmem:[%s7199 + $0x30] sm:$0xff]
    %v7207 = vld [vmem:[%s7199 + $0x38] sm:$0xff]
    %v7208 = vld [vmem:[%s7199 + $0x40] sm:$0xff]
    %v7209 = vld [vmem:[%s7199 + $0x48] sm:$0xff]
    %v7210 = vld [vmem:[%s7199 + $0x50] sm:$0xff]
    %v7211 = vld [vmem:[%s7199 + $0x58] sm:$0xff]
    %v7212 = vld [vmem:[%s7199 + $0x60] sm:$0xff]
    %v7213 = vld [vmem:[%s7199 + $0x68] sm:$0xff]
    %v7214 = vld [vmem:[%s7199 + $0x70] sm:$0xff]
    %v7215 = vld [vmem:[%s7199 + $0x78] sm:$0xff]
    %s7216 = scalar_lea.vmem %s12, 2
    %v7217 = vld [vmem:[%s7216] sm:$0x3]
    %v7218 = vpack.c.bf16 %v7192, %v7191
    %v7219 = vpack.c.bf16 %v7198, %v7197
    %v7220 = vunpack.c.l.s8.bf16 %v7200
    %v7221 = vunpack.c.l.s8.bf16 %v7201
    %v7222 = vunpack.c.h.s8.bf16 %v7200
    %v7223 = vunpack.c.h.s8.bf16 %v7201
    %v7224 = vunpack.c.l.s8.bf16 %v7202
    %v7225 = vunpack.c.l.s8.bf16 %v7203
    %v7226 = vunpack.c.h.s8.bf16 %v7202
    %v7227 = vunpack.c.h.s8.bf16 %v7203
    %v7228 = vunpack.c.l.s8.bf16 %v7204
    %v7229 = vunpack.c.l.s8.bf16 %v7205
    %v7230 = vunpack.c.h.s8.bf16 %v7204
    %v7231 = vunpack.c.h.s8.bf16 %v7205
    %v7232 = vunpack.c.l.s8.bf16 %v7206
    %v7233 = vunpack.c.l.s8.bf16 %v7207
    %v7234 = vunpack.c.h.s8.bf16 %v7206
    %v7235 = vunpack.c.h.s8.bf16 %v7207
    %v7236 = vunpack.c.l.s8.bf16 %v7208
    %v7237 = vunpack.c.l.s8.bf16 %v7209
    %v7238 = vunpack.c.h.s8.bf16 %v7208
    %v7239 = vunpack.c.h.s8.bf16 %v7209
    %v7240 = vunpack.c.l.s8.bf16 %v7210
    %v7241 = vunpack.c.l.s8.bf16 %v7211
    %v7242 = vunpack.c.h.s8.bf16 %v7210
    %v7243 = vunpack.c.h.s8.bf16 %v7211
    %v7244 = vunpack.c.l.s8.bf16 %v7212
    %v7245 = vunpack.c.l.s8.bf16 %v7213
    %v7246 = vunpack.c.h.s8.bf16 %v7212
    %v7247 = vunpack.c.h.s8.bf16 %v7213
    %v7248 = vunpack.c.l.s8.bf16 %v7214
    %v7249 = vunpack.c.l.s8.bf16 %v7215
    %v7250 = vunpack.c.h.s8.bf16 %v7214
    %v7251 = vunpack.c.h.s8.bf16 %v7215
    %7252 = vmatprep.subr.bf16.mxu0 %v7235
    %7253 = vmatpush1.bf16.msra.mxu0 %v7234
    %7254 = vmatprep.subr.bf16.mxu0 %v7233
    %7255 = vmatpush1.bf16.msra.mxu0 %v7232
    %7256 = vmatprep.subr.bf16.mxu0 %v7231
    %7257 = vmatpush1.bf16.msra.mxu0 %v7230
    %7258 = vmatprep.subr.bf16.mxu0 %v7229
    %7259 = vmatpush1.bf16.msra.mxu0 %v7228
    %7260 = vmatprep.subr.bf16.mxu0 %v7227
    %7261 = vmatpush1.bf16.msra.mxu0 %v7226
    %7262 = vmatprep.subr.bf16.mxu0 %v7225
    %7263 = vmatpush1.bf16.msra.mxu0 %v7224
    %7264 = vmatprep.subr.bf16.mxu0 %v7223
    %7265 = vmatpush1.bf16.msra.mxu0 %v7222
    %7266 = vmatprep.subr.bf16.mxu0 %v7221
    %7267 = vmatpush1.bf16.msra.mxu0 %v7220
    %7268 = vmatprep.subr.bf16.mxu0 %v7251
    %7269 = vmatpush2.bf16.msra.mxu0 %v7250
    %7270 = vmatprep.subr.bf16.mxu0 %v7249
    %7271 = vmatpush2.bf16.msra.mxu0 %v7248
    %7272 = vmatprep.subr.bf16.mxu0 %v7247
    %7273 = vmatpush2.bf16.msra.mxu0 %v7246
    %7274 = vmatprep.subr.bf16.mxu0 %v7245
    %7275 = vmatpush2.bf16.msra.mxu0 %v7244
    %7276 = vmatprep.subr.bf16.mxu0 %v7243
    %7277 = vmatpush2.bf16.msra.mxu0 %v7242
    %7278 = vmatprep.subr.bf16.mxu0 %v7241
    %7279 = vmatpush2.bf16.msra.mxu0 %v7240
    %7280 = vmatprep.subr.bf16.mxu0 %v7239
    %7281 = vmatpush2.bf16.msra.mxu0 %v7238
    %7282 = vmatprep.subr.bf16.mxu0 %v7237
    %7283 = vmatpush2.bf16.msra.mxu0 %v7236
    %7284 = vmatprep.mubr.bf16.mxu0 %v7219
    %7285 = vmatmul.mubr.bf16.gmra.mxu0 %v7218
    %v7286 = vpop.f32.mrf.mxu0
    %v7287 = vadd.f32 0.0, %v7286
    %v7288 = vpop.f32.mrf.mxu0
    %v7289 = vadd.f32 0.0, %v7288
    %v7290 = vpop.f32.mrf.mxu0
    %v7291 = vadd.f32 0.0, %v7290
    %v7292 = vpop.f32.mrf.mxu0
    %v7293 = vadd.f32 0.0, %v7292
    %7294 = vdwg.mxu0
    %v7296 = vlaneseq
    %v7297 = vshrl.u32 %v7296, 7
    %v7298 = vsub.s32 0, %v7297
    %v7299 = vrot.slane %v7217, %v7298
    %v7300 = vlaneseq
    %v7301 = vshrl.u32 %v7300, 7
    %v7302 = vsub.s32 1, %v7301
    %v7303 = vrot.slane %v7217, %v7302
    %v7306 = vmul.f32 %v7287, %v7299
    %v7307 = vmul.f32 %v7289, %v7303
    %v7308 = vmul.f32 %v7291, %v7299
    %v7309 = vmul.f32 %v7293, %v7303
    %s7310 = scalar_lea.vmem [#allocation22], 2
    %v7311 = vld [vmem:[%s7310] sm:$0x3]
    %v7313 = vlaneseq
    %v7314 = vshrl.u32 %v7313, 7
    %v7315 = vsub.s32 0, %v7314
    %v7316 = vrot.slane %v7311, %v7315
    %v7317 = vlaneseq
    %v7318 = vshrl.u32 %v7317, 7
    %v7319 = vsub.s32 1, %v7318
    %v7320 = vrot.slane %v7311, %v7319
    %v7323 = vadd.f32 %v7306, %v7316
    %v7324 = vadd.f32 %v7307, %v7320
    %v7325 = vadd.f32 %v7308, %v7316
    %v7326 = vadd.f32 %v7309, %v7320
    %v7327 = vadd.f32 %v5009, %v7323
    %v7328 = vadd.f32 %v5010, %v7324
    %v7329 = vadd.f32 %v5011, %v7325
    %v7330 = vadd.f32 %v5012, %v7326
    %s7331 = scalar_lea.vmem [#allocation23], 2
    %v7332 = vld [vmem:[%s7331] sm:$0x3]
    %s7333 = scalar_lea.vmem [#allocation25], 2
    %v7334 = vld [vmem:[%s7333] sm:$0x3]
    %v7335 = vadd.f32 %v7327, %v7328
    %7336 = vadd.xlane.f32.xlu0 %v7335
    %v7337 = vpop.xlane.xlu0 %7336
    %v7338 = vadd.f32 %v7329, %v7330
    %7339 = vadd.xlane.f32.xlu0 %v7338
    %v7340 = vpop.xlane.xlu0 %7339
    %v7341 = vmul.f32 %v7337, %v3118
    %v7342 = vmul.f32 %v7340, %v3118
    %v7343 = vsub.f32 %v7327, %v7341
    %v7344 = vsub.f32 %v7328, %v7341
    %v7345 = vsub.f32 %v7329, %v7342
    %v7346 = vsub.f32 %v7330, %v7342
    %v7347 = vmul.f32 %v7343, %v7343
    %v7348 = vmul.f32 %v7344, %v7344
    %v7349 = vmul.f32 %v7345, %v7345
    %v7350 = vmul.f32 %v7346, %v7346
    %v7351 = vadd.f32 %v7347, %v7348
    %7352 = vadd.xlane.f32.xlu0 %v7351
    %v7353 = vpop.xlane.xlu0 %7352
    %v7354 = vadd.f32 %v7349, %v7350
    %7355 = vadd.xlane.f32.xlu0 %v7354
    %v7356 = vpop.xlane.xlu0 %7355
    %v7357 = vmul.f32 %v7353, %v3118
    %v7358 = vmul.f32 %v7356, %v3118
    %v7359 = vadd.f32 %v7357, 1e-05
    %v7360 = vadd.f32 %v7358, 1e-05
    %v7361 = vrsqrt.pop %v7359
    %v7362 = vrsqrt.pop %v7360
    %v7363 = vmul.f32 %v7343, %v7361
    %v7364 = vmul.f32 %v7344, %v7361
    %v7365 = vmul.f32 %v7345, %v7362
    %v7366 = vmul.f32 %v7346, %v7362
    %v7368 = vlaneseq
    %v7369 = vshrl.u32 %v7368, 7
    %v7370 = vsub.s32 0, %v7369
    %v7371 = vrot.slane %v7332, %v7370
    %v7372 = vlaneseq
    %v7373 = vshrl.u32 %v7372, 7
    %v7374 = vsub.s32 1, %v7373
    %v7375 = vrot.slane %v7332, %v7374
    %v7378 = vmul.f32 %v7363, %v7371
    %v7379 = vmul.f32 %v7364, %v7375
    %v7380 = vmul.f32 %v7365, %v7371
    %v7381 = vmul.f32 %v7366, %v7375
    %v7383 = vlaneseq
    %v7384 = vshrl.u32 %v7383, 7
    %v7385 = vsub.s32 0, %v7384
    %v7386 = vrot.slane %v7334, %v7385
    %v7387 = vlaneseq
    %v7388 = vshrl.u32 %v7387, 7
    %v7389 = vsub.s32 1, %v7388
    %v7390 = vrot.slane %v7334, %v7389
    %v7393 = vadd.f32 %v7378, %v7386
    %v7394 = vadd.f32 %v7379, %v7390
    %v7395 = vadd.f32 %v7380, %v7386
    %v7396 = vadd.f32 %v7381, %v7390
    %s7397 = scalar_lea.vmem [#allocation26], 1024
    %v7398 = vld [vmem:[%s7397] sm:$0xff]
    %v7399 = vld [vmem:[%s7397 + $0x8] sm:$0xff]
    %v7400 = vld [vmem:[%s7397 + $0x10] sm:$0xff]
    %v7401 = vld [vmem:[%s7397 + $0x18] sm:$0xff]
    %v7402 = vld [vmem:[%s7397 + $0x20] sm:$0xff]
    %v7403 = vld [vmem:[%s7397 + $0x28] sm:$0xff]
    %v7404 = vld [vmem:[%s7397 + $0x30] sm:$0xff]
    %v7405 = vld [vmem:[%s7397 + $0x38] sm:$0xff]
    %v7406 = vld [vmem:[%s7397 + $0x40] sm:$0xff]
    %v7407 = vld [vmem:[%s7397 + $0x48] sm:$0xff]
    %v7408 = vld [vmem:[%s7397 + $0x50] sm:$0xff]
    %v7409 = vld [vmem:[%s7397 + $0x58] sm:$0xff]
    %v7410 = vld [vmem:[%s7397 + $0x60] sm:$0xff]
    %v7411 = vld [vmem:[%s7397 + $0x68] sm:$0xff]
    %v7412 = vld [vmem:[%s7397 + $0x70] sm:$0xff]
    %v7413 = vld [vmem:[%s7397 + $0x78] sm:$0xff]
    %v7414 = vld [vmem:[%s7397 + $0x80] sm:$0xff]
    %v7415 = vld [vmem:[%s7397 + $0x88] sm:$0xff]
    %v7416 = vld [vmem:[%s7397 + $0x90] sm:$0xff]
    %v7417 = vld [vmem:[%s7397 + $0x98] sm:$0xff]
    %v7418 = vld [vmem:[%s7397 + $0xa0] sm:$0xff]
    %v7419 = vld [vmem:[%s7397 + $0xa8] sm:$0xff]
    %v7420 = vld [vmem:[%s7397 + $0xb0] sm:$0xff]
    %v7421 = vld [vmem:[%s7397 + $0xb8] sm:$0xff]
    %v7422 = vld [vmem:[%s7397 + $0xc0] sm:$0xff]
    %v7423 = vld [vmem:[%s7397 + $0xc8] sm:$0xff]
    %v7424 = vld [vmem:[%s7397 + $0xd0] sm:$0xff]
    %v7425 = vld [vmem:[%s7397 + $0xd8] sm:$0xff]
    %v7426 = vld [vmem:[%s7397 + $0xe0] sm:$0xff]
    %v7427 = vld [vmem:[%s7397 + $0xe8] sm:$0xff]
    %v7428 = vld [vmem:[%s7397 + $0xf0] sm:$0xff]
    %v7429 = vld [vmem:[%s7397 + $0xf8] sm:$0xff]
    %v7430 = vld [vmem:[%s7397 + $0x100] sm:$0xff]
    %v7431 = vld [vmem:[%s7397 + $0x108] sm:$0xff]
    %v7432 = vld [vmem:[%s7397 + $0x110] sm:$0xff]
    %v7433 = vld [vmem:[%s7397 + $0x118] sm:$0xff]
    %v7434 = vld [vmem:[%s7397 + $0x120] sm:$0xff]
    %v7435 = vld [vmem:[%s7397 + $0x128] sm:$0xff]
    %v7436 = vld [vmem:[%s7397 + $0x130] sm:$0xff]
    %v7437 = vld [vmem:[%s7397 + $0x138] sm:$0xff]
    %v7438 = vld [vmem:[%s7397 + $0x140] sm:$0xff]
    %v7439 = vld [vmem:[%s7397 + $0x148] sm:$0xff]
    %v7440 = vld [vmem:[%s7397 + $0x150] sm:$0xff]
    %v7441 = vld [vmem:[%s7397 + $0x158] sm:$0xff]
    %v7442 = vld [vmem:[%s7397 + $0x160] sm:$0xff]
    %v7443 = vld [vmem:[%s7397 + $0x168] sm:$0xff]
    %v7444 = vld [vmem:[%s7397 + $0x170] sm:$0xff]
    %v7445 = vld [vmem:[%s7397 + $0x178] sm:$0xff]
    %v7446 = vld [vmem:[%s7397 + $0x180] sm:$0xff]
    %v7447 = vld [vmem:[%s7397 + $0x188] sm:$0xff]
    %v7448 = vld [vmem:[%s7397 + $0x190] sm:$0xff]
    %v7449 = vld [vmem:[%s7397 + $0x198] sm:$0xff]
    %v7450 = vld [vmem:[%s7397 + $0x1a0] sm:$0xff]
    %v7451 = vld [vmem:[%s7397 + $0x1a8] sm:$0xff]
    %v7452 = vld [vmem:[%s7397 + $0x1b0] sm:$0xff]
    %v7453 = vld [vmem:[%s7397 + $0x1b8] sm:$0xff]
    %v7454 = vld [vmem:[%s7397 + $0x1c0] sm:$0xff]
    %v7455 = vld [vmem:[%s7397 + $0x1c8] sm:$0xff]
    %v7456 = vld [vmem:[%s7397 + $0x1d0] sm:$0xff]
    %v7457 = vld [vmem:[%s7397 + $0x1d8] sm:$0xff]
    %v7458 = vld [vmem:[%s7397 + $0x1e0] sm:$0xff]
    %v7459 = vld [vmem:[%s7397 + $0x1e8] sm:$0xff]
    %v7460 = vld [vmem:[%s7397 + $0x1f0] sm:$0xff]
    %v7461 = vld [vmem:[%s7397 + $0x1f8] sm:$0xff]
    %v7462 = vld [vmem:[%s7397 + $0x200] sm:$0xff]
    %v7463 = vld [vmem:[%s7397 + $0x208] sm:$0xff]
    %v7464 = vld [vmem:[%s7397 + $0x210] sm:$0xff]
    %v7465 = vld [vmem:[%s7397 + $0x218] sm:$0xff]
    %v7466 = vld [vmem:[%s7397 + $0x220] sm:$0xff]
    %v7467 = vld [vmem:[%s7397 + $0x228] sm:$0xff]
    %v7468 = vld [vmem:[%s7397 + $0x230] sm:$0xff]
    %v7469 = vld [vmem:[%s7397 + $0x238] sm:$0xff]
    %v7470 = vld [vmem:[%s7397 + $0x240] sm:$0xff]
    %v7471 = vld [vmem:[%s7397 + $0x248] sm:$0xff]
    %v7472 = vld [vmem:[%s7397 + $0x250] sm:$0xff]
    %v7473 = vld [vmem:[%s7397 + $0x258] sm:$0xff]
    %v7474 = vld [vmem:[%s7397 + $0x260] sm:$0xff]
    %v7475 = vld [vmem:[%s7397 + $0x268] sm:$0xff]
    %v7476 = vld [vmem:[%s7397 + $0x270] sm:$0xff]
    %v7477 = vld [vmem:[%s7397 + $0x278] sm:$0xff]
    %v7478 = vld [vmem:[%s7397 + $0x280] sm:$0xff]
    %v7479 = vld [vmem:[%s7397 + $0x288] sm:$0xff]
    %v7480 = vld [vmem:[%s7397 + $0x290] sm:$0xff]
    %v7481 = vld [vmem:[%s7397 + $0x298] sm:$0xff]
    %v7482 = vld [vmem:[%s7397 + $0x2a0] sm:$0xff]
    %v7483 = vld [vmem:[%s7397 + $0x2a8] sm:$0xff]
    %v7484 = vld [vmem:[%s7397 + $0x2b0] sm:$0xff]
    %v7485 = vld [vmem:[%s7397 + $0x2b8] sm:$0xff]
    %v7486 = vld [vmem:[%s7397 + $0x2c0] sm:$0xff]
    %v7487 = vld [vmem:[%s7397 + $0x2c8] sm:$0xff]
    %v7488 = vld [vmem:[%s7397 + $0x2d0] sm:$0xff]
    %v7489 = vld [vmem:[%s7397 + $0x2d8] sm:$0xff]
    %v7490 = vld [vmem:[%s7397 + $0x2e0] sm:$0xff]
    %v7491 = vld [vmem:[%s7397 + $0x2e8] sm:$0xff]
    %v7492 = vld [vmem:[%s7397 + $0x2f0] sm:$0xff]
    %v7493 = vld [vmem:[%s7397 + $0x2f8] sm:$0xff]
    %v7494 = vld [vmem:[%s7397 + $0x300] sm:$0xff]
    %v7495 = vld [vmem:[%s7397 + $0x308] sm:$0xff]
    %v7496 = vld [vmem:[%s7397 + $0x310] sm:$0xff]
    %v7497 = vld [vmem:[%s7397 + $0x318] sm:$0xff]
    %v7498 = vld [vmem:[%s7397 + $0x320] sm:$0xff]
    %v7499 = vld [vmem:[%s7397 + $0x328] sm:$0xff]
    %v7500 = vld [vmem:[%s7397 + $0x330] sm:$0xff]
    %v7501 = vld [vmem:[%s7397 + $0x338] sm:$0xff]
    %v7502 = vld [vmem:[%s7397 + $0x340] sm:$0xff]
    %v7503 = vld [vmem:[%s7397 + $0x348] sm:$0xff]
    %v7504 = vld [vmem:[%s7397 + $0x350] sm:$0xff]
    %v7505 = vld [vmem:[%s7397 + $0x358] sm:$0xff]
    %v7506 = vld [vmem:[%s7397 + $0x360] sm:$0xff]
    %v7507 = vld [vmem:[%s7397 + $0x368] sm:$0xff]
    %v7508 = vld [vmem:[%s7397 + $0x370] sm:$0xff]
    %v7509 = vld [vmem:[%s7397 + $0x378] sm:$0xff]
    %v7510 = vld [vmem:[%s7397 + $0x380] sm:$0xff]
    %v7511 = vld [vmem:[%s7397 + $0x388] sm:$0xff]
    %v7512 = vld [vmem:[%s7397 + $0x390] sm:$0xff]
    %v7513 = vld [vmem:[%s7397 + $0x398] sm:$0xff]
    %v7514 = vld [vmem:[%s7397 + $0x3a0] sm:$0xff]
    %v7515 = vld [vmem:[%s7397 + $0x3a8] sm:$0xff]
    %v7516 = vld [vmem:[%s7397 + $0x3b0] sm:$0xff]
    %v7517 = vld [vmem:[%s7397 + $0x3b8] sm:$0xff]
    %v7518 = vld [vmem:[%s7397 + $0x3c0] sm:$0xff]
    %v7519 = vld [vmem:[%s7397 + $0x3c8] sm:$0xff]
    %v7520 = vld [vmem:[%s7397 + $0x3d0] sm:$0xff]
    %v7521 = vld [vmem:[%s7397 + $0x3d8] sm:$0xff]
    %v7522 = vld [vmem:[%s7397 + $0x3e0] sm:$0xff]
    %v7523 = vld [vmem:[%s7397 + $0x3e8] sm:$0xff]
    %v7524 = vld [vmem:[%s7397 + $0x3f0] sm:$0xff]
    %v7525 = vld [vmem:[%s7397 + $0x3f8] sm:$0xff]
    %s7526 = scalar_lea.vmem %s17, 16
    %v7527 = vld [vmem:[%s7526] sm:$0xff]
    %v7528 = vld [vmem:[%s7526 + $0x8] sm:$0xff]
    %v7529 = vpack.c.bf16 %v7395, %v7393
    %v7530 = vpack.c.bf16 %v7396, %v7394
    %v7531 = vunpack.c.l.s8.bf16 %v7398
    %v7532 = vunpack.c.l.s8.bf16 %v7399
    %v7533 = vunpack.c.l.s8.bf16 %v7400
    %v7534 = vunpack.c.l.s8.bf16 %v7401
    %v7535 = vunpack.c.l.s8.bf16 %v7402
    %v7536 = vunpack.c.l.s8.bf16 %v7403
    %v7537 = vunpack.c.l.s8.bf16 %v7404
    %v7538 = vunpack.c.l.s8.bf16 %v7405
    %v7539 = vunpack.c.l.s8.bf16 %v7406
    %v7540 = vunpack.c.l.s8.bf16 %v7407
    %v7541 = vunpack.c.l.s8.bf16 %v7408
    %v7542 = vunpack.c.l.s8.bf16 %v7409
    %v7543 = vunpack.c.l.s8.bf16 %v7410
    %v7544 = vunpack.c.l.s8.bf16 %v7411
    %v7545 = vunpack.c.l.s8.bf16 %v7412
    %v7546 = vunpack.c.l.s8.bf16 %v7413
    %v7547 = vunpack.c.h.s8.bf16 %v7398
    %v7548 = vunpack.c.h.s8.bf16 %v7399
    %v7549 = vunpack.c.h.s8.bf16 %v7400
    %v7550 = vunpack.c.h.s8.bf16 %v7401
    %v7551 = vunpack.c.h.s8.bf16 %v7402
    %v7552 = vunpack.c.h.s8.bf16 %v7403
    %v7553 = vunpack.c.h.s8.bf16 %v7404
    %v7554 = vunpack.c.h.s8.bf16 %v7405
    %v7555 = vunpack.c.h.s8.bf16 %v7406
    %v7556 = vunpack.c.h.s8.bf16 %v7407
    %v7557 = vunpack.c.h.s8.bf16 %v7408
    %v7558 = vunpack.c.h.s8.bf16 %v7409
    %v7559 = vunpack.c.h.s8.bf16 %v7410
    %v7560 = vunpack.c.h.s8.bf16 %v7411
    %v7561 = vunpack.c.h.s8.bf16 %v7412
    %v7562 = vunpack.c.h.s8.bf16 %v7413
    %v7563 = vunpack.c.l.s8.bf16 %v7414
    %v7564 = vunpack.c.l.s8.bf16 %v7415
    %v7565 = vunpack.c.l.s8.bf16 %v7416
    %v7566 = vunpack.c.l.s8.bf16 %v7417
    %v7567 = vunpack.c.l.s8.bf16 %v7418
    %v7568 = vunpack.c.l.s8.bf16 %v7419
    %v7569 = vunpack.c.l.s8.bf16 %v7420
    %v7570 = vunpack.c.l.s8.bf16 %v7421
    %v7571 = vunpack.c.l.s8.bf16 %v7422
    %v7572 = vunpack.c.l.s8.bf16 %v7423
    %v7573 = vunpack.c.l.s8.bf16 %v7424
    %v7574 = vunpack.c.l.s8.bf16 %v7425
    %v7575 = vunpack.c.l.s8.bf16 %v7426
    %v7576 = vunpack.c.l.s8.bf16 %v7427
    %v7577 = vunpack.c.l.s8.bf16 %v7428
    %v7578 = vunpack.c.l.s8.bf16 %v7429
    %v7579 = vunpack.c.h.s8.bf16 %v7414
    %v7580 = vunpack.c.h.s8.bf16 %v7415
    %v7581 = vunpack.c.h.s8.bf16 %v7416
    %v7582 = vunpack.c.h.s8.bf16 %v7417
    %v7583 = vunpack.c.h.s8.bf16 %v7418
    %v7584 = vunpack.c.h.s8.bf16 %v7419
    %v7585 = vunpack.c.h.s8.bf16 %v7420
    %v7586 = vunpack.c.h.s8.bf16 %v7421
    %v7587 = vunpack.c.h.s8.bf16 %v7422
    %v7588 = vunpack.c.h.s8.bf16 %v7423
    %v7589 = vunpack.c.h.s8.bf16 %v7424
    %v7590 = vunpack.c.h.s8.bf16 %v7425
    %v7591 = vunpack.c.h.s8.bf16 %v7426
    %v7592 = vunpack.c.h.s8.bf16 %v7427
    %v7593 = vunpack.c.h.s8.bf16 %v7428
    %v7594 = vunpack.c.h.s8.bf16 %v7429
    %v7595 = vunpack.c.l.s8.bf16 %v7430
    %v7596 = vunpack.c.l.s8.bf16 %v7431
    %v7597 = vunpack.c.l.s8.bf16 %v7432
    %v7598 = vunpack.c.l.s8.bf16 %v7433
    %v7599 = vunpack.c.l.s8.bf16 %v7434
    %v7600 = vunpack.c.l.s8.bf16 %v7435
    %v7601 = vunpack.c.l.s8.bf16 %v7436
    %v7602 = vunpack.c.l.s8.bf16 %v7437
    %v7603 = vunpack.c.l.s8.bf16 %v7438
    %v7604 = vunpack.c.l.s8.bf16 %v7439
    %v7605 = vunpack.c.l.s8.bf16 %v7440
    %v7606 = vunpack.c.l.s8.bf16 %v7441
    %v7607 = vunpack.c.l.s8.bf16 %v7442
    %v7608 = vunpack.c.l.s8.bf16 %v7443
    %v7609 = vunpack.c.l.s8.bf16 %v7444
    %v7610 = vunpack.c.l.s8.bf16 %v7445
    %v7611 = vunpack.c.h.s8.bf16 %v7430
    %v7612 = vunpack.c.h.s8.bf16 %v7431
    %v7613 = vunpack.c.h.s8.bf16 %v7432
    %v7614 = vunpack.c.h.s8.bf16 %v7433
    %v7615 = vunpack.c.h.s8.bf16 %v7434
    %v7616 = vunpack.c.h.s8.bf16 %v7435
    %v7617 = vunpack.c.h.s8.bf16 %v7436
    %v7618 = vunpack.c.h.s8.bf16 %v7437
    %v7619 = vunpack.c.h.s8.bf16 %v7438
    %v7620 = vunpack.c.h.s8.bf16 %v7439
    %v7621 = vunpack.c.h.s8.bf16 %v7440
    %v7622 = vunpack.c.h.s8.bf16 %v7441
    %v7623 = vunpack.c.h.s8.bf16 %v7442
    %v7624 = vunpack.c.h.s8.bf16 %v7443
    %v7625 = vunpack.c.h.s8.bf16 %v7444
    %v7626 = vunpack.c.h.s8.bf16 %v7445
    %v7627 = vunpack.c.l.s8.bf16 %v7446
    %v7628 = vunpack.c.l.s8.bf16 %v7447
    %v7629 = vunpack.c.l.s8.bf16 %v7448
    %v7630 = vunpack.c.l.s8.bf16 %v7449
    %v7631 = vunpack.c.l.s8.bf16 %v7450
    %v7632 = vunpack.c.l.s8.bf16 %v7451
    %v7633 = vunpack.c.l.s8.bf16 %v7452
    %v7634 = vunpack.c.l.s8.bf16 %v7453
    %v7635 = vunpack.c.l.s8.bf16 %v7454
    %v7636 = vunpack.c.l.s8.bf16 %v7455
    %v7637 = vunpack.c.l.s8.bf16 %v7456
    %v7638 = vunpack.c.l.s8.bf16 %v7457
    %v7639 = vunpack.c.l.s8.bf16 %v7458
    %v7640 = vunpack.c.l.s8.bf16 %v7459
    %v7641 = vunpack.c.l.s8.bf16 %v7460
    %v7642 = vunpack.c.l.s8.bf16 %v7461
    %v7643 = vunpack.c.h.s8.bf16 %v7446
    %v7644 = vunpack.c.h.s8.bf16 %v7447
    %v7645 = vunpack.c.h.s8.bf16 %v7448
    %v7646 = vunpack.c.h.s8.bf16 %v7449
    %v7647 = vunpack.c.h.s8.bf16 %v7450
    %v7648 = vunpack.c.h.s8.bf16 %v7451
    %v7649 = vunpack.c.h.s8.bf16 %v7452
    %v7650 = vunpack.c.h.s8.bf16 %v7453
    %v7651 = vunpack.c.h.s8.bf16 %v7454
    %v7652 = vunpack.c.h.s8.bf16 %v7455
    %v7653 = vunpack.c.h.s8.bf16 %v7456
    %v7654 = vunpack.c.h.s8.bf16 %v7457
    %v7655 = vunpack.c.h.s8.bf16 %v7458
    %v7656 = vunpack.c.h.s8.bf16 %v7459
    %v7657 = vunpack.c.h.s8.bf16 %v7460
    %v7658 = vunpack.c.h.s8.bf16 %v7461
    %v7659 = vunpack.c.l.s8.bf16 %v7462
    %v7660 = vunpack.c.l.s8.bf16 %v7463
    %v7661 = vunpack.c.l.s8.bf16 %v7464
    %v7662 = vunpack.c.l.s8.bf16 %v7465
    %v7663 = vunpack.c.l.s8.bf16 %v7466
    %v7664 = vunpack.c.l.s8.bf16 %v7467
    %v7665 = vunpack.c.l.s8.bf16 %v7468
    %v7666 = vunpack.c.l.s8.bf16 %v7469
    %v7667 = vunpack.c.l.s8.bf16 %v7470
    %v7668 = vunpack.c.l.s8.bf16 %v7471
    %v7669 = vunpack.c.l.s8.bf16 %v7472
    %v7670 = vunpack.c.l.s8.bf16 %v7473
    %v7671 = vunpack.c.l.s8.bf16 %v7474
    %v7672 = vunpack.c.l.s8.bf16 %v7475
    %v7673 = vunpack.c.l.s8.bf16 %v7476
    %v7674 = vunpack.c.l.s8.bf16 %v7477
    %v7675 = vunpack.c.h.s8.bf16 %v7462
    %v7676 = vunpack.c.h.s8.bf16 %v7463
    %v7677 = vunpack.c.h.s8.bf16 %v7464
    %v7678 = vunpack.c.h.s8.bf16 %v7465
    %v7679 = vunpack.c.h.s8.bf16 %v7466
    %v7680 = vunpack.c.h.s8.bf16 %v7467
    %v7681 = vunpack.c.h.s8.bf16 %v7468
    %v7682 = vunpack.c.h.s8.bf16 %v7469
    %v7683 = vunpack.c.h.s8.bf16 %v7470
    %v7684 = vunpack.c.h.s8.bf16 %v7471
    %v7685 = vunpack.c.h.s8.bf16 %v7472
    %v7686 = vunpack.c.h.s8.bf16 %v7473
    %v7687 = vunpack.c.h.s8.bf16 %v7474
    %v7688 = vunpack.c.h.s8.bf16 %v7475
    %v7689 = vunpack.c.h.s8.bf16 %v7476
    %v7690 = vunpack.c.h.s8.bf16 %v7477
    %v7691 = vunpack.c.l.s8.bf16 %v7478
    %v7692 = vunpack.c.l.s8.bf16 %v7479
    %v7693 = vunpack.c.l.s8.bf16 %v7480
    %v7694 = vunpack.c.l.s8.bf16 %v7481
    %v7695 = vunpack.c.l.s8.bf16 %v7482
    %v7696 = vunpack.c.l.s8.bf16 %v7483
    %v7697 = vunpack.c.l.s8.bf16 %v7484
    %v7698 = vunpack.c.l.s8.bf16 %v7485
    %v7699 = vunpack.c.l.s8.bf16 %v7486
    %v7700 = vunpack.c.l.s8.bf16 %v7487
    %v7701 = vunpack.c.l.s8.bf16 %v7488
    %v7702 = vunpack.c.l.s8.bf16 %v7489
    %v7703 = vunpack.c.l.s8.bf16 %v7490
    %v7704 = vunpack.c.l.s8.bf16 %v7491
    %v7705 = vunpack.c.l.s8.bf16 %v7492
    %v7706 = vunpack.c.l.s8.bf16 %v7493
    %v7707 = vunpack.c.h.s8.bf16 %v7478
    %v7708 = vunpack.c.h.s8.bf16 %v7479
    %v7709 = vunpack.c.h.s8.bf16 %v7480
    %v7710 = vunpack.c.h.s8.bf16 %v7481
    %v7711 = vunpack.c.h.s8.bf16 %v7482
    %v7712 = vunpack.c.h.s8.bf16 %v7483
    %v7713 = vunpack.c.h.s8.bf16 %v7484
    %v7714 = vunpack.c.h.s8.bf16 %v7485
    %v7715 = vunpack.c.h.s8.bf16 %v7486
    %v7716 = vunpack.c.h.s8.bf16 %v7487
    %v7717 = vunpack.c.h.s8.bf16 %v7488
    %v7718 = vunpack.c.h.s8.bf16 %v7489
    %v7719 = vunpack.c.h.s8.bf16 %v7490
    %v7720 = vunpack.c.h.s8.bf16 %v7491
    %v7721 = vunpack.c.h.s8.bf16 %v7492
    %v7722 = vunpack.c.h.s8.bf16 %v7493
    %v7723 = vunpack.c.l.s8.bf16 %v7494
    %v7724 = vunpack.c.l.s8.bf16 %v7495
    %v7725 = vunpack.c.l.s8.bf16 %v7496
    %v7726 = vunpack.c.l.s8.bf16 %v7497
    %v7727 = vunpack.c.l.s8.bf16 %v7498
    %v7728 = vunpack.c.l.s8.bf16 %v7499
    %v7729 = vunpack.c.l.s8.bf16 %v7500
    %v7730 = vunpack.c.l.s8.bf16 %v7501
    %v7731 = vunpack.c.l.s8.bf16 %v7502
    %v7732 = vunpack.c.l.s8.bf16 %v7503
    %v7733 = vunpack.c.l.s8.bf16 %v7504
    %v7734 = vunpack.c.l.s8.bf16 %v7505
    %v7735 = vunpack.c.l.s8.bf16 %v7506
    %v7736 = vunpack.c.l.s8.bf16 %v7507
    %v7737 = vunpack.c.l.s8.bf16 %v7508
    %v7738 = vunpack.c.l.s8.bf16 %v7509
    %v7739 = vunpack.c.h.s8.bf16 %v7494
    %v7740 = vunpack.c.h.s8.bf16 %v7495
    %v7741 = vunpack.c.h.s8.bf16 %v7496
    %v7742 = vunpack.c.h.s8.bf16 %v7497
    %v7743 = vunpack.c.h.s8.bf16 %v7498
    %v7744 = vunpack.c.h.s8.bf16 %v7499
    %v7745 = vunpack.c.h.s8.bf16 %v7500
    %v7746 = vunpack.c.h.s8.bf16 %v7501
    %v7747 = vunpack.c.h.s8.bf16 %v7502
    %v7748 = vunpack.c.h.s8.bf16 %v7503
    %v7749 = vunpack.c.h.s8.bf16 %v7504
    %v7750 = vunpack.c.h.s8.bf16 %v7505
    %v7751 = vunpack.c.h.s8.bf16 %v7506
    %v7752 = vunpack.c.h.s8.bf16 %v7507
    %v7753 = vunpack.c.h.s8.bf16 %v7508
    %v7754 = vunpack.c.h.s8.bf16 %v7509
    %v7755 = vunpack.c.l.s8.bf16 %v7510
    %v7756 = vunpack.c.l.s8.bf16 %v7511
    %v7757 = vunpack.c.l.s8.bf16 %v7512
    %v7758 = vunpack.c.l.s8.bf16 %v7513
    %v7759 = vunpack.c.l.s8.bf16 %v7514
    %v7760 = vunpack.c.l.s8.bf16 %v7515
    %v7761 = vunpack.c.l.s8.bf16 %v7516
    %v7762 = vunpack.c.l.s8.bf16 %v7517
    %v7763 = vunpack.c.l.s8.bf16 %v7518
    %v7764 = vunpack.c.l.s8.bf16 %v7519
    %v7765 = vunpack.c.l.s8.bf16 %v7520
    %v7766 = vunpack.c.l.s8.bf16 %v7521
    %v7767 = vunpack.c.l.s8.bf16 %v7522
    %v7768 = vunpack.c.l.s8.bf16 %v7523
    %v7769 = vunpack.c.l.s8.bf16 %v7524
    %v7770 = vunpack.c.l.s8.bf16 %v7525
    %v7771 = vunpack.c.h.s8.bf16 %v7510
    %v7772 = vunpack.c.h.s8.bf16 %v7511
    %v7773 = vunpack.c.h.s8.bf16 %v7512
    %v7774 = vunpack.c.h.s8.bf16 %v7513
    %v7775 = vunpack.c.h.s8.bf16 %v7514
    %v7776 = vunpack.c.h.s8.bf16 %v7515
    %v7777 = vunpack.c.h.s8.bf16 %v7516
    %v7778 = vunpack.c.h.s8.bf16 %v7517
    %v7779 = vunpack.c.h.s8.bf16 %v7518
    %v7780 = vunpack.c.h.s8.bf16 %v7519
    %v7781 = vunpack.c.h.s8.bf16 %v7520
    %v7782 = vunpack.c.h.s8.bf16 %v7521
    %v7783 = vunpack.c.h.s8.bf16 %v7522
    %v7784 = vunpack.c.h.s8.bf16 %v7523
    %v7785 = vunpack.c.h.s8.bf16 %v7524
    %v7786 = vunpack.c.h.s8.bf16 %v7525
    %7787 = vmatprep.subr.bf16.mxu0 %v7644
    %7788 = vmatpush1.bf16.msra.mxu0 %v7643
    %7789 = vmatprep.subr.bf16.mxu0 %v7628
    %7790 = vmatpush1.bf16.msra.mxu0 %v7627
    %7791 = vmatprep.subr.bf16.mxu0 %v7612
    %7792 = vmatpush1.bf16.msra.mxu0 %v7611
    %7793 = vmatprep.subr.bf16.mxu0 %v7596
    %7794 = vmatpush1.bf16.msra.mxu0 %v7595
    %7795 = vmatprep.subr.bf16.mxu0 %v7580
    %7796 = vmatpush1.bf16.msra.mxu0 %v7579
    %7797 = vmatprep.subr.bf16.mxu0 %v7564
    %7798 = vmatpush1.bf16.msra.mxu0 %v7563
    %7799 = vmatprep.subr.bf16.mxu0 %v7548
    %7800 = vmatpush1.bf16.msra.mxu0 %v7547
    %7801 = vmatprep.subr.bf16.mxu0 %v7532
    %7802 = vmatpush1.bf16.msra.mxu0 %v7531
    %7803 = vmatprep.subr.bf16.mxu0 %v7772
    %7804 = vmatpush2.bf16.msra.mxu0 %v7771
    %7805 = vmatprep.subr.bf16.mxu0 %v7756
    %7806 = vmatpush2.bf16.msra.mxu0 %v7755
    %7807 = vmatprep.subr.bf16.mxu0 %v7740
    %7808 = vmatpush2.bf16.msra.mxu0 %v7739
    %7809 = vmatprep.subr.bf16.mxu0 %v7724
    %7810 = vmatpush2.bf16.msra.mxu0 %v7723
    %7811 = vmatprep.subr.bf16.mxu0 %v7708
    %7812 = vmatpush2.bf16.msra.mxu0 %v7707
    %7813 = vmatprep.subr.bf16.mxu0 %v7692
    %7814 = vmatpush2.bf16.msra.mxu0 %v7691
    %7815 = vmatprep.subr.bf16.mxu0 %v7676
    %7816 = vmatpush2.bf16.msra.mxu0 %v7675
    %7817 = vmatprep.subr.bf16.mxu0 %v7660
    %7818 = vmatpush2.bf16.msra.mxu0 %v7659
    %7819 = vmatprep.mubr.bf16.mxu0 %v7530
    %7820 = vmatmul.mubr.bf16.gmra.mxu0 %v7529
    %v7821 = vpop.f32.mrf.mxu0
    %v7822 = vadd.f32 0.0, %v7821
    %v7823 = vpop.f32.mrf.mxu0
    %v7824 = vadd.f32 0.0, %v7823
    %v7825 = vpop.f32.mrf.mxu0
    %v7826 = vadd.f32 0.0, %v7825
    %v7827 = vpop.f32.mrf.mxu0
    %v7828 = vadd.f32 0.0, %v7827
    %7829 = vdwg.mxu0
    %7830 = vmatprep.subr.bf16.mxu0 %v7646
    %7831 = vmatpush1.bf16.msra.mxu0 %v7645
    %7832 = vmatprep.subr.bf16.mxu0 %v7630
    %7833 = vmatpush1.bf16.msra.mxu0 %v7629
    %7834 = vmatprep.subr.bf16.mxu0 %v7614
    %7835 = vmatpush1.bf16.msra.mxu0 %v7613
    %7836 = vmatprep.subr.bf16.mxu0 %v7598
    %7837 = vmatpush1.bf16.msra.mxu0 %v7597
    %7838 = vmatprep.subr.bf16.mxu0 %v7582
    %7839 = vmatpush1.bf16.msra.mxu0 %v7581
    %7840 = vmatprep.subr.bf16.mxu0 %v7566
    %7841 = vmatpush1.bf16.msra.mxu0 %v7565
    %7842 = vmatprep.subr.bf16.mxu0 %v7550
    %7843 = vmatpush1.bf16.msra.mxu0 %v7549
    %7844 = vmatprep.subr.bf16.mxu0 %v7534
    %7845 = vmatpush1.bf16.msra.mxu0 %v7533
    %7846 = vmatprep.subr.bf16.mxu0 %v7774
    %7847 = vmatpush2.bf16.msra.mxu0 %v7773
    %7848 = vmatprep.subr.bf16.mxu0 %v7758
    %7849 = vmatpush2.bf16.msra.mxu0 %v7757
    %7850 = vmatprep.subr.bf16.mxu0 %v7742
    %7851 = vmatpush2.bf16.msra.mxu0 %v7741
    %7852 = vmatprep.subr.bf16.mxu0 %v7726
    %7853 = vmatpush2.bf16.msra.mxu0 %v7725
    %7854 = vmatprep.subr.bf16.mxu0 %v7710
    %7855 = vmatpush2.bf16.msra.mxu0 %v7709
    %7856 = vmatprep.subr.bf16.mxu0 %v7694
    %7857 = vmatpush2.bf16.msra.mxu0 %v7693
    %7858 = vmatprep.subr.bf16.mxu0 %v7678
    %7859 = vmatpush2.bf16.msra.mxu0 %v7677
    %7860 = vmatprep.subr.bf16.mxu0 %v7662
    %7861 = vmatpush2.bf16.msra.mxu0 %v7661
    %7862 = vmatprep.mubr.bf16.mxu0 %v7530
    %7863 = vmatmul.mubr.bf16.gmra.mxu0 %v7529
    %v7864 = vpop.f32.mrf.mxu0
    %v7865 = vadd.f32 0.0, %v7864
    %v7866 = vpop.f32.mrf.mxu0
    %v7867 = vadd.f32 0.0, %v7866
    %v7868 = vpop.f32.mrf.mxu0
    %v7869 = vadd.f32 0.0, %v7868
    %v7870 = vpop.f32.mrf.mxu0
    %v7871 = vadd.f32 0.0, %v7870
    %7872 = vdwg.mxu0
    %7873 = vmatprep.subr.bf16.mxu0 %v7648
    %7874 = vmatpush1.bf16.msra.mxu0 %v7647
    %7875 = vmatprep.subr.bf16.mxu0 %v7632
    %7876 = vmatpush1.bf16.msra.mxu0 %v7631
    %7877 = vmatprep.subr.bf16.mxu0 %v7616
    %7878 = vmatpush1.bf16.msra.mxu0 %v7615
    %7879 = vmatprep.subr.bf16.mxu0 %v7600
    %7880 = vmatpush1.bf16.msra.mxu0 %v7599
    %7881 = vmatprep.subr.bf16.mxu0 %v7584
    %7882 = vmatpush1.bf16.msra.mxu0 %v7583
    %7883 = vmatprep.subr.bf16.mxu0 %v7568
    %7884 = vmatpush1.bf16.msra.mxu0 %v7567
    %7885 = vmatprep.subr.bf16.mxu0 %v7552
    %7886 = vmatpush1.bf16.msra.mxu0 %v7551
    %7887 = vmatprep.subr.bf16.mxu0 %v7536
    %7888 = vmatpush1.bf16.msra.mxu0 %v7535
    %7889 = vmatprep.subr.bf16.mxu0 %v7776
    %7890 = vmatpush2.bf16.msra.mxu0 %v7775
    %7891 = vmatprep.subr.bf16.mxu0 %v7760
    %7892 = vmatpush2.bf16.msra.mxu0 %v7759
    %7893 = vmatprep.subr.bf16.mxu0 %v7744
    %7894 = vmatpush2.bf16.msra.mxu0 %v7743
    %7895 = vmatprep.subr.bf16.mxu0 %v7728
    %7896 = vmatpush2.bf16.msra.mxu0 %v7727
    %7897 = vmatprep.subr.bf16.mxu0 %v7712
    %7898 = vmatpush2.bf16.msra.mxu0 %v7711
    %7899 = vmatprep.subr.bf16.mxu0 %v7696
    %7900 = vmatpush2.bf16.msra.mxu0 %v7695
    %7901 = vmatprep.subr.bf16.mxu0 %v7680
    %7902 = vmatpush2.bf16.msra.mxu0 %v7679
    %7903 = vmatprep.subr.bf16.mxu0 %v7664
    %7904 = vmatpush2.bf16.msra.mxu0 %v7663
    %7905 = vmatprep.mubr.bf16.mxu0 %v7530
    %7906 = vmatmul.mubr.bf16.gmra.mxu0 %v7529
    %v7907 = vpop.f32.mrf.mxu0
    %v7908 = vadd.f32 0.0, %v7907
    %v7909 = vpop.f32.mrf.mxu0
    %v7910 = vadd.f32 0.0, %v7909
    %v7911 = vpop.f32.mrf.mxu0
    %v7912 = vadd.f32 0.0, %v7911
    %v7913 = vpop.f32.mrf.mxu0
    %v7914 = vadd.f32 0.0, %v7913
    %7915 = vdwg.mxu0
    %7916 = vmatprep.subr.bf16.mxu0 %v7650
    %7917 = vmatpush1.bf16.msra.mxu0 %v7649
    %7918 = vmatprep.subr.bf16.mxu0 %v7634
    %7919 = vmatpush1.bf16.msra.mxu0 %v7633
    %7920 = vmatprep.subr.bf16.mxu0 %v7618
    %7921 = vmatpush1.bf16.msra.mxu0 %v7617
    %7922 = vmatprep.subr.bf16.mxu0 %v7602
    %7923 = vmatpush1.bf16.msra.mxu0 %v7601
    %7924 = vmatprep.subr.bf16.mxu0 %v7586
    %7925 = vmatpush1.bf16.msra.mxu0 %v7585
    %7926 = vmatprep.subr.bf16.mxu0 %v7570
    %7927 = vmatpush1.bf16.msra.mxu0 %v7569
    %7928 = vmatprep.subr.bf16.mxu0 %v7554
    %7929 = vmatpush1.bf16.msra.mxu0 %v7553
    %7930 = vmatprep.subr.bf16.mxu0 %v7538
    %7931 = vmatpush1.bf16.msra.mxu0 %v7537
    %7932 = vmatprep.subr.bf16.mxu0 %v7778
    %7933 = vmatpush2.bf16.msra.mxu0 %v7777
    %7934 = vmatprep.subr.bf16.mxu0 %v7762
    %7935 = vmatpush2.bf16.msra.mxu0 %v7761
    %7936 = vmatprep.subr.bf16.mxu0 %v7746
    %7937 = vmatpush2.bf16.msra.mxu0 %v7745
    %7938 = vmatprep.subr.bf16.mxu0 %v7730
    %7939 = vmatpush2.bf16.msra.mxu0 %v7729
    %7940 = vmatprep.subr.bf16.mxu0 %v7714
    %7941 = vmatpush2.bf16.msra.mxu0 %v7713
    %7942 = vmatprep.subr.bf16.mxu0 %v7698
    %7943 = vmatpush2.bf16.msra.mxu0 %v7697
    %7944 = vmatprep.subr.bf16.mxu0 %v7682
    %7945 = vmatpush2.bf16.msra.mxu0 %v7681
    %7946 = vmatprep.subr.bf16.mxu0 %v7666
    %7947 = vmatpush2.bf16.msra.mxu0 %v7665
    %7948 = vmatprep.mubr.bf16.mxu0 %v7530
    %7949 = vmatmul.mubr.bf16.gmra.mxu0 %v7529
    %v7950 = vpop.f32.mrf.mxu0
    %v7951 = vadd.f32 0.0, %v7950
    %v7952 = vpop.f32.mrf.mxu0
    %v7953 = vadd.f32 0.0, %v7952
    %v7954 = vpop.f32.mrf.mxu0
    %v7955 = vadd.f32 0.0, %v7954
    %v7956 = vpop.f32.mrf.mxu0
    %v7957 = vadd.f32 0.0, %v7956
    %7958 = vdwg.mxu0
    %7959 = vmatprep.subr.bf16.mxu0 %v7652
    %7960 = vmatpush1.bf16.msra.mxu0 %v7651
    %7961 = vmatprep.subr.bf16.mxu0 %v7636
    %7962 = vmatpush1.bf16.msra.mxu0 %v7635
    %7963 = vmatprep.subr.bf16.mxu0 %v7620
    %7964 = vmatpush1.bf16.msra.mxu0 %v7619
    %7965 = vmatprep.subr.bf16.mxu0 %v7604
    %7966 = vmatpush1.bf16.msra.mxu0 %v7603
    %7967 = vmatprep.subr.bf16.mxu0 %v7588
    %7968 = vmatpush1.bf16.msra.mxu0 %v7587
    %7969 = vmatprep.subr.bf16.mxu0 %v7572
    %7970 = vmatpush1.bf16.msra.mxu0 %v7571
    %7971 = vmatprep.subr.bf16.mxu0 %v7556
    %7972 = vmatpush1.bf16.msra.mxu0 %v7555
    %7973 = vmatprep.subr.bf16.mxu0 %v7540
    %7974 = vmatpush1.bf16.msra.mxu0 %v7539
    %7975 = vmatprep.subr.bf16.mxu0 %v7780
    %7976 = vmatpush2.bf16.msra.mxu0 %v7779
    %7977 = vmatprep.subr.bf16.mxu0 %v7764
    %7978 = vmatpush2.bf16.msra.mxu0 %v7763
    %7979 = vmatprep.subr.bf16.mxu0 %v7748
    %7980 = vmatpush2.bf16.msra.mxu0 %v7747
    %7981 = vmatprep.subr.bf16.mxu0 %v7732
    %7982 = vmatpush2.bf16.msra.mxu0 %v7731
    %7983 = vmatprep.subr.bf16.mxu0 %v7716
    %7984 = vmatpush2.bf16.msra.mxu0 %v7715
    %7985 = vmatprep.subr.bf16.mxu0 %v7700
    %7986 = vmatpush2.bf16.msra.mxu0 %v7699
    %7987 = vmatprep.subr.bf16.mxu0 %v7684
    %7988 = vmatpush2.bf16.msra.mxu0 %v7683
    %7989 = vmatprep.subr.bf16.mxu0 %v7668
    %7990 = vmatpush2.bf16.msra.mxu0 %v7667
    %7991 = vmatprep.mubr.bf16.mxu0 %v7530
    %7992 = vmatmul.mubr.bf16.gmra.mxu0 %v7529
    %v7993 = vpop.f32.mrf.mxu0
    %v7994 = vadd.f32 0.0, %v7993
    %v7995 = vpop.f32.mrf.mxu0
    %v7996 = vadd.f32 0.0, %v7995
    %v7997 = vpop.f32.mrf.mxu0
    %v7998 = vadd.f32 0.0, %v7997
    %v7999 = vpop.f32.mrf.mxu0
    %v8000 = vadd.f32 0.0, %v7999
    %8001 = vdwg.mxu0
    %8002 = vmatprep.subr.bf16.mxu0 %v7654
    %8003 = vmatpush1.bf16.msra.mxu0 %v7653
    %8004 = vmatprep.subr.bf16.mxu0 %v7638
    %8005 = vmatpush1.bf16.msra.mxu0 %v7637
    %8006 = vmatprep.subr.bf16.mxu0 %v7622
    %8007 = vmatpush1.bf16.msra.mxu0 %v7621
    %8008 = vmatprep.subr.bf16.mxu0 %v7606
    %8009 = vmatpush1.bf16.msra.mxu0 %v7605
    %8010 = vmatprep.subr.bf16.mxu0 %v7590
    %8011 = vmatpush1.bf16.msra.mxu0 %v7589
    %8012 = vmatprep.subr.bf16.mxu0 %v7574
    %8013 = vmatpush1.bf16.msra.mxu0 %v7573
    %8014 = vmatprep.subr.bf16.mxu0 %v7558
    %8015 = vmatpush1.bf16.msra.mxu0 %v7557
    %8016 = vmatprep.subr.bf16.mxu0 %v7542
    %8017 = vmatpush1.bf16.msra.mxu0 %v7541
    %8018 = vmatprep.subr.bf16.mxu0 %v7782
    %8019 = vmatpush2.bf16.msra.mxu0 %v7781
    %8020 = vmatprep.subr.bf16.mxu0 %v7766
    %8021 = vmatpush2.bf16.msra.mxu0 %v7765
    %8022 = vmatprep.subr.bf16.mxu0 %v7750
    %8023 = vmatpush2.bf16.msra.mxu0 %v7749
    %8024 = vmatprep.subr.bf16.mxu0 %v7734
    %8025 = vmatpush2.bf16.msra.mxu0 %v7733
    %8026 = vmatprep.subr.bf16.mxu0 %v7718
    %8027 = vmatpush2.bf16.msra.mxu0 %v7717
    %8028 = vmatprep.subr.bf16.mxu0 %v7702
    %8029 = vmatpush2.bf16.msra.mxu0 %v7701
    %8030 = vmatprep.subr.bf16.mxu0 %v7686
    %8031 = vmatpush2.bf16.msra.mxu0 %v7685
    %8032 = vmatprep.subr.bf16.mxu0 %v7670
    %8033 = vmatpush2.bf16.msra.mxu0 %v7669
    %8034 = vmatprep.mubr.bf16.mxu0 %v7530
    %8035 = vmatmul.mubr.bf16.gmra.mxu0 %v7529
    %v8036 = vpop.f32.mrf.mxu0
    %v8037 = vadd.f32 0.0, %v8036
    %v8038 = vpop.f32.mrf.mxu0
    %v8039 = vadd.f32 0.0, %v8038
    %v8040 = vpop.f32.mrf.mxu0
    %v8041 = vadd.f32 0.0, %v8040
    %v8042 = vpop.f32.mrf.mxu0
    %v8043 = vadd.f32 0.0, %v8042
    %8044 = vdwg.mxu0
    %8045 = vmatprep.subr.bf16.mxu0 %v7656
    %8046 = vmatpush1.bf16.msra.mxu0 %v7655
    %8047 = vmatprep.subr.bf16.mxu0 %v7640
    %8048 = vmatpush1.bf16.msra.mxu0 %v7639
    %8049 = vmatprep.subr.bf16.mxu0 %v7624
    %8050 = vmatpush1.bf16.msra.mxu0 %v7623
    %8051 = vmatprep.subr.bf16.mxu0 %v7608
    %8052 = vmatpush1.bf16.msra.mxu0 %v7607
    %8053 = vmatprep.subr.bf16.mxu0 %v7592
    %8054 = vmatpush1.bf16.msra.mxu0 %v7591
    %8055 = vmatprep.subr.bf16.mxu0 %v7576
    %8056 = vmatpush1.bf16.msra.mxu0 %v7575
    %8057 = vmatprep.subr.bf16.mxu0 %v7560
    %8058 = vmatpush1.bf16.msra.mxu0 %v7559
    %8059 = vmatprep.subr.bf16.mxu0 %v7544
    %8060 = vmatpush1.bf16.msra.mxu0 %v7543
    %8061 = vmatprep.subr.bf16.mxu0 %v7784
    %8062 = vmatpush2.bf16.msra.mxu0 %v7783
    %8063 = vmatprep.subr.bf16.mxu0 %v7768
    %8064 = vmatpush2.bf16.msra.mxu0 %v7767
    %8065 = vmatprep.subr.bf16.mxu0 %v7752
    %8066 = vmatpush2.bf16.msra.mxu0 %v7751
    %8067 = vmatprep.subr.bf16.mxu0 %v7736
    %8068 = vmatpush2.bf16.msra.mxu0 %v7735
    %8069 = vmatprep.subr.bf16.mxu0 %v7720
    %8070 = vmatpush2.bf16.msra.mxu0 %v7719
    %8071 = vmatprep.subr.bf16.mxu0 %v7704
    %8072 = vmatpush2.bf16.msra.mxu0 %v7703
    %8073 = vmatprep.subr.bf16.mxu0 %v7688
    %8074 = vmatpush2.bf16.msra.mxu0 %v7687
    %8075 = vmatprep.subr.bf16.mxu0 %v7672
    %8076 = vmatpush2.bf16.msra.mxu0 %v7671
    %8077 = vmatprep.mubr.bf16.mxu0 %v7530
    %8078 = vmatmul.mubr.bf16.gmra.mxu0 %v7529
    %v8079 = vpop.f32.mrf.mxu0
    %v8080 = vadd.f32 0.0, %v8079
    %v8081 = vpop.f32.mrf.mxu0
    %v8082 = vadd.f32 0.0, %v8081
    %v8083 = vpop.f32.mrf.mxu0
    %v8084 = vadd.f32 0.0, %v8083
    %v8085 = vpop.f32.mrf.mxu0
    %v8086 = vadd.f32 0.0, %v8085
    %8087 = vdwg.mxu0
    %8088 = vmatprep.subr.bf16.mxu0 %v7658
    %8089 = vmatpush1.bf16.msra.mxu0 %v7657
    %8090 = vmatprep.subr.bf16.mxu0 %v7642
    %8091 = vmatpush1.bf16.msra.mxu0 %v7641
    %8092 = vmatprep.subr.bf16.mxu0 %v7626
    %8093 = vmatpush1.bf16.msra.mxu0 %v7625
    %8094 = vmatprep.subr.bf16.mxu0 %v7610
    %8095 = vmatpush1.bf16.msra.mxu0 %v7609
    %8096 = vmatprep.subr.bf16.mxu0 %v7594
    %8097 = vmatpush1.bf16.msra.mxu0 %v7593
    %8098 = vmatprep.subr.bf16.mxu0 %v7578
    %8099 = vmatpush1.bf16.msra.mxu0 %v7577
    %8100 = vmatprep.subr.bf16.mxu0 %v7562
    %8101 = vmatpush1.bf16.msra.mxu0 %v7561
    %8102 = vmatprep.subr.bf16.mxu0 %v7546
    %8103 = vmatpush1.bf16.msra.mxu0 %v7545
    %8104 = vmatprep.subr.bf16.mxu0 %v7786
    %8105 = vmatpush2.bf16.msra.mxu0 %v7785
    %8106 = vmatprep.subr.bf16.mxu0 %v7770
    %8107 = vmatpush2.bf16.msra.mxu0 %v7769
    %8108 = vmatprep.subr.bf16.mxu0 %v7754
    %8109 = vmatpush2.bf16.msra.mxu0 %v7753
    %8110 = vmatprep.subr.bf16.mxu0 %v7738
    %8111 = vmatpush2.bf16.msra.mxu0 %v7737
    %8112 = vmatprep.subr.bf16.mxu0 %v7722
    %8113 = vmatpush2.bf16.msra.mxu0 %v7721
    %8114 = vmatprep.subr.bf16.mxu0 %v7706
    %8115 = vmatpush2.bf16.msra.mxu0 %v7705
    %8116 = vmatprep.subr.bf16.mxu0 %v7690
    %8117 = vmatpush2.bf16.msra.mxu0 %v7689
    %8118 = vmatprep.subr.bf16.mxu0 %v7674
    %8119 = vmatpush2.bf16.msra.mxu0 %v7673
    %8120 = vmatprep.mubr.bf16.mxu0 %v7530
    %8121 = vmatmul.mubr.bf16.gmra.mxu0 %v7529
    %v8122 = vpop.f32.mrf.mxu0
    %v8123 = vadd.f32 0.0, %v8122
    %v8124 = vpop.f32.mrf.mxu0
    %v8125 = vadd.f32 0.0, %v8124
    %v8126 = vpop.f32.mrf.mxu0
    %v8127 = vadd.f32 0.0, %v8126
    %v8128 = vpop.f32.mrf.mxu0
    %v8129 = vadd.f32 0.0, %v8128
    %8130 = vdwg.mxu0
    %v8133 = vlaneseq
    %v8134 = vshrl.u32 %v8133, 7
    %v8135 = vsub.s32 0, %v8134
    %v8136 = vrot.slane %v7527, %v8135
    %v8137 = vlaneseq
    %v8138 = vshrl.u32 %v8137, 7
    %v8139 = vsub.s32 1, %v8138
    %v8140 = vrot.slane %v7527, %v8139
    %v8141 = vlaneseq
    %v8142 = vshrl.u32 %v8141, 7
    %v8143 = vsub.s32 2, %v8142
    %v8144 = vrot.slane %v7527, %v8143
    %v8145 = vlaneseq
    %v8146 = vshrl.u32 %v8145, 7
    %v8147 = vsub.s32 3, %v8146
    %v8148 = vrot.slane %v7527, %v8147
    %v8149 = vlaneseq
    %v8150 = vshrl.u32 %v8149, 7
    %v8151 = vsub.s32 4, %v8150
    %v8152 = vrot.slane %v7527, %v8151
    %v8153 = vlaneseq
    %v8154 = vshrl.u32 %v8153, 7
    %v8155 = vsub.s32 5, %v8154
    %v8156 = vrot.slane %v7527, %v8155
    %v8157 = vlaneseq
    %v8158 = vshrl.u32 %v8157, 7
    %v8159 = vsub.s32 6, %v8158
    %v8160 = vrot.slane %v7527, %v8159
    %v8161 = vlaneseq
    %v8162 = vshrl.u32 %v8161, 7
    %v8163 = vsub.s32 7, %v8162
    %v8164 = vrot.slane %v7527, %v8163
    %v8165 = vlaneseq
    %v8166 = vshrl.u32 %v8165, 7
    %v8167 = vsub.s32 0, %v8166
    %v8168 = vrot.slane %v7528, %v8167
    %v8169 = vlaneseq
    %v8170 = vshrl.u32 %v8169, 7
    %v8171 = vsub.s32 1, %v8170
    %v8172 = vrot.slane %v7528, %v8171
    %v8173 = vlaneseq
    %v8174 = vshrl.u32 %v8173, 7
    %v8175 = vsub.s32 2, %v8174
    %v8176 = vrot.slane %v7528, %v8175
    %v8177 = vlaneseq
    %v8178 = vshrl.u32 %v8177, 7
    %v8179 = vsub.s32 3, %v8178
    %v8180 = vrot.slane %v7528, %v8179
    %v8181 = vlaneseq
    %v8182 = vshrl.u32 %v8181, 7
    %v8183 = vsub.s32 4, %v8182
    %v8184 = vrot.slane %v7528, %v8183
    %v8185 = vlaneseq
    %v8186 = vshrl.u32 %v8185, 7
    %v8187 = vsub.s32 5, %v8186
    %v8188 = vrot.slane %v7528, %v8187
    %v8189 = vlaneseq
    %v8190 = vshrl.u32 %v8189, 7
    %v8191 = vsub.s32 6, %v8190
    %v8192 = vrot.slane %v7528, %v8191
    %v8193 = vlaneseq
    %v8194 = vshrl.u32 %v8193, 7
    %v8195 = vsub.s32 7, %v8194
    %v8196 = vrot.slane %v7528, %v8195
    %v8213 = vmul.f32 %v7822, %v8136
    %v8214 = vmul.f32 %v7824, %v8140
    %v8215 = vmul.f32 %v7865, %v8144
    %v8216 = vmul.f32 %v7867, %v8148
    %v8217 = vmul.f32 %v7908, %v8152
    %v8218 = vmul.f32 %v7910, %v8156
    %v8219 = vmul.f32 %v7951, %v8160
    %v8220 = vmul.f32 %v7953, %v8164
    %v8221 = vmul.f32 %v7994, %v8168
    %v8222 = vmul.f32 %v7996, %v8172
    %v8223 = vmul.f32 %v8037, %v8176
    %v8224 = vmul.f32 %v8039, %v8180
    %v8225 = vmul.f32 %v8080, %v8184
    %v8226 = vmul.f32 %v8082, %v8188
    %v8227 = vmul.f32 %v8123, %v8192
    %v8228 = vmul.f32 %v8125, %v8196
    %v8229 = vmul.f32 %v7826, %v8136
    %v8230 = vmul.f32 %v7828, %v8140
    %v8231 = vmul.f32 %v7869, %v8144
    %v8232 = vmul.f32 %v7871, %v8148
    %v8233 = vmul.f32 %v7912, %v8152
    %v8234 = vmul.f32 %v7914, %v8156
    %v8235 = vmul.f32 %v7955, %v8160
    %v8236 = vmul.f32 %v7957, %v8164
    %v8237 = vmul.f32 %v7998, %v8168
    %v8238 = vmul.f32 %v8000, %v8172
    %v8239 = vmul.f32 %v8041, %v8176
    %v8240 = vmul.f32 %v8043, %v8180
    %v8241 = vmul.f32 %v8084, %v8184
    %v8242 = vmul.f32 %v8086, %v8188
    %v8243 = vmul.f32 %v8127, %v8192
    %v8244 = vmul.f32 %v8129, %v8196
    %s8245 = scalar_lea.vmem [#allocation28], 16
    %v8246 = vld [vmem:[%s8245] sm:$0xff]
    %v8247 = vld [vmem:[%s8245 + $0x8] sm:$0xff]
    %v8250 = vlaneseq
    %v8251 = vshrl.u32 %v8250, 7
    %v8252 = vsub.s32 0, %v8251
    %v8253 = vrot.slane %v8246, %v8252
    %v8254 = vlaneseq
    %v8255 = vshrl.u32 %v8254, 7
    %v8256 = vsub.s32 1, %v8255
    %v8257 = vrot.slane %v8246, %v8256
    %v8258 = vlaneseq
    %v8259 = vshrl.u32 %v8258, 7
    %v8260 = vsub.s32 2, %v8259
    %v8261 = vrot.slane %v8246, %v8260
    %v8262 = vlaneseq
    %v8263 = vshrl.u32 %v8262, 7
    %v8264 = vsub.s32 3, %v8263
    %v8265 = vrot.slane %v8246, %v8264
    %v8266 = vlaneseq
    %v8267 = vshrl.u32 %v8266, 7
    %v8268 = vsub.s32 4, %v8267
    %v8269 = vrot.slane %v8246, %v8268
    %v8270 = vlaneseq
    %v8271 = vshrl.u32 %v8270, 7
    %v8272 = vsub.s32 5, %v8271
    %v8273 = vrot.slane %v8246, %v8272
    %v8274 = vlaneseq
    %v8275 = vshrl.u32 %v8274, 7
    %v8276 = vsub.s32 6, %v8275
    %v8277 = vrot.slane %v8246, %v8276
    %v8278 = vlaneseq
    %v8279 = vshrl.u32 %v8278, 7
    %v8280 = vsub.s32 7, %v8279
    %v8281 = vrot.slane %v8246, %v8280
    %v8282 = vlaneseq
    %v8283 = vshrl.u32 %v8282, 7
    %v8284 = vsub.s32 0, %v8283
    %v8285 = vrot.slane %v8247, %v8284
    %v8286 = vlaneseq
    %v8287 = vshrl.u32 %v8286, 7
    %v8288 = vsub.s32 1, %v8287
    %v8289 = vrot.slane %v8247, %v8288
    %v8290 = vlaneseq
    %v8291 = vshrl.u32 %v8290, 7
    %v8292 = vsub.s32 2, %v8291
    %v8293 = vrot.slane %v8247, %v8292
    %v8294 = vlaneseq
    %v8295 = vshrl.u32 %v8294, 7
    %v8296 = vsub.s32 3, %v8295
    %v8297 = vrot.slane %v8247, %v8296
    %v8298 = vlaneseq
    %v8299 = vshrl.u32 %v8298, 7
    %v8300 = vsub.s32 4, %v8299
    %v8301 = vrot.slane %v8247, %v8300
    %v8302 = vlaneseq
    %v8303 = vshrl.u32 %v8302, 7
    %v8304 = vsub.s32 5, %v8303
    %v8305 = vrot.slane %v8247, %v8304
    %v8306 = vlaneseq
    %v8307 = vshrl.u32 %v8306, 7
    %v8308 = vsub.s32 6, %v8307
    %v8309 = vrot.slane %v8247, %v8308
    %v8310 = vlaneseq
    %v8311 = vshrl.u32 %v8310, 7
    %v8312 = vsub.s32 7, %v8311
    %v8313 = vrot.slane %v8247, %v8312
    %v8330 = vadd.f32 %v8213, %v8253
    %v8331 = vadd.f32 %v8214, %v8257
    %v8332 = vadd.f32 %v8215, %v8261
    %v8333 = vadd.f32 %v8216, %v8265
    %v8334 = vadd.f32 %v8217, %v8269
    %v8335 = vadd.f32 %v8218, %v8273
    %v8336 = vadd.f32 %v8219, %v8277
    %v8337 = vadd.f32 %v8220, %v8281
    %v8338 = vadd.f32 %v8221, %v8285
    %v8339 = vadd.f32 %v8222, %v8289
    %v8340 = vadd.f32 %v8223, %v8293
    %v8341 = vadd.f32 %v8224, %v8297
    %v8342 = vadd.f32 %v8225, %v8301
    %v8343 = vadd.f32 %v8226, %v8305
    %v8344 = vadd.f32 %v8227, %v8309
    %v8345 = vadd.f32 %v8228, %v8313
    %v8346 = vadd.f32 %v8229, %v8253
    %v8347 = vadd.f32 %v8230, %v8257
    %v8348 = vadd.f32 %v8231, %v8261
    %v8349 = vadd.f32 %v8232, %v8265
    %v8350 = vadd.f32 %v8233, %v8269
    %v8351 = vadd.f32 %v8234, %v8273
    %v8352 = vadd.f32 %v8235, %v8277
    %v8353 = vadd.f32 %v8236, %v8281
    %v8354 = vadd.f32 %v8237, %v8285
    %v8355 = vadd.f32 %v8238, %v8289
    %v8356 = vadd.f32 %v8239, %v8293
    %v8357 = vadd.f32 %v8240, %v8297
    %v8358 = vadd.f32 %v8241, %v8301
    %v8359 = vadd.f32 %v8242, %v8305
    %v8360 = vadd.f32 %v8243, %v8309
    %v8361 = vadd.f32 %v8244, %v8313
    %v8362 = vmax.f32 %v8330, 0.0
    %v8363 = vmax.f32 %v8331, 0.0
    %v8364 = vmax.f32 %v8332, 0.0
    %v8365 = vmax.f32 %v8333, 0.0
    %v8366 = vmax.f32 %v8334, 0.0
    %v8367 = vmax.f32 %v8335, 0.0
    %v8368 = vmax.f32 %v8336, 0.0
    %v8369 = vmax.f32 %v8337, 0.0
    %v8370 = vmax.f32 %v8338, 0.0
    %v8371 = vmax.f32 %v8339, 0.0
    %v8372 = vmax.f32 %v8340, 0.0
    %v8373 = vmax.f32 %v8341, 0.0
    %v8374 = vmax.f32 %v8342, 0.0
    %v8375 = vmax.f32 %v8343, 0.0
    %v8376 = vmax.f32 %v8344, 0.0
    %v8377 = vmax.f32 %v8345, 0.0
    %v8378 = vmax.f32 %v8346, 0.0
    %v8379 = vmax.f32 %v8347, 0.0
    %v8380 = vmax.f32 %v8348, 0.0
    %v8381 = vmax.f32 %v8349, 0.0
    %v8382 = vmax.f32 %v8350, 0.0
    %v8383 = vmax.f32 %v8351, 0.0
    %v8384 = vmax.f32 %v8352, 0.0
    %v8385 = vmax.f32 %v8353, 0.0
    %v8386 = vmax.f32 %v8354, 0.0
    %v8387 = vmax.f32 %v8355, 0.0
    %v8388 = vmax.f32 %v8356, 0.0
    %v8389 = vmax.f32 %v8357, 0.0
    %v8390 = vmax.f32 %v8358, 0.0
    %v8391 = vmax.f32 %v8359, 0.0
    %v8392 = vmax.f32 %v8360, 0.0
    %v8393 = vmax.f32 %v8361, 0.0
    %s8394 = scalar_lea.vmem [#allocation29], 1024
    %v8395 = vld [vmem:[%s8394] sm:$0xff]
    %v8396 = vld [vmem:[%s8394 + $0x8] sm:$0xff]
    %v8397 = vld [vmem:[%s8394 + $0x10] sm:$0xff]
    %v8398 = vld [vmem:[%s8394 + $0x18] sm:$0xff]
    %v8399 = vld [vmem:[%s8394 + $0x20] sm:$0xff]
    %v8400 = vld [vmem:[%s8394 + $0x28] sm:$0xff]
    %v8401 = vld [vmem:[%s8394 + $0x30] sm:$0xff]
    %v8402 = vld [vmem:[%s8394 + $0x38] sm:$0xff]
    %v8403 = vld [vmem:[%s8394 + $0x40] sm:$0xff]
    %v8404 = vld [vmem:[%s8394 + $0x48] sm:$0xff]
    %v8405 = vld [vmem:[%s8394 + $0x50] sm:$0xff]
    %v8406 = vld [vmem:[%s8394 + $0x58] sm:$0xff]
    %v8407 = vld [vmem:[%s8394 + $0x60] sm:$0xff]
    %v8408 = vld [vmem:[%s8394 + $0x68] sm:$0xff]
    %v8409 = vld [vmem:[%s8394 + $0x70] sm:$0xff]
    %v8410 = vld [vmem:[%s8394 + $0x78] sm:$0xff]
    %v8411 = vld [vmem:[%s8394 + $0x80] sm:$0xff]
    %v8412 = vld [vmem:[%s8394 + $0x88] sm:$0xff]
    %v8413 = vld [vmem:[%s8394 + $0x90] sm:$0xff]
    %v8414 = vld [vmem:[%s8394 + $0x98] sm:$0xff]
    %v8415 = vld [vmem:[%s8394 + $0xa0] sm:$0xff]
    %v8416 = vld [vmem:[%s8394 + $0xa8] sm:$0xff]
    %v8417 = vld [vmem:[%s8394 + $0xb0] sm:$0xff]
    %v8418 = vld [vmem:[%s8394 + $0xb8] sm:$0xff]
    %v8419 = vld [vmem:[%s8394 + $0xc0] sm:$0xff]
    %v8420 = vld [vmem:[%s8394 + $0xc8] sm:$0xff]
    %v8421 = vld [vmem:[%s8394 + $0xd0] sm:$0xff]
    %v8422 = vld [vmem:[%s8394 + $0xd8] sm:$0xff]
    %v8423 = vld [vmem:[%s8394 + $0xe0] sm:$0xff]
    %v8424 = vld [vmem:[%s8394 + $0xe8] sm:$0xff]
    %v8425 = vld [vmem:[%s8394 + $0xf0] sm:$0xff]
    %v8426 = vld [vmem:[%s8394 + $0xf8] sm:$0xff]
    %v8427 = vld [vmem:[%s8394 + $0x100] sm:$0xff]
    %v8428 = vld [vmem:[%s8394 + $0x108] sm:$0xff]
    %v8429 = vld [vmem:[%s8394 + $0x110] sm:$0xff]
    %v8430 = vld [vmem:[%s8394 + $0x118] sm:$0xff]
    %v8431 = vld [vmem:[%s8394 + $0x120] sm:$0xff]
    %v8432 = vld [vmem:[%s8394 + $0x128] sm:$0xff]
    %v8433 = vld [vmem:[%s8394 + $0x130] sm:$0xff]
    %v8434 = vld [vmem:[%s8394 + $0x138] sm:$0xff]
    %v8435 = vld [vmem:[%s8394 + $0x140] sm:$0xff]
    %v8436 = vld [vmem:[%s8394 + $0x148] sm:$0xff]
    %v8437 = vld [vmem:[%s8394 + $0x150] sm:$0xff]
    %v8438 = vld [vmem:[%s8394 + $0x158] sm:$0xff]
    %v8439 = vld [vmem:[%s8394 + $0x160] sm:$0xff]
    %v8440 = vld [vmem:[%s8394 + $0x168] sm:$0xff]
    %v8441 = vld [vmem:[%s8394 + $0x170] sm:$0xff]
    %v8442 = vld [vmem:[%s8394 + $0x178] sm:$0xff]
    %v8443 = vld [vmem:[%s8394 + $0x180] sm:$0xff]
    %v8444 = vld [vmem:[%s8394 + $0x188] sm:$0xff]
    %v8445 = vld [vmem:[%s8394 + $0x190] sm:$0xff]
    %v8446 = vld [vmem:[%s8394 + $0x198] sm:$0xff]
    %v8447 = vld [vmem:[%s8394 + $0x1a0] sm:$0xff]
    %v8448 = vld [vmem:[%s8394 + $0x1a8] sm:$0xff]
    %v8449 = vld [vmem:[%s8394 + $0x1b0] sm:$0xff]
    %v8450 = vld [vmem:[%s8394 + $0x1b8] sm:$0xff]
    %v8451 = vld [vmem:[%s8394 + $0x1c0] sm:$0xff]
    %v8452 = vld [vmem:[%s8394 + $0x1c8] sm:$0xff]
    %v8453 = vld [vmem:[%s8394 + $0x1d0] sm:$0xff]
    %v8454 = vld [vmem:[%s8394 + $0x1d8] sm:$0xff]
    %v8455 = vld [vmem:[%s8394 + $0x1e0] sm:$0xff]
    %v8456 = vld [vmem:[%s8394 + $0x1e8] sm:$0xff]
    %v8457 = vld [vmem:[%s8394 + $0x1f0] sm:$0xff]
    %v8458 = vld [vmem:[%s8394 + $0x1f8] sm:$0xff]
    %v8459 = vld [vmem:[%s8394 + $0x200] sm:$0xff]
    %v8460 = vld [vmem:[%s8394 + $0x208] sm:$0xff]
    %v8461 = vld [vmem:[%s8394 + $0x210] sm:$0xff]
    %v8462 = vld [vmem:[%s8394 + $0x218] sm:$0xff]
    %v8463 = vld [vmem:[%s8394 + $0x220] sm:$0xff]
    %v8464 = vld [vmem:[%s8394 + $0x228] sm:$0xff]
    %v8465 = vld [vmem:[%s8394 + $0x230] sm:$0xff]
    %v8466 = vld [vmem:[%s8394 + $0x238] sm:$0xff]
    %v8467 = vld [vmem:[%s8394 + $0x240] sm:$0xff]
    %v8468 = vld [vmem:[%s8394 + $0x248] sm:$0xff]
    %v8469 = vld [vmem:[%s8394 + $0x250] sm:$0xff]
    %v8470 = vld [vmem:[%s8394 + $0x258] sm:$0xff]
    %v8471 = vld [vmem:[%s8394 + $0x260] sm:$0xff]
    %v8472 = vld [vmem:[%s8394 + $0x268] sm:$0xff]
    %v8473 = vld [vmem:[%s8394 + $0x270] sm:$0xff]
    %v8474 = vld [vmem:[%s8394 + $0x278] sm:$0xff]
    %v8475 = vld [vmem:[%s8394 + $0x280] sm:$0xff]
    %v8476 = vld [vmem:[%s8394 + $0x288] sm:$0xff]
    %v8477 = vld [vmem:[%s8394 + $0x290] sm:$0xff]
    %v8478 = vld [vmem:[%s8394 + $0x298] sm:$0xff]
    %v8479 = vld [vmem:[%s8394 + $0x2a0] sm:$0xff]
    %v8480 = vld [vmem:[%s8394 + $0x2a8] sm:$0xff]
    %v8481 = vld [vmem:[%s8394 + $0x2b0] sm:$0xff]
    %v8482 = vld [vmem:[%s8394 + $0x2b8] sm:$0xff]
    %v8483 = vld [vmem:[%s8394 + $0x2c0] sm:$0xff]
    %v8484 = vld [vmem:[%s8394 + $0x2c8] sm:$0xff]
    %v8485 = vld [vmem:[%s8394 + $0x2d0] sm:$0xff]
    %v8486 = vld [vmem:[%s8394 + $0x2d8] sm:$0xff]
    %v8487 = vld [vmem:[%s8394 + $0x2e0] sm:$0xff]
    %v8488 = vld [vmem:[%s8394 + $0x2e8] sm:$0xff]
    %v8489 = vld [vmem:[%s8394 + $0x2f0] sm:$0xff]
    %v8490 = vld [vmem:[%s8394 + $0x2f8] sm:$0xff]
    %v8491 = vld [vmem:[%s8394 + $0x300] sm:$0xff]
    %v8492 = vld [vmem:[%s8394 + $0x308] sm:$0xff]
    %v8493 = vld [vmem:[%s8394 + $0x310] sm:$0xff]
    %v8494 = vld [vmem:[%s8394 + $0x318] sm:$0xff]
    %v8495 = vld [vmem:[%s8394 + $0x320] sm:$0xff]
    %v8496 = vld [vmem:[%s8394 + $0x328] sm:$0xff]
    %v8497 = vld [vmem:[%s8394 + $0x330] sm:$0xff]
    %v8498 = vld [vmem:[%s8394 + $0x338] sm:$0xff]
    %v8499 = vld [vmem:[%s8394 + $0x340] sm:$0xff]
    %v8500 = vld [vmem:[%s8394 + $0x348] sm:$0xff]
    %v8501 = vld [vmem:[%s8394 + $0x350] sm:$0xff]
    %v8502 = vld [vmem:[%s8394 + $0x358] sm:$0xff]
    %v8503 = vld [vmem:[%s8394 + $0x360] sm:$0xff]
    %v8504 = vld [vmem:[%s8394 + $0x368] sm:$0xff]
    %v8505 = vld [vmem:[%s8394 + $0x370] sm:$0xff]
    %v8506 = vld [vmem:[%s8394 + $0x378] sm:$0xff]
    %v8507 = vld [vmem:[%s8394 + $0x380] sm:$0xff]
    %v8508 = vld [vmem:[%s8394 + $0x388] sm:$0xff]
    %v8509 = vld [vmem:[%s8394 + $0x390] sm:$0xff]
    %v8510 = vld [vmem:[%s8394 + $0x398] sm:$0xff]
    %v8511 = vld [vmem:[%s8394 + $0x3a0] sm:$0xff]
    %v8512 = vld [vmem:[%s8394 + $0x3a8] sm:$0xff]
    %v8513 = vld [vmem:[%s8394 + $0x3b0] sm:$0xff]
    %v8514 = vld [vmem:[%s8394 + $0x3b8] sm:$0xff]
    %v8515 = vld [vmem:[%s8394 + $0x3c0] sm:$0xff]
    %v8516 = vld [vmem:[%s8394 + $0x3c8] sm:$0xff]
    %v8517 = vld [vmem:[%s8394 + $0x3d0] sm:$0xff]
    %v8518 = vld [vmem:[%s8394 + $0x3d8] sm:$0xff]
    %v8519 = vld [vmem:[%s8394 + $0x3e0] sm:$0xff]
    %v8520 = vld [vmem:[%s8394 + $0x3e8] sm:$0xff]
    %v8521 = vld [vmem:[%s8394 + $0x3f0] sm:$0xff]
    %v8522 = vld [vmem:[%s8394 + $0x3f8] sm:$0xff]
    %s8523 = scalar_lea.vmem [#allocation31], 2
    %v8524 = vld [vmem:[%s8523] sm:$0x3]
    %v8525 = vpack.c.bf16 %v8378, %v8362
    %v8526 = vpack.c.bf16 %v8379, %v8363
    %v8527 = vpack.c.bf16 %v8380, %v8364
    %v8528 = vpack.c.bf16 %v8381, %v8365
    %v8529 = vpack.c.bf16 %v8382, %v8366
    %v8530 = vpack.c.bf16 %v8383, %v8367
    %v8531 = vpack.c.bf16 %v8384, %v8368
    %v8532 = vpack.c.bf16 %v8385, %v8369
    %v8533 = vpack.c.bf16 %v8386, %v8370
    %v8534 = vpack.c.bf16 %v8387, %v8371
    %v8535 = vpack.c.bf16 %v8388, %v8372
    %v8536 = vpack.c.bf16 %v8389, %v8373
    %v8537 = vpack.c.bf16 %v8390, %v8374
    %v8538 = vpack.c.bf16 %v8391, %v8375
    %v8539 = vpack.c.bf16 %v8392, %v8376
    %v8540 = vpack.c.bf16 %v8393, %v8377
    %v8541 = vunpack.c.l.s8.bf16 %v8395
    %v8542 = vunpack.c.l.s8.bf16 %v8396
    %v8543 = vunpack.c.h.s8.bf16 %v8395
    %v8544 = vunpack.c.h.s8.bf16 %v8396
    %v8545 = vunpack.c.l.s8.bf16 %v8397
    %v8546 = vunpack.c.l.s8.bf16 %v8398
    %v8547 = vunpack.c.h.s8.bf16 %v8397
    %v8548 = vunpack.c.h.s8.bf16 %v8398
    %v8549 = vunpack.c.l.s8.bf16 %v8399
    %v8550 = vunpack.c.l.s8.bf16 %v8400
    %v8551 = vunpack.c.h.s8.bf16 %v8399
    %v8552 = vunpack.c.h.s8.bf16 %v8400
    %v8553 = vunpack.c.l.s8.bf16 %v8401
    %v8554 = vunpack.c.l.s8.bf16 %v8402
    %v8555 = vunpack.c.h.s8.bf16 %v8401
    %v8556 = vunpack.c.h.s8.bf16 %v8402
    %v8557 = vunpack.c.l.s8.bf16 %v8403
    %v8558 = vunpack.c.l.s8.bf16 %v8404
    %v8559 = vunpack.c.h.s8.bf16 %v8403
    %v8560 = vunpack.c.h.s8.bf16 %v8404
    %v8561 = vunpack.c.l.s8.bf16 %v8405
    %v8562 = vunpack.c.l.s8.bf16 %v8406
    %v8563 = vunpack.c.h.s8.bf16 %v8405
    %v8564 = vunpack.c.h.s8.bf16 %v8406
    %v8565 = vunpack.c.l.s8.bf16 %v8407
    %v8566 = vunpack.c.l.s8.bf16 %v8408
    %v8567 = vunpack.c.h.s8.bf16 %v8407
    %v8568 = vunpack.c.h.s8.bf16 %v8408
    %v8569 = vunpack.c.l.s8.bf16 %v8409
    %v8570 = vunpack.c.l.s8.bf16 %v8410
    %v8571 = vunpack.c.h.s8.bf16 %v8409
    %v8572 = vunpack.c.h.s8.bf16 %v8410
    %v8573 = vunpack.c.l.s8.bf16 %v8411
    %v8574 = vunpack.c.l.s8.bf16 %v8412
    %v8575 = vunpack.c.h.s8.bf16 %v8411
    %v8576 = vunpack.c.h.s8.bf16 %v8412
    %v8577 = vunpack.c.l.s8.bf16 %v8413
    %v8578 = vunpack.c.l.s8.bf16 %v8414
    %v8579 = vunpack.c.h.s8.bf16 %v8413
    %v8580 = vunpack.c.h.s8.bf16 %v8414
    %v8581 = vunpack.c.l.s8.bf16 %v8415
    %v8582 = vunpack.c.l.s8.bf16 %v8416
    %v8583 = vunpack.c.h.s8.bf16 %v8415
    %v8584 = vunpack.c.h.s8.bf16 %v8416
    %v8585 = vunpack.c.l.s8.bf16 %v8417
    %v8586 = vunpack.c.l.s8.bf16 %v8418
    %v8587 = vunpack.c.h.s8.bf16 %v8417
    %v8588 = vunpack.c.h.s8.bf16 %v8418
    %v8589 = vunpack.c.l.s8.bf16 %v8419
    %v8590 = vunpack.c.l.s8.bf16 %v8420
    %v8591 = vunpack.c.h.s8.bf16 %v8419
    %v8592 = vunpack.c.h.s8.bf16 %v8420
    %v8593 = vunpack.c.l.s8.bf16 %v8421
    %v8594 = vunpack.c.l.s8.bf16 %v8422
    %v8595 = vunpack.c.h.s8.bf16 %v8421
    %v8596 = vunpack.c.h.s8.bf16 %v8422
    %v8597 = vunpack.c.l.s8.bf16 %v8423
    %v8598 = vunpack.c.l.s8.bf16 %v8424
    %v8599 = vunpack.c.h.s8.bf16 %v8423
    %v8600 = vunpack.c.h.s8.bf16 %v8424
    %v8601 = vunpack.c.l.s8.bf16 %v8425
    %v8602 = vunpack.c.l.s8.bf16 %v8426
    %v8603 = vunpack.c.h.s8.bf16 %v8425
    %v8604 = vunpack.c.h.s8.bf16 %v8426
    %v8605 = vunpack.c.l.s8.bf16 %v8427
    %v8606 = vunpack.c.l.s8.bf16 %v8428
    %v8607 = vunpack.c.h.s8.bf16 %v8427
    %v8608 = vunpack.c.h.s8.bf16 %v8428
    %v8609 = vunpack.c.l.s8.bf16 %v8429
    %v8610 = vunpack.c.l.s8.bf16 %v8430
    %v8611 = vunpack.c.h.s8.bf16 %v8429
    %v8612 = vunpack.c.h.s8.bf16 %v8430
    %v8613 = vunpack.c.l.s8.bf16 %v8431
    %v8614 = vunpack.c.l.s8.bf16 %v8432
    %v8615 = vunpack.c.h.s8.bf16 %v8431
    %v8616 = vunpack.c.h.s8.bf16 %v8432
    %v8617 = vunpack.c.l.s8.bf16 %v8433
    %v8618 = vunpack.c.l.s8.bf16 %v8434
    %v8619 = vunpack.c.h.s8.bf16 %v8433
    %v8620 = vunpack.c.h.s8.bf16 %v8434
    %v8621 = vunpack.c.l.s8.bf16 %v8435
    %v8622 = vunpack.c.l.s8.bf16 %v8436
    %v8623 = vunpack.c.h.s8.bf16 %v8435
    %v8624 = vunpack.c.h.s8.bf16 %v8436
    %v8625 = vunpack.c.l.s8.bf16 %v8437
    %v8626 = vunpack.c.l.s8.bf16 %v8438
    %v8627 = vunpack.c.h.s8.bf16 %v8437
    %v8628 = vunpack.c.h.s8.bf16 %v8438
    %v8629 = vunpack.c.l.s8.bf16 %v8439
    %v8630 = vunpack.c.l.s8.bf16 %v8440
    %v8631 = vunpack.c.h.s8.bf16 %v8439
    %v8632 = vunpack.c.h.s8.bf16 %v8440
    %v8633 = vunpack.c.l.s8.bf16 %v8441
    %v8634 = vunpack.c.l.s8.bf16 %v8442
    %v8635 = vunpack.c.h.s8.bf16 %v8441
    %v8636 = vunpack.c.h.s8.bf16 %v8442
    %v8637 = vunpack.c.l.s8.bf16 %v8443
    %v8638 = vunpack.c.l.s8.bf16 %v8444
    %v8639 = vunpack.c.h.s8.bf16 %v8443
    %v8640 = vunpack.c.h.s8.bf16 %v8444
    %v8641 = vunpack.c.l.s8.bf16 %v8445
    %v8642 = vunpack.c.l.s8.bf16 %v8446
    %v8643 = vunpack.c.h.s8.bf16 %v8445
    %v8644 = vunpack.c.h.s8.bf16 %v8446
    %v8645 = vunpack.c.l.s8.bf16 %v8447
    %v8646 = vunpack.c.l.s8.bf16 %v8448
    %v8647 = vunpack.c.h.s8.bf16 %v8447
    %v8648 = vunpack.c.h.s8.bf16 %v8448
    %v8649 = vunpack.c.l.s8.bf16 %v8449
    %v8650 = vunpack.c.l.s8.bf16 %v8450
    %v8651 = vunpack.c.h.s8.bf16 %v8449
    %v8652 = vunpack.c.h.s8.bf16 %v8450
    %v8653 = vunpack.c.l.s8.bf16 %v8451
    %v8654 = vunpack.c.l.s8.bf16 %v8452
    %v8655 = vunpack.c.h.s8.bf16 %v8451
    %v8656 = vunpack.c.h.s8.bf16 %v8452
    %v8657 = vunpack.c.l.s8.bf16 %v8453
    %v8658 = vunpack.c.l.s8.bf16 %v8454
    %v8659 = vunpack.c.h.s8.bf16 %v8453
    %v8660 = vunpack.c.h.s8.bf16 %v8454
    %v8661 = vunpack.c.l.s8.bf16 %v8455
    %v8662 = vunpack.c.l.s8.bf16 %v8456
    %v8663 = vunpack.c.h.s8.bf16 %v8455
    %v8664 = vunpack.c.h.s8.bf16 %v8456
    %v8665 = vunpack.c.l.s8.bf16 %v8457
    %v8666 = vunpack.c.l.s8.bf16 %v8458
    %v8667 = vunpack.c.h.s8.bf16 %v8457
    %v8668 = vunpack.c.h.s8.bf16 %v8458
    %v8669 = vunpack.c.l.s8.bf16 %v8459
    %v8670 = vunpack.c.l.s8.bf16 %v8460
    %v8671 = vunpack.c.h.s8.bf16 %v8459
    %v8672 = vunpack.c.h.s8.bf16 %v8460
    %v8673 = vunpack.c.l.s8.bf16 %v8461
    %v8674 = vunpack.c.l.s8.bf16 %v8462
    %v8675 = vunpack.c.h.s8.bf16 %v8461
    %v8676 = vunpack.c.h.s8.bf16 %v8462
    %v8677 = vunpack.c.l.s8.bf16 %v8463
    %v8678 = vunpack.c.l.s8.bf16 %v8464
    %v8679 = vunpack.c.h.s8.bf16 %v8463
    %v8680 = vunpack.c.h.s8.bf16 %v8464
    %v8681 = vunpack.c.l.s8.bf16 %v8465
    %v8682 = vunpack.c.l.s8.bf16 %v8466
    %v8683 = vunpack.c.h.s8.bf16 %v8465
    %v8684 = vunpack.c.h.s8.bf16 %v8466
    %v8685 = vunpack.c.l.s8.bf16 %v8467
    %v8686 = vunpack.c.l.s8.bf16 %v8468
    %v8687 = vunpack.c.h.s8.bf16 %v8467
    %v8688 = vunpack.c.h.s8.bf16 %v8468
    %v8689 = vunpack.c.l.s8.bf16 %v8469
    %v8690 = vunpack.c.l.s8.bf16 %v8470
    %v8691 = vunpack.c.h.s8.bf16 %v8469
    %v8692 = vunpack.c.h.s8.bf16 %v8470
    %v8693 = vunpack.c.l.s8.bf16 %v8471
    %v8694 = vunpack.c.l.s8.bf16 %v8472
    %v8695 = vunpack.c.h.s8.bf16 %v8471
    %v8696 = vunpack.c.h.s8.bf16 %v8472
    %v8697 = vunpack.c.l.s8.bf16 %v8473
    %v8698 = vunpack.c.l.s8.bf16 %v8474
    %v8699 = vunpack.c.h.s8.bf16 %v8473
    %v8700 = vunpack.c.h.s8.bf16 %v8474
    %v8701 = vunpack.c.l.s8.bf16 %v8475
    %v8702 = vunpack.c.l.s8.bf16 %v8476
    %v8703 = vunpack.c.h.s8.bf16 %v8475
    %v8704 = vunpack.c.h.s8.bf16 %v8476
    %v8705 = vunpack.c.l.s8.bf16 %v8477
    %v8706 = vunpack.c.l.s8.bf16 %v8478
    %v8707 = vunpack.c.h.s8.bf16 %v8477
    %v8708 = vunpack.c.h.s8.bf16 %v8478
    %v8709 = vunpack.c.l.s8.bf16 %v8479
    %v8710 = vunpack.c.l.s8.bf16 %v8480
    %v8711 = vunpack.c.h.s8.bf16 %v8479
    %v8712 = vunpack.c.h.s8.bf16 %v8480
    %v8713 = vunpack.c.l.s8.bf16 %v8481
    %v8714 = vunpack.c.l.s8.bf16 %v8482
    %v8715 = vunpack.c.h.s8.bf16 %v8481
    %v8716 = vunpack.c.h.s8.bf16 %v8482
    %v8717 = vunpack.c.l.s8.bf16 %v8483
    %v8718 = vunpack.c.l.s8.bf16 %v8484
    %v8719 = vunpack.c.h.s8.bf16 %v8483
    %v8720 = vunpack.c.h.s8.bf16 %v8484
    %v8721 = vunpack.c.l.s8.bf16 %v8485
    %v8722 = vunpack.c.l.s8.bf16 %v8486
    %v8723 = vunpack.c.h.s8.bf16 %v8485
    %v8724 = vunpack.c.h.s8.bf16 %v8486
    %v8725 = vunpack.c.l.s8.bf16 %v8487
    %v8726 = vunpack.c.l.s8.bf16 %v8488
    %v8727 = vunpack.c.h.s8.bf16 %v8487
    %v8728 = vunpack.c.h.s8.bf16 %v8488
    %v8729 = vunpack.c.l.s8.bf16 %v8489
    %v8730 = vunpack.c.l.s8.bf16 %v8490
    %v8731 = vunpack.c.h.s8.bf16 %v8489
    %v8732 = vunpack.c.h.s8.bf16 %v8490
    %v8733 = vunpack.c.l.s8.bf16 %v8491
    %v8734 = vunpack.c.l.s8.bf16 %v8492
    %v8735 = vunpack.c.h.s8.bf16 %v8491
    %v8736 = vunpack.c.h.s8.bf16 %v8492
    %v8737 = vunpack.c.l.s8.bf16 %v8493
    %v8738 = vunpack.c.l.s8.bf16 %v8494
    %v8739 = vunpack.c.h.s8.bf16 %v8493
    %v8740 = vunpack.c.h.s8.bf16 %v8494
    %v8741 = vunpack.c.l.s8.bf16 %v8495
    %v8742 = vunpack.c.l.s8.bf16 %v8496
    %v8743 = vunpack.c.h.s8.bf16 %v8495
    %v8744 = vunpack.c.h.s8.bf16 %v8496
    %v8745 = vunpack.c.l.s8.bf16 %v8497
    %v8746 = vunpack.c.l.s8.bf16 %v8498
    %v8747 = vunpack.c.h.s8.bf16 %v8497
    %v8748 = vunpack.c.h.s8.bf16 %v8498
    %v8749 = vunpack.c.l.s8.bf16 %v8499
    %v8750 = vunpack.c.l.s8.bf16 %v8500
    %v8751 = vunpack.c.h.s8.bf16 %v8499
    %v8752 = vunpack.c.h.s8.bf16 %v8500
    %v8753 = vunpack.c.l.s8.bf16 %v8501
    %v8754 = vunpack.c.l.s8.bf16 %v8502
    %v8755 = vunpack.c.h.s8.bf16 %v8501
    %v8756 = vunpack.c.h.s8.bf16 %v8502
    %v8757 = vunpack.c.l.s8.bf16 %v8503
    %v8758 = vunpack.c.l.s8.bf16 %v8504
    %v8759 = vunpack.c.h.s8.bf16 %v8503
    %v8760 = vunpack.c.h.s8.bf16 %v8504
    %v8761 = vunpack.c.l.s8.bf16 %v8505
    %v8762 = vunpack.c.l.s8.bf16 %v8506
    %v8763 = vunpack.c.h.s8.bf16 %v8505
    %v8764 = vunpack.c.h.s8.bf16 %v8506
    %v8765 = vunpack.c.l.s8.bf16 %v8507
    %v8766 = vunpack.c.l.s8.bf16 %v8508
    %v8767 = vunpack.c.h.s8.bf16 %v8507
    %v8768 = vunpack.c.h.s8.bf16 %v8508
    %v8769 = vunpack.c.l.s8.bf16 %v8509
    %v8770 = vunpack.c.l.s8.bf16 %v8510
    %v8771 = vunpack.c.h.s8.bf16 %v8509
    %v8772 = vunpack.c.h.s8.bf16 %v8510
    %v8773 = vunpack.c.l.s8.bf16 %v8511
    %v8774 = vunpack.c.l.s8.bf16 %v8512
    %v8775 = vunpack.c.h.s8.bf16 %v8511
    %v8776 = vunpack.c.h.s8.bf16 %v8512
    %v8777 = vunpack.c.l.s8.bf16 %v8513
    %v8778 = vunpack.c.l.s8.bf16 %v8514
    %v8779 = vunpack.c.h.s8.bf16 %v8513
    %v8780 = vunpack.c.h.s8.bf16 %v8514
    %v8781 = vunpack.c.l.s8.bf16 %v8515
    %v8782 = vunpack.c.l.s8.bf16 %v8516
    %v8783 = vunpack.c.h.s8.bf16 %v8515
    %v8784 = vunpack.c.h.s8.bf16 %v8516
    %v8785 = vunpack.c.l.s8.bf16 %v8517
    %v8786 = vunpack.c.l.s8.bf16 %v8518
    %v8787 = vunpack.c.h.s8.bf16 %v8517
    %v8788 = vunpack.c.h.s8.bf16 %v8518
    %v8789 = vunpack.c.l.s8.bf16 %v8519
    %v8790 = vunpack.c.l.s8.bf16 %v8520
    %v8791 = vunpack.c.h.s8.bf16 %v8519
    %v8792 = vunpack.c.h.s8.bf16 %v8520
    %v8793 = vunpack.c.l.s8.bf16 %v8521
    %v8794 = vunpack.c.l.s8.bf16 %v8522
    %v8795 = vunpack.c.h.s8.bf16 %v8521
    %v8796 = vunpack.c.h.s8.bf16 %v8522
    %8797 = vmatprep.subr.bf16.mxu0 %v8556
    %8798 = vmatpush1.bf16.msra.mxu0 %v8555
    %8799 = vmatprep.subr.bf16.mxu0 %v8554
    %8800 = vmatpush1.bf16.msra.mxu0 %v8553
    %8801 = vmatprep.subr.bf16.mxu0 %v8552
    %8802 = vmatpush1.bf16.msra.mxu0 %v8551
    %8803 = vmatprep.subr.bf16.mxu0 %v8550
    %8804 = vmatpush1.bf16.msra.mxu0 %v8549
    %8805 = vmatprep.subr.bf16.mxu0 %v8548
    %8806 = vmatpush1.bf16.msra.mxu0 %v8547
    %8807 = vmatprep.subr.bf16.mxu0 %v8546
    %8808 = vmatpush1.bf16.msra.mxu0 %v8545
    %8809 = vmatprep.subr.bf16.mxu0 %v8544
    %8810 = vmatpush1.bf16.msra.mxu0 %v8543
    %8811 = vmatprep.subr.bf16.mxu0 %v8542
    %8812 = vmatpush1.bf16.msra.mxu0 %v8541
    %8813 = vmatprep.subr.bf16.mxu0 %v8572
    %8814 = vmatpush2.bf16.msra.mxu0 %v8571
    %8815 = vmatprep.subr.bf16.mxu0 %v8570
    %8816 = vmatpush2.bf16.msra.mxu0 %v8569
    %8817 = vmatprep.subr.bf16.mxu0 %v8568
    %8818 = vmatpush2.bf16.msra.mxu0 %v8567
    %8819 = vmatprep.subr.bf16.mxu0 %v8566
    %8820 = vmatpush2.bf16.msra.mxu0 %v8565
    %8821 = vmatprep.subr.bf16.mxu0 %v8564
    %8822 = vmatpush2.bf16.msra.mxu0 %v8563
    %8823 = vmatprep.subr.bf16.mxu0 %v8562
    %8824 = vmatpush2.bf16.msra.mxu0 %v8561
    %8825 = vmatprep.subr.bf16.mxu0 %v8560
    %8826 = vmatpush2.bf16.msra.mxu0 %v8559
    %8827 = vmatprep.subr.bf16.mxu0 %v8558
    %8828 = vmatpush2.bf16.msra.mxu0 %v8557
    %8829 = vmatprep.mubr.bf16.mxu0 %v8526
    %8830 = vmatmul.mubr.bf16.gmra.mxu0 %v8525
    %v8831 = vpop.f32.mrf.mxu0
    %v8832 = vadd.f32 0.0, %v8831
    %v8833 = vpop.f32.mrf.mxu0
    %v8834 = vadd.f32 0.0, %v8833
    %v8835 = vpop.f32.mrf.mxu0
    %v8836 = vadd.f32 0.0, %v8835
    %v8837 = vpop.f32.mrf.mxu0
    %v8838 = vadd.f32 0.0, %v8837
    %8839 = vdwg.mxu0
    %8840 = vmatprep.subr.bf16.mxu0 %v8588
    %8841 = vmatpush1.bf16.msra.mxu0 %v8587
    %8842 = vmatprep.subr.bf16.mxu0 %v8586
    %8843 = vmatpush1.bf16.msra.mxu0 %v8585
    %8844 = vmatprep.subr.bf16.mxu0 %v8584
    %8845 = vmatpush1.bf16.msra.mxu0 %v8583
    %8846 = vmatprep.subr.bf16.mxu0 %v8582
    %8847 = vmatpush1.bf16.msra.mxu0 %v8581
    %8848 = vmatprep.subr.bf16.mxu0 %v8580
    %8849 = vmatpush1.bf16.msra.mxu0 %v8579
    %8850 = vmatprep.subr.bf16.mxu0 %v8578
    %8851 = vmatpush1.bf16.msra.mxu0 %v8577
    %8852 = vmatprep.subr.bf16.mxu0 %v8576
    %8853 = vmatpush1.bf16.msra.mxu0 %v8575
    %8854 = vmatprep.subr.bf16.mxu0 %v8574
    %8855 = vmatpush1.bf16.msra.mxu0 %v8573
    %8856 = vmatprep.subr.bf16.mxu0 %v8604
    %8857 = vmatpush2.bf16.msra.mxu0 %v8603
    %8858 = vmatprep.subr.bf16.mxu0 %v8602
    %8859 = vmatpush2.bf16.msra.mxu0 %v8601
    %8860 = vmatprep.subr.bf16.mxu0 %v8600
    %8861 = vmatpush2.bf16.msra.mxu0 %v8599
    %8862 = vmatprep.subr.bf16.mxu0 %v8598
    %8863 = vmatpush2.bf16.msra.mxu0 %v8597
    %8864 = vmatprep.subr.bf16.mxu0 %v8596
    %8865 = vmatpush2.bf16.msra.mxu0 %v8595
    %8866 = vmatprep.subr.bf16.mxu0 %v8594
    %8867 = vmatpush2.bf16.msra.mxu0 %v8593
    %8868 = vmatprep.subr.bf16.mxu0 %v8592
    %8869 = vmatpush2.bf16.msra.mxu0 %v8591
    %8870 = vmatprep.subr.bf16.mxu0 %v8590
    %8871 = vmatpush2.bf16.msra.mxu0 %v8589
    %8872 = vmatprep.mubr.bf16.mxu0 %v8528
    %8873 = vmatmul.mubr.bf16.gmra.mxu0 %v8527
    %v8874 = vpop.f32.mrf.mxu0
    %v8875 = vadd.f32 %v8832, %v8874
    %v8876 = vpop.f32.mrf.mxu0
    %v8877 = vadd.f32 %v8834, %v8876
    %v8878 = vpop.f32.mrf.mxu0
    %v8879 = vadd.f32 %v8836, %v8878
    %v8880 = vpop.f32.mrf.mxu0
    %v8881 = vadd.f32 %v8838, %v8880
    %8882 = vdwg.mxu0
    %8883 = vmatprep.subr.bf16.mxu0 %v8620
    %8884 = vmatpush1.bf16.msra.mxu0 %v8619
    %8885 = vmatprep.subr.bf16.mxu0 %v8618
    %8886 = vmatpush1.bf16.msra.mxu0 %v8617
    %8887 = vmatprep.subr.bf16.mxu0 %v8616
    %8888 = vmatpush1.bf16.msra.mxu0 %v8615
    %8889 = vmatprep.subr.bf16.mxu0 %v8614
    %8890 = vmatpush1.bf16.msra.mxu0 %v8613
    %8891 = vmatprep.subr.bf16.mxu0 %v8612
    %8892 = vmatpush1.bf16.msra.mxu0 %v8611
    %8893 = vmatprep.subr.bf16.mxu0 %v8610
    %8894 = vmatpush1.bf16.msra.mxu0 %v8609
    %8895 = vmatprep.subr.bf16.mxu0 %v8608
    %8896 = vmatpush1.bf16.msra.mxu0 %v8607
    %8897 = vmatprep.subr.bf16.mxu0 %v8606
    %8898 = vmatpush1.bf16.msra.mxu0 %v8605
    %8899 = vmatprep.subr.bf16.mxu0 %v8636
    %8900 = vmatpush2.bf16.msra.mxu0 %v8635
    %8901 = vmatprep.subr.bf16.mxu0 %v8634
    %8902 = vmatpush2.bf16.msra.mxu0 %v8633
    %8903 = vmatprep.subr.bf16.mxu0 %v8632
    %8904 = vmatpush2.bf16.msra.mxu0 %v8631
    %8905 = vmatprep.subr.bf16.mxu0 %v8630
    %8906 = vmatpush2.bf16.msra.mxu0 %v8629
    %8907 = vmatprep.subr.bf16.mxu0 %v8628
    %8908 = vmatpush2.bf16.msra.mxu0 %v8627
    %8909 = vmatprep.subr.bf16.mxu0 %v8626
    %8910 = vmatpush2.bf16.msra.mxu0 %v8625
    %8911 = vmatprep.subr.bf16.mxu0 %v8624
    %8912 = vmatpush2.bf16.msra.mxu0 %v8623
    %8913 = vmatprep.subr.bf16.mxu0 %v8622
    %8914 = vmatpush2.bf16.msra.mxu0 %v8621
    %8915 = vmatprep.mubr.bf16.mxu0 %v8530
    %8916 = vmatmul.mubr.bf16.gmra.mxu0 %v8529
    %v8917 = vpop.f32.mrf.mxu0
    %v8918 = vadd.f32 %v8875, %v8917
    %v8919 = vpop.f32.mrf.mxu0
    %v8920 = vadd.f32 %v8877, %v8919
    %v8921 = vpop.f32.mrf.mxu0
    %v8922 = vadd.f32 %v8879, %v8921
    %v8923 = vpop.f32.mrf.mxu0
    %v8924 = vadd.f32 %v8881, %v8923
    %8925 = vdwg.mxu0
    %8926 = vmatprep.subr.bf16.mxu0 %v8652
    %8927 = vmatpush1.bf16.msra.mxu0 %v8651
    %8928 = vmatprep.subr.bf16.mxu0 %v8650
    %8929 = vmatpush1.bf16.msra.mxu0 %v8649
    %8930 = vmatprep.subr.bf16.mxu0 %v8648
    %8931 = vmatpush1.bf16.msra.mxu0 %v8647
    %8932 = vmatprep.subr.bf16.mxu0 %v8646
    %8933 = vmatpush1.bf16.msra.mxu0 %v8645
    %8934 = vmatprep.subr.bf16.mxu0 %v8644
    %8935 = vmatpush1.bf16.msra.mxu0 %v8643
    %8936 = vmatprep.subr.bf16.mxu0 %v8642
    %8937 = vmatpush1.bf16.msra.mxu0 %v8641
    %8938 = vmatprep.subr.bf16.mxu0 %v8640
    %8939 = vmatpush1.bf16.msra.mxu0 %v8639
    %8940 = vmatprep.subr.bf16.mxu0 %v8638
    %8941 = vmatpush1.bf16.msra.mxu0 %v8637
    %8942 = vmatprep.subr.bf16.mxu0 %v8668
    %8943 = vmatpush2.bf16.msra.mxu0 %v8667
    %8944 = vmatprep.subr.bf16.mxu0 %v8666
    %8945 = vmatpush2.bf16.msra.mxu0 %v8665
    %8946 = vmatprep.subr.bf16.mxu0 %v8664
    %8947 = vmatpush2.bf16.msra.mxu0 %v8663
    %8948 = vmatprep.subr.bf16.mxu0 %v8662
    %8949 = vmatpush2.bf16.msra.mxu0 %v8661
    %8950 = vmatprep.subr.bf16.mxu0 %v8660
    %8951 = vmatpush2.bf16.msra.mxu0 %v8659
    %8952 = vmatprep.subr.bf16.mxu0 %v8658
    %8953 = vmatpush2.bf16.msra.mxu0 %v8657
    %8954 = vmatprep.subr.bf16.mxu0 %v8656
    %8955 = vmatpush2.bf16.msra.mxu0 %v8655
    %8956 = vmatprep.subr.bf16.mxu0 %v8654
    %8957 = vmatpush2.bf16.msra.mxu0 %v8653
    %8958 = vmatprep.mubr.bf16.mxu0 %v8532
    %8959 = vmatmul.mubr.bf16.gmra.mxu0 %v8531
    %v8960 = vpop.f32.mrf.mxu0
    %v8961 = vadd.f32 %v8918, %v8960
    %v8962 = vpop.f32.mrf.mxu0
    %v8963 = vadd.f32 %v8920, %v8962
    %v8964 = vpop.f32.mrf.mxu0
    %v8965 = vadd.f32 %v8922, %v8964
    %v8966 = vpop.f32.mrf.mxu0
    %v8967 = vadd.f32 %v8924, %v8966
    %8968 = vdwg.mxu0
    %8969 = vmatprep.subr.bf16.mxu0 %v8684
    %8970 = vmatpush1.bf16.msra.mxu0 %v8683
    %8971 = vmatprep.subr.bf16.mxu0 %v8682
    %8972 = vmatpush1.bf16.msra.mxu0 %v8681
    %8973 = vmatprep.subr.bf16.mxu0 %v8680
    %8974 = vmatpush1.bf16.msra.mxu0 %v8679
    %8975 = vmatprep.subr.bf16.mxu0 %v8678
    %8976 = vmatpush1.bf16.msra.mxu0 %v8677
    %8977 = vmatprep.subr.bf16.mxu0 %v8676
    %8978 = vmatpush1.bf16.msra.mxu0 %v8675
    %8979 = vmatprep.subr.bf16.mxu0 %v8674
    %8980 = vmatpush1.bf16.msra.mxu0 %v8673
    %8981 = vmatprep.subr.bf16.mxu0 %v8672
    %8982 = vmatpush1.bf16.msra.mxu0 %v8671
    %8983 = vmatprep.subr.bf16.mxu0 %v8670
    %8984 = vmatpush1.bf16.msra.mxu0 %v8669
    %8985 = vmatprep.subr.bf16.mxu0 %v8700
    %8986 = vmatpush2.bf16.msra.mxu0 %v8699
    %8987 = vmatprep.subr.bf16.mxu0 %v8698
    %8988 = vmatpush2.bf16.msra.mxu0 %v8697
    %8989 = vmatprep.subr.bf16.mxu0 %v8696
    %8990 = vmatpush2.bf16.msra.mxu0 %v8695
    %8991 = vmatprep.subr.bf16.mxu0 %v8694
    %8992 = vmatpush2.bf16.msra.mxu0 %v8693
    %8993 = vmatprep.subr.bf16.mxu0 %v8692
    %8994 = vmatpush2.bf16.msra.mxu0 %v8691
    %8995 = vmatprep.subr.bf16.mxu0 %v8690
    %8996 = vmatpush2.bf16.msra.mxu0 %v8689
    %8997 = vmatprep.subr.bf16.mxu0 %v8688
    %8998 = vmatpush2.bf16.msra.mxu0 %v8687
    %8999 = vmatprep.subr.bf16.mxu0 %v8686
    %9000 = vmatpush2.bf16.msra.mxu0 %v8685
    %9001 = vmatprep.mubr.bf16.mxu0 %v8534
    %9002 = vmatmul.mubr.bf16.gmra.mxu0 %v8533
    %v9003 = vpop.f32.mrf.mxu0
    %v9004 = vadd.f32 %v8961, %v9003
    %v9005 = vpop.f32.mrf.mxu0
    %v9006 = vadd.f32 %v8963, %v9005
    %v9007 = vpop.f32.mrf.mxu0
    %v9008 = vadd.f32 %v8965, %v9007
    %v9009 = vpop.f32.mrf.mxu0
    %v9010 = vadd.f32 %v8967, %v9009
    %9011 = vdwg.mxu0
    %9012 = vmatprep.subr.bf16.mxu0 %v8716
    %9013 = vmatpush1.bf16.msra.mxu0 %v8715
    %9014 = vmatprep.subr.bf16.mxu0 %v8714
    %9015 = vmatpush1.bf16.msra.mxu0 %v8713
    %9016 = vmatprep.subr.bf16.mxu0 %v8712
    %9017 = vmatpush1.bf16.msra.mxu0 %v8711
    %9018 = vmatprep.subr.bf16.mxu0 %v8710
    %9019 = vmatpush1.bf16.msra.mxu0 %v8709
    %9020 = vmatprep.subr.bf16.mxu0 %v8708
    %9021 = vmatpush1.bf16.msra.mxu0 %v8707
    %9022 = vmatprep.subr.bf16.mxu0 %v8706
    %9023 = vmatpush1.bf16.msra.mxu0 %v8705
    %9024 = vmatprep.subr.bf16.mxu0 %v8704
    %9025 = vmatpush1.bf16.msra.mxu0 %v8703
    %9026 = vmatprep.subr.bf16.mxu0 %v8702
    %9027 = vmatpush1.bf16.msra.mxu0 %v8701
    %9028 = vmatprep.subr.bf16.mxu0 %v8732
    %9029 = vmatpush2.bf16.msra.mxu0 %v8731
    %9030 = vmatprep.subr.bf16.mxu0 %v8730
    %9031 = vmatpush2.bf16.msra.mxu0 %v8729
    %9032 = vmatprep.subr.bf16.mxu0 %v8728
    %9033 = vmatpush2.bf16.msra.mxu0 %v8727
    %9034 = vmatprep.subr.bf16.mxu0 %v8726
    %9035 = vmatpush2.bf16.msra.mxu0 %v8725
    %9036 = vmatprep.subr.bf16.mxu0 %v8724
    %9037 = vmatpush2.bf16.msra.mxu0 %v8723
    %9038 = vmatprep.subr.bf16.mxu0 %v8722
    %9039 = vmatpush2.bf16.msra.mxu0 %v8721
    %9040 = vmatprep.subr.bf16.mxu0 %v8720
    %9041 = vmatpush2.bf16.msra.mxu0 %v8719
    %9042 = vmatprep.subr.bf16.mxu0 %v8718
    %9043 = vmatpush2.bf16.msra.mxu0 %v8717
    %9044 = vmatprep.mubr.bf16.mxu0 %v8536
    %9045 = vmatmul.mubr.bf16.gmra.mxu0 %v8535
    %v9046 = vpop.f32.mrf.mxu0
    %v9047 = vadd.f32 %v9004, %v9046
    %v9048 = vpop.f32.mrf.mxu0
    %v9049 = vadd.f32 %v9006, %v9048
    %v9050 = vpop.f32.mrf.mxu0
    %v9051 = vadd.f32 %v9008, %v9050
    %v9052 = vpop.f32.mrf.mxu0
    %v9053 = vadd.f32 %v9010, %v9052
    %9054 = vdwg.mxu0
    %9055 = vmatprep.subr.bf16.mxu0 %v8748
    %9056 = vmatpush1.bf16.msra.mxu0 %v8747
    %9057 = vmatprep.subr.bf16.mxu0 %v8746
    %9058 = vmatpush1.bf16.msra.mxu0 %v8745
    %9059 = vmatprep.subr.bf16.mxu0 %v8744
    %9060 = vmatpush1.bf16.msra.mxu0 %v8743
    %9061 = vmatprep.subr.bf16.mxu0 %v8742
    %9062 = vmatpush1.bf16.msra.mxu0 %v8741
    %9063 = vmatprep.subr.bf16.mxu0 %v8740
    %9064 = vmatpush1.bf16.msra.mxu0 %v8739
    %9065 = vmatprep.subr.bf16.mxu0 %v8738
    %9066 = vmatpush1.bf16.msra.mxu0 %v8737
    %9067 = vmatprep.subr.bf16.mxu0 %v8736
    %9068 = vmatpush1.bf16.msra.mxu0 %v8735
    %9069 = vmatprep.subr.bf16.mxu0 %v8734
    %9070 = vmatpush1.bf16.msra.mxu0 %v8733
    %9071 = vmatprep.subr.bf16.mxu0 %v8764
    %9072 = vmatpush2.bf16.msra.mxu0 %v8763
    %9073 = vmatprep.subr.bf16.mxu0 %v8762
    %9074 = vmatpush2.bf16.msra.mxu0 %v8761
    %9075 = vmatprep.subr.bf16.mxu0 %v8760
    %9076 = vmatpush2.bf16.msra.mxu0 %v8759
    %9077 = vmatprep.subr.bf16.mxu0 %v8758
    %9078 = vmatpush2.bf16.msra.mxu0 %v8757
    %9079 = vmatprep.subr.bf16.mxu0 %v8756
    %9080 = vmatpush2.bf16.msra.mxu0 %v8755
    %9081 = vmatprep.subr.bf16.mxu0 %v8754
    %9082 = vmatpush2.bf16.msra.mxu0 %v8753
    %9083 = vmatprep.subr.bf16.mxu0 %v8752
    %9084 = vmatpush2.bf16.msra.mxu0 %v8751
    %9085 = vmatprep.subr.bf16.mxu0 %v8750
    %9086 = vmatpush2.bf16.msra.mxu0 %v8749
    %9087 = vmatprep.mubr.bf16.mxu0 %v8538
    %9088 = vmatmul.mubr.bf16.gmra.mxu0 %v8537
    %v9089 = vpop.f32.mrf.mxu0
    %v9090 = vadd.f32 %v9047, %v9089
    %v9091 = vpop.f32.mrf.mxu0
    %v9092 = vadd.f32 %v9049, %v9091
    %v9093 = vpop.f32.mrf.mxu0
    %v9094 = vadd.f32 %v9051, %v9093
    %v9095 = vpop.f32.mrf.mxu0
    %v9096 = vadd.f32 %v9053, %v9095
    %9097 = vdwg.mxu0
    %9098 = vmatprep.subr.bf16.mxu0 %v8780
    %9099 = vmatpush1.bf16.msra.mxu0 %v8779
    %9100 = vmatprep.subr.bf16.mxu0 %v8778
    %9101 = vmatpush1.bf16.msra.mxu0 %v8777
    %9102 = vmatprep.subr.bf16.mxu0 %v8776
    %9103 = vmatpush1.bf16.msra.mxu0 %v8775
    %9104 = vmatprep.subr.bf16.mxu0 %v8774
    %9105 = vmatpush1.bf16.msra.mxu0 %v8773
    %9106 = vmatprep.subr.bf16.mxu0 %v8772
    %9107 = vmatpush1.bf16.msra.mxu0 %v8771
    %9108 = vmatprep.subr.bf16.mxu0 %v8770
    %9109 = vmatpush1.bf16.msra.mxu0 %v8769
    %9110 = vmatprep.subr.bf16.mxu0 %v8768
    %9111 = vmatpush1.bf16.msra.mxu0 %v8767
    %9112 = vmatprep.subr.bf16.mxu0 %v8766
    %9113 = vmatpush1.bf16.msra.mxu0 %v8765
    %9114 = vmatprep.subr.bf16.mxu0 %v8796
    %9115 = vmatpush2.bf16.msra.mxu0 %v8795
    %9116 = vmatprep.subr.bf16.mxu0 %v8794
    %9117 = vmatpush2.bf16.msra.mxu0 %v8793
    %9118 = vmatprep.subr.bf16.mxu0 %v8792
    %9119 = vmatpush2.bf16.msra.mxu0 %v8791
    %9120 = vmatprep.subr.bf16.mxu0 %v8790
    %9121 = vmatpush2.bf16.msra.mxu0 %v8789
    %9122 = vmatprep.subr.bf16.mxu0 %v8788
    %9123 = vmatpush2.bf16.msra.mxu0 %v8787
    %9124 = vmatprep.subr.bf16.mxu0 %v8786
    %9125 = vmatpush2.bf16.msra.mxu0 %v8785
    %9126 = vmatprep.subr.bf16.mxu0 %v8784
    %9127 = vmatpush2.bf16.msra.mxu0 %v8783
    %9128 = vmatprep.subr.bf16.mxu0 %v8782
    %9129 = vmatpush2.bf16.msra.mxu0 %v8781
    %9130 = vmatprep.mubr.bf16.mxu0 %v8540
    %9131 = vmatmul.mubr.bf16.gmra.mxu0 %v8539
    %v9132 = vpop.f32.mrf.mxu0
    %v9133 = vadd.f32 %v9090, %v9132
    %v9134 = vpop.f32.mrf.mxu0
    %v9135 = vadd.f32 %v9092, %v9134
    %v9136 = vpop.f32.mrf.mxu0
    %v9137 = vadd.f32 %v9094, %v9136
    %v9138 = vpop.f32.mrf.mxu0
    %v9139 = vadd.f32 %v9096, %v9138
    %9140 = vdwg.mxu0
    %v9142 = vlaneseq
    %v9143 = vshrl.u32 %v9142, 7
    %v9144 = vsub.s32 0, %v9143
    %v9145 = vrot.slane %v8524, %v9144
    %v9146 = vlaneseq
    %v9147 = vshrl.u32 %v9146, 7
    %v9148 = vsub.s32 1, %v9147
    %v9149 = vrot.slane %v8524, %v9148
    %v9152 = vmul.f32 %v9133, %v9145
    %v9153 = vmul.f32 %v9135, %v9149
    %v9154 = vmul.f32 %v9137, %v9145
    %v9155 = vmul.f32 %v9139, %v9149
    %s9156 = scalar_lea.vmem [#allocation32], 2
    %v9157 = vld [vmem:[%s9156] sm:$0x3]
    %v9159 = vlaneseq
    %v9160 = vshrl.u32 %v9159, 7
    %v9161 = vsub.s32 0, %v9160
    %v9162 = vrot.slane %v9157, %v9161
    %v9163 = vlaneseq
    %v9164 = vshrl.u32 %v9163, 7
    %v9165 = vsub.s32 1, %v9164
    %v9166 = vrot.slane %v9157, %v9165
    %v9169 = vadd.f32 %v9152, %v9162
    %v9170 = vadd.f32 %v9153, %v9166
    %v9171 = vadd.f32 %v9154, %v9162
    %v9172 = vadd.f32 %v9155, %v9166
    %v9173 = vadd.f32 %v7393, %v9169
    %v9174 = vadd.f32 %v7394, %v9170
    %v9175 = vadd.f32 %v7395, %v9171
    %v9176 = vadd.f32 %v7396, %v9172
    %s9177 = scalar_lea.vmem [#allocation34], 2
    %v9178 = vld [vmem:[%s9177] sm:$0x3]
    %s9179 = scalar_lea.vmem [#allocation35], 2
    %v9180 = vld [vmem:[%s9179] sm:$0x3]
    %v9181 = vadd.f32 %v9173, %v9174
    %9182 = vadd.xlane.f32.xlu0 %v9181
    %v9183 = vpop.xlane.xlu0 %9182
    %v9184 = vadd.f32 %v9175, %v9176
    %9185 = vadd.xlane.f32.xlu0 %v9184
    %v9186 = vpop.xlane.xlu0 %9185
    %v9187 = vmul.f32 %v9183, %v3118
    %v9188 = vmul.f32 %v9186, %v3118
    %v9189 = vsub.f32 %v9173, %v9187
    %v9190 = vsub.f32 %v9174, %v9187
    %v9191 = vsub.f32 %v9175, %v9188
    %v9192 = vsub.f32 %v9176, %v9188
    %v9193 = vmul.f32 %v9189, %v9189
    %v9194 = vmul.f32 %v9190, %v9190
    %v9195 = vmul.f32 %v9191, %v9191
    %v9196 = vmul.f32 %v9192, %v9192
    %v9197 = vadd.f32 %v9193, %v9194
    %9198 = vadd.xlane.f32.xlu0 %v9197
    %v9199 = vpop.xlane.xlu0 %9198
    %v9200 = vadd.f32 %v9195, %v9196
    %9201 = vadd.xlane.f32.xlu0 %v9200
    %v9202 = vpop.xlane.xlu0 %9201
    %v9203 = vmul.f32 %v9199, %v3118
    %v9204 = vmul.f32 %v9202, %v3118
    %v9205 = vadd.f32 %v9203, 1e-05
    %v9206 = vadd.f32 %v9204, 1e-05
    %v9207 = vrsqrt.pop %v9205
    %v9208 = vrsqrt.pop %v9206
    %v9209 = vmul.f32 %v9189, %v9207
    %v9210 = vmul.f32 %v9190, %v9207
    %v9211 = vmul.f32 %v9191, %v9208
    %v9212 = vmul.f32 %v9192, %v9208
    %v9214 = vlaneseq
    %v9215 = vshrl.u32 %v9214, 7
    %v9216 = vsub.s32 0, %v9215
    %v9217 = vrot.slane %v9178, %v9216
    %v9218 = vlaneseq
    %v9219 = vshrl.u32 %v9218, 7
    %v9220 = vsub.s32 1, %v9219
    %v9221 = vrot.slane %v9178, %v9220
    %v9224 = vmul.f32 %v9209, %v9217
    %v9225 = vmul.f32 %v9210, %v9221
    %v9226 = vmul.f32 %v9211, %v9217
    %v9227 = vmul.f32 %v9212, %v9221
    %v9229 = vlaneseq
    %v9230 = vshrl.u32 %v9229, 7
    %v9231 = vsub.s32 0, %v9230
    %v9232 = vrot.slane %v9180, %v9231
    %v9233 = vlaneseq
    %v9234 = vshrl.u32 %v9233, 7
    %v9235 = vsub.s32 1, %v9234
    %v9236 = vrot.slane %v9180, %v9235
    %v9239 = vadd.f32 %v9224, %v9232
    %v9240 = vadd.f32 %v9225, %v9236
    %v9241 = vadd.f32 %v9226, %v9232
    %v9242 = vadd.f32 %v9227, %v9236
    %v9243 = vrot.slane %v9239, 4
    %v9244 = vadd.f32 %v9239, %v9243
    %v9245 = vrot.slane %v9244, 2
    %v9246 = vadd.f32 %v9244, %v9245
    %v9247 = vrot.slane %v9246, 1
    %v9248 = vadd.f32 %v9246, %v9247
    %v9249 = vrot.slane %v9240, 4
    %v9250 = vadd.f32 %v9240, %v9249
    %v9251 = vrot.slane %v9250, 2
    %v9252 = vadd.f32 %v9250, %v9251
    %v9253 = vrot.slane %v9252, 1
    %v9254 = vadd.f32 %v9252, %v9253
    %v9255 = vrot.slane %v9241, 4
    %v9256 = vadd.f32 %v9241, %v9255
    %v9257 = vrot.slane %v9256, 2
    %v9258 = vadd.f32 %v9256, %v9257
    %v9259 = vrot.slane %v9258, 1
    %v9260 = vadd.f32 %v9258, %v9259
    %v9261 = vrot.slane %v9242, 4
    %v9262 = vadd.f32 %v9242, %v9261
    %v9263 = vrot.slane %v9262, 2
    %v9264 = vadd.f32 %v9262, %v9263
    %v9265 = vrot.slane %v9264, 1
    %v9266 = vadd.f32 %v9264, %v9265
    %v9267 = vrcp.pop 8.0
    %v9268 = vmul.f32 %v9248, %v9267
    %v9269 = vmul.f32 %v9254, %v9267
    %v9270 = vmul.f32 %v9260, %v9267
    %v9271 = vmul.f32 %v9266, %v9267
    %v9272 = vld [vmem:[#allocation37] sm:$0xff]
    %v9273 = vld [vmem:[#allocation37 + $0x8] sm:$0xff]
    %v9274 = vld [vmem:[#allocation37 + $0x10] sm:$0xff]
    %v9275 = vld [vmem:[#allocation37 + $0x18] sm:$0xff]
    %v9276 = vld [vmem:[#allocation37 + $0x20] sm:$0xff]
    %v9277 = vld [vmem:[#allocation37 + $0x28] sm:$0xff]
    %v9278 = vld [vmem:[#allocation37 + $0x30] sm:$0xff]
    %v9279 = vld [vmem:[#allocation37 + $0x38] sm:$0xff]
    %v9280 = vld [vmem:[#allocation38] sm:$0x1]
    %v9281 = vpack.c.bf16 %v9268, %v9268
    %v9282 = vpack.c.bf16 %v9269, %v9269
    %v9283 = vpack.c.bf16 %v9270, %v9270
    %v9284 = vpack.c.bf16 %v9271, %v9271
    %v9285 = vunpack.c.l.s8.bf16 %v9272
    %v9286 = vunpack.c.h.s8.bf16 %v9272
    %v9287 = vunpack.c.l.s8.bf16 %v9273
    %v9288 = vunpack.c.h.s8.bf16 %v9273
    %v9289 = vunpack.c.l.s8.bf16 %v9274
    %v9290 = vunpack.c.h.s8.bf16 %v9274
    %v9291 = vunpack.c.l.s8.bf16 %v9275
    %v9292 = vunpack.c.h.s8.bf16 %v9275
    %v9293 = vunpack.c.l.s8.bf16 %v9276
    %v9294 = vunpack.c.h.s8.bf16 %v9276
    %v9295 = vunpack.c.l.s8.bf16 %v9277
    %v9296 = vunpack.c.h.s8.bf16 %v9277
    %v9297 = vunpack.c.l.s8.bf16 %v9278
    %v9298 = vunpack.c.h.s8.bf16 %v9278
    %v9299 = vunpack.c.l.s8.bf16 %v9279
    %v9300 = vunpack.c.h.s8.bf16 %v9279
    %v9305 = vunpack.c.l.b16 %v9281
    %v9306 = vunpack.c.l.b16 %v9282
    %v9307 = vunpack.c.l.b16 %v9283
    %v9308 = vunpack.c.l.b16 %v9284
    %vm9309 = vcmask 1041409
    %v9310 = vsel %vm9309, %v9307, %v9305
    %v9311 = vsel %vm9309, %v9308, %v9306
    %v9312 = vpack.c.b16 %v9310, %v9310
    %v9313 = vpack.c.b16 %v9311, %v9311
    %9316 = vmatprep.subr.bf16.mxu0 0
    %9317 = vmatpush1.bf16.msra.mxu0 %v9292
    %9318 = vmatprep.subr.bf16.mxu0 0
    %9319 = vmatpush1.bf16.msra.mxu0 %v9291
    %9320 = vmatprep.subr.bf16.mxu0 0
    %9321 = vmatpush1.bf16.msra.mxu0 %v9290
    %9322 = vmatprep.subr.bf16.mxu0 0
    %9323 = vmatpush1.bf16.msra.mxu0 %v9289
    %9324 = vmatprep.subr.bf16.mxu0 0
    %9325 = vmatpush1.bf16.msra.mxu0 %v9288
    %9326 = vmatprep.subr.bf16.mxu0 0
    %9327 = vmatpush1.bf16.msra.mxu0 %v9287
    %9328 = vmatprep.subr.bf16.mxu0 0
    %9329 = vmatpush1.bf16.msra.mxu0 %v9286
    %9330 = vmatprep.subr.bf16.mxu0 0
    %9331 = vmatpush1.bf16.msra.mxu0 %v9285
    %9332 = vmatprep.subr.bf16.mxu0 0
    %9333 = vmatpush2.bf16.msra.mxu0 %v9300
    %9334 = vmatprep.subr.bf16.mxu0 0
    %9335 = vmatpush2.bf16.msra.mxu0 %v9299
    %9336 = vmatprep.subr.bf16.mxu0 0
    %9337 = vmatpush2.bf16.msra.mxu0 %v9298
    %9338 = vmatprep.subr.bf16.mxu0 0
    %9339 = vmatpush2.bf16.msra.mxu0 %v9297
    %9340 = vmatprep.subr.bf16.mxu0 0
    %9341 = vmatpush2.bf16.msra.mxu0 %v9296
    %9342 = vmatprep.subr.bf16.mxu0 0
    %9343 = vmatpush2.bf16.msra.mxu0 %v9295
    %9344 = vmatprep.subr.bf16.mxu0 0
    %9345 = vmatpush2.bf16.msra.mxu0 %v9294
    %9346 = vmatprep.subr.bf16.mxu0 0
    %9347 = vmatpush2.bf16.msra.mxu0 %v9293
    %9348 = vmatprep.mubr.bf16.mxu0 %v9313
    %9349 = vmatmul.mubr.bf16.gmra.mxu0 %v9312
    %v9350 = vpop.f32.mrf.mxu0
    %v9351 = vadd.f32 0.0, %v9350
    %v9352 = vpop.f32.mrf.mxu0
    %v9353 = vpop.f32.mrf.mxu0
    %v9354 = vpop.f32.mrf.mxu0
    %9355 = vdwg.mxu0
    %v9357 = vlaneseq
    %v9358 = vshrl.u32 %v9357, 7
    %v9359 = vsub.s32 0, %v9358
    %v9360 = vrot.slane %v9280, %v9359
    %v9362 = vmul.f32 %v9351, %v9360
    %v9363 = vld [vmem:[#allocation40] sm:$0x1]
    %v9365 = vlaneseq
    %v9366 = vshrl.u32 %v9365, 7
    %v9367 = vsub.s32 0, %v9366
    %v9368 = vrot.slane %v9363, %v9367
    %v9370 = vadd.f32 %v9362, %v9368
    %9371 = vst [vmem:[#allocation41] sm:$0x3] %v9370
    // Predicated region
    $region210: #{full_model_forward.1} parent=1 // pred_check
      _
    $region211: #{full_model_forward.1} parent=1 // pred_check_branch
      %9373 = sbr.rel (0) target = $region213
    $region212: #{full_model_forward.1} parent=1 // pred_region
      %s9375 = ssub.s32 32, 32
      %9376 = vsyncadd [#allocation4], %s9375
      %s9378 = sshll.u32 [#allocation41], 4
      %s9379 = int_to_ptr.vmem [resolvable:$true] %s9378
      %9381 = dma.vmem_to_hbm [thread:$0]  %s9379, 32, %s27, [#allocation4]
    $region213: #{full_model_forward.1} parent=1 // pred_fallthru
      _
    // Predicated region
    $region214: #{full_model_forward.1} parent=1 // pred_check
      _
    $region215: #{full_model_forward.1} parent=1 // pred_check_branch
      %9383 = sbr.rel (0) target = $region217
    $region216: #{full_model_forward.1} parent=1 // pred_region
      %9384 = dma.done [#allocation4], 32
    $region217: #{full_model_forward.1} parent=1 // pred_fallthru
      _
    %9385 = vsyncpa [#allocation3], 1
    %9386 = vsyncpa [#allocation6], 1
    %9387 = vsyncpa [#allocation9], 1
    %9388 = vsyncpa [#allocation12], 1
    %9389 = vsyncpa [#allocation15], 1
    %9390 = vsyncpa [#allocation18], 1
    %9391 = vsyncpa [#allocation21], 1
    %9392 = vsyncpa [#allocation24], 1
    %9393 = vsyncpa [#allocation27], 1
    %9394 = vsyncpa [#allocation30], 1
    %9395 = vsyncpa [#allocation33], 1
    %9396 = vsyncpa [#allocation36], 1
    %9397 = vsyncpa [#allocation39], 1
    %9398 = vsyncpa [#allocation4], 1

</llo_original>
